<compile_context>
chip_gen: v7x
topology: tpu7x:2x2x1
jax: 0.10.0
libtpu: 0.0.40
codegen_flags: <defaults>
</compile_context>

<pallas_src>
import functools
from typing import NamedTuple

import jax
import jax.numpy as jnp
from jax.experimental import pallas as pl
from jax.experimental.pallas import tpu as pltpu


class QNetDims(NamedTuple):
    C: int
    H: int
    W: int
    C1: int
    KH1: int
    KW1: int
    C2: int
    KH2: int
    KW2: int
    ENC: int
    NACT: int
    NV: int
    NVH: int
    PAD1: int
    PAD2: int
    K1: int
    K2: int


# ----------------------------------------------------------------------------
# Fused forward kernel: one grid step == one batch element.
# ----------------------------------------------------------------------------
def _qnet_kernel(vis_ref, nonvis_ref,
                 w1f_ref, w2f_ref, w1e_ref,
                 wn_ref, bn_ref, w1n_ref, b1d_ref, w2d_ref, b2d_ref,
                 out_ref,
                 stk1_ref, a2_ref, stk2_ref, c2f_ref, *, dims):
    d = dims
    HW = d.H * d.W
    K1V = d.KH1 * d.KW1 * d.C      # valid rows of the conv1 stacked operand
    K2V = d.KH2 * d.KW2 * d.C1     # valid rows of the conv2 stacked operand

    # Constant rows, written every step (so they exist on every core under the
    # parallel batch grid): the all-ones rows drive the bias column of each fused
    # conv weight; extra pad rows hit zero weight columns.
    stk1_ref[K1V:d.K1, :] = jnp.ones((d.K1 - K1V, HW), jnp.float32)
    stk2_ref[K2V:d.K2, :] = jnp.ones((d.K2 - K2V, HW), jnp.float32)
    # conv1-output pad lanes must stay finite: conv2 taps read past H*W, and the
    # resulting garbage output lanes are later killed by zero rows of w1e.
    # TODO(synk): if NaN/Inf inputs must be tolerated, mask garbage lanes after conv2.
    a2_ref[:, HW:] = jnp.zeros((d.C1, d.PAD2), jnp.float32)

    # ---- conv1 (5x5 valid): gather all taps -> ONE MXU matmul (K = K1) --------
    for i in range(d.KH1):
        for j in range(d.KW1):
            t = i * d.KW1 + j
            off = i * d.W + j
            stk1_ref[t * d.C:(t + 1) * d.C, :] = vis_ref[:, off:off + HW]
    a2_ref[:, :HW] = jnp.maximum(
        jnp.dot(w1f_ref[...], stk1_ref[...],
                preferred_element_type=jnp.float32), 0.0)

    # ---- conv2 (3x3 valid): same trick, 9 taps -> ONE matmul (K = K2) ---------
    for i in range(d.KH2):
        for j in range(d.KW2):
            t = i * d.KW2 + j
            off = i * d.W + j
            stk2_ref[t * d.C1:(t + 1) * d.C1, :] = a2_ref[:, off:off + HW]
    c2 = jnp.maximum(
        jnp.dot(w2f_ref[...], stk2_ref[...],
                preferred_element_type=jnp.float32), 0.0)          # (C2, HW)

    # ---- flatten conv2's output into one lane-dense row (CHW order) so dense1's
    #      conv part is a single K = C2*H*W contraction instead of C2 GEMVs ------
    for c in range(d.C2):
        c2f_ref[:, c * HW:(c + 1) * HW] = c2[c:c + 1, :]

    # ---- nonvis branch + dense1 + dense2 (concat folded into a weight split) ---
    nv = jnp.maximum(
        jnp.dot(nonvis_ref[...], wn_ref[...],
                preferred_element_type=jnp.float32) + bn_ref[...], 0.0)   # (1, NVH)
    h1 = (jnp.dot(c2f_ref[...], w1e_ref[...], preferred_element_type=jnp.float32)
          + jnp.dot(nv, w1n_ref[...], preferred_element_type=jnp.float32)
          + b1d_ref[...])
    h1 = jnp.maximum(h1, 0.0)                                             # (1, ENC)
    out_ref[...] = (jnp.dot(h1, w2d_ref[...], preferred_element_type=jnp.float32)
                    + b2d_ref[...])                                       # (1, NACT)


# ----------------------------------------------------------------------------
# One-time parameter preparation (all transposes / fusions / zero-expansion)
# ----------------------------------------------------------------------------
def prepare_params(params, visual_input_shape):
    C, H, W = visual_input_shape
    c1w = jnp.asarray(params["conv1_w"], jnp.float32)   # (C1, C, 5, 5)
    c2w = jnp.asarray(params["conv2_w"], jnp.float32)   # (C2, C1, 3, 3)
    C1, _, KH1, KW1 = c1w.shape
    C2, _, KH2, KW2 = c2w.shape
    Ho1, Wo1 = H - KH1 + 1, W - KW1 + 1
    Ho2, Wo2 = Ho1 - KH2 + 1, Wo1 - KW2 + 1
    final_flat = C2 * Ho2 * Wo2

    d1w = jnp.asarray(params["dense1_w"], jnp.float32)  # (ENC, final_flat + NVH)
    d2w = jnp.asarray(params["dense2_w"], jnp.float32)  # (NACT, ENC)
    nvw = jnp.asarray(params["nonvis_w"], jnp.float32)  # (NVH, NV)
    ENC, NACT = d1w.shape[0], d2w.shape[0]
    NVH, NV = nvw.shape

    def rup(x, m):
        return ((x + m - 1) // m) * m

    K1 = rup(KH1 * KW1 * C + 1, 8)    # tap rows + ones(bias) row, padded to 8
    K2 = rup(KH2 * KW2 * C1 + 1, 8)

    dims = QNetDims(C=C, H=H, W=W, C1=C1, KH1=KH1, KW1=KW1,
                    C2=C2, KH2=KH2, KW2=KW2, ENC=ENC, NACT=NACT,
                    NV=NV, NVH=NVH, PAD1=128, PAD2=128, K1=K1, K2=K2)

    # Fused conv weights: column (tap*Cin + cin) = w[cout, cin, i, j], one bias
    # column (driven by the ones row of the stacked operand), zero pad columns.
    def fuse_conv(w, b, K):
        Co, Ci, KH, KW = w.shape
        wt = jnp.transpose(w, (0, 2, 3, 1)).reshape(Co, KH * KW * Ci)
        return jnp.concatenate(
            [wt, b.reshape(Co, 1),
             jnp.zeros((Co, K - KH * KW * Ci - 1), jnp.float32)], axis=1)

    w1f = fuse_conv(c1w, jnp.asarray(params["conv1_b"], jnp.float32), K1)
    w2f = fuse_conv(c2w, jnp.asarray(params["conv2_b"], jnp.float32), K2)

    # dense1 conv-part weights, zero-expanded onto the full (C2, H*W) lane grid so
    # the kernel's flat conv2 activation (garbage lanes included) needs no
    # compaction.  Row order matches PyTorch's CHW flatten of (C2, Ho2, Wo2).
    w1c = d1w[:, :final_flat].reshape(ENC, C2, Ho2, Wo2)
    w1e = jnp.zeros((C2, H, W, ENC), jnp.float32)
    w1e = w1e.at[:, :Ho2, :Wo2, :].set(jnp.transpose(w1c, (1, 2, 3, 0)))
    w1e = w1e.reshape(C2 * H * W, ENC)

    prep = {
        "w1f": w1f,
        "w2f": w2f,
        "w1e": w1e,
        "wn": nvw.T,
        "bn": jnp.asarray(params["nonvis_b"], jnp.float32).reshape(1, NVH),
        "w1n": d1w[:, final_flat:].T,
        "b1d": jnp.asarray(params["dense1_b"], jnp.float32).reshape(1, ENC),
        "w2d": d2w.T,
        "b2d": jnp.asarray(params["dense2_b"], jnp.float32).reshape(1, NACT),
    }
    return prep, dims


# ----------------------------------------------------------------------------
# Forward wrapper: batch grid (parallel), weights VMEM-resident via constant maps.
# ----------------------------------------------------------------------------
def qnetwork_forward(prep, visual_obs, nonvis_obs, *, dims):
    d = dims
    B = visual_obs.shape[0]
    HW = d.H * d.W
    HWP = HW + d.PAD1

    # NCHW row-major flatten; zero lane-pad done once in the wrapper so the kernel
    # needs no staging copy (tap reads past H*W land in finite zeros).
    vis = visual_obs.astype(jnp.float32).reshape(B, d.C, HW)
    vis = jnp.pad(vis, ((0, 0), (0, 0), (0, d.PAD1)))
    nonvis = nonvis_obs.astype(jnp.float32).reshape(B, 1, d.NV)

    kernel = functools.partial(_qnet_kernel, dims=d)
    out = pl.pallas_call(
        kernel,
        out_shape=jax.ShapeDtypeStruct((B, 1, d.NACT), jnp.float32),
        grid=(B,),
        in_specs=[
            pl.BlockSpec((None, d.C, HWP), lambda b: (b, 0, 0)),      # visual
            pl.BlockSpec((None, 1, d.NV), lambda b: (b, 0, 0)),       # nonvis
            pl.BlockSpec((d.C1, d.K1), lambda b: (0, 0)),             # w1f
            pl.BlockSpec((d.C2, d.K2), lambda b: (0, 0)),             # w2f
            pl.BlockSpec((d.C2 * HW, d.ENC), lambda b: (0, 0)),       # w1e
            pl.BlockSpec((d.NV, d.NVH), lambda b: (0, 0)),            # wn
            pl.BlockSpec((1, d.NVH), lambda b: (0, 0)),               # bn
            pl.BlockSpec((d.NVH, d.ENC), lambda b: (0, 0)),           # w1n
            pl.BlockSpec((1, d.ENC), lambda b: (0, 0)),               # b1d
            pl.BlockSpec((d.ENC, d.NACT), lambda b: (0, 0)),          # w2d
            pl.BlockSpec((1, d.NACT), lambda b: (0, 0)),              # b2d
        ],
        out_specs=pl.BlockSpec((None, 1, d.NACT), lambda b: (b, 0, 0)),
        scratch_shapes=[
            pltpu.VMEM((d.K1, HW), jnp.float32),           # conv1 stacked operand
            pltpu.VMEM((d.C1, HW + d.PAD2), jnp.float32),  # padded conv1 output
            pltpu.VMEM((d.K2, HW), jnp.float32),           # conv2 stacked operand
            pltpu.VMEM((1, d.C2 * HW), jnp.float32),       # flat conv2 output
        ],
        compiler_params=pltpu.CompilerParams(
            dimension_semantics=("parallel",)),
    )(vis, nonvis, prep["w1f"], prep["w2f"], prep["w1e"], prep["wn"],
      prep["bn"], prep["w1n"], prep["b1d"], prep["w2d"], prep["b2d"])
    return out.reshape(B, d.NACT)


# ----------------------------------------------------------------------------
# Pure-JAX reference (for correctness check)
# ----------------------------------------------------------------------------
def ref_forward(params, visual_obs, nonvis_obs):
    dn = ("NCHW", "OIHW", "NCHW")
    x = jax.lax.conv_general_dilated(visual_obs, params["conv1_w"], (1, 1),
                                     "VALID", dimension_numbers=dn)
    x = jax.nn.relu(x + params["conv1_b"][None, :, None, None])
    x = jax.lax.conv_general_dilated(x, params["conv2_w"], (1, 1),
                                     "VALID", dimension_numbers=dn)
    x = jax.nn.relu(x + params["conv2_b"][None, :, None, None])
    nv = jax.nn.relu(nonvis_obs @ params["nonvis_w"].T + params["nonvis_b"])
    hidden = jnp.concatenate([x.reshape(x.shape[0], -1), nv], axis=1)
    h = jax.nn.relu(hidden @ params["dense1_w"].T + params["dense1_b"])
    return h @ params["dense2_w"].T + params["dense2_b"]


# ----------------------------------------------------------------------------
# Deterministic parameter init (PyTorch-style shapes, uniform(-1/sqrt(fan_in)))
# ----------------------------------------------------------------------------
def init_params(key, visual_input_shape, nonvis_input_shape, encoding_size):
    C, H, W = visual_input_shape
    c1_hw = (H - 4, W - 4)                 # conv_output_shape((H,W), 5, 1)
    c2_hw = (c1_hw[0] - 2, c1_hw[1] - 2)   # conv_output_shape(c1_hw, 3, 1)
    final_flat = c2_hw[0] * c2_hw[1] * 32
    n_actions = 3                          # len(action_options)

    ks = jax.random.split(key, 10)

    def u(k, shape, fan_in):
        bound = 1.0 / float(fan_in) ** 0.5
        return jax.random.uniform(k, shape, jnp.float32, -bound, bound)

    params = {
        "conv1_w": u(ks[0], (16, C, 5, 5), C * 25),
        "conv1_b": u(ks[1], (16,), C * 25),
        "conv2_w": u(ks[2], (32, 16, 3, 3), 16 * 9),
        "conv2_b": u(ks[3], (32,), 16 * 9),
        "nonvis_w": u(ks[4], (8, nonvis_input_shape[0]), nonvis_input_shape[0]),
        "nonvis_b": u(ks[5], (8,), nonvis_input_shape[0]),
        "dense1_w": u(ks[6], (encoding_size, final_flat + 8), final_flat + 8),
        "dense1_b": u(ks[7], (encoding_size,), final_flat + 8),
        "dense2_w": u(ks[8], (n_actions, encoding_size), encoding_size),
        "dense2_b": u(ks[9], (n_actions,), encoding_size),
    }
    return params, final_flat


if __name__ == "__main__":
    visual_input_shape = (4, 16, 16)   # (C, H, W)
    nonvis_input_shape = (8,)
    encoding_size = 32
    batch = 2

    key = jax.random.PRNGKey(0)
    k_params, k_vis, k_nonvis = jax.random.split(key, 3)

    params, final_flat = init_params(
        k_params, visual_input_shape, nonvis_input_shape, encoding_size)

    visual_obs = jax.random.normal(
        k_vis, (batch,) + visual_input_shape, jnp.float32)
    nonvis_obs = jax.random.normal(
        k_nonvis, (batch,) + nonvis_input_shape, jnp.float32)

    # One-time parameter prep (tap fusion, bias folding, zero-expansion).
    prep, dims = prepare_params(params, visual_input_shape)
    fwd = jax.jit(functools.partial(qnetwork_forward, dims=dims))

    out = jax.block_until_ready(fwd(prep, visual_obs, nonvis_obs))
    ref = jax.block_until_ready(ref_forward(params, visual_obs, nonvis_obs))

    assert out.shape == (batch, 3), out.shape
    assert jnp.allclose(out, ref, rtol=1e-4, atol=1e-4), (out, ref)

    print("KERNEL_OK")
</pallas_src>

<mosaic_0001>
module attributes {stable_mosaic.version = 11 : i64} {
  func.func @_qnet_kernel(%arg0: i32, %arg1: memref<1x4x384xf32, #tpu.memory_space<vmem>>, %arg2: memref<1x1x8xf32, #tpu.memory_space<vmem>>, %arg3: memref<16x104xf32, #tpu.memory_space<vmem>>, %arg4: memref<32x152xf32, #tpu.memory_space<vmem>>, %arg5: memref<8192x32xf32, #tpu.memory_space<vmem>>, %arg6: memref<8x8xf32, #tpu.memory_space<vmem>>, %arg7: memref<1x8xf32, #tpu.memory_space<vmem>>, %arg8: memref<8x32xf32, #tpu.memory_space<vmem>>, %arg9: memref<1x32xf32, #tpu.memory_space<vmem>>, %arg10: memref<32x3xf32, #tpu.memory_space<vmem>>, %arg11: memref<1x3xf32, #tpu.memory_space<vmem>>, %arg12: memref<1x1x3xf32, #tpu.memory_space<vmem>>, %arg13: memref<104x256xf32, #tpu.memory_space<vmem>>, %arg14: memref<16x384xf32, #tpu.memory_space<vmem>>, %arg15: memref<152x256xf32, #tpu.memory_space<vmem>>, %arg16: memref<1x8192xf32, #tpu.memory_space<vmem>>) attributes {dimension_semantics = [#tpu.dimension_semantics<parallel>], iteration_bounds = array<i64: 2>, scalar_prefetch = 0 : i64, scratch_operands = 4 : i64, tpu.core_type = #tpu.core_type<tc>, window_params = [{transform_indices = @transform_0, window_bounds = array<i64: 1, 4, 384>}, {transform_indices = @transform_1, window_bounds = array<i64: 1, 1, 8>}, {pipeline_mode = #tpu.pipeline_mode<synchronous>, transform_indices = @transform_2, window_bounds = array<i64: 16, 104>}, {pipeline_mode = #tpu.pipeline_mode<synchronous>, transform_indices = @transform_3, window_bounds = array<i64: 32, 152>}, {pipeline_mode = #tpu.pipeline_mode<synchronous>, transform_indices = @transform_4, window_bounds = array<i64: 8192, 32>}, {pipeline_mode = #tpu.pipeline_mode<synchronous>, transform_indices = @transform_5, window_bounds = array<i64: 8, 8>}, {pipeline_mode = #tpu.pipeline_mode<synchronous>, transform_indices = @transform_6, window_bounds = array<i64: 1, 8>}, {pipeline_mode = #tpu.pipeline_mode<synchronous>, transform_indices = @transform_7, window_bounds = array<i64: 8, 32>}, {pipeline_mode = #tpu.pipeline_mode<synchronous>, transform_indices = @transform_8, window_bounds = array<i64: 1, 32>}, {pipeline_mode = #tpu.pipeline_mode<synchronous>, transform_indices = @transform_9, window_bounds = array<i64: 32, 3>}, {pipeline_mode = #tpu.pipeline_mode<synchronous>, transform_indices = @transform_10, window_bounds = array<i64: 1, 3>}, {transform_indices = @transform_11, window_bounds = array<i64: 1, 1, 3>}]} {
    %cst = arith.constant 1.000000e+00 : f32
    %0 = vector.broadcast %cst : f32 to vector<4x256xf32>
    %c100 = arith.constant 100 : index
    %c0 = arith.constant 0 : index
    %1 = vector.load %arg13[%c100, %c0] : memref<104x256xf32, #tpu.memory_space<vmem>>, vector<4x256xf32>
    tpu.vector_store %arg13[%c100, %c0], %0 {strides = array<i32>} : memref<104x256xf32, #tpu.memory_space<vmem>>, vector<4x256xf32>,
    %cst_0 = arith.constant 1.000000e+00 : f32
    %2 = vector.broadcast %cst_0 : f32 to vector<8x256xf32>
    %c144 = arith.constant 144 : index
    %c0_1 = arith.constant 0 : index
    %3 = vector.load %arg15[%c144, %c0_1] : memref<152x256xf32, #tpu.memory_space<vmem>>, vector<8x256xf32>
    tpu.vector_store %arg15[%c144, %c0_1], %2 {strides = array<i32>} : memref<152x256xf32, #tpu.memory_space<vmem>>, vector<8x256xf32>,
    %cst_2 = arith.constant 0.000000e+00 : f32
    %4 = vector.broadcast %cst_2 : f32 to vector<16x128xf32>
    %c0_3 = arith.constant 0 : index
    %c256 = arith.constant 256 : index
    %5 = vector.load %arg14[%c0_3, %c256] : memref<16x384xf32, #tpu.memory_space<vmem>>, vector<16x128xf32>
    tpu.vector_store %arg14[%c0_3, %c256], %4 {strides = array<i32>} : memref<16x384xf32, #tpu.memory_space<vmem>>, vector<16x128xf32>,
    %c0_4 = arith.constant 0 : index
    %c0_5 = arith.constant 0 : index
    %c0_6 = arith.constant 0 : index
    %6 = vector.load %arg1[%c0_4, %c0_5, %c0_6] : memref<1x4x384xf32, #tpu.memory_space<vmem>>, vector<1x4x256xf32>
    %7 = vector.shape_cast %6 : vector<1x4x256xf32> to vector<4x256xf32>
    %c0_7 = arith.constant 0 : index
    %c0_8 = arith.constant 0 : index
    %8 = vector.load %arg13[%c0_7, %c0_8] : memref<104x256xf32, #tpu.memory_space<vmem>>, vector<4x256xf32>
    tpu.vector_store %arg13[%c0_7, %c0_8], %7 {strides = array<i32>} : memref<104x256xf32, #tpu.memory_space<vmem>>, vector<4x256xf32>,
    %c0_9 = arith.constant 0 : index
    %c0_10 = arith.constant 0 : index
    %c1 = arith.constant 1 : index
    %9 = vector.load %arg1[%c0_9, %c0_10, %c1] : memref<1x4x384xf32, #tpu.memory_space<vmem>>, vector<1x4x256xf32>
    %10 = vector.shape_cast %9 : vector<1x4x256xf32> to vector<4x256xf32>
    %c4 = arith.constant 4 : index
    %c0_11 = arith.constant 0 : index
    %11 = vector.load %arg13[%c4, %c0_11] : memref<104x256xf32, #tpu.memory_space<vmem>>, vector<4x256xf32>
    tpu.vector_store %arg13[%c4, %c0_11], %10 {strides = array<i32>} : memref<104x256xf32, #tpu.memory_space<vmem>>, vector<4x256xf32>,
    %c0_12 = arith.constant 0 : index
    %c0_13 = arith.constant 0 : index
    %c2 = arith.constant 2 : index
    %12 = vector.load %arg1[%c0_12, %c0_13, %c2] : memref<1x4x384xf32, #tpu.memory_space<vmem>>, vector<1x4x256xf32>
    %13 = vector.shape_cast %12 : vector<1x4x256xf32> to vector<4x256xf32>
    %c8 = arith.constant 8 : index
    %c0_14 = arith.constant 0 : index
    %14 = vector.load %arg13[%c8, %c0_14] : memref<104x256xf32, #tpu.memory_space<vmem>>, vector<4x256xf32>
    tpu.vector_store %arg13[%c8, %c0_14], %13 {strides = array<i32>} : memref<104x256xf32, #tpu.memory_space<vmem>>, vector<4x256xf32>,
    %c0_15 = arith.constant 0 : index
    %c0_16 = arith.constant 0 : index
    %c3 = arith.constant 3 : index
    %15 = vector.load %arg1[%c0_15, %c0_16, %c3] : memref<1x4x384xf32, #tpu.memory_space<vmem>>, vector<1x4x256xf32>
    %16 = vector.shape_cast %15 : vector<1x4x256xf32> to vector<4x256xf32>
    %c12 = arith.constant 12 : index
    %c0_17 = arith.constant 0 : index
    %17 = vector.load %arg13[%c12, %c0_17] : memref<104x256xf32, #tpu.memory_space<vmem>>, vector<4x256xf32>
    tpu.vector_store %arg13[%c12, %c0_17], %16 {strides = array<i32>} : memref<104x256xf32, #tpu.memory_space<vmem>>, vector<4x256xf32>,
    %c0_18 = arith.constant 0 : index
    %c0_19 = arith.constant 0 : index
    %c4_20 = arith.constant 4 : index
    %18 = vector.load %arg1[%c0_18, %c0_19, %c4_20] : memref<1x4x384xf32, #tpu.memory_space<vmem>>, vector<1x4x256xf32>
    %19 = vector.shape_cast %18 : vector<1x4x256xf32> to vector<4x256xf32>
    %c16 = arith.constant 16 : index
    %c0_21 = arith.constant 0 : index
    %20 = vector.load %arg13[%c16, %c0_21] : memref<104x256xf32, #tpu.memory_space<vmem>>, vector<4x256xf32>
    tpu.vector_store %arg13[%c16, %c0_21], %19 {strides = array<i32>} : memref<104x256xf32, #tpu.memory_space<vmem>>, vector<4x256xf32>,
    %c0_22 = arith.constant 0 : index
    %c0_23 = arith.constant 0 : index
    %c16_24 = arith.constant 16 : index
    %21 = vector.load %arg1[%c0_22, %c0_23, %c16_24] : memref<1x4x384xf32, #tpu.memory_space<vmem>>, vector<1x4x256xf32>
    %22 = vector.shape_cast %21 : vector<1x4x256xf32> to vector<4x256xf32>
    %c20 = arith.constant 20 : index
    %c0_25 = arith.constant 0 : index
    %23 = vector.load %arg13[%c20, %c0_25] : memref<104x256xf32, #tpu.memory_space<vmem>>, vector<4x256xf32>
    tpu.vector_store %arg13[%c20, %c0_25], %22 {strides = array<i32>} : memref<104x256xf32, #tpu.memory_space<vmem>>, vector<4x256xf32>,
    %c0_26 = arith.constant 0 : index
    %c0_27 = arith.constant 0 : index
    %c17 = arith.constant 17 : index
    %24 = vector.load %arg1[%c0_26, %c0_27, %c17] : memref<1x4x384xf32, #tpu.memory_space<vmem>>, vector<1x4x256xf32>
    %25 = vector.shape_cast %24 : vector<1x4x256xf32> to vector<4x256xf32>
    %c24 = arith.constant 24 : index
    %c0_28 = arith.constant 0 : index
    %26 = vector.load %arg13[%c24, %c0_28] : memref<104x256xf32, #tpu.memory_space<vmem>>, vector<4x256xf32>
    tpu.vector_store %arg13[%c24, %c0_28], %25 {strides = array<i32>} : memref<104x256xf32, #tpu.memory_space<vmem>>, vector<4x256xf32>,
    %c0_29 = arith.constant 0 : index
    %c0_30 = arith.constant 0 : index
    %c18 = arith.constant 18 : index
    %27 = vector.load %arg1[%c0_29, %c0_30, %c18] : memref<1x4x384xf32, #tpu.memory_space<vmem>>, vector<1x4x256xf32>
    %28 = vector.shape_cast %27 : vector<1x4x256xf32> to vector<4x256xf32>
    %c28 = arith.constant 28 : index
    %c0_31 = arith.constant 0 : index
    %29 = vector.load %arg13[%c28, %c0_31] : memref<104x256xf32, #tpu.memory_space<vmem>>, vector<4x256xf32>
    tpu.vector_store %arg13[%c28, %c0_31], %28 {strides = array<i32>} : memref<104x256xf32, #tpu.memory_space<vmem>>, vector<4x256xf32>,
    %c0_32 = arith.constant 0 : index
    %c0_33 = arith.constant 0 : index
    %c19 = arith.constant 19 : index
    %30 = vector.load %arg1[%c0_32, %c0_33, %c19] : memref<1x4x384xf32, #tpu.memory_space<vmem>>, vector<1x4x256xf32>
    %31 = vector.shape_cast %30 : vector<1x4x256xf32> to vector<4x256xf32>
    %c32 = arith.constant 32 : index
    %c0_34 = arith.constant 0 : index
    %32 = vector.load %arg13[%c32, %c0_34] : memref<104x256xf32, #tpu.memory_space<vmem>>, vector<4x256xf32>
    tpu.vector_store %arg13[%c32, %c0_34], %31 {strides = array<i32>} : memref<104x256xf32, #tpu.memory_space<vmem>>, vector<4x256xf32>,
    %c0_35 = arith.constant 0 : index
    %c0_36 = arith.constant 0 : index
    %c20_37 = arith.constant 20 : index
    %33 = vector.load %arg1[%c0_35, %c0_36, %c20_37] : memref<1x4x384xf32, #tpu.memory_space<vmem>>, vector<1x4x256xf32>
    %34 = vector.shape_cast %33 : vector<1x4x256xf32> to vector<4x256xf32>
    %c36 = arith.constant 36 : index
    %c0_38 = arith.constant 0 : index
    %35 = vector.load %arg13[%c36, %c0_38] : memref<104x256xf32, #tpu.memory_space<vmem>>, vector<4x256xf32>
    tpu.vector_store %arg13[%c36, %c0_38], %34 {strides = array<i32>} : memref<104x256xf32, #tpu.memory_space<vmem>>, vector<4x256xf32>,
    %c0_39 = arith.constant 0 : index
    %c0_40 = arith.constant 0 : index
    %c32_41 = arith.constant 32 : index
    %36 = vector.load %arg1[%c0_39, %c0_40, %c32_41] : memref<1x4x384xf32, #tpu.memory_space<vmem>>, vector<1x4x256xf32>
    %37 = vector.shape_cast %36 : vector<1x4x256xf32> to vector<4x256xf32>
    %c40 = arith.constant 40 : index
    %c0_42 = arith.constant 0 : index
    %38 = vector.load %arg13[%c40, %c0_42] : memref<104x256xf32, #tpu.memory_space<vmem>>, vector<4x256xf32>
    tpu.vector_store %arg13[%c40, %c0_42], %37 {strides = array<i32>} : memref<104x256xf32, #tpu.memory_space<vmem>>, vector<4x256xf32>,
    %c0_43 = arith.constant 0 : index
    %c0_44 = arith.constant 0 : index
    %c33 = arith.constant 33 : index
    %39 = vector.load %arg1[%c0_43, %c0_44, %c33] : memref<1x4x384xf32, #tpu.memory_space<vmem>>, vector<1x4x256xf32>
    %40 = vector.shape_cast %39 : vector<1x4x256xf32> to vector<4x256xf32>
    %c44 = arith.constant 44 : index
    %c0_45 = arith.constant 0 : index
    %41 = vector.load %arg13[%c44, %c0_45] : memref<104x256xf32, #tpu.memory_space<vmem>>, vector<4x256xf32>
    tpu.vector_store %arg13[%c44, %c0_45], %40 {strides = array<i32>} : memref<104x256xf32, #tpu.memory_space<vmem>>, vector<4x256xf32>,
    %c0_46 = arith.constant 0 : index
    %c0_47 = arith.constant 0 : index
    %c34 = arith.constant 34 : index
    %42 = vector.load %arg1[%c0_46, %c0_47, %c34] : memref<1x4x384xf32, #tpu.memory_space<vmem>>, vector<1x4x256xf32>
    %43 = vector.shape_cast %42 : vector<1x4x256xf32> to vector<4x256xf32>
    %c48 = arith.constant 48 : index
    %c0_48 = arith.constant 0 : index
    %44 = vector.load %arg13[%c48, %c0_48] : memref<104x256xf32, #tpu.memory_space<vmem>>, vector<4x256xf32>
    tpu.vector_store %arg13[%c48, %c0_48], %43 {strides = array<i32>} : memref<104x256xf32, #tpu.memory_space<vmem>>, vector<4x256xf32>,
    %c0_49 = arith.constant 0 : index
    %c0_50 = arith.constant 0 : index
    %c35 = arith.constant 35 : index
    %45 = vector.load %arg1[%c0_49, %c0_50, %c35] : memref<1x4x384xf32, #tpu.memory_space<vmem>>, vector<1x4x256xf32>
    %46 = vector.shape_cast %45 : vector<1x4x256xf32> to vector<4x256xf32>
    %c52 = arith.constant 52 : index
    %c0_51 = arith.constant 0 : index
    %47 = vector.load %arg13[%c52, %c0_51] : memref<104x256xf32, #tpu.memory_space<vmem>>, vector<4x256xf32>
    tpu.vector_store %arg13[%c52, %c0_51], %46 {strides = array<i32>} : memref<104x256xf32, #tpu.memory_space<vmem>>, vector<4x256xf32>,
    %c0_52 = arith.constant 0 : index
    %c0_53 = arith.constant 0 : index
    %c36_54 = arith.constant 36 : index
    %48 = vector.load %arg1[%c0_52, %c0_53, %c36_54] : memref<1x4x384xf32, #tpu.memory_space<vmem>>, vector<1x4x256xf32>
    %49 = vector.shape_cast %48 : vector<1x4x256xf32> to vector<4x256xf32>
    %c56 = arith.constant 56 : index
    %c0_55 = arith.constant 0 : index
    %50 = vector.load %arg13[%c56, %c0_55] : memref<104x256xf32, #tpu.memory_space<vmem>>, vector<4x256xf32>
    tpu.vector_store %arg13[%c56, %c0_55], %49 {strides = array<i32>} : memref<104x256xf32, #tpu.memory_space<vmem>>, vector<4x256xf32>,
    %c0_56 = arith.constant 0 : index
    %c0_57 = arith.constant 0 : index
    %c48_58 = arith.constant 48 : index
    %51 = vector.load %arg1[%c0_56, %c0_57, %c48_58] : memref<1x4x384xf32, #tpu.memory_space<vmem>>, vector<1x4x256xf32>
    %52 = vector.shape_cast %51 : vector<1x4x256xf32> to vector<4x256xf32>
    %c60 = arith.constant 60 : index
    %c0_59 = arith.constant 0 : index
    %53 = vector.load %arg13[%c60, %c0_59] : memref<104x256xf32, #tpu.memory_space<vmem>>, vector<4x256xf32>
    tpu.vector_store %arg13[%c60, %c0_59], %52 {strides = array<i32>} : memref<104x256xf32, #tpu.memory_space<vmem>>, vector<4x256xf32>,
    %c0_60 = arith.constant 0 : index
    %c0_61 = arith.constant 0 : index
    %c49 = arith.constant 49 : index
    %54 = vector.load %arg1[%c0_60, %c0_61, %c49] : memref<1x4x384xf32, #tpu.memory_space<vmem>>, vector<1x4x256xf32>
    %55 = vector.shape_cast %54 : vector<1x4x256xf32> to vector<4x256xf32>
    %c64 = arith.constant 64 : index
    %c0_62 = arith.constant 0 : index
    %56 = vector.load %arg13[%c64, %c0_62] : memref<104x256xf32, #tpu.memory_space<vmem>>, vector<4x256xf32>
    tpu.vector_store %arg13[%c64, %c0_62], %55 {strides = array<i32>} : memref<104x256xf32, #tpu.memory_space<vmem>>, vector<4x256xf32>,
    %c0_63 = arith.constant 0 : index
    %c0_64 = arith.constant 0 : index
    %c50 = arith.constant 50 : index
    %57 = vector.load %arg1[%c0_63, %c0_64, %c50] : memref<1x4x384xf32, #tpu.memory_space<vmem>>, vector<1x4x256xf32>
    %58 = vector.shape_cast %57 : vector<1x4x256xf32> to vector<4x256xf32>
    %c68 = arith.constant 68 : index
    %c0_65 = arith.constant 0 : index
    %59 = vector.load %arg13[%c68, %c0_65] : memref<104x256xf32, #tpu.memory_space<vmem>>, vector<4x256xf32>
    tpu.vector_store %arg13[%c68, %c0_65], %58 {strides = array<i32>} : memref<104x256xf32, #tpu.memory_space<vmem>>, vector<4x256xf32>,
    %c0_66 = arith.constant 0 : index
    %c0_67 = arith.constant 0 : index
    %c51 = arith.constant 51 : index
    %60 = vector.load %arg1[%c0_66, %c0_67, %c51] : memref<1x4x384xf32, #tpu.memory_space<vmem>>, vector<1x4x256xf32>
    %61 = vector.shape_cast %60 : vector<1x4x256xf32> to vector<4x256xf32>
    %c72 = arith.constant 72 : index
    %c0_68 = arith.constant 0 : index
    %62 = vector.load %arg13[%c72, %c0_68] : memref<104x256xf32, #tpu.memory_space<vmem>>, vector<4x256xf32>
    tpu.vector_store %arg13[%c72, %c0_68], %61 {strides = array<i32>} : memref<104x256xf32, #tpu.memory_space<vmem>>, vector<4x256xf32>,
    %c0_69 = arith.constant 0 : index
    %c0_70 = arith.constant 0 : index
    %c52_71 = arith.constant 52 : index
    %63 = vector.load %arg1[%c0_69, %c0_70, %c52_71] : memref<1x4x384xf32, #tpu.memory_space<vmem>>, vector<1x4x256xf32>
    %64 = vector.shape_cast %63 : vector<1x4x256xf32> to vector<4x256xf32>
    %c76 = arith.constant 76 : index
    %c0_72 = arith.constant 0 : index
    %65 = vector.load %arg13[%c76, %c0_72] : memref<104x256xf32, #tpu.memory_space<vmem>>, vector<4x256xf32>
    tpu.vector_store %arg13[%c76, %c0_72], %64 {strides = array<i32>} : memref<104x256xf32, #tpu.memory_space<vmem>>, vector<4x256xf32>,
    %c0_73 = arith.constant 0 : index
    %c0_74 = arith.constant 0 : index
    %c64_75 = arith.constant 64 : index
    %66 = vector.load %arg1[%c0_73, %c0_74, %c64_75] : memref<1x4x384xf32, #tpu.memory_space<vmem>>, vector<1x4x256xf32>
    %67 = vector.shape_cast %66 : vector<1x4x256xf32> to vector<4x256xf32>
    %c80 = arith.constant 80 : index
    %c0_76 = arith.constant 0 : index
    %68 = vector.load %arg13[%c80, %c0_76] : memref<104x256xf32, #tpu.memory_space<vmem>>, vector<4x256xf32>
    tpu.vector_store %arg13[%c80, %c0_76], %67 {strides = array<i32>} : memref<104x256xf32, #tpu.memory_space<vmem>>, vector<4x256xf32>,
    %c0_77 = arith.constant 0 : index
    %c0_78 = arith.constant 0 : index
    %c65 = arith.constant 65 : index
    %69 = vector.load %arg1[%c0_77, %c0_78, %c65] : memref<1x4x384xf32, #tpu.memory_space<vmem>>, vector<1x4x256xf32>
    %70 = vector.shape_cast %69 : vector<1x4x256xf32> to vector<4x256xf32>
    %c84 = arith.constant 84 : index
    %c0_79 = arith.constant 0 : index
    %71 = vector.load %arg13[%c84, %c0_79] : memref<104x256xf32, #tpu.memory_space<vmem>>, vector<4x256xf32>
    tpu.vector_store %arg13[%c84, %c0_79], %70 {strides = array<i32>} : memref<104x256xf32, #tpu.memory_space<vmem>>, vector<4x256xf32>,
    %c0_80 = arith.constant 0 : index
    %c0_81 = arith.constant 0 : index
    %c66 = arith.constant 66 : index
    %72 = vector.load %arg1[%c0_80, %c0_81, %c66] : memref<1x4x384xf32, #tpu.memory_space<vmem>>, vector<1x4x256xf32>
    %73 = vector.shape_cast %72 : vector<1x4x256xf32> to vector<4x256xf32>
    %c88 = arith.constant 88 : index
    %c0_82 = arith.constant 0 : index
    %74 = vector.load %arg13[%c88, %c0_82] : memref<104x256xf32, #tpu.memory_space<vmem>>, vector<4x256xf32>
    tpu.vector_store %arg13[%c88, %c0_82], %73 {strides = array<i32>} : memref<104x256xf32, #tpu.memory_space<vmem>>, vector<4x256xf32>,
    %c0_83 = arith.constant 0 : index
    %c0_84 = arith.constant 0 : index
    %c67 = arith.constant 67 : index
    %75 = vector.load %arg1[%c0_83, %c0_84, %c67] : memref<1x4x384xf32, #tpu.memory_space<vmem>>, vector<1x4x256xf32>
    %76 = vector.shape_cast %75 : vector<1x4x256xf32> to vector<4x256xf32>
    %c92 = arith.constant 92 : index
    %c0_85 = arith.constant 0 : index
    %77 = vector.load %arg13[%c92, %c0_85] : memref<104x256xf32, #tpu.memory_space<vmem>>, vector<4x256xf32>
    tpu.vector_store %arg13[%c92, %c0_85], %76 {strides = array<i32>} : memref<104x256xf32, #tpu.memory_space<vmem>>, vector<4x256xf32>,
    %c0_86 = arith.constant 0 : index
    %c0_87 = arith.constant 0 : index
    %c68_88 = arith.constant 68 : index
    %78 = vector.load %arg1[%c0_86, %c0_87, %c68_88] : memref<1x4x384xf32, #tpu.memory_space<vmem>>, vector<1x4x256xf32>
    %79 = vector.shape_cast %78 : vector<1x4x256xf32> to vector<4x256xf32>
    %c96 = arith.constant 96 : index
    %c0_89 = arith.constant 0 : index
    %80 = vector.load %arg13[%c96, %c0_89] : memref<104x256xf32, #tpu.memory_space<vmem>>, vector<4x256xf32>
    tpu.vector_store %arg13[%c96, %c0_89], %79 {strides = array<i32>} : memref<104x256xf32, #tpu.memory_space<vmem>>, vector<4x256xf32>,
    %c0_90 = arith.constant 0 : index
    %c0_91 = arith.constant 0 : index
    %81 = vector.load %arg3[%c0_90, %c0_91] : memref<16x104xf32, #tpu.memory_space<vmem>>, vector<16x104xf32>
    %c0_92 = arith.constant 0 : index
    %c0_93 = arith.constant 0 : index
    %82 = vector.load %arg13[%c0_92, %c0_93] : memref<104x256xf32, #tpu.memory_space<vmem>>, vector<104x256xf32>
    %cst_94 = arith.constant dense<0.000000e+00> : vector<16x256xf32>
    %83 = tpu.matmul %81, %82, %cst_94 {dimension_numbers = #tpu.dot_dimension_numbers<[1], [0], [0], [1], [0, 0, 1, 1], [], []>} : vector<16x104xf32>, vector<104x256xf32>, vector<16x256xf32> -> vector<16x256xf32>
    %cst_95 = arith.constant 0.000000e+00 : f32
    %84 = vector.broadcast %cst_95 : f32 to vector<16x256xf32>
    %85 = arith.maximumf %83, %84 : vector<16x256xf32>
    %c0_96 = arith.constant 0 : index
    %c0_97 = arith.constant 0 : index
    %86 = vector.load %arg14[%c0_96, %c0_97] : memref<16x384xf32, #tpu.memory_space<vmem>>, vector<16x256xf32>
    tpu.vector_store %arg14[%c0_96, %c0_97], %85 {strides = array<i32>} : memref<16x384xf32, #tpu.memory_space<vmem>>, vector<16x256xf32>,
    %c0_98 = arith.constant 0 : index
    %c0_99 = arith.constant 0 : index
    %87 = vector.load %arg14[%c0_98, %c0_99] : memref<16x384xf32, #tpu.memory_space<vmem>>, vector<16x256xf32>
    %c0_100 = arith.constant 0 : index
    %c0_101 = arith.constant 0 : index
    %88 = vector.load %arg15[%c0_100, %c0_101] : memref<152x256xf32, #tpu.memory_space<vmem>>, vector<16x256xf32>
    tpu.vector_store %arg15[%c0_100, %c0_101], %87 {strides = array<i32>} : memref<152x256xf32, #tpu.memory_space<vmem>>, vector<16x256xf32>,
    %c0_102 = arith.constant 0 : index
    %c1_103 = arith.constant 1 : index
    %89 = vector.load %arg14[%c0_102, %c1_103] : memref<16x384xf32, #tpu.memory_space<vmem>>, vector<16x256xf32>
    %c16_104 = arith.constant 16 : index
    %c0_105 = arith.constant 0 : index
    %90 = vector.load %arg15[%c16_104, %c0_105] : memref<152x256xf32, #tpu.memory_space<vmem>>, vector<16x256xf32>
    tpu.vector_store %arg15[%c16_104, %c0_105], %89 {strides = array<i32>} : memref<152x256xf32, #tpu.memory_space<vmem>>, vector<16x256xf32>,
    %c0_106 = arith.constant 0 : index
    %c2_107 = arith.constant 2 : index
    %91 = vector.load %arg14[%c0_106, %c2_107] : memref<16x384xf32, #tpu.memory_space<vmem>>, vector<16x256xf32>
    %c32_108 = arith.constant 32 : index
    %c0_109 = arith.constant 0 : index
    %92 = vector.load %arg15[%c32_108, %c0_109] : memref<152x256xf32, #tpu.memory_space<vmem>>, vector<16x256xf32>
    tpu.vector_store %arg15[%c32_108, %c0_109], %91 {strides = array<i32>} : memref<152x256xf32, #tpu.memory_space<vmem>>, vector<16x256xf32>,
    %c0_110 = arith.constant 0 : index
    %c16_111 = arith.constant 16 : index
    %93 = vector.load %arg14[%c0_110, %c16_111] : memref<16x384xf32, #tpu.memory_space<vmem>>, vector<16x256xf32>
    %c48_112 = arith.constant 48 : index
    %c0_113 = arith.constant 0 : index
    %94 = vector.load %arg15[%c48_112, %c0_113] : memref<152x256xf32, #tpu.memory_space<vmem>>, vector<16x256xf32>
    tpu.vector_store %arg15[%c48_112, %c0_113], %93 {strides = array<i32>} : memref<152x256xf32, #tpu.memory_space<vmem>>, vector<16x256xf32>,
    %c0_114 = arith.constant 0 : index
    %c17_115 = arith.constant 17 : index
    %95 = vector.load %arg14[%c0_114, %c17_115] : memref<16x384xf32, #tpu.memory_space<vmem>>, vector<16x256xf32>
    %c64_116 = arith.constant 64 : index
    %c0_117 = arith.constant 0 : index
    %96 = vector.load %arg15[%c64_116, %c0_117] : memref<152x256xf32, #tpu.memory_space<vmem>>, vector<16x256xf32>
    tpu.vector_store %arg15[%c64_116, %c0_117], %95 {strides = array<i32>} : memref<152x256xf32, #tpu.memory_space<vmem>>, vector<16x256xf32>,
    %c0_118 = arith.constant 0 : index
    %c18_119 = arith.constant 18 : index
    %97 = vector.load %arg14[%c0_118, %c18_119] : memref<16x384xf32, #tpu.memory_space<vmem>>, vector<16x256xf32>
    %c80_120 = arith.constant 80 : index
    %c0_121 = arith.constant 0 : index
    %98 = vector.load %arg15[%c80_120, %c0_121] : memref<152x256xf32, #tpu.memory_space<vmem>>, vector<16x256xf32>
    tpu.vector_store %arg15[%c80_120, %c0_121], %97 {strides = array<i32>} : memref<152x256xf32, #tpu.memory_space<vmem>>, vector<16x256xf32>,
    %c0_122 = arith.constant 0 : index
    %c32_123 = arith.constant 32 : index
    %99 = vector.load %arg14[%c0_122, %c32_123] : memref<16x384xf32, #tpu.memory_space<vmem>>, vector<16x256xf32>
    %c96_124 = arith.constant 96 : index
    %c0_125 = arith.constant 0 : index
    %100 = vector.load %arg15[%c96_124, %c0_125] : memref<152x256xf32, #tpu.memory_space<vmem>>, vector<16x256xf32>
    tpu.vector_store %arg15[%c96_124, %c0_125], %99 {strides = array<i32>} : memref<152x256xf32, #tpu.memory_space<vmem>>, vector<16x256xf32>,
    %c0_126 = arith.constant 0 : index
    %c33_127 = arith.constant 33 : index
    %101 = vector.load %arg14[%c0_126, %c33_127] : memref<16x384xf32, #tpu.memory_space<vmem>>, vector<16x256xf32>
    %c112 = arith.constant 112 : index
    %c0_128 = arith.constant 0 : index
    %102 = vector.load %arg15[%c112, %c0_128] : memref<152x256xf32, #tpu.memory_space<vmem>>, vector<16x256xf32>
    tpu.vector_store %arg15[%c112, %c0_128], %101 {strides = array<i32>} : memref<152x256xf32, #tpu.memory_space<vmem>>, vector<16x256xf32>,
    %c0_129 = arith.constant 0 : index
    %c34_130 = arith.constant 34 : index
    %103 = vector.load %arg14[%c0_129, %c34_130] : memref<16x384xf32, #tpu.memory_space<vmem>>, vector<16x256xf32>
    %c128 = arith.constant 128 : index
    %c0_131 = arith.constant 0 : index
    %104 = vector.load %arg15[%c128, %c0_131] : memref<152x256xf32, #tpu.memory_space<vmem>>, vector<16x256xf32>
    tpu.vector_store %arg15[%c128, %c0_131], %103 {strides = array<i32>} : memref<152x256xf32, #tpu.memory_space<vmem>>, vector<16x256xf32>,
    %c0_132 = arith.constant 0 : index
    %c0_133 = arith.constant 0 : index
    %105 = vector.load %arg4[%c0_132, %c0_133] : memref<32x152xf32, #tpu.memory_space<vmem>>, vector<32x152xf32>
    %c0_134 = arith.constant 0 : index
    %c0_135 = arith.constant 0 : index
    %106 = vector.load %arg15[%c0_134, %c0_135] : memref<152x256xf32, #tpu.memory_space<vmem>>, vector<152x256xf32>
    %cst_136 = arith.constant dense<0.000000e+00> : vector<32x256xf32>
    %107 = tpu.matmul %105, %106, %cst_136 {dimension_numbers = #tpu.dot_dimension_numbers<[1], [0], [0], [1], [0, 0, 1, 1], [], []>} : vector<32x152xf32>, vector<152x256xf32>, vector<32x256xf32> -> vector<32x256xf32>
    %cst_137 = arith.constant 0.000000e+00 : f32
    %108 = vector.broadcast %cst_137 : f32 to vector<32x256xf32>
    %109 = arith.maximumf %107, %108 : vector<32x256xf32>
    %110 = vector.extract_strided_slice %109 {offsets = [0, 0], sizes = [1, 256], strides = [1, 1]} : vector<32x256xf32> to vector<1x256xf32>
    %c0_138 = arith.constant 0 : index
    %c0_139 = arith.constant 0 : index
    %111 = vector.load %arg16[%c0_138, %c0_139] : memref<1x8192xf32, #tpu.memory_space<vmem>>, vector<1x256xf32>
    tpu.vector_store %arg16[%c0_138, %c0_139], %110 {strides = array<i32>} : memref<1x8192xf32, #tpu.memory_space<vmem>>, vector<1x256xf32>,
    %112 = vector.extract_strided_slice %109 {offsets = [1, 0], sizes = [1, 256], strides = [1, 1]} : vector<32x256xf32> to vector<1x256xf32>
    %c0_140 = arith.constant 0 : index
    %c256_141 = arith.constant 256 : index
    %113 = vector.load %arg16[%c0_140, %c256_141] : memref<1x8192xf32, #tpu.memory_space<vmem>>, vector<1x256xf32>
    tpu.vector_store %arg16[%c0_140, %c256_141], %112 {strides = array<i32>} : memref<1x8192xf32, #tpu.memory_space<vmem>>, vector<1x256xf32>,
    %114 = vector.extract_strided_slice %109 {offsets = [2, 0], sizes = [1, 256], strides = [1, 1]} : vector<32x256xf32> to vector<1x256xf32>
    %c0_142 = arith.constant 0 : index
    %c512 = arith.constant 512 : index
    %115 = vector.load %arg16[%c0_142, %c512] : memref<1x8192xf32, #tpu.memory_space<vmem>>, vector<1x256xf32>
    tpu.vector_store %arg16[%c0_142, %c512], %114 {strides = array<i32>} : memref<1x8192xf32, #tpu.memory_space<vmem>>, vector<1x256xf32>,
    %116 = vector.extract_strided_slice %109 {offsets = [3, 0], sizes = [1, 256], strides = [1, 1]} : vector<32x256xf32> to vector<1x256xf32>
    %c0_143 = arith.constant 0 : index
    %c768 = arith.constant 768 : index
    %117 = vector.load %arg16[%c0_143, %c768] : memref<1x8192xf32, #tpu.memory_space<vmem>>, vector<1x256xf32>
    tpu.vector_store %arg16[%c0_143, %c768], %116 {strides = array<i32>} : memref<1x8192xf32, #tpu.memory_space<vmem>>, vector<1x256xf32>,
    %118 = vector.extract_strided_slice %109 {offsets = [4, 0], sizes = [1, 256], strides = [1, 1]} : vector<32x256xf32> to vector<1x256xf32>
    %c0_144 = arith.constant 0 : index
    %c1024 = arith.constant 1024 : index
    %119 = vector.load %arg16[%c0_144, %c1024] : memref<1x8192xf32, #tpu.memory_space<vmem>>, vector<1x256xf32>
    tpu.vector_store %arg16[%c0_144, %c1024], %118 {strides = array<i32>} : memref<1x8192xf32, #tpu.memory_space<vmem>>, vector<1x256xf32>,
    %120 = vector.extract_strided_slice %109 {offsets = [5, 0], sizes = [1, 256], strides = [1, 1]} : vector<32x256xf32> to vector<1x256xf32>
    %c0_145 = arith.constant 0 : index
    %c1280 = arith.constant 1280 : index
    %121 = vector.load %arg16[%c0_145, %c1280] : memref<1x8192xf32, #tpu.memory_space<vmem>>, vector<1x256xf32>
    tpu.vector_store %arg16[%c0_145, %c1280], %120 {strides = array<i32>} : memref<1x8192xf32, #tpu.memory_space<vmem>>, vector<1x256xf32>,
    %122 = vector.extract_strided_slice %109 {offsets = [6, 0], sizes = [1, 256], strides = [1, 1]} : vector<32x256xf32> to vector<1x256xf32>
    %c0_146 = arith.constant 0 : index
    %c1536 = arith.constant 1536 : index
    %123 = vector.load %arg16[%c0_146, %c1536] : memref<1x8192xf32, #tpu.memory_space<vmem>>, vector<1x256xf32>
    tpu.vector_store %arg16[%c0_146, %c1536], %122 {strides = array<i32>} : memref<1x8192xf32, #tpu.memory_space<vmem>>, vector<1x256xf32>,
    %124 = vector.extract_strided_slice %109 {offsets = [7, 0], sizes = [1, 256], strides = [1, 1]} : vector<32x256xf32> to vector<1x256xf32>
    %c0_147 = arith.constant 0 : index
    %c1792 = arith.constant 1792 : index
    %125 = vector.load %arg16[%c0_147, %c1792] : memref<1x8192xf32, #tpu.memory_space<vmem>>, vector<1x256xf32>
    tpu.vector_store %arg16[%c0_147, %c1792], %124 {strides = array<i32>} : memref<1x8192xf32, #tpu.memory_space<vmem>>, vector<1x256xf32>,
    %126 = vector.extract_strided_slice %109 {offsets = [8, 0], sizes = [1, 256], strides = [1, 1]} : vector<32x256xf32> to vector<1x256xf32>
    %c0_148 = arith.constant 0 : index
    %c2048 = arith.constant 2048 : index
    %127 = vector.load %arg16[%c0_148, %c2048] : memref<1x8192xf32, #tpu.memory_space<vmem>>, vector<1x256xf32>
    tpu.vector_store %arg16[%c0_148, %c2048], %126 {strides = array<i32>} : memref<1x8192xf32, #tpu.memory_space<vmem>>, vector<1x256xf32>,
    %128 = vector.extract_strided_slice %109 {offsets = [9, 0], sizes = [1, 256], strides = [1, 1]} : vector<32x256xf32> to vector<1x256xf32>
    %c0_149 = arith.constant 0 : index
    %c2304 = arith.constant 2304 : index
    %129 = vector.load %arg16[%c0_149, %c2304] : memref<1x8192xf32, #tpu.memory_space<vmem>>, vector<1x256xf32>
    tpu.vector_store %arg16[%c0_149, %c2304], %128 {strides = array<i32>} : memref<1x8192xf32, #tpu.memory_space<vmem>>, vector<1x256xf32>,
    %130 = vector.extract_strided_slice %109 {offsets = [10, 0], sizes = [1, 256], strides = [1, 1]} : vector<32x256xf32> to vector<1x256xf32>
    %c0_150 = arith.constant 0 : index
    %c2560 = arith.constant 2560 : index
    %131 = vector.load %arg16[%c0_150, %c2560] : memref<1x8192xf32, #tpu.memory_space<vmem>>, vector<1x256xf32>
    tpu.vector_store %arg16[%c0_150, %c2560], %130 {strides = array<i32>} : memref<1x8192xf32, #tpu.memory_space<vmem>>, vector<1x256xf32>,
    %132 = vector.extract_strided_slice %109 {offsets = [11, 0], sizes = [1, 256], strides = [1, 1]} : vector<32x256xf32> to vector<1x256xf32>
    %c0_151 = arith.constant 0 : index
    %c2816 = arith.constant 2816 : index
    %133 = vector.load %arg16[%c0_151, %c2816] : memref<1x8192xf32, #tpu.memory_space<vmem>>, vector<1x256xf32>
    tpu.vector_store %arg16[%c0_151, %c2816], %132 {strides = array<i32>} : memref<1x8192xf32, #tpu.memory_space<vmem>>, vector<1x256xf32>,
    %134 = vector.extract_strided_slice %109 {offsets = [12, 0], sizes = [1, 256], strides = [1, 1]} : vector<32x256xf32> to vector<1x256xf32>
    %c0_152 = arith.constant 0 : index
    %c3072 = arith.constant 3072 : index
    %135 = vector.load %arg16[%c0_152, %c3072] : memref<1x8192xf32, #tpu.memory_space<vmem>>, vector<1x256xf32>
    tpu.vector_store %arg16[%c0_152, %c3072], %134 {strides = array<i32>} : memref<1x8192xf32, #tpu.memory_space<vmem>>, vector<1x256xf32>,
    %136 = vector.extract_strided_slice %109 {offsets = [13, 0], sizes = [1, 256], strides = [1, 1]} : vector<32x256xf32> to vector<1x256xf32>
    %c0_153 = arith.constant 0 : index
    %c3328 = arith.constant 3328 : index
    %137 = vector.load %arg16[%c0_153, %c3328] : memref<1x8192xf32, #tpu.memory_space<vmem>>, vector<1x256xf32>
    tpu.vector_store %arg16[%c0_153, %c3328], %136 {strides = array<i32>} : memref<1x8192xf32, #tpu.memory_space<vmem>>, vector<1x256xf32>,
    %138 = vector.extract_strided_slice %109 {offsets = [14, 0], sizes = [1, 256], strides = [1, 1]} : vector<32x256xf32> to vector<1x256xf32>
    %c0_154 = arith.constant 0 : index
    %c3584 = arith.constant 3584 : index
    %139 = vector.load %arg16[%c0_154, %c3584] : memref<1x8192xf32, #tpu.memory_space<vmem>>, vector<1x256xf32>
    tpu.vector_store %arg16[%c0_154, %c3584], %138 {strides = array<i32>} : memref<1x8192xf32, #tpu.memory_space<vmem>>, vector<1x256xf32>,
    %140 = vector.extract_strided_slice %109 {offsets = [15, 0], sizes = [1, 256], strides = [1, 1]} : vector<32x256xf32> to vector<1x256xf32>
    %c0_155 = arith.constant 0 : index
    %c3840 = arith.constant 3840 : index
    %141 = vector.load %arg16[%c0_155, %c3840] : memref<1x8192xf32, #tpu.memory_space<vmem>>, vector<1x256xf32>
    tpu.vector_store %arg16[%c0_155, %c3840], %140 {strides = array<i32>} : memref<1x8192xf32, #tpu.memory_space<vmem>>, vector<1x256xf32>,
    %142 = vector.extract_strided_slice %109 {offsets = [16, 0], sizes = [1, 256], strides = [1, 1]} : vector<32x256xf32> to vector<1x256xf32>
    %c0_156 = arith.constant 0 : index
    %c4096 = arith.constant 4096 : index
    %143 = vector.load %arg16[%c0_156, %c4096] : memref<1x8192xf32, #tpu.memory_space<vmem>>, vector<1x256xf32>
    tpu.vector_store %arg16[%c0_156, %c4096], %142 {strides = array<i32>} : memref<1x8192xf32, #tpu.memory_space<vmem>>, vector<1x256xf32>,
    %144 = vector.extract_strided_slice %109 {offsets = [17, 0], sizes = [1, 256], strides = [1, 1]} : vector<32x256xf32> to vector<1x256xf32>
    %c0_157 = arith.constant 0 : index
    %c4352 = arith.constant 4352 : index
    %145 = vector.load %arg16[%c0_157, %c4352] : memref<1x8192xf32, #tpu.memory_space<vmem>>, vector<1x256xf32>
    tpu.vector_store %arg16[%c0_157, %c4352], %144 {strides = array<i32>} : memref<1x8192xf32, #tpu.memory_space<vmem>>, vector<1x256xf32>,
    %146 = vector.extract_strided_slice %109 {offsets = [18, 0], sizes = [1, 256], strides = [1, 1]} : vector<32x256xf32> to vector<1x256xf32>
    %c0_158 = arith.constant 0 : index
    %c4608 = arith.constant 4608 : index
    %147 = vector.load %arg16[%c0_158, %c4608] : memref<1x8192xf32, #tpu.memory_space<vmem>>, vector<1x256xf32>
    tpu.vector_store %arg16[%c0_158, %c4608], %146 {strides = array<i32>} : memref<1x8192xf32, #tpu.memory_space<vmem>>, vector<1x256xf32>,
    %148 = vector.extract_strided_slice %109 {offsets = [19, 0], sizes = [1, 256], strides = [1, 1]} : vector<32x256xf32> to vector<1x256xf32>
    %c0_159 = arith.constant 0 : index
    %c4864 = arith.constant 4864 : index
    %149 = vector.load %arg16[%c0_159, %c4864] : memref<1x8192xf32, #tpu.memory_space<vmem>>, vector<1x256xf32>
    tpu.vector_store %arg16[%c0_159, %c4864], %148 {strides = array<i32>} : memref<1x8192xf32, #tpu.memory_space<vmem>>, vector<1x256xf32>,
    %150 = vector.extract_strided_slice %109 {offsets = [20, 0], sizes = [1, 256], strides = [1, 1]} : vector<32x256xf32> to vector<1x256xf32>
    %c0_160 = arith.constant 0 : index
    %c5120 = arith.constant 5120 : index
    %151 = vector.load %arg16[%c0_160, %c5120] : memref<1x8192xf32, #tpu.memory_space<vmem>>, vector<1x256xf32>
    tpu.vector_store %arg16[%c0_160, %c5120], %150 {strides = array<i32>} : memref<1x8192xf32, #tpu.memory_space<vmem>>, vector<1x256xf32>,
    %152 = vector.extract_strided_slice %109 {offsets = [21, 0], sizes = [1, 256], strides = [1, 1]} : vector<32x256xf32> to vector<1x256xf32>
    %c0_161 = arith.constant 0 : index
    %c5376 = arith.constant 5376 : index
    %153 = vector.load %arg16[%c0_161, %c5376] : memref<1x8192xf32, #tpu.memory_space<vmem>>, vector<1x256xf32>
    tpu.vector_store %arg16[%c0_161, %c5376], %152 {strides = array<i32>} : memref<1x8192xf32, #tpu.memory_space<vmem>>, vector<1x256xf32>,
    %154 = vector.extract_strided_slice %109 {offsets = [22, 0], sizes = [1, 256], strides = [1, 1]} : vector<32x256xf32> to vector<1x256xf32>
    %c0_162 = arith.constant 0 : index
    %c5632 = arith.constant 5632 : index
    %155 = vector.load %arg16[%c0_162, %c5632] : memref<1x8192xf32, #tpu.memory_space<vmem>>, vector<1x256xf32>
    tpu.vector_store %arg16[%c0_162, %c5632], %154 {strides = array<i32>} : memref<1x8192xf32, #tpu.memory_space<vmem>>, vector<1x256xf32>,
    %156 = vector.extract_strided_slice %109 {offsets = [23, 0], sizes = [1, 256], strides = [1, 1]} : vector<32x256xf32> to vector<1x256xf32>
    %c0_163 = arith.constant 0 : index
    %c5888 = arith.constant 5888 : index
    %157 = vector.load %arg16[%c0_163, %c5888] : memref<1x8192xf32, #tpu.memory_space<vmem>>, vector<1x256xf32>
    tpu.vector_store %arg16[%c0_163, %c5888], %156 {strides = array<i32>} : memref<1x8192xf32, #tpu.memory_space<vmem>>, vector<1x256xf32>,
    %158 = vector.extract_strided_slice %109 {offsets = [24, 0], sizes = [1, 256], strides = [1, 1]} : vector<32x256xf32> to vector<1x256xf32>
    %c0_164 = arith.constant 0 : index
    %c6144 = arith.constant 6144 : index
    %159 = vector.load %arg16[%c0_164, %c6144] : memref<1x8192xf32, #tpu.memory_space<vmem>>, vector<1x256xf32>
    tpu.vector_store %arg16[%c0_164, %c6144], %158 {strides = array<i32>} : memref<1x8192xf32, #tpu.memory_space<vmem>>, vector<1x256xf32>,
    %160 = vector.extract_strided_slice %109 {offsets = [25, 0], sizes = [1, 256], strides = [1, 1]} : vector<32x256xf32> to vector<1x256xf32>
    %c0_165 = arith.constant 0 : index
    %c6400 = arith.constant 6400 : index
    %161 = vector.load %arg16[%c0_165, %c6400] : memref<1x8192xf32, #tpu.memory_space<vmem>>, vector<1x256xf32>
    tpu.vector_store %arg16[%c0_165, %c6400], %160 {strides = array<i32>} : memref<1x8192xf32, #tpu.memory_space<vmem>>, vector<1x256xf32>,
    %162 = vector.extract_strided_slice %109 {offsets = [26, 0], sizes = [1, 256], strides = [1, 1]} : vector<32x256xf32> to vector<1x256xf32>
    %c0_166 = arith.constant 0 : index
    %c6656 = arith.constant 6656 : index
    %163 = vector.load %arg16[%c0_166, %c6656] : memref<1x8192xf32, #tpu.memory_space<vmem>>, vector<1x256xf32>
    tpu.vector_store %arg16[%c0_166, %c6656], %162 {strides = array<i32>} : memref<1x8192xf32, #tpu.memory_space<vmem>>, vector<1x256xf32>,
    %164 = vector.extract_strided_slice %109 {offsets = [27, 0], sizes = [1, 256], strides = [1, 1]} : vector<32x256xf32> to vector<1x256xf32>
    %c0_167 = arith.constant 0 : index
    %c6912 = arith.constant 6912 : index
    %165 = vector.load %arg16[%c0_167, %c6912] : memref<1x8192xf32, #tpu.memory_space<vmem>>, vector<1x256xf32>
    tpu.vector_store %arg16[%c0_167, %c6912], %164 {strides = array<i32>} : memref<1x8192xf32, #tpu.memory_space<vmem>>, vector<1x256xf32>,
    %166 = vector.extract_strided_slice %109 {offsets = [28, 0], sizes = [1, 256], strides = [1, 1]} : vector<32x256xf32> to vector<1x256xf32>
    %c0_168 = arith.constant 0 : index
    %c7168 = arith.constant 7168 : index
    %167 = vector.load %arg16[%c0_168, %c7168] : memref<1x8192xf32, #tpu.memory_space<vmem>>, vector<1x256xf32>
    tpu.vector_store %arg16[%c0_168, %c7168], %166 {strides = array<i32>} : memref<1x8192xf32, #tpu.memory_space<vmem>>, vector<1x256xf32>,
    %168 = vector.extract_strided_slice %109 {offsets = [29, 0], sizes = [1, 256], strides = [1, 1]} : vector<32x256xf32> to vector<1x256xf32>
    %c0_169 = arith.constant 0 : index
    %c7424 = arith.constant 7424 : index
    %169 = vector.load %arg16[%c0_169, %c7424] : memref<1x8192xf32, #tpu.memory_space<vmem>>, vector<1x256xf32>
    tpu.vector_store %arg16[%c0_169, %c7424], %168 {strides = array<i32>} : memref<1x8192xf32, #tpu.memory_space<vmem>>, vector<1x256xf32>,
    %170 = vector.extract_strided_slice %109 {offsets = [30, 0], sizes = [1, 256], strides = [1, 1]} : vector<32x256xf32> to vector<1x256xf32>
    %c0_170 = arith.constant 0 : index
    %c7680 = arith.constant 7680 : index
    %171 = vector.load %arg16[%c0_170, %c7680] : memref<1x8192xf32, #tpu.memory_space<vmem>>, vector<1x256xf32>
    tpu.vector_store %arg16[%c0_170, %c7680], %170 {strides = array<i32>} : memref<1x8192xf32, #tpu.memory_space<vmem>>, vector<1x256xf32>,
    %172 = vector.extract_strided_slice %109 {offsets = [31, 0], sizes = [1, 256], strides = [1, 1]} : vector<32x256xf32> to vector<1x256xf32>
    %c0_171 = arith.constant 0 : index
    %c7936 = arith.constant 7936 : index
    %173 = vector.load %arg16[%c0_171, %c7936] : memref<1x8192xf32, #tpu.memory_space<vmem>>, vector<1x256xf32>
    tpu.vector_store %arg16[%c0_171, %c7936], %172 {strides = array<i32>} : memref<1x8192xf32, #tpu.memory_space<vmem>>, vector<1x256xf32>,
    %c0_172 = arith.constant 0 : index
    %c0_173 = arith.constant 0 : index
    %c0_174 = arith.constant 0 : index
    %174 = vector.load %arg2[%c0_172, %c0_173, %c0_174] : memref<1x1x8xf32, #tpu.memory_space<vmem>>, vector<1x1x8xf32>
    %175 = vector.shape_cast %174 : vector<1x1x8xf32> to vector<1x8xf32>
    %c0_175 = arith.constant 0 : index
    %c0_176 = arith.constant 0 : index
    %176 = vector.load %arg6[%c0_175, %c0_176] : memref<8x8xf32, #tpu.memory_space<vmem>>, vector<8x8xf32>
    %cst_177 = arith.constant dense<0.000000e+00> : vector<1x8xf32>
    %177 = tpu.matmul %175, %176, %cst_177 {dimension_numbers = #tpu.dot_dimension_numbers<[1], [0], [0], [1], [0, 0, 1, 1], [], []>} : vector<1x8xf32>, vector<8x8xf32>, vector<1x8xf32> -> vector<1x8xf32>
    %c0_178 = arith.constant 0 : index
    %c0_179 = arith.constant 0 : index
    %178 = vector.load %arg7[%c0_178, %c0_179] : memref<1x8xf32, #tpu.memory_space<vmem>>, vector<1x8xf32>
    %179 = arith.addf %177, %178 : vector<1x8xf32>
    %cst_180 = arith.constant 0.000000e+00 : f32
    %180 = vector.broadcast %cst_180 : f32 to vector<1x8xf32>
    %181 = arith.maximumf %179, %180 : vector<1x8xf32>
    %c0_181 = arith.constant 0 : index
    %c0_182 = arith.constant 0 : index
    %182 = vector.load %arg16[%c0_181, %c0_182] : memref<1x8192xf32, #tpu.memory_space<vmem>>, vector<1x8192xf32>
    %c0_183 = arith.constant 0 : index
    %c0_184 = arith.constant 0 : index
    %183 = vector.load %arg5[%c0_183, %c0_184] : memref<8192x32xf32, #tpu.memory_space<vmem>>, vector<8192x32xf32>
    %cst_185 = arith.constant dense<0.000000e+00> : vector<1x32xf32>
    %184 = tpu.matmul %182, %183, %cst_185 {dimension_numbers = #tpu.dot_dimension_numbers<[1], [0], [0], [1], [0, 0, 1, 1], [], []>} : vector<1x8192xf32>, vector<8192x32xf32>, vector<1x32xf32> -> vector<1x32xf32>
    %c0_186 = arith.constant 0 : index
    %c0_187 = arith.constant 0 : index
    %185 = vector.load %arg8[%c0_186, %c0_187] : memref<8x32xf32, #tpu.memory_space<vmem>>, vector<8x32xf32>
    %cst_188 = arith.constant dense<0.000000e+00> : vector<1x32xf32>
    %186 = tpu.matmul %181, %185, %cst_188 {dimension_numbers = #tpu.dot_dimension_numbers<[1], [0], [0], [1], [0, 0, 1, 1], [], []>} : vector<1x8xf32>, vector<8x32xf32>, vector<1x32xf32> -> vector<1x32xf32>
    %187 = arith.addf %184, %186 : vector<1x32xf32>
    %c0_189 = arith.constant 0 : index
    %c0_190 = arith.constant 0 : index
    %188 = vector.load %arg9[%c0_189, %c0_190] : memref<1x32xf32, #tpu.memory_space<vmem>>, vector<1x32xf32>
    %189 = arith.addf %187, %188 : vector<1x32xf32>
    %cst_191 = arith.constant 0.000000e+00 : f32
    %190 = vector.broadcast %cst_191 : f32 to vector<1x32xf32>
    %191 = arith.maximumf %189, %190 : vector<1x32xf32>
    %c0_192 = arith.constant 0 : index
    %c0_193 = arith.constant 0 : index
    %192 = vector.load %arg10[%c0_192, %c0_193] : memref<32x3xf32, #tpu.memory_space<vmem>>, vector<32x3xf32>
    %cst_194 = arith.constant dense<0.000000e+00> : vector<1x3xf32>
    %193 = tpu.matmul %191, %192, %cst_194 {dimension_numbers = #tpu.dot_dimension_numbers<[1], [0], [0], [1], [0, 0, 1, 1], [], []>} : vector<1x32xf32>, vector<32x3xf32>, vector<1x3xf32> -> vector<1x3xf32>
    %c0_195 = arith.constant 0 : index
    %c0_196 = arith.constant 0 : index
    %194 = vector.load %arg11[%c0_195, %c0_196] : memref<1x3xf32, #tpu.memory_space<vmem>>, vector<1x3xf32>
    %195 = arith.addf %193, %194 : vector<1x3xf32>
    %c0_197 = arith.constant 0 : index
    %c0_198 = arith.constant 0 : index
    %c0_199 = arith.constant 0 : index
    %196 = vector.load %arg12[%c0_197, %c0_198, %c0_199] : memref<1x1x3xf32, #tpu.memory_space<vmem>>, vector<1x1x3xf32>
    %197 = vector.shape_cast %196 : vector<1x1x3xf32> to vector<1x3xf32>
    %198 = vector.shape_cast %195 : vector<1x3xf32> to vector<1x1x3xf32>
    tpu.vector_store %arg12[%c0_197, %c0_198, %c0_199], %198 {strides = array<i32>} : memref<1x1x3xf32, #tpu.memory_space<vmem>>, vector<1x1x3xf32>,
    return
  }
  func.func @transform_0(%arg0: i32) -> (i32, i32, i32) {
    %c0_i32 = arith.constant 0 : i32
    %c0_i32_0 = arith.constant 0 : i32
    %c0_i32_1 = arith.constant 0 : i32
    return %arg0, %c0_i32, %c0_i32_0 : i32, i32, i32
  }
  func.func @transform_1(%arg0: i32) -> (i32, i32, i32) {
    %c0_i32 = arith.constant 0 : i32
    %c0_i32_0 = arith.constant 0 : i32
    %c0_i32_1 = arith.constant 0 : i32
    return %arg0, %c0_i32, %c0_i32_0 : i32, i32, i32
  }
  func.func @transform_2(%arg0: i32) -> (i32, i32) {
    %c0_i32 = arith.constant 0 : i32
    %c0_i32_0 = arith.constant 0 : i32
    %c0_i32_1 = arith.constant 0 : i32
    return %c0_i32, %c0_i32_0 : i32, i32
  }
  func.func @transform_3(%arg0: i32) -> (i32, i32) {
    %c0_i32 = arith.constant 0 : i32
    %c0_i32_0 = arith.constant 0 : i32
    %c0_i32_1 = arith.constant 0 : i32
    return %c0_i32, %c0_i32_0 : i32, i32
  }
  func.func @transform_4(%arg0: i32) -> (i32, i32) {
    %c0_i32 = arith.constant 0 : i32
    %c0_i32_0 = arith.constant 0 : i32
    %c0_i32_1 = arith.constant 0 : i32
    return %c0_i32, %c0_i32_0 : i32, i32
  }
  func.func @transform_5(%arg0: i32) -> (i32, i32) {
    %c0_i32 = arith.constant 0 : i32
    %c0_i32_0 = arith.constant 0 : i32
    %c0_i32_1 = arith.constant 0 : i32
    return %c0_i32, %c0_i32_0 : i32, i32
  }
  func.func @transform_6(%arg0: i32) -> (i32, i32) {
    %c0_i32 = arith.constant 0 : i32
    %c0_i32_0 = arith.constant 0 : i32
    %c0_i32_1 = arith.constant 0 : i32
    return %c0_i32, %c0_i32_0 : i32, i32
  }
  func.func @transform_7(%arg0: i32) -> (i32, i32) {
    %c0_i32 = arith.constant 0 : i32
    %c0_i32_0 = arith.constant 0 : i32
    %c0_i32_1 = arith.constant 0 : i32
    return %c0_i32, %c0_i32_0 : i32, i32
  }
  func.func @transform_8(%arg0: i32) -> (i32, i32) {
    %c0_i32 = arith.constant 0 : i32
    %c0_i32_0 = arith.constant 0 : i32
    %c0_i32_1 = arith.constant 0 : i32
    return %c0_i32, %c0_i32_0 : i32, i32
  }
  func.func @transform_9(%arg0: i32) -> (i32, i32) {
    %c0_i32 = arith.constant 0 : i32
    %c0_i32_0 = arith.constant 0 : i32
    %c0_i32_1 = arith.constant 0 : i32
    return %c0_i32, %c0_i32_0 : i32, i32
  }
  func.func @transform_10(%arg0: i32) -> (i32, i32) {
    %c0_i32 = arith.constant 0 : i32
    %c0_i32_0 = arith.constant 0 : i32
    %c0_i32_1 = arith.constant 0 : i32
    return %c0_i32, %c0_i32_0 : i32, i32
  }
  func.func @transform_11(%arg0: i32) -> (i32, i32, i32) {
    %c0_i32 = arith.constant 0 : i32
    %c0_i32_0 = arith.constant 0 : i32
    %c0_i32_1 = arith.constant 0 : i32
    return %arg0, %c0_i32, %c0_i32_0 : i32, i32, i32
  }
}

</mosaic_0001>

<llo_original>
// kernel: qnetwork_forward.1
$region0: #{qnetwork_forward.1}
  #allocation0 [shape = 'u32[]', space=smem, size = 0x4, offset = 0x4, fixed_abs, tag = 'smem constant byte address 0x4 - core index']
  #allocation1 [shape = 'u32[144,128]{1,0:T(1,128)}', space=vmem, size = 0x12000, scoped, tag = 'internal scratch']
  #allocation2 [shape = 'f32[104,256]{1,0:T(8,128)}', space=vmem, size = 0x1a000, scoped, tag = 'scratch operand']
  #allocation3 [shape = 'f32[16,384]{1,0:T(8,128)}', space=vmem, size = 0x6000, scoped, tag = 'scratch operand']
  #allocation4 [shape = 'f32[152,256]{1,0:T(8,128)}', space=vmem, size = 0x26000, scoped, tag = 'scratch operand']
  #allocation5 [shape = 'f32[1,8192]{1,0:T(1,128)}', space=vmem, size = 0x8000, scoped, tag = 'scratch operand']
  %s0 = inlined_call_operand.vmem [shape: f32[2,4,384], index: 0, kind: input, shape index: {}]
  %s1 = inlined_call_operand.vmem [shape: f32[2,1,8], index: 1, kind: input, shape index: {}]
  %s2 = inlined_call_operand.vmem [shape: f32[16,104], index: 2, kind: input, shape index: {}]
  %s3 = inlined_call_operand.vmem [shape: f32[32,152], index: 3, kind: input, shape index: {}]
  %s4 = inlined_call_operand.vmem [shape: f32[8192,32], index: 4, kind: input, shape index: {}]
  %s5 = inlined_call_operand.vmem [shape: f32[8,8], index: 5, kind: input, shape index: {}]
  %s6 = inlined_call_operand.vmem [shape: f32[1,8], index: 6, kind: input, shape index: {}]
  %s7 = inlined_call_operand.vmem [shape: f32[8,32], index: 7, kind: input, shape index: {}]
  %s8 = inlined_call_operand.vmem [shape: f32[1,32], index: 8, kind: input, shape index: {}]
  %s9 = inlined_call_operand.vmem [shape: f32[32,3], index: 9, kind: input, shape index: {}]
  %s10 = inlined_call_operand.vmem [shape: f32[1,3], index: 10, kind: input, shape index: {}]
  %s11 = inlined_call_operand.hbm [shape: f32[2,1,3], index: 11, kind: output, shape index: {}]
  %s12 = sld [smem:[#allocation0]]
  $region77: #{qnetwork_forward.1} parent=0
    _
  %s14 = ssub.s32 1, %s12
  %s15 = scalar_select 0, %s14, %s12
  $region1: #{qnetwork_forward.1} parent=0
    #allocation6 [shape = 'u8[1024]{0}', space=vmem, size = 0x400, scoped, tag = 'output window, operand 0']
    #allocation7 [shape = 's32[2]{0}', space=sflag, size = 0x8, scoped, tag = 'scoped memory for qnetwork_forward.1']
    %16 = vsyncpa [#allocation7], 0
    %s17 = scalar_lea.sflag [#allocation7], 1
    %18 = vsyncpa %s17, 0
    loop: start=0, step=1, limit=4
    $region2: #{qnetwork_forward.1} parent=1 // loop_pre_header
      _
    $region3: #{qnetwork_forward.1} parent=1 // loop_header
      %s20 = sphi 0, %s24
      %p21 = scmp.ge.s32.totalorder %s20, 4
      %s30 = sphi 0, %s32
      %s33 = sphi 0, %s30
      %s34 = sphi 0, %s33
      %s50 = sphi 0, %s34
      %s56 = sphi 0, %s58
      %s59 = sphi 0, %s56
      %s60 = sphi 0, %s59
      %s76 = sphi 0, %s60
      %s80 = sphi 0, %s80
      %s82 = sphi 0, %s80
      %s83 = sphi 0, %s82
      %s97 = sphi 0, %s83
      %s101 = sphi 0, %s101
      %s103 = sphi 0, %s101
      %s104 = sphi 0, %s103
      %s118 = sphi 0, %s104
      %s122 = sphi 0, %s122
      %s124 = sphi 0, %s122
      %s125 = sphi 0, %s124
      %s139 = sphi 0, %s125
      %s143 = sphi 0, %s143
      %s145 = sphi 0, %s143
      %s146 = sphi 0, %s145
      %s160 = sphi 0, %s146
      %s164 = sphi 0, %s164
      %s166 = sphi 0, %s164
      %s167 = sphi 0, %s166
      %s181 = sphi 0, %s167
      %s185 = sphi 0, %s185
      %s187 = sphi 0, %s185
      %s188 = sphi 0, %s187
      %s202 = sphi 0, %s188
      %s206 = sphi 0, %s206
      %s208 = sphi 0, %s206
      %s209 = sphi 0, %s208
      %s223 = sphi 0, %s209
      %s227 = sphi 0, %s227
      %s229 = sphi 0, %s227
      %s230 = sphi 0, %s229
      %s244 = sphi 0, %s230
      %s248 = sphi 0, %s248
      %s250 = sphi 0, %s248
      %s251 = sphi 0, %s250
      %s265 = sphi 0, %s251
      %s271 = sphi 0, %s273
      %s274 = sphi 0, %s271
      %s275 = sphi 0, %s274
      %s291 = sphi 0, %s275
    $region4: #{qnetwork_forward.1} parent=1 // loop_header_branch
      %23 = sbr.rel (%p21) target = $region8
    $region5: #{qnetwork_forward.1} parent=1 // loop_body
      %s25 = ssub.s32 %s20, 1
      %s26 = ssub.s32 %s20, 2
      %s27 = sadd.s32 %s20, 1
      %s28 = ssub.s32 %s20, %s27
      %p29 = scmp.eq.s32.totalorder %s28, 0
      %s31 = sadd.s32 %s30, 1
      %s32 = scalar_select %p29, %s30, %s31
      %p35 = pneg %p29
      %p36 = scmp.eq.s32.totalorder %s20, 1
      %p37 = por %p35, %p36
      %p38 = scmp.ne.s32.totalorder %s30, %s33
      %p39 = scmp.eq.s32.totalorder %s20, 0
      %p40 = por %p38, %p39
      %p41 = scmp.ne.s32.totalorder %s30, %s33
      %p42 = scmp.eq.s32.totalorder %s25, 1
      %p43 = por %p41, %p42
      %p44 = scmp.ne.s32.totalorder %s33, %s34
      %p45 = scmp.eq.s32.totalorder %s25, 0
      %p46 = por %p44, %p45
      %p47 = scmp.ne.s32.totalorder %s33, %s34
      %p48 = scmp.eq.s32.totalorder %s26, 1
      %p49 = por %p47, %p48
      %p51 = scmp.ne.s32.totalorder %s34, %s50
      %p52 = scmp.eq.s32.totalorder %s26, 0
      %p53 = por %p51, %p52
      %s54 = ssub.s32 %s20, %s27
      %p55 = scmp.eq.s32.totalorder %s54, 0
      %s57 = sadd.s32 %s56, 1
      %s58 = scalar_select %p55, %s56, %s57
      %p61 = pneg %p55
      %p62 = scmp.eq.s32.totalorder %s20, 1
      %p63 = por %p61, %p62
      %p64 = scmp.ne.s32.totalorder %s56, %s59
      %p65 = scmp.eq.s32.totalorder %s20, 0
      %p66 = por %p64, %p65
      %p67 = scmp.ne.s32.totalorder %s56, %s59
      %p68 = scmp.eq.s32.totalorder %s25, 1
      %p69 = por %p67, %p68
      %p70 = scmp.ne.s32.totalorder %s59, %s60
      %p71 = scmp.eq.s32.totalorder %s25, 0
      %p72 = por %p70, %p71
      %p73 = scmp.ne.s32.totalorder %s59, %s60
      %p74 = scmp.eq.s32.totalorder %s26, 1
      %p75 = por %p73, %p74
      %p77 = scmp.ne.s32.totalorder %s60, %s76
      %p78 = scmp.eq.s32.totalorder %s26, 0
      %p79 = por %p77, %p78
      %s81 = sadd.s32 %s80, 1
      %p84 = scmp.eq.s32.totalorder %s20, 1
      %p85 = scmp.ne.s32.totalorder %s80, %s82
      %p86 = scmp.eq.s32.totalorder %s20, 0
      %p87 = por %p85, %p86
      %p88 = scmp.ne.s32.totalorder %s80, %s82
      %p89 = scmp.eq.s32.totalorder %s25, 1
      %p90 = por %p88, %p89
      %p91 = scmp.ne.s32.totalorder %s82, %s83
      %p92 = scmp.eq.s32.totalorder %s25, 0
      %p93 = por %p91, %p92
      %p94 = scmp.ne.s32.totalorder %s82, %s83
      %p95 = scmp.eq.s32.totalorder %s26, 1
      %p96 = por %p94, %p95
      %p98 = scmp.ne.s32.totalorder %s83, %s97
      %p99 = scmp.eq.s32.totalorder %s26, 0
      %p100 = por %p98, %p99
      %s102 = sadd.s32 %s101, 1
      %p105 = scmp.eq.s32.totalorder %s20, 1
      %p106 = scmp.ne.s32.totalorder %s101, %s103
      %p107 = scmp.eq.s32.totalorder %s20, 0
      %p108 = por %p106, %p107
      %p109 = scmp.ne.s32.totalorder %s101, %s103
      %p110 = scmp.eq.s32.totalorder %s25, 1
      %p111 = por %p109, %p110
      %p112 = scmp.ne.s32.totalorder %s103, %s104
      %p113 = scmp.eq.s32.totalorder %s25, 0
      %p114 = por %p112, %p113
      %p115 = scmp.ne.s32.totalorder %s103, %s104
      %p116 = scmp.eq.s32.totalorder %s26, 1
      %p117 = por %p115, %p116
      %p119 = scmp.ne.s32.totalorder %s104, %s118
      %p120 = scmp.eq.s32.totalorder %s26, 0
      %p121 = por %p119, %p120
      %s123 = sadd.s32 %s122, 1
      %p126 = scmp.eq.s32.totalorder %s20, 1
      %p127 = scmp.ne.s32.totalorder %s122, %s124
      %p128 = scmp.eq.s32.totalorder %s20, 0
      %p129 = por %p127, %p128
      %p130 = scmp.ne.s32.totalorder %s122, %s124
      %p131 = scmp.eq.s32.totalorder %s25, 1
      %p132 = por %p130, %p131
      %p133 = scmp.ne.s32.totalorder %s124, %s125
      %p134 = scmp.eq.s32.totalorder %s25, 0
      %p135 = por %p133, %p134
      %p136 = scmp.ne.s32.totalorder %s124, %s125
      %p137 = scmp.eq.s32.totalorder %s26, 1
      %p138 = por %p136, %p137
      %p140 = scmp.ne.s32.totalorder %s125, %s139
      %p141 = scmp.eq.s32.totalorder %s26, 0
      %p142 = por %p140, %p141
      %s144 = sadd.s32 %s143, 1
      %p147 = scmp.eq.s32.totalorder %s20, 1
      %p148 = scmp.ne.s32.totalorder %s143, %s145
      %p149 = scmp.eq.s32.totalorder %s20, 0
      %p150 = por %p148, %p149
      %p151 = scmp.ne.s32.totalorder %s143, %s145
      %p152 = scmp.eq.s32.totalorder %s25, 1
      %p153 = por %p151, %p152
      %p154 = scmp.ne.s32.totalorder %s145, %s146
      %p155 = scmp.eq.s32.totalorder %s25, 0
      %p156 = por %p154, %p155
      %p157 = scmp.ne.s32.totalorder %s145, %s146
      %p158 = scmp.eq.s32.totalorder %s26, 1
      %p159 = por %p157, %p158
      %p161 = scmp.ne.s32.totalorder %s146, %s160
      %p162 = scmp.eq.s32.totalorder %s26, 0
      %p163 = por %p161, %p162
      %s165 = sadd.s32 %s164, 1
      %p168 = scmp.eq.s32.totalorder %s20, 1
      %p169 = scmp.ne.s32.totalorder %s164, %s166
      %p170 = scmp.eq.s32.totalorder %s20, 0
      %p171 = por %p169, %p170
      %p172 = scmp.ne.s32.totalorder %s164, %s166
      %p173 = scmp.eq.s32.totalorder %s25, 1
      %p174 = por %p172, %p173
      %p175 = scmp.ne.s32.totalorder %s166, %s167
      %p176 = scmp.eq.s32.totalorder %s25, 0
      %p177 = por %p175, %p176
      %p178 = scmp.ne.s32.totalorder %s166, %s167
      %p179 = scmp.eq.s32.totalorder %s26, 1
      %p180 = por %p178, %p179
      %p182 = scmp.ne.s32.totalorder %s167, %s181
      %p183 = scmp.eq.s32.totalorder %s26, 0
      %p184 = por %p182, %p183
      %s186 = sadd.s32 %s185, 1
      %p189 = scmp.eq.s32.totalorder %s20, 1
      %p190 = scmp.ne.s32.totalorder %s185, %s187
      %p191 = scmp.eq.s32.totalorder %s20, 0
      %p192 = por %p190, %p191
      %p193 = scmp.ne.s32.totalorder %s185, %s187
      %p194 = scmp.eq.s32.totalorder %s25, 1
      %p195 = por %p193, %p194
      %p196 = scmp.ne.s32.totalorder %s187, %s188
      %p197 = scmp.eq.s32.totalorder %s25, 0
      %p198 = por %p196, %p197
      %p199 = scmp.ne.s32.totalorder %s187, %s188
      %p200 = scmp.eq.s32.totalorder %s26, 1
      %p201 = por %p199, %p200
      %p203 = scmp.ne.s32.totalorder %s188, %s202
      %p204 = scmp.eq.s32.totalorder %s26, 0
      %p205 = por %p203, %p204
      %s207 = sadd.s32 %s206, 1
      %p210 = scmp.eq.s32.totalorder %s20, 1
      %p211 = scmp.ne.s32.totalorder %s206, %s208
      %p212 = scmp.eq.s32.totalorder %s20, 0
      %p213 = por %p211, %p212
      %p214 = scmp.ne.s32.totalorder %s206, %s208
      %p215 = scmp.eq.s32.totalorder %s25, 1
      %p216 = por %p214, %p215
      %p217 = scmp.ne.s32.totalorder %s208, %s209
      %p218 = scmp.eq.s32.totalorder %s25, 0
      %p219 = por %p217, %p218
      %p220 = scmp.ne.s32.totalorder %s208, %s209
      %p221 = scmp.eq.s32.totalorder %s26, 1
      %p222 = por %p220, %p221
      %p224 = scmp.ne.s32.totalorder %s209, %s223
      %p225 = scmp.eq.s32.totalorder %s26, 0
      %p226 = por %p224, %p225
      %s228 = sadd.s32 %s227, 1
      %p231 = scmp.eq.s32.totalorder %s20, 1
      %p232 = scmp.ne.s32.totalorder %s227, %s229
      %p233 = scmp.eq.s32.totalorder %s20, 0
      %p234 = por %p232, %p233
      %p235 = scmp.ne.s32.totalorder %s227, %s229
      %p236 = scmp.eq.s32.totalorder %s25, 1
      %p237 = por %p235, %p236
      %p238 = scmp.ne.s32.totalorder %s229, %s230
      %p239 = scmp.eq.s32.totalorder %s25, 0
      %p240 = por %p238, %p239
      %p241 = scmp.ne.s32.totalorder %s229, %s230
      %p242 = scmp.eq.s32.totalorder %s26, 1
      %p243 = por %p241, %p242
      %p245 = scmp.ne.s32.totalorder %s230, %s244
      %p246 = scmp.eq.s32.totalorder %s26, 0
      %p247 = por %p245, %p246
      %s249 = sadd.s32 %s248, 1
      %p252 = scmp.eq.s32.totalorder %s20, 1
      %p253 = scmp.ne.s32.totalorder %s248, %s250
      %p254 = scmp.eq.s32.totalorder %s20, 0
      %p255 = por %p253, %p254
      %p256 = scmp.ne.s32.totalorder %s248, %s250
      %p257 = scmp.eq.s32.totalorder %s25, 1
      %p258 = por %p256, %p257
      %p259 = scmp.ne.s32.totalorder %s250, %s251
      %p260 = scmp.eq.s32.totalorder %s25, 0
      %p261 = por %p259, %p260
      %p262 = scmp.ne.s32.totalorder %s250, %s251
      %p263 = scmp.eq.s32.totalorder %s26, 1
      %p264 = por %p262, %p263
      %p266 = scmp.ne.s32.totalorder %s251, %s265
      %p267 = scmp.eq.s32.totalorder %s26, 0
      %p268 = por %p266, %p267
      %s269 = ssub.s32 %s20, %s27
      %p270 = scmp.eq.s32.totalorder %s269, 0
      %s272 = sadd.s32 %s271, 1
      %s273 = scalar_select %p270, %s271, %s272
      %p276 = pneg %p270
      %p277 = scmp.eq.s32.totalorder %s20, 1
      %p278 = por %p276, %p277
      %p279 = scmp.ne.s32.totalorder %s271, %s274
      %p280 = scmp.eq.s32.totalorder %s20, 0
      %p281 = por %p279, %p280
      %p282 = scmp.ne.s32.totalorder %s271, %s274
      %p283 = scmp.eq.s32.totalorder %s25, 1
      %p284 = por %p282, %p283
      %p285 = scmp.ne.s32.totalorder %s274, %s275
      %p286 = scmp.eq.s32.totalorder %s25, 0
      %p287 = por %p285, %p286
      %p288 = scmp.ne.s32.totalorder %s274, %s275
      %p289 = scmp.eq.s32.totalorder %s26, 1
      %p290 = por %p288, %p289
      %p292 = scmp.ne.s32.totalorder %s275, %s291
      %p293 = scmp.eq.s32.totalorder %s26, 0
      %p294 = por %p292, %p293
      %p295 = scmp.le.s32.totalorder 1, %s20
      %p296 = scmp.lt.s32.totalorder %s20, 3
      %p297 = pnand %p295, %p296
      %p298 = pneg %p297
      // Predicated region
      $region9: #{qnetwork_forward.1} parent=5 // pred_check
        _
      $region10: #{qnetwork_forward.1} parent=5 // pred_check_branch
        %300 = sbr.rel (%p297) target = $region12
      $region11: #{qnetwork_forward.1} parent=5 // pred_region
        %s301 = ssub.s32 %s20, 1
        // Predicated region
        $region13: #{qnetwork_forward.1} parent=11 // pred_check
          %p302 = pneg %p93
        $region14: #{qnetwork_forward.1} parent=11 // pred_check_branch
          %304 = sbr.rel (%p302) target = $region16
        $region15: #{qnetwork_forward.1} parent=11 // pred_region
          _
        $region16: #{qnetwork_forward.1} parent=11 // pred_fallthru
          _
        // Predicated region
        $region17: #{qnetwork_forward.1} parent=11 // pred_check
          %p305 = pneg %p114
        $region18: #{qnetwork_forward.1} parent=11 // pred_check_branch
          %307 = sbr.rel (%p305) target = $region20
        $region19: #{qnetwork_forward.1} parent=11 // pred_region
          _
        $region20: #{qnetwork_forward.1} parent=11 // pred_fallthru
          _
        // Predicated region
        $region21: #{qnetwork_forward.1} parent=11 // pred_check
          %p308 = pneg %p135
        $region22: #{qnetwork_forward.1} parent=11 // pred_check_branch
          %310 = sbr.rel (%p308) target = $region24
        $region23: #{qnetwork_forward.1} parent=11 // pred_region
          _
        $region24: #{qnetwork_forward.1} parent=11 // pred_fallthru
          _
        // Predicated region
        $region25: #{qnetwork_forward.1} parent=11 // pred_check
          %p311 = pneg %p156
        $region26: #{qnetwork_forward.1} parent=11 // pred_check_branch
          %313 = sbr.rel (%p311) target = $region28
        $region27: #{qnetwork_forward.1} parent=11 // pred_region
          _
        $region28: #{qnetwork_forward.1} parent=11 // pred_fallthru
          _
        // Predicated region
        $region29: #{qnetwork_forward.1} parent=11 // pred_check
          %p314 = pneg %p177
        $region30: #{qnetwork_forward.1} parent=11 // pred_check_branch
          %316 = sbr.rel (%p314) target = $region32
        $region31: #{qnetwork_forward.1} parent=11 // pred_region
          _
        $region32: #{qnetwork_forward.1} parent=11 // pred_fallthru
          _
        // Predicated region
        $region33: #{qnetwork_forward.1} parent=11 // pred_check
          %p317 = pneg %p198
        $region34: #{qnetwork_forward.1} parent=11 // pred_check_branch
          %319 = sbr.rel (%p317) target = $region36
        $region35: #{qnetwork_forward.1} parent=11 // pred_region
          _
        $region36: #{qnetwork_forward.1} parent=11 // pred_fallthru
          _
        // Predicated region
        $region37: #{qnetwork_forward.1} parent=11 // pred_check
          %p320 = pneg %p219
        $region38: #{qnetwork_forward.1} parent=11 // pred_check_branch
          %322 = sbr.rel (%p320) target = $region40
        $region39: #{qnetwork_forward.1} parent=11 // pred_region
          _
        $region40: #{qnetwork_forward.1} parent=11 // pred_fallthru
          _
        // Predicated region
        $region41: #{qnetwork_forward.1} parent=11 // pred_check
          %p323 = pneg %p240
        $region42: #{qnetwork_forward.1} parent=11 // pred_check_branch
          %325 = sbr.rel (%p323) target = $region44
        $region43: #{qnetwork_forward.1} parent=11 // pred_region
          _
        $region44: #{qnetwork_forward.1} parent=11 // pred_fallthru
          _
        // Predicated region
        $region45: #{qnetwork_forward.1} parent=11 // pred_check
          %p326 = pneg %p261
        $region46: #{qnetwork_forward.1} parent=11 // pred_check_branch
          %328 = sbr.rel (%p326) target = $region48
        $region47: #{qnetwork_forward.1} parent=11 // pred_region
          _
        $region48: #{qnetwork_forward.1} parent=11 // pred_fallthru
          _
      $region12: #{qnetwork_forward.1} parent=5 // pred_fallthru
        _
      %p329 = scmp.lt.s32.totalorder %s20, 2
      // Predicated region
      $region49: #{qnetwork_forward.1} parent=5 // pred_check
        %p330 = pneg %p329
      $region50: #{qnetwork_forward.1} parent=5 // pred_check_branch
        %332 = sbr.rel (%p330) target = $region52
      $region51: #{qnetwork_forward.1} parent=5 // pred_region
        // Predicated region
        $region53: #{qnetwork_forward.1} parent=51 // pred_check
          %p333 = pneg %p40
        $region54: #{qnetwork_forward.1} parent=51 // pred_check_branch
          %335 = sbr.rel (%p333) target = $region56
        $region55: #{qnetwork_forward.1} parent=51 // pred_region
          %p336 = scmp.lt.s32.totalorder %s20, 1
          %s337 = scalar_select %p336, %s20, 1
          %s338 = smul.addr %s337, 3
          %s339 = smul.addr %s338, 4
          %s340 = scalar_lea.vmem %s0, %s339
        $region56: #{qnetwork_forward.1} parent=51 // pred_fallthru
          _
        // Predicated region
        $region57: #{qnetwork_forward.1} parent=51 // pred_check
          %p341 = pneg %p66
        $region58: #{qnetwork_forward.1} parent=51 // pred_check_branch
          %343 = sbr.rel (%p341) target = $region60
        $region59: #{qnetwork_forward.1} parent=51 // pred_region
          %p344 = scmp.lt.s32.totalorder %s20, 1
          %s345 = scalar_select %p344, %s20, 1
          %s346 = scalar_lea.vmem %s1, %s345
        $region60: #{qnetwork_forward.1} parent=51 // pred_fallthru
          _
      $region52: #{qnetwork_forward.1} parent=5 // pred_fallthru
        _
      %p347 = scmp.le.s32.totalorder 1, %s20
      %p348 = scmp.lt.s32.totalorder %s20, 3
      %p349 = pnand %p347, %p348
      %p350 = pneg %p349
      // Predicated region
      $region61: #{qnetwork_forward.1} parent=5 // pred_check
        _
      $region62: #{qnetwork_forward.1} parent=5 // pred_check_branch
        %352 = sbr.rel (%p349) target = $region64
      $region63: #{qnetwork_forward.1} parent=5 // pred_region
        %s353 = ssub.s32 %s20, 1
        %p354 = scmp.lt.s32.totalorder %s25, 1
        %s355 = scalar_select %p354, %s25, 1
        %s356 = smul.addr %s355, 3
        %s357 = smul.addr %s356, 4
        %s358 = scalar_lea.vmem %s0, %s357
        %p359 = pneg %p46
        %p360 = pneg %p43
        %p361 = scmp.lt.s32.totalorder %s25, 1
        %s362 = scalar_select %p361, %s25, 1
        %s363 = scalar_lea.vmem %s1, %s362
        %p364 = pneg %p72
        %p365 = pneg %p69
        %p366 = pneg %p93
        %p367 = pneg %p90
        %p368 = pneg %p114
        %p369 = pneg %p111
        %p370 = pneg %p135
        %p371 = pneg %p132
        %p372 = pneg %p156
        %p373 = pneg %p153
        %p374 = pneg %p177
        %p375 = pneg %p174
        %p376 = pneg %p198
        %p377 = pneg %p195
        %p378 = pneg %p219
        %p379 = pneg %p216
        %p380 = pneg %p240
        %p381 = pneg %p237
        %p382 = pneg %p261
        %p383 = pneg %p258
        %p384 = pneg %p287
        %p385 = pneg %p284
        %s386 = sand.u32 %s274, 1
        %s387 = scalar_lea.sflag [#allocation7], %s386
        %s388 = sand.u32 %s274, 1
        %s389 = scalar_lea.vmem [#allocation6], %s388
        %p390 = scmp.lt.s32.totalorder %s25, 1
        %s391 = scalar_select %p390, %s25, 1
        %s392 = smul.addr %s391, 3
        %s393 = smul.addr %s392, 4
        %s394 = scalar_lea.vmem %s0, %s393
        %p395 = scmp.lt.s32.totalorder %s25, 1
        %s396 = scalar_select %p395, %s25, 1
        %s397 = scalar_lea.vmem %s1, %s396
        %398 = vst [vmem:[#allocation2 + $0xc0] sm:$0xf0] 1.0
        %399 = vst [vmem:[#allocation2 + $0xc8] sm:$0xf0] 1.0
        %400 = vst [vmem:[#allocation4 + $0x120] sm:$0xff] 1.0
        %401 = vst [vmem:[#allocation4 + $0x128] sm:$0xff] 1.0
        %402 = vst [vmem:[#allocation3 + $0x10] sm:$0xff] 0.0
        %403 = vst [vmem:[#allocation3 + $0x28] sm:$0xff] 0.0
        %v404 = vld [vmem:[%s394] sm:$0xff]
        %v406 = vcombine.high %v404, %v404
        %408 = vst [vmem:[#allocation2] sm:$0xf] %v404
        %409 = vst [vmem:[#allocation2 + $0x8] sm:$0xf] %v406
        %v410 = vld [vmem:[%s394] sm:$0xff]
        %v411 = vld [vmem:[%s394 + $0x8] sm:$0xf]
        %v414 = vcombine.low %v410, %v410
        %v415 = vcombine.low %v411, %v411
        %416 = vrot.lane.b32.xlu0 %v414, 127
        %v417 = vpop.permute.xlu0 %416
        %418 = vrot.lane.b32.xlu0 %v410, 127
        %v419 = vpop.permute.xlu0 %418
        %420 = vrot.lane.b32.xlu0 %v415, 127
        %v421 = vpop.permute.xlu0 %420
        %vm422 = vcmask 1039360
        %v423 = vsel %vm422, %v417, %v419
        %v424 = vsel %vm422, %v419, %v421
        %427 = vst [vmem:[#allocation2] sm:$0xf0] %v423
        %428 = vst [vmem:[#allocation2 + $0x8] sm:$0xf0] %v424
        %v429 = vld [vmem:[%s394] sm:$0xff]
        %v430 = vld [vmem:[%s394 + $0x8] sm:$0xf]
        %v433 = vcombine.high %v429, %v429
        %434 = vrot.lane.b32.xlu0 %v429, 126
        %v435 = vpop.permute.xlu0 %434
        %436 = vrot.lane.b32.xlu0 %v433, 126
        %v437 = vpop.permute.xlu0 %436
        %438 = vrot.lane.b32.xlu0 %v430, 126
        %v439 = vpop.permute.xlu0 %438
        %vm440 = vcmask 1031168
        %v441 = vsel %vm440, %v435, %v437
        %v442 = vsel %vm440, %v437, %v439
        %445 = vst [vmem:[#allocation2 + $0x10] sm:$0xf] %v441
        %446 = vst [vmem:[#allocation2 + $0x18] sm:$0xf] %v442
        %v447 = vld [vmem:[%s394] sm:$0xff]
        %v448 = vld [vmem:[%s394 + $0x8] sm:$0xf]
        %v451 = vcombine.low %v447, %v447
        %v452 = vcombine.low %v448, %v448
        %453 = vrot.lane.b32.xlu0 %v451, 125
        %v454 = vpop.permute.xlu0 %453
        %455 = vrot.lane.b32.xlu0 %v447, 125
        %v456 = vpop.permute.xlu0 %455
        %457 = vrot.lane.b32.xlu0 %v452, 125
        %v458 = vpop.permute.xlu0 %457
        %vm459 = vcmask 1022976
        %v460 = vsel %vm459, %v454, %v456
        %v461 = vsel %vm459, %v456, %v458
        %464 = vst [vmem:[#allocation2 + $0x10] sm:$0xf0] %v460
        %465 = vst [vmem:[#allocation2 + $0x18] sm:$0xf0] %v461
        %v466 = vld [vmem:[%s394] sm:$0xff]
        %v467 = vld [vmem:[%s394 + $0x8] sm:$0xf]
        %v470 = vcombine.high %v466, %v466
        %471 = vrot.lane.b32.xlu0 %v466, 124
        %v472 = vpop.permute.xlu0 %471
        %473 = vrot.lane.b32.xlu0 %v470, 124
        %v474 = vpop.permute.xlu0 %473
        %475 = vrot.lane.b32.xlu0 %v467, 124
        %v476 = vpop.permute.xlu0 %475
        %vm477 = vcmask 1014784
        %v478 = vsel %vm477, %v472, %v474
        %v479 = vsel %vm477, %v474, %v476
        %482 = vst [vmem:[#allocation2 + $0x20] sm:$0xf] %v478
        %483 = vst [vmem:[#allocation2 + $0x28] sm:$0xf] %v479
        %v484 = vld [vmem:[%s394] sm:$0xff]
        %v485 = vld [vmem:[%s394 + $0x8] sm:$0xf]
        %v488 = vcombine.low %v484, %v484
        %v489 = vcombine.low %v485, %v485
        %490 = vrot.lane.b32.xlu0 %v488, 112
        %v491 = vpop.permute.xlu0 %490
        %492 = vrot.lane.b32.xlu0 %v484, 112
        %v493 = vpop.permute.xlu0 %492
        %494 = vrot.lane.b32.xlu0 %v489, 112
        %v495 = vpop.permute.xlu0 %494
        %vm496 = vcmask 916480
        %v497 = vsel %vm496, %v491, %v493
        %v498 = vsel %vm496, %v493, %v495
        %501 = vst [vmem:[#allocation2 + $0x20] sm:$0xf0] %v497
        %502 = vst [vmem:[#allocation2 + $0x28] sm:$0xf0] %v498
        %v503 = vld [vmem:[%s394] sm:$0xff]
        %v504 = vld [vmem:[%s394 + $0x8] sm:$0xf]
        %v507 = vcombine.high %v503, %v503
        %508 = vrot.lane.b32.xlu0 %v503, 111
        %v509 = vpop.permute.xlu0 %508
        %510 = vrot.lane.b32.xlu0 %v507, 111
        %v511 = vpop.permute.xlu0 %510
        %512 = vrot.lane.b32.xlu0 %v504, 111
        %v513 = vpop.permute.xlu0 %512
        %vm514 = vcmask 908288
        %v515 = vsel %vm514, %v509, %v511
        %v516 = vsel %vm514, %v511, %v513
        %519 = vst [vmem:[#allocation2 + $0x30] sm:$0xf] %v515
        %520 = vst [vmem:[#allocation2 + $0x38] sm:$0xf] %v516
        %v521 = vld [vmem:[%s394] sm:$0xff]
        %v522 = vld [vmem:[%s394 + $0x8] sm:$0xf]
        %v525 = vcombine.low %v521, %v521
        %v526 = vcombine.low %v522, %v522
        %527 = vrot.lane.b32.xlu0 %v525, 110
        %v528 = vpop.permute.xlu0 %527
        %529 = vrot.lane.b32.xlu0 %v521, 110
        %v530 = vpop.permute.xlu0 %529
        %531 = vrot.lane.b32.xlu0 %v526, 110
        %v532 = vpop.permute.xlu0 %531
        %vm533 = vcmask 900096
        %v534 = vsel %vm533, %v528, %v530
        %v535 = vsel %vm533, %v530, %v532
        %538 = vst [vmem:[#allocation2 + $0x30] sm:$0xf0] %v534
        %539 = vst [vmem:[#allocation2 + $0x38] sm:$0xf0] %v535
        %v540 = vld [vmem:[%s394] sm:$0xff]
        %v541 = vld [vmem:[%s394 + $0x8] sm:$0xf]
        %v544 = vcombine.high %v540, %v540
        %545 = vrot.lane.b32.xlu0 %v540, 109
        %v546 = vpop.permute.xlu0 %545
        %547 = vrot.lane.b32.xlu0 %v544, 109
        %v548 = vpop.permute.xlu0 %547
        %549 = vrot.lane.b32.xlu0 %v541, 109
        %v550 = vpop.permute.xlu0 %549
        %vm551 = vcmask 891904
        %v552 = vsel %vm551, %v546, %v548
        %v553 = vsel %vm551, %v548, %v550
        %556 = vst [vmem:[#allocation2 + $0x40] sm:$0xf] %v552
        %557 = vst [vmem:[#allocation2 + $0x48] sm:$0xf] %v553
        %v558 = vld [vmem:[%s394] sm:$0xff]
        %v559 = vld [vmem:[%s394 + $0x8] sm:$0xf]
        %v562 = vcombine.low %v558, %v558
        %v563 = vcombine.low %v559, %v559
        %564 = vrot.lane.b32.xlu0 %v562, 108
        %v565 = vpop.permute.xlu0 %564
        %566 = vrot.lane.b32.xlu0 %v558, 108
        %v567 = vpop.permute.xlu0 %566
        %568 = vrot.lane.b32.xlu0 %v563, 108
        %v569 = vpop.permute.xlu0 %568
        %vm570 = vcmask 883712
        %v571 = vsel %vm570, %v565, %v567
        %v572 = vsel %vm570, %v567, %v569
        %575 = vst [vmem:[#allocation2 + $0x40] sm:$0xf0] %v571
        %576 = vst [vmem:[#allocation2 + $0x48] sm:$0xf0] %v572
        %v577 = vld [vmem:[%s394] sm:$0xff]
        %v578 = vld [vmem:[%s394 + $0x8] sm:$0xf]
        %v581 = vcombine.high %v577, %v577
        %582 = vrot.lane.b32.xlu0 %v577, 96
        %v583 = vpop.permute.xlu0 %582
        %584 = vrot.lane.b32.xlu0 %v581, 96
        %v585 = vpop.permute.xlu0 %584
        %586 = vrot.lane.b32.xlu0 %v578, 96
        %v587 = vpop.permute.xlu0 %586
        %vm588 = vcmask 785408
        %v589 = vsel %vm588, %v583, %v585
        %v590 = vsel %vm588, %v585, %v587
        %593 = vst [vmem:[#allocation2 + $0x50] sm:$0xf] %v589
        %594 = vst [vmem:[#allocation2 + $0x58] sm:$0xf] %v590
        %v595 = vld [vmem:[%s394] sm:$0xff]
        %v596 = vld [vmem:[%s394 + $0x8] sm:$0xf]
        %v599 = vcombine.low %v595, %v595
        %v600 = vcombine.low %v596, %v596
        %601 = vrot.lane.b32.xlu0 %v599, 95
        %v602 = vpop.permute.xlu0 %601
        %603 = vrot.lane.b32.xlu0 %v595, 95
        %v604 = vpop.permute.xlu0 %603
        %605 = vrot.lane.b32.xlu0 %v600, 95
        %v606 = vpop.permute.xlu0 %605
        %vm607 = vcmask 777216
        %v608 = vsel %vm607, %v602, %v604
        %v609 = vsel %vm607, %v604, %v606
        %612 = vst [vmem:[#allocation2 + $0x50] sm:$0xf0] %v608
        %613 = vst [vmem:[#allocation2 + $0x58] sm:$0xf0] %v609
        %v614 = vld [vmem:[%s394] sm:$0xff]
        %v615 = vld [vmem:[%s394 + $0x8] sm:$0xf]
        %v618 = vcombine.high %v614, %v614
        %619 = vrot.lane.b32.xlu0 %v614, 94
        %v620 = vpop.permute.xlu0 %619
        %621 = vrot.lane.b32.xlu0 %v618, 94
        %v622 = vpop.permute.xlu0 %621
        %623 = vrot.lane.b32.xlu0 %v615, 94
        %v624 = vpop.permute.xlu0 %623
        %vm625 = vcmask 769024
        %v626 = vsel %vm625, %v620, %v622
        %v627 = vsel %vm625, %v622, %v624
        %630 = vst [vmem:[#allocation2 + $0x60] sm:$0xf] %v626
        %631 = vst [vmem:[#allocation2 + $0x68] sm:$0xf] %v627
        %v632 = vld [vmem:[%s394] sm:$0xff]
        %v633 = vld [vmem:[%s394 + $0x8] sm:$0xf]
        %v636 = vcombine.low %v632, %v632
        %v637 = vcombine.low %v633, %v633
        %638 = vrot.lane.b32.xlu0 %v636, 93
        %v639 = vpop.permute.xlu0 %638
        %640 = vrot.lane.b32.xlu0 %v632, 93
        %v641 = vpop.permute.xlu0 %640
        %642 = vrot.lane.b32.xlu0 %v637, 93
        %v643 = vpop.permute.xlu0 %642
        %vm644 = vcmask 760832
        %v645 = vsel %vm644, %v639, %v641
        %v646 = vsel %vm644, %v641, %v643
        %649 = vst [vmem:[#allocation2 + $0x60] sm:$0xf0] %v645
        %650 = vst [vmem:[#allocation2 + $0x68] sm:$0xf0] %v646
        %v651 = vld [vmem:[%s394] sm:$0xff]
        %v652 = vld [vmem:[%s394 + $0x8] sm:$0xf]
        %v655 = vcombine.high %v651, %v651
        %656 = vrot.lane.b32.xlu0 %v651, 92
        %v657 = vpop.permute.xlu0 %656
        %658 = vrot.lane.b32.xlu0 %v655, 92
        %v659 = vpop.permute.xlu0 %658
        %660 = vrot.lane.b32.xlu0 %v652, 92
        %v661 = vpop.permute.xlu0 %660
        %vm662 = vcmask 752640
        %v663 = vsel %vm662, %v657, %v659
        %v664 = vsel %vm662, %v659, %v661
        %667 = vst [vmem:[#allocation2 + $0x70] sm:$0xf] %v663
        %668 = vst [vmem:[#allocation2 + $0x78] sm:$0xf] %v664
        %v669 = vld [vmem:[%s394] sm:$0xff]
        %v670 = vld [vmem:[%s394 + $0x8] sm:$0xf]
        %v673 = vcombine.low %v669, %v669
        %v674 = vcombine.low %v670, %v670
        %675 = vrot.lane.b32.xlu0 %v673, 80
        %v676 = vpop.permute.xlu0 %675
        %677 = vrot.lane.b32.xlu0 %v669, 80
        %v678 = vpop.permute.xlu0 %677
        %679 = vrot.lane.b32.xlu0 %v674, 80
        %v680 = vpop.permute.xlu0 %679
        %vm681 = vcmask 654336
        %v682 = vsel %vm681, %v676, %v678
        %v683 = vsel %vm681, %v678, %v680
        %686 = vst [vmem:[#allocation2 + $0x70] sm:$0xf0] %v682
        %687 = vst [vmem:[#allocation2 + $0x78] sm:$0xf0] %v683
        %v688 = vld [vmem:[%s394] sm:$0xff]
        %v689 = vld [vmem:[%s394 + $0x8] sm:$0xf]
        %v692 = vcombine.high %v688, %v688
        %693 = vrot.lane.b32.xlu0 %v688, 79
        %v694 = vpop.permute.xlu0 %693
        %695 = vrot.lane.b32.xlu0 %v692, 79
        %v696 = vpop.permute.xlu0 %695
        %697 = vrot.lane.b32.xlu0 %v689, 79
        %v698 = vpop.permute.xlu0 %697
        %vm699 = vcmask 646144
        %v700 = vsel %vm699, %v694, %v696
        %v701 = vsel %vm699, %v696, %v698
        %704 = vst [vmem:[#allocation2 + $0x80] sm:$0xf] %v700
        %705 = vst [vmem:[#allocation2 + $0x88] sm:$0xf] %v701
        %v706 = vld [vmem:[%s394] sm:$0xff]
        %v707 = vld [vmem:[%s394 + $0x8] sm:$0xf]
        %v710 = vcombine.low %v706, %v706
        %v711 = vcombine.low %v707, %v707
        %712 = vrot.lane.b32.xlu0 %v710, 78
        %v713 = vpop.permute.xlu0 %712
        %714 = vrot.lane.b32.xlu0 %v706, 78
        %v715 = vpop.permute.xlu0 %714
        %716 = vrot.lane.b32.xlu0 %v711, 78
        %v717 = vpop.permute.xlu0 %716
        %vm718 = vcmask 637952
        %v719 = vsel %vm718, %v713, %v715
        %v720 = vsel %vm718, %v715, %v717
        %723 = vst [vmem:[#allocation2 + $0x80] sm:$0xf0] %v719
        %724 = vst [vmem:[#allocation2 + $0x88] sm:$0xf0] %v720
        %v725 = vld [vmem:[%s394] sm:$0xff]
        %v726 = vld [vmem:[%s394 + $0x8] sm:$0xf]
        %v729 = vcombine.high %v725, %v725
        %730 = vrot.lane.b32.xlu0 %v725, 77
        %v731 = vpop.permute.xlu0 %730
        %732 = vrot.lane.b32.xlu0 %v729, 77
        %v733 = vpop.permute.xlu0 %732
        %734 = vrot.lane.b32.xlu0 %v726, 77
        %v735 = vpop.permute.xlu0 %734
        %vm736 = vcmask 629760
        %v737 = vsel %vm736, %v731, %v733
        %v738 = vsel %vm736, %v733, %v735
        %741 = vst [vmem:[#allocation2 + $0x90] sm:$0xf] %v737
        %742 = vst [vmem:[#allocation2 + $0x98] sm:$0xf] %v738
        %v743 = vld [vmem:[%s394] sm:$0xff]
        %v744 = vld [vmem:[%s394 + $0x8] sm:$0xf]
        %v747 = vcombine.low %v743, %v743
        %v748 = vcombine.low %v744, %v744
        %749 = vrot.lane.b32.xlu0 %v747, 76
        %v750 = vpop.permute.xlu0 %749
        %751 = vrot.lane.b32.xlu0 %v743, 76
        %v752 = vpop.permute.xlu0 %751
        %753 = vrot.lane.b32.xlu0 %v748, 76
        %v754 = vpop.permute.xlu0 %753
        %vm755 = vcmask 621568
        %v756 = vsel %vm755, %v750, %v752
        %v757 = vsel %vm755, %v752, %v754
        %760 = vst [vmem:[#allocation2 + $0x90] sm:$0xf0] %v756
        %761 = vst [vmem:[#allocation2 + $0x98] sm:$0xf0] %v757
        %v762 = vld [vmem:[%s394] sm:$0xff]
        %v763 = vld [vmem:[%s394 + $0x8] sm:$0xf]
        %v766 = vcombine.high %v762, %v762
        %767 = vrot.lane.b32.xlu0 %v762, 64
        %v768 = vpop.permute.xlu0 %767
        %769 = vrot.lane.b32.xlu0 %v766, 64
        %v770 = vpop.permute.xlu0 %769
        %771 = vrot.lane.b32.xlu0 %v763, 64
        %v772 = vpop.permute.xlu0 %771
        %vm773 = vcmask 523264
        %v774 = vsel %vm773, %v768, %v770
        %v775 = vsel %vm773, %v770, %v772
        %778 = vst [vmem:[#allocation2 + $0xa0] sm:$0xf] %v774
        %779 = vst [vmem:[#allocation2 + $0xa8] sm:$0xf] %v775
        %v780 = vld [vmem:[%s394] sm:$0xff]
        %v781 = vld [vmem:[%s394 + $0x8] sm:$0xf]
        %v784 = vcombine.low %v780, %v780
        %v785 = vcombine.low %v781, %v781
        %786 = vrot.lane.b32.xlu0 %v784, 63
        %v787 = vpop.permute.xlu0 %786
        %788 = vrot.lane.b32.xlu0 %v780, 63
        %v789 = vpop.permute.xlu0 %788
        %790 = vrot.lane.b32.xlu0 %v785, 63
        %v791 = vpop.permute.xlu0 %790
        %vm792 = vcmask 515072
        %v793 = vsel %vm792, %v787, %v789
        %v794 = vsel %vm792, %v789, %v791
        %797 = vst [vmem:[#allocation2 + $0xa0] sm:$0xf0] %v793
        %798 = vst [vmem:[#allocation2 + $0xa8] sm:$0xf0] %v794
        %v799 = vld [vmem:[%s394] sm:$0xff]
        %v800 = vld [vmem:[%s394 + $0x8] sm:$0xf]
        %v803 = vcombine.high %v799, %v799
        %804 = vrot.lane.b32.xlu0 %v799, 62
        %v805 = vpop.permute.xlu0 %804
        %806 = vrot.lane.b32.xlu0 %v803, 62
        %v807 = vpop.permute.xlu0 %806
        %808 = vrot.lane.b32.xlu0 %v800, 62
        %v809 = vpop.permute.xlu0 %808
        %vm810 = vcmask 506880
        %v811 = vsel %vm810, %v805, %v807
        %v812 = vsel %vm810, %v807, %v809
        %815 = vst [vmem:[#allocation2 + $0xb0] sm:$0xf] %v811
        %816 = vst [vmem:[#allocation2 + $0xb8] sm:$0xf] %v812
        %v817 = vld [vmem:[%s394] sm:$0xff]
        %v818 = vld [vmem:[%s394 + $0x8] sm:$0xf]
        %v821 = vcombine.low %v817, %v817
        %v822 = vcombine.low %v818, %v818
        %823 = vrot.lane.b32.xlu0 %v821, 61
        %v824 = vpop.permute.xlu0 %823
        %825 = vrot.lane.b32.xlu0 %v817, 61
        %v826 = vpop.permute.xlu0 %825
        %827 = vrot.lane.b32.xlu0 %v822, 61
        %v828 = vpop.permute.xlu0 %827
        %vm829 = vcmask 498688
        %v830 = vsel %vm829, %v824, %v826
        %v831 = vsel %vm829, %v826, %v828
        %834 = vst [vmem:[#allocation2 + $0xb0] sm:$0xf0] %v830
        %835 = vst [vmem:[#allocation2 + $0xb8] sm:$0xf0] %v831
        %v836 = vld [vmem:[%s394] sm:$0xff]
        %v837 = vld [vmem:[%s394 + $0x8] sm:$0xf]
        %v840 = vcombine.high %v836, %v836
        %841 = vrot.lane.b32.xlu0 %v836, 60
        %v842 = vpop.permute.xlu0 %841
        %843 = vrot.lane.b32.xlu0 %v840, 60
        %v844 = vpop.permute.xlu0 %843
        %845 = vrot.lane.b32.xlu0 %v837, 60
        %v846 = vpop.permute.xlu0 %845
        %vm847 = vcmask 490496
        %v848 = vsel %vm847, %v842, %v844
        %v849 = vsel %vm847, %v844, %v846
        %852 = vst [vmem:[#allocation2 + $0xc0] sm:$0xf] %v848
        %853 = vst [vmem:[#allocation2 + $0xc8] sm:$0xf] %v849
        %v854 = vld [vmem:[%s2] sm:$0xff]
        %v855 = vld [vmem:[%s2 + $0x8] sm:$0xff]
        %v856 = vld [vmem:[#allocation2] sm:$0xff]
        %v857 = vld [vmem:[#allocation2 + $0x8] sm:$0xff]
        %v858 = vld [vmem:[#allocation2 + $0x10] sm:$0xff]
        %v859 = vld [vmem:[#allocation2 + $0x18] sm:$0xff]
        %v860 = vld [vmem:[#allocation2 + $0x20] sm:$0xff]
        %v861 = vld [vmem:[#allocation2 + $0x28] sm:$0xff]
        %v862 = vld [vmem:[#allocation2 + $0x30] sm:$0xff]
        %v863 = vld [vmem:[#allocation2 + $0x38] sm:$0xff]
        %v864 = vld [vmem:[#allocation2 + $0x40] sm:$0xff]
        %v865 = vld [vmem:[#allocation2 + $0x48] sm:$0xff]
        %v866 = vld [vmem:[#allocation2 + $0x50] sm:$0xff]
        %v867 = vld [vmem:[#allocation2 + $0x58] sm:$0xff]
        %v868 = vld [vmem:[#allocation2 + $0x60] sm:$0xff]
        %v869 = vld [vmem:[#allocation2 + $0x68] sm:$0xff]
        %v870 = vld [vmem:[#allocation2 + $0x70] sm:$0xff]
        %v871 = vld [vmem:[#allocation2 + $0x78] sm:$0xff]
        %v872 = vld [vmem:[#allocation2 + $0x80] sm:$0xff]
        %v873 = vld [vmem:[#allocation2 + $0x88] sm:$0xff]
        %v874 = vld [vmem:[#allocation2 + $0x90] sm:$0xff]
        %v875 = vld [vmem:[#allocation2 + $0x98] sm:$0xff]
        %v876 = vld [vmem:[#allocation2 + $0xa0] sm:$0xff]
        %v877 = vld [vmem:[#allocation2 + $0xa8] sm:$0xff]
        %v878 = vld [vmem:[#allocation2 + $0xb0] sm:$0xff]
        %v879 = vld [vmem:[#allocation2 + $0xb8] sm:$0xff]
        %v880 = vld [vmem:[#allocation2 + $0xc0] sm:$0xff]
        %v881 = vld [vmem:[#allocation2 + $0xc8] sm:$0xff]
        %vm882 = vcmask 850944
        %v884 = vsel %vm882, %v854, 0
        %v887 = vsel %vm882, %v855, 0
        %889 = vmatprep.subr.mxu0 %v857
        %890 = vmatpush1.msra.mxu0 %v856
        %891 = vmatprep.subr.mxu0 %v859
        %892 = vmatpush1.msra.mxu0 %v858
        %893 = vmatprep.subr.mxu0 %v861
        %894 = vmatpush1.msra.mxu0 %v860
        %895 = vmatprep.subr.mxu0 %v863
        %896 = vmatpush1.msra.mxu0 %v862
        %897 = vmatprep.subr.mxu0 %v865
        %898 = vmatpush1.msra.mxu0 %v864
        %899 = vmatprep.subr.mxu0 %v867
        %900 = vmatpush1.msra.mxu0 %v866
        %901 = vmatprep.subr.mxu0 %v869
        %902 = vmatpush1.msra.mxu0 %v868
        %903 = vmatprep.subr.mxu0 %v871
        %904 = vmatpush1.msra.mxu0 %v870
        %905 = vmatprep.subr.mxu0 %v873
        %906 = vmatpush1.msra.mxu0 %v872
        %907 = vmatprep.subr.mxu0 %v875
        %908 = vmatpush1.msra.mxu0 %v874
        %909 = vmatprep.subr.mxu0 %v877
        %910 = vmatpush1.msra.mxu0 %v876
        %911 = vmatprep.subr.mxu0 %v879
        %912 = vmatpush1.msra.mxu0 %v878
        %913 = vmatprep.subr.mxu0 %v881
        %914 = vmatpush1.msra.mxu0 %v880
        %915 = vmatprep.subr.mxu0 0.0
        %916 = vmatpush1.msra.mxu0 0.0
        %917 = vmatprep.subr.mxu0 0.0
        %918 = vmatpush1.msra.mxu0 0.0
        %919 = vmatprep.subr.mxu0 0.0
        %920 = vmatpush1.msra.mxu0 0.0
        %921 = vmatprep.subr.mxu0 0.0
        %922 = vmatpush1.msra.mxu0 0.0
        %923 = vmatprep.subr.mxu0 0.0
        %924 = vmatpush1.msra.mxu0 0.0
        %925 = vmatprep.subr.mxu0 0.0
        %926 = vmatpush1.msra.mxu0 0.0
        %927 = vmatprep.subr.mxu0 0.0
        %928 = vmatpush1.msra.mxu0 0.0
        %929 = vmatprep.subr.mxu0 0.0
        %930 = vmatpush1.msra.mxu0 0.0
        %931 = vmatprep.subr.mxu0 0.0
        %932 = vmatpush1.msra.mxu0 0.0
        %933 = vmatprep.subr.mxu0 0.0
        %934 = vmatpush1.msra.mxu0 0.0
        %935 = vmatprep.subr.mxu0 0.0
        %936 = vmatpush1.msra.mxu0 0.0
        %937 = vmatprep.subr.mxu0 0.0
        %938 = vmatpush1.msra.mxu0 0.0
        %939 = vmatprep.subr.mxu0 0.0
        %940 = vmatpush1.msra.mxu0 0.0
        %941 = vmatprep.subr.mxu0 0.0
        %942 = vmatpush1.msra.mxu0 0.0
        %943 = vmatprep.subr.mxu0 0.0
        %944 = vmatpush1.msra.mxu0 0.0
        %945 = vmatprep.subr.mxu0 0.0
        %946 = vmatpush1.msra.mxu0 0.0
        %947 = vmatprep.subr.mxu0 0.0
        %948 = vmatpush1.msra.mxu0 0.0
        %949 = vmatprep.subr.mxu0 0.0
        %950 = vmatpush1.msra.mxu0 0.0
        %951 = vmatprep.subr.mxu0 0.0
        %952 = vmatpush1.msra.mxu0 0.0
        %953 = vmatprep.mubr.f32.mxu0 0.0
        %954 = vmatmul.mubr.f32.gmra.mrb[0].mxu0 %v884
        %v955 = vpop.f32.mrb[0].mxu0
        %v956 = vadd.f32 0.0, %v955
        %v957 = vpop.f32.mrb[0].mxu0
        %v958 = vadd.f32 0.0, %v957
        %959 = vmatprep.mubr.f32.mxu0 0.0
        %960 = vmatmul.mubr.f32.gmra.mrb[0].mxu0 %v887
        %v961 = vpop.f32.mrb[0].mxu0
        %v962 = vadd.f32 0.0, %v961
        %v963 = vpop.f32.mrb[0].mxu0
        %v964 = vadd.f32 0.0, %v963
        %965 = vdwg.mxu0
        %v966 = vmax.f32 %v956, 0.0
        %v967 = vmax.f32 %v958, 0.0
        %v968 = vmax.f32 %v962, 0.0
        %v969 = vmax.f32 %v964, 0.0
        %970 = vst [vmem:[#allocation3] sm:$0xff] %v966
        %971 = vst [vmem:[#allocation3 + $0x8] sm:$0xff] %v967
        %972 = vst [vmem:[#allocation3 + $0x18] sm:$0xff] %v968
        %973 = vst [vmem:[#allocation3 + $0x20] sm:$0xff] %v969
        %v974 = vld [vmem:[#allocation3] sm:$0xff]
        %v975 = vld [vmem:[#allocation3 + $0x8] sm:$0xff]
        %v976 = vld [vmem:[#allocation3 + $0x18] sm:$0xff]
        %v977 = vld [vmem:[#allocation3 + $0x20] sm:$0xff]
        %978 = vst [vmem:[#allocation4] sm:$0xff] %v974
        %979 = vst [vmem:[#allocation4 + $0x8] sm:$0xff] %v975
        %980 = vst [vmem:[#allocation4 + $0x10] sm:$0xff] %v976
        %981 = vst [vmem:[#allocation4 + $0x18] sm:$0xff] %v977
        %v982 = vld [vmem:[#allocation3] sm:$0xff]
        %v983 = vld [vmem:[#allocation3 + $0x8] sm:$0xff]
        %v984 = vld [vmem:[#allocation3 + $0x10] sm:$0xff]
        %v985 = vld [vmem:[#allocation3 + $0x18] sm:$0xff]
        %v986 = vld [vmem:[#allocation3 + $0x20] sm:$0xff]
        %v987 = vld [vmem:[#allocation3 + $0x28] sm:$0xff]
        %994 = vrot.lane.b32.xlu0 %v982, 127
        %v995 = vpop.permute.xlu0 %994
        %996 = vrot.lane.b32.xlu0 %v983, 127
        %v997 = vpop.permute.xlu0 %996
        %998 = vrot.lane.b32.xlu0 %v984, 127
        %v999 = vpop.permute.xlu0 %998
        %1000 = vrot.lane.b32.xlu0 %v985, 127
        %v1001 = vpop.permute.xlu0 %1000
        %1002 = vrot.lane.b32.xlu0 %v986, 127
        %v1003 = vpop.permute.xlu0 %1002
        %1004 = vrot.lane.b32.xlu0 %v987, 127
        %v1005 = vpop.permute.xlu0 %1004
        %v1006 = vsel %vm422, %v995, %v997
        %v1007 = vsel %vm422, %v997, %v999
        %v1008 = vsel %vm422, %v1001, %v1003
        %v1009 = vsel %vm422, %v1003, %v1005
        %1014 = vst [vmem:[#allocation4 + $0x20] sm:$0xff] %v1006
        %1015 = vst [vmem:[#allocation4 + $0x28] sm:$0xff] %v1007
        %1016 = vst [vmem:[#allocation4 + $0x30] sm:$0xff] %v1008
        %1017 = vst [vmem:[#allocation4 + $0x38] sm:$0xff] %v1009
        %v1018 = vld [vmem:[#allocation3] sm:$0xff]
        %v1019 = vld [vmem:[#allocation3 + $0x8] sm:$0xff]
        %v1020 = vld [vmem:[#allocation3 + $0x10] sm:$0xff]
        %v1021 = vld [vmem:[#allocation3 + $0x18] sm:$0xff]
        %v1022 = vld [vmem:[#allocation3 + $0x20] sm:$0xff]
        %v1023 = vld [vmem:[#allocation3 + $0x28] sm:$0xff]
        %1030 = vrot.lane.b32.xlu0 %v1018, 126
        %v1031 = vpop.permute.xlu0 %1030
        %1032 = vrot.lane.b32.xlu0 %v1019, 126
        %v1033 = vpop.permute.xlu0 %1032
        %1034 = vrot.lane.b32.xlu0 %v1020, 126
        %v1035 = vpop.permute.xlu0 %1034
        %1036 = vrot.lane.b32.xlu0 %v1021, 126
        %v1037 = vpop.permute.xlu0 %1036
        %1038 = vrot.lane.b32.xlu0 %v1022, 126
        %v1039 = vpop.permute.xlu0 %1038
        %1040 = vrot.lane.b32.xlu0 %v1023, 126
        %v1041 = vpop.permute.xlu0 %1040
        %v1042 = vsel %vm440, %v1031, %v1033
        %v1043 = vsel %vm440, %v1033, %v1035
        %v1044 = vsel %vm440, %v1037, %v1039
        %v1045 = vsel %vm440, %v1039, %v1041
        %1050 = vst [vmem:[#allocation4 + $0x40] sm:$0xff] %v1042
        %1051 = vst [vmem:[#allocation4 + $0x48] sm:$0xff] %v1043
        %1052 = vst [vmem:[#allocation4 + $0x50] sm:$0xff] %v1044
        %1053 = vst [vmem:[#allocation4 + $0x58] sm:$0xff] %v1045
        %v1054 = vld [vmem:[#allocation3] sm:$0xff]
        %v1055 = vld [vmem:[#allocation3 + $0x8] sm:$0xff]
        %v1056 = vld [vmem:[#allocation3 + $0x10] sm:$0xff]
        %v1057 = vld [vmem:[#allocation3 + $0x18] sm:$0xff]
        %v1058 = vld [vmem:[#allocation3 + $0x20] sm:$0xff]
        %v1059 = vld [vmem:[#allocation3 + $0x28] sm:$0xff]
        %1066 = vrot.lane.b32.xlu0 %v1054, 112
        %v1067 = vpop.permute.xlu0 %1066
        %1068 = vrot.lane.b32.xlu0 %v1055, 112
        %v1069 = vpop.permute.xlu0 %1068
        %1070 = vrot.lane.b32.xlu0 %v1056, 112
        %v1071 = vpop.permute.xlu0 %1070
        %1072 = vrot.lane.b32.xlu0 %v1057, 112
        %v1073 = vpop.permute.xlu0 %1072
        %1074 = vrot.lane.b32.xlu0 %v1058, 112
        %v1075 = vpop.permute.xlu0 %1074
        %1076 = vrot.lane.b32.xlu0 %v1059, 112
        %v1077 = vpop.permute.xlu0 %1076
        %v1078 = vsel %vm496, %v1067, %v1069
        %v1079 = vsel %vm496, %v1069, %v1071
        %v1080 = vsel %vm496, %v1073, %v1075
        %v1081 = vsel %vm496, %v1075, %v1077
        %1086 = vst [vmem:[#allocation4 + $0x60] sm:$0xff] %v1078
        %1087 = vst [vmem:[#allocation4 + $0x68] sm:$0xff] %v1079
        %1088 = vst [vmem:[#allocation4 + $0x70] sm:$0xff] %v1080
        %1089 = vst [vmem:[#allocation4 + $0x78] sm:$0xff] %v1081
        %v1090 = vld [vmem:[#allocation3] sm:$0xff]
        %v1091 = vld [vmem:[#allocation3 + $0x8] sm:$0xff]
        %v1092 = vld [vmem:[#allocation3 + $0x10] sm:$0xff]
        %v1093 = vld [vmem:[#allocation3 + $0x18] sm:$0xff]
        %v1094 = vld [vmem:[#allocation3 + $0x20] sm:$0xff]
        %v1095 = vld [vmem:[#allocation3 + $0x28] sm:$0xff]
        %1102 = vrot.lane.b32.xlu0 %v1090, 111
        %v1103 = vpop.permute.xlu0 %1102
        %1104 = vrot.lane.b32.xlu0 %v1091, 111
        %v1105 = vpop.permute.xlu0 %1104
        %1106 = vrot.lane.b32.xlu0 %v1092, 111
        %v1107 = vpop.permute.xlu0 %1106
        %1108 = vrot.lane.b32.xlu0 %v1093, 111
        %v1109 = vpop.permute.xlu0 %1108
        %1110 = vrot.lane.b32.xlu0 %v1094, 111
        %v1111 = vpop.permute.xlu0 %1110
        %1112 = vrot.lane.b32.xlu0 %v1095, 111
        %v1113 = vpop.permute.xlu0 %1112
        %v1114 = vsel %vm514, %v1103, %v1105
        %v1115 = vsel %vm514, %v1105, %v1107
        %v1116 = vsel %vm514, %v1109, %v1111
        %v1117 = vsel %vm514, %v1111, %v1113
        %1122 = vst [vmem:[#allocation4 + $0x80] sm:$0xff] %v1114
        %1123 = vst [vmem:[#allocation4 + $0x88] sm:$0xff] %v1115
        %1124 = vst [vmem:[#allocation4 + $0x90] sm:$0xff] %v1116
        %1125 = vst [vmem:[#allocation4 + $0x98] sm:$0xff] %v1117
        %v1126 = vld [vmem:[#allocation3] sm:$0xff]
        %v1127 = vld [vmem:[#allocation3 + $0x8] sm:$0xff]
        %v1128 = vld [vmem:[#allocation3 + $0x10] sm:$0xff]
        %v1129 = vld [vmem:[#allocation3 + $0x18] sm:$0xff]
        %v1130 = vld [vmem:[#allocation3 + $0x20] sm:$0xff]
        %v1131 = vld [vmem:[#allocation3 + $0x28] sm:$0xff]
        %1138 = vrot.lane.b32.xlu0 %v1126, 110
        %v1139 = vpop.permute.xlu0 %1138
        %1140 = vrot.lane.b32.xlu0 %v1127, 110
        %v1141 = vpop.permute.xlu0 %1140
        %1142 = vrot.lane.b32.xlu0 %v1128, 110
        %v1143 = vpop.permute.xlu0 %1142
        %1144 = vrot.lane.b32.xlu0 %v1129, 110
        %v1145 = vpop.permute.xlu0 %1144
        %1146 = vrot.lane.b32.xlu0 %v1130, 110
        %v1147 = vpop.permute.xlu0 %1146
        %1148 = vrot.lane.b32.xlu0 %v1131, 110
        %v1149 = vpop.permute.xlu0 %1148
        %v1150 = vsel %vm533, %v1139, %v1141
        %v1151 = vsel %vm533, %v1141, %v1143
        %v1152 = vsel %vm533, %v1145, %v1147
        %v1153 = vsel %vm533, %v1147, %v1149
        %1158 = vst [vmem:[#allocation4 + $0xa0] sm:$0xff] %v1150
        %1159 = vst [vmem:[#allocation4 + $0xa8] sm:$0xff] %v1151
        %1160 = vst [vmem:[#allocation4 + $0xb0] sm:$0xff] %v1152
        %1161 = vst [vmem:[#allocation4 + $0xb8] sm:$0xff] %v1153
        %v1162 = vld [vmem:[#allocation3] sm:$0xff]
        %v1163 = vld [vmem:[#allocation3 + $0x8] sm:$0xff]
        %v1164 = vld [vmem:[#allocation3 + $0x10] sm:$0xff]
        %v1165 = vld [vmem:[#allocation3 + $0x18] sm:$0xff]
        %v1166 = vld [vmem:[#allocation3 + $0x20] sm:$0xff]
        %v1167 = vld [vmem:[#allocation3 + $0x28] sm:$0xff]
        %1174 = vrot.lane.b32.xlu0 %v1162, 96
        %v1175 = vpop.permute.xlu0 %1174
        %1176 = vrot.lane.b32.xlu0 %v1163, 96
        %v1177 = vpop.permute.xlu0 %1176
        %1178 = vrot.lane.b32.xlu0 %v1164, 96
        %v1179 = vpop.permute.xlu0 %1178
        %1180 = vrot.lane.b32.xlu0 %v1165, 96
        %v1181 = vpop.permute.xlu0 %1180
        %1182 = vrot.lane.b32.xlu0 %v1166, 96
        %v1183 = vpop.permute.xlu0 %1182
        %1184 = vrot.lane.b32.xlu0 %v1167, 96
        %v1185 = vpop.permute.xlu0 %1184
        %v1186 = vsel %vm588, %v1175, %v1177
        %v1187 = vsel %vm588, %v1177, %v1179
        %v1188 = vsel %vm588, %v1181, %v1183
        %v1189 = vsel %vm588, %v1183, %v1185
        %1194 = vst [vmem:[#allocation4 + $0xc0] sm:$0xff] %v1186
        %1195 = vst [vmem:[#allocation4 + $0xc8] sm:$0xff] %v1187
        %1196 = vst [vmem:[#allocation4 + $0xd0] sm:$0xff] %v1188
        %1197 = vst [vmem:[#allocation4 + $0xd8] sm:$0xff] %v1189
        %v1198 = vld [vmem:[#allocation3] sm:$0xff]
        %v1199 = vld [vmem:[#allocation3 + $0x8] sm:$0xff]
        %v1200 = vld [vmem:[#allocation3 + $0x10] sm:$0xff]
        %v1201 = vld [vmem:[#allocation3 + $0x18] sm:$0xff]
        %v1202 = vld [vmem:[#allocation3 + $0x20] sm:$0xff]
        %v1203 = vld [vmem:[#allocation3 + $0x28] sm:$0xff]
        %1210 = vrot.lane.b32.xlu0 %v1198, 95
        %v1211 = vpop.permute.xlu0 %1210
        %1212 = vrot.lane.b32.xlu0 %v1199, 95
        %v1213 = vpop.permute.xlu0 %1212
        %1214 = vrot.lane.b32.xlu0 %v1200, 95
        %v1215 = vpop.permute.xlu0 %1214
        %1216 = vrot.lane.b32.xlu0 %v1201, 95
        %v1217 = vpop.permute.xlu0 %1216
        %1218 = vrot.lane.b32.xlu0 %v1202, 95
        %v1219 = vpop.permute.xlu0 %1218
        %1220 = vrot.lane.b32.xlu0 %v1203, 95
        %v1221 = vpop.permute.xlu0 %1220
        %v1222 = vsel %vm607, %v1211, %v1213
        %v1223 = vsel %vm607, %v1213, %v1215
        %v1224 = vsel %vm607, %v1217, %v1219
        %v1225 = vsel %vm607, %v1219, %v1221
        %1230 = vst [vmem:[#allocation4 + $0xe0] sm:$0xff] %v1222
        %1231 = vst [vmem:[#allocation4 + $0xe8] sm:$0xff] %v1223
        %1232 = vst [vmem:[#allocation4 + $0xf0] sm:$0xff] %v1224
        %1233 = vst [vmem:[#allocation4 + $0xf8] sm:$0xff] %v1225
        %v1234 = vld [vmem:[#allocation3] sm:$0xff]
        %v1235 = vld [vmem:[#allocation3 + $0x8] sm:$0xff]
        %v1236 = vld [vmem:[#allocation3 + $0x10] sm:$0xff]
        %v1237 = vld [vmem:[#allocation3 + $0x18] sm:$0xff]
        %v1238 = vld [vmem:[#allocation3 + $0x20] sm:$0xff]
        %v1239 = vld [vmem:[#allocation3 + $0x28] sm:$0xff]
        %1246 = vrot.lane.b32.xlu0 %v1234, 94
        %v1247 = vpop.permute.xlu0 %1246
        %1248 = vrot.lane.b32.xlu0 %v1235, 94
        %v1249 = vpop.permute.xlu0 %1248
        %1250 = vrot.lane.b32.xlu0 %v1236, 94
        %v1251 = vpop.permute.xlu0 %1250
        %1252 = vrot.lane.b32.xlu0 %v1237, 94
        %v1253 = vpop.permute.xlu0 %1252
        %1254 = vrot.lane.b32.xlu0 %v1238, 94
        %v1255 = vpop.permute.xlu0 %1254
        %1256 = vrot.lane.b32.xlu0 %v1239, 94
        %v1257 = vpop.permute.xlu0 %1256
        %v1258 = vsel %vm625, %v1247, %v1249
        %v1259 = vsel %vm625, %v1249, %v1251
        %v1260 = vsel %vm625, %v1253, %v1255
        %v1261 = vsel %vm625, %v1255, %v1257
        %1266 = vst [vmem:[#allocation4 + $0x100] sm:$0xff] %v1258
        %1267 = vst [vmem:[#allocation4 + $0x108] sm:$0xff] %v1259
        %1268 = vst [vmem:[#allocation4 + $0x110] sm:$0xff] %v1260
        %1269 = vst [vmem:[#allocation4 + $0x118] sm:$0xff] %v1261
        %v1270 = vld [vmem:[%s3] sm:$0xff]
        %v1271 = vld [vmem:[%s3 + $0x8] sm:$0xff]
        %v1272 = vld [vmem:[%s3 + $0x10] sm:$0xff]
        %v1273 = vld [vmem:[%s3 + $0x18] sm:$0xff]
        %v1274 = vld [vmem:[%s3 + $0x20] sm:$0xff]
        %v1275 = vld [vmem:[%s3 + $0x28] sm:$0xff]
        %v1276 = vld [vmem:[%s3 + $0x30] sm:$0xff]
        %v1277 = vld [vmem:[%s3 + $0x38] sm:$0xff]
        %v1278 = vld [vmem:[#allocation4] sm:$0xff]
        %v1279 = vld [vmem:[#allocation4 + $0x8] sm:$0xff]
        %v1280 = vld [vmem:[#allocation4 + $0x10] sm:$0xff]
        %v1281 = vld [vmem:[#allocation4 + $0x18] sm:$0xff]
        %v1282 = vld [vmem:[#allocation4 + $0x20] sm:$0xff]
        %v1283 = vld [vmem:[#allocation4 + $0x28] sm:$0xff]
        %v1284 = vld [vmem:[#allocation4 + $0x30] sm:$0xff]
        %v1285 = vld [vmem:[#allocation4 + $0x38] sm:$0xff]
        %v1286 = vld [vmem:[#allocation4 + $0x40] sm:$0xff]
        %v1287 = vld [vmem:[#allocation4 + $0x48] sm:$0xff]
        %v1288 = vld [vmem:[#allocation4 + $0x50] sm:$0xff]
        %v1289 = vld [vmem:[#allocation4 + $0x58] sm:$0xff]
        %v1290 = vld [vmem:[#allocation4 + $0x60] sm:$0xff]
        %v1291 = vld [vmem:[#allocation4 + $0x68] sm:$0xff]
        %v1292 = vld [vmem:[#allocation4 + $0x70] sm:$0xff]
        %v1293 = vld [vmem:[#allocation4 + $0x78] sm:$0xff]
        %v1294 = vld [vmem:[#allocation4 + $0x80] sm:$0xff]
        %v1295 = vld [vmem:[#allocation4 + $0x88] sm:$0xff]
        %v1296 = vld [vmem:[#allocation4 + $0x90] sm:$0xff]
        %v1297 = vld [vmem:[#allocation4 + $0x98] sm:$0xff]
        %v1298 = vld [vmem:[#allocation4 + $0xa0] sm:$0xff]
        %v1299 = vld [vmem:[#allocation4 + $0xa8] sm:$0xff]
        %v1300 = vld [vmem:[#allocation4 + $0xb0] sm:$0xff]
        %v1301 = vld [vmem:[#allocation4 + $0xb8] sm:$0xff]
        %v1302 = vld [vmem:[#allocation4 + $0xc0] sm:$0xff]
        %v1303 = vld [vmem:[#allocation4 + $0xc8] sm:$0xff]
        %v1304 = vld [vmem:[#allocation4 + $0xd0] sm:$0xff]
        %v1305 = vld [vmem:[#allocation4 + $0xd8] sm:$0xff]
        %v1306 = vld [vmem:[#allocation4 + $0xe0] sm:$0xff]
        %v1307 = vld [vmem:[#allocation4 + $0xe8] sm:$0xff]
        %v1308 = vld [vmem:[#allocation4 + $0xf0] sm:$0xff]
        %v1309 = vld [vmem:[#allocation4 + $0xf8] sm:$0xff]
        %v1310 = vld [vmem:[#allocation4 + $0x100] sm:$0xff]
        %v1311 = vld [vmem:[#allocation4 + $0x108] sm:$0xff]
        %v1312 = vld [vmem:[#allocation4 + $0x110] sm:$0xff]
        %v1313 = vld [vmem:[#allocation4 + $0x118] sm:$0xff]
        %v1314 = vld [vmem:[#allocation4 + $0x120] sm:$0xff]
        %v1315 = vld [vmem:[#allocation4 + $0x128] sm:$0xff]
        %vm1316 = vcmask 195584
        %v1318 = vsel %vm1316, %v1271, 0
        %v1321 = vsel %vm1316, %v1273, 0
        %v1324 = vsel %vm1316, %v1275, 0
        %v1327 = vsel %vm1316, %v1277, 0
        %1329 = vmatprep.subr.mxu0 %v1279
        %1330 = vmatpush1.msra.mxu0 %v1278
        %1331 = vmatprep.subr.mxu0 %v1281
        %1332 = vmatpush1.msra.mxu0 %v1280
        %1333 = vmatprep.subr.mxu0 %v1283
        %1334 = vmatpush1.msra.mxu0 %v1282
        %1335 = vmatprep.subr.mxu0 %v1285
        %1336 = vmatpush1.msra.mxu0 %v1284
        %1337 = vmatprep.subr.mxu0 %v1287
        %1338 = vmatpush1.msra.mxu0 %v1286
        %1339 = vmatprep.subr.mxu0 %v1289
        %1340 = vmatpush1.msra.mxu0 %v1288
        %1341 = vmatprep.subr.mxu0 %v1291
        %1342 = vmatpush1.msra.mxu0 %v1290
        %1343 = vmatprep.subr.mxu0 %v1293
        %1344 = vmatpush1.msra.mxu0 %v1292
        %1345 = vmatprep.subr.mxu0 %v1295
        %1346 = vmatpush1.msra.mxu0 %v1294
        %1347 = vmatprep.subr.mxu0 %v1297
        %1348 = vmatpush1.msra.mxu0 %v1296
        %1349 = vmatprep.subr.mxu0 %v1299
        %1350 = vmatpush1.msra.mxu0 %v1298
        %1351 = vmatprep.subr.mxu0 %v1301
        %1352 = vmatpush1.msra.mxu0 %v1300
        %1353 = vmatprep.subr.mxu0 %v1303
        %1354 = vmatpush1.msra.mxu0 %v1302
        %1355 = vmatprep.subr.mxu0 %v1305
        %1356 = vmatpush1.msra.mxu0 %v1304
        %1357 = vmatprep.subr.mxu0 %v1307
        %1358 = vmatpush1.msra.mxu0 %v1306
        %1359 = vmatprep.subr.mxu0 %v1309
        %1360 = vmatpush1.msra.mxu0 %v1308
        %1361 = vmatprep.subr.mxu0 %v1311
        %1362 = vmatpush1.msra.mxu0 %v1310
        %1363 = vmatprep.subr.mxu0 %v1313
        %1364 = vmatpush1.msra.mxu0 %v1312
        %1365 = vmatprep.subr.mxu0 %v1315
        %1366 = vmatpush1.msra.mxu0 %v1314
        %1367 = vmatprep.subr.mxu0 0.0
        %1368 = vmatpush1.msra.mxu0 0.0
        %1369 = vmatprep.subr.mxu0 0.0
        %1370 = vmatpush1.msra.mxu0 0.0
        %1371 = vmatprep.subr.mxu0 0.0
        %1372 = vmatpush1.msra.mxu0 0.0
        %1373 = vmatprep.subr.mxu0 0.0
        %1374 = vmatpush1.msra.mxu0 0.0
        %1375 = vmatprep.subr.mxu0 0.0
        %1376 = vmatpush1.msra.mxu0 0.0
        %1377 = vmatprep.subr.mxu0 0.0
        %1378 = vmatpush1.msra.mxu0 0.0
        %1379 = vmatprep.subr.mxu0 0.0
        %1380 = vmatpush1.msra.mxu0 0.0
        %1381 = vmatprep.subr.mxu0 0.0
        %1382 = vmatpush1.msra.mxu0 0.0
        %1383 = vmatprep.subr.mxu0 0.0
        %1384 = vmatpush1.msra.mxu0 0.0
        %1385 = vmatprep.subr.mxu0 0.0
        %1386 = vmatpush1.msra.mxu0 0.0
        %1387 = vmatprep.subr.mxu0 0.0
        %1388 = vmatpush1.msra.mxu0 0.0
        %1389 = vmatprep.subr.mxu0 0.0
        %1390 = vmatpush1.msra.mxu0 0.0
        %1391 = vmatprep.subr.mxu0 0.0
        %1392 = vmatpush1.msra.mxu0 0.0
        %1393 = vmatprep.mubr.f32.mxu0 %v1318
        %1394 = vmatmul.mubr.f32.gmra.mrb[0].mxu0 %v1270
        %v1395 = vpop.f32.mrb[0].mxu0
        %v1396 = vadd.f32 0.0, %v1395
        %v1397 = vpop.f32.mrb[0].mxu0
        %v1398 = vadd.f32 0.0, %v1397
        %1399 = vmatprep.mubr.f32.mxu0 %v1321
        %1400 = vmatmul.mubr.f32.gmra.mrb[0].mxu0 %v1272
        %v1401 = vpop.f32.mrb[0].mxu0
        %v1402 = vadd.f32 0.0, %v1401
        %v1403 = vpop.f32.mrb[0].mxu0
        %v1404 = vadd.f32 0.0, %v1403
        %1405 = vmatprep.mubr.f32.mxu0 %v1324
        %1406 = vmatmul.mubr.f32.gmra.mrb[0].mxu0 %v1274
        %v1407 = vpop.f32.mrb[0].mxu0
        %v1408 = vadd.f32 0.0, %v1407
        %v1409 = vpop.f32.mrb[0].mxu0
        %v1410 = vadd.f32 0.0, %v1409
        %1411 = vmatprep.mubr.f32.mxu0 %v1327
        %1412 = vmatmul.mubr.f32.gmra.mrb[0].mxu0 %v1276
        %v1413 = vpop.f32.mrb[0].mxu0
        %v1414 = vadd.f32 0.0, %v1413
        %v1415 = vpop.f32.mrb[0].mxu0
        %v1416 = vadd.f32 0.0, %v1415
        %1417 = vdwg.mxu0
        %v1418 = vmax.f32 %v1396, 0.0
        %v1419 = vmax.f32 %v1398, 0.0
        %v1420 = vmax.f32 %v1402, 0.0
        %v1421 = vmax.f32 %v1404, 0.0
        %v1422 = vmax.f32 %v1408, 0.0
        %v1423 = vmax.f32 %v1410, 0.0
        %v1424 = vmax.f32 %v1414, 0.0
        %v1425 = vmax.f32 %v1416, 0.0
        %v1428 = vcombine.low %v1418, %v1419
        %v1430 = vunpack.c.l.s4 1966171168
        %v1431 = vunpack.c.0.s8 %v1430
        %v1432 = vlaneseq
        %v1433 = vshrl.u32 %v1432, 7
        %v1434 = vsub.s32 %v1431, %v1433
        %v1435 = vrot.slane %v1428, %v1434
        %v1437 = vunpack.c.l.s4 1966171168
        %v1438 = vunpack.c.0.s8 %v1437
        %v1439 = vlaneseq
        %v1440 = vshrl.u32 %v1439, 7
        %v1441 = vsub.s32 %v1438, %v1440
        %v1442 = vrot.slane %v1435, %v1441
        %v1444 = vlaneseq
        %vm1445 = vcmp.ge.s32.totalorder %v1444, 0
        %vm1446 = vcmp.lt.s32.totalorder %v1444, 256
        %vm1447 = vmand %vm1445, %vm1446
        %1448 = vst.msk [vmem:[#allocation5] sm:$0x3] %vm1447, %v1442
        %v1449 = vcombine.high %v1435, %v1435
        %v1451 = vunpack.c.l.s4 1966171168
        %v1452 = vunpack.c.0.s8 %v1451
        %v1453 = vlaneseq
        %v1454 = vshrl.u32 %v1453, 7
        %v1455 = vsub.s32 %v1452, %v1454
        %v1456 = vrot.slane %v1449, %v1455
        %1458 = vst.msk [vmem:[#allocation5 + $0x2] sm:$0x3] %vm1447, %v1456
        %v1459 = vcombine.high %v1442, %v1442
        %1461 = vst.msk [vmem:[#allocation5 + $0x4] sm:$0x3] %vm1447, %v1459
        %v1462 = vcombine.high %v1456, %v1456
        %1464 = vst.msk [vmem:[#allocation5 + $0x6] sm:$0x3] %vm1447, %v1462
        %v1465 = vcombine.high %v1418, %v1419
        %v1467 = vunpack.c.l.s4 1966171168
        %v1468 = vunpack.c.0.s8 %v1467
        %v1469 = vlaneseq
        %v1470 = vshrl.u32 %v1469, 7
        %v1471 = vsub.s32 %v1468, %v1470
        %v1472 = vrot.slane %v1465, %v1471
        %v1474 = vunpack.c.l.s4 1966171168
        %v1475 = vunpack.c.0.s8 %v1474
        %v1476 = vlaneseq
        %v1477 = vshrl.u32 %v1476, 7
        %v1478 = vsub.s32 %v1475, %v1477
        %v1479 = vrot.slane %v1472, %v1478
        %1481 = vst.msk [vmem:[#allocation5 + $0x8] sm:$0x3] %vm1447, %v1479
        %v1482 = vcombine.high %v1472, %v1472
        %v1484 = vunpack.c.l.s4 1966171168
        %v1485 = vunpack.c.0.s8 %v1484
        %v1486 = vlaneseq
        %v1487 = vshrl.u32 %v1486, 7
        %v1488 = vsub.s32 %v1485, %v1487
        %v1489 = vrot.slane %v1482, %v1488
        %1491 = vst.msk [vmem:[#allocation5 + $0xa] sm:$0x3] %vm1447, %v1489
        %v1492 = vcombine.high %v1479, %v1479
        %1494 = vst.msk [vmem:[#allocation5 + $0xc] sm:$0x3] %vm1447, %v1492
        %v1495 = vcombine.high %v1489, %v1489
        %1497 = vst.msk [vmem:[#allocation5 + $0xe] sm:$0x3] %vm1447, %v1495
        %v1500 = vcombine.low %v1420, %v1421
        %v1502 = vunpack.c.l.s4 1966171168
        %v1503 = vunpack.c.0.s8 %v1502
        %v1504 = vlaneseq
        %v1505 = vshrl.u32 %v1504, 7
        %v1506 = vsub.s32 %v1503, %v1505
        %v1507 = vrot.slane %v1500, %v1506
        %v1509 = vunpack.c.l.s4 1966171168
        %v1510 = vunpack.c.0.s8 %v1509
        %v1511 = vlaneseq
        %v1512 = vshrl.u32 %v1511, 7
        %v1513 = vsub.s32 %v1510, %v1512
        %v1514 = vrot.slane %v1507, %v1513
        %1516 = vst.msk [vmem:[#allocation5 + $0x10] sm:$0x3] %vm1447, %v1514
        %v1517 = vcombine.high %v1507, %v1507
        %v1519 = vunpack.c.l.s4 1966171168
        %v1520 = vunpack.c.0.s8 %v1519
        %v1521 = vlaneseq
        %v1522 = vshrl.u32 %v1521, 7
        %v1523 = vsub.s32 %v1520, %v1522
        %v1524 = vrot.slane %v1517, %v1523
        %1526 = vst.msk [vmem:[#allocation5 + $0x12] sm:$0x3] %vm1447, %v1524
        %v1527 = vcombine.high %v1514, %v1514
        %1529 = vst.msk [vmem:[#allocation5 + $0x14] sm:$0x3] %vm1447, %v1527
        %v1530 = vcombine.high %v1524, %v1524
        %1532 = vst.msk [vmem:[#allocation5 + $0x16] sm:$0x3] %vm1447, %v1530
        %v1533 = vcombine.high %v1420, %v1421
        %v1535 = vunpack.c.l.s4 1966171168
        %v1536 = vunpack.c.0.s8 %v1535
        %v1537 = vlaneseq
        %v1538 = vshrl.u32 %v1537, 7
        %v1539 = vsub.s32 %v1536, %v1538
        %v1540 = vrot.slane %v1533, %v1539
        %v1542 = vunpack.c.l.s4 1966171168
        %v1543 = vunpack.c.0.s8 %v1542
        %v1544 = vlaneseq
        %v1545 = vshrl.u32 %v1544, 7
        %v1546 = vsub.s32 %v1543, %v1545
        %v1547 = vrot.slane %v1540, %v1546
        %1549 = vst.msk [vmem:[#allocation5 + $0x18] sm:$0x3] %vm1447, %v1547
        %v1550 = vcombine.high %v1540, %v1540
        %v1552 = vunpack.c.l.s4 1966171168
        %v1553 = vunpack.c.0.s8 %v1552
        %v1554 = vlaneseq
        %v1555 = vshrl.u32 %v1554, 7
        %v1556 = vsub.s32 %v1553, %v1555
        %v1557 = vrot.slane %v1550, %v1556
        %1559 = vst.msk [vmem:[#allocation5 + $0x1a] sm:$0x3] %vm1447, %v1557
        %v1560 = vcombine.high %v1547, %v1547
        %1562 = vst.msk [vmem:[#allocation5 + $0x1c] sm:$0x3] %vm1447, %v1560
        %v1563 = vcombine.high %v1557, %v1557
        %1565 = vst.msk [vmem:[#allocation5 + $0x1e] sm:$0x3] %vm1447, %v1563
        %v1568 = vcombine.low %v1422, %v1423
        %v1570 = vunpack.c.l.s4 1966171168
        %v1571 = vunpack.c.0.s8 %v1570
        %v1572 = vlaneseq
        %v1573 = vshrl.u32 %v1572, 7
        %v1574 = vsub.s32 %v1571, %v1573
        %v1575 = vrot.slane %v1568, %v1574
        %v1577 = vunpack.c.l.s4 1966171168
        %v1578 = vunpack.c.0.s8 %v1577
        %v1579 = vlaneseq
        %v1580 = vshrl.u32 %v1579, 7
        %v1581 = vsub.s32 %v1578, %v1580
        %v1582 = vrot.slane %v1575, %v1581
        %1584 = vst.msk [vmem:[#allocation5 + $0x20] sm:$0x3] %vm1447, %v1582
        %v1585 = vcombine.high %v1575, %v1575
        %v1587 = vunpack.c.l.s4 1966171168
        %v1588 = vunpack.c.0.s8 %v1587
        %v1589 = vlaneseq
        %v1590 = vshrl.u32 %v1589, 7
        %v1591 = vsub.s32 %v1588, %v1590
        %v1592 = vrot.slane %v1585, %v1591
        %1594 = vst.msk [vmem:[#allocation5 + $0x22] sm:$0x3] %vm1447, %v1592
        %v1595 = vcombine.high %v1582, %v1582
        %1597 = vst.msk [vmem:[#allocation5 + $0x24] sm:$0x3] %vm1447, %v1595
        %v1598 = vcombine.high %v1592, %v1592
        %1600 = vst.msk [vmem:[#allocation5 + $0x26] sm:$0x3] %vm1447, %v1598
        %v1601 = vcombine.high %v1422, %v1423
        %v1603 = vunpack.c.l.s4 1966171168
        %v1604 = vunpack.c.0.s8 %v1603
        %v1605 = vlaneseq
        %v1606 = vshrl.u32 %v1605, 7
        %v1607 = vsub.s32 %v1604, %v1606
        %v1608 = vrot.slane %v1601, %v1607
        %v1610 = vunpack.c.l.s4 1966171168
        %v1611 = vunpack.c.0.s8 %v1610
        %v1612 = vlaneseq
        %v1613 = vshrl.u32 %v1612, 7
        %v1614 = vsub.s32 %v1611, %v1613
        %v1615 = vrot.slane %v1608, %v1614
        %1617 = vst.msk [vmem:[#allocation5 + $0x28] sm:$0x3] %vm1447, %v1615
        %v1618 = vcombine.high %v1608, %v1608
        %v1620 = vunpack.c.l.s4 1966171168
        %v1621 = vunpack.c.0.s8 %v1620
        %v1622 = vlaneseq
        %v1623 = vshrl.u32 %v1622, 7
        %v1624 = vsub.s32 %v1621, %v1623
        %v1625 = vrot.slane %v1618, %v1624
        %1627 = vst.msk [vmem:[#allocation5 + $0x2a] sm:$0x3] %vm1447, %v1625
        %v1628 = vcombine.high %v1615, %v1615
        %1630 = vst.msk [vmem:[#allocation5 + $0x2c] sm:$0x3] %vm1447, %v1628
        %v1631 = vcombine.high %v1625, %v1625
        %1633 = vst.msk [vmem:[#allocation5 + $0x2e] sm:$0x3] %vm1447, %v1631
        %v1636 = vcombine.low %v1424, %v1425
        %v1638 = vunpack.c.l.s4 1966171168
        %v1639 = vunpack.c.0.s8 %v1638
        %v1640 = vlaneseq
        %v1641 = vshrl.u32 %v1640, 7
        %v1642 = vsub.s32 %v1639, %v1641
        %v1643 = vrot.slane %v1636, %v1642
        %v1645 = vunpack.c.l.s4 1966171168
        %v1646 = vunpack.c.0.s8 %v1645
        %v1647 = vlaneseq
        %v1648 = vshrl.u32 %v1647, 7
        %v1649 = vsub.s32 %v1646, %v1648
        %v1650 = vrot.slane %v1643, %v1649
        %1652 = vst.msk [vmem:[#allocation5 + $0x30] sm:$0x3] %vm1447, %v1650
        %v1653 = vcombine.high %v1643, %v1643
        %v1655 = vunpack.c.l.s4 1966171168
        %v1656 = vunpack.c.0.s8 %v1655
        %v1657 = vlaneseq
        %v1658 = vshrl.u32 %v1657, 7
        %v1659 = vsub.s32 %v1656, %v1658
        %v1660 = vrot.slane %v1653, %v1659
        %1662 = vst.msk [vmem:[#allocation5 + $0x32] sm:$0x3] %vm1447, %v1660
        %v1663 = vcombine.high %v1650, %v1650
        %1665 = vst.msk [vmem:[#allocation5 + $0x34] sm:$0x3] %vm1447, %v1663
        %v1666 = vcombine.high %v1660, %v1660
        %1668 = vst.msk [vmem:[#allocation5 + $0x36] sm:$0x3] %vm1447, %v1666
        %v1669 = vcombine.high %v1424, %v1425
        %v1671 = vunpack.c.l.s4 1966171168
        %v1672 = vunpack.c.0.s8 %v1671
        %v1673 = vlaneseq
        %v1674 = vshrl.u32 %v1673, 7
        %v1675 = vsub.s32 %v1672, %v1674
        %v1676 = vrot.slane %v1669, %v1675
        %v1678 = vunpack.c.l.s4 1966171168
        %v1679 = vunpack.c.0.s8 %v1678
        %v1680 = vlaneseq
        %v1681 = vshrl.u32 %v1680, 7
        %v1682 = vsub.s32 %v1679, %v1681
        %v1683 = vrot.slane %v1676, %v1682
        %1685 = vst.msk [vmem:[#allocation5 + $0x38] sm:$0x3] %vm1447, %v1683
        %v1686 = vcombine.high %v1676, %v1676
        %v1688 = vunpack.c.l.s4 1966171168
        %v1689 = vunpack.c.0.s8 %v1688
        %v1690 = vlaneseq
        %v1691 = vshrl.u32 %v1690, 7
        %v1692 = vsub.s32 %v1689, %v1691
        %v1693 = vrot.slane %v1686, %v1692
        %1695 = vst.msk [vmem:[#allocation5 + $0x3a] sm:$0x3] %vm1447, %v1693
        %v1696 = vcombine.high %v1683, %v1683
        %1698 = vst.msk [vmem:[#allocation5 + $0x3c] sm:$0x3] %vm1447, %v1696
        %v1699 = vcombine.high %v1693, %v1693
        %1701 = vst.msk [vmem:[#allocation5 + $0x3e] sm:$0x3] %vm1447, %v1699
        %v1702 = vld [vmem:[%s397] sm:$0x1]
        %v1703 = vld [vmem:[%s5] sm:$0xff]
        %v1704 = vld [vmem:[%s6] sm:$0x1]
        %vm1705 = vcmask 64512
        %v1707 = vsel %vm1705, %v1702, 0
        %1709 = vmatprep.subr.mxu0 0.0
        %1710 = vmatpush1.msra.mxu0 %v1703
        %1711 = vmatprep.subr.mxu0 0.0
        %1712 = vmatpush1.msra.mxu0 0.0
        %1713 = vmatprep.subr.mxu0 0.0
        %1714 = vmatpush1.msra.mxu0 0.0
        %1715 = vmatprep.subr.mxu0 0.0
        %1716 = vmatpush1.msra.mxu0 0.0
        %1717 = vmatprep.subr.mxu0 0.0
        %1718 = vmatpush1.msra.mxu0 0.0
        %1719 = vmatprep.subr.mxu0 0.0
        %1720 = vmatpush1.msra.mxu0 0.0
        %1721 = vmatprep.subr.mxu0 0.0
        %1722 = vmatpush1.msra.mxu0 0.0
        %1723 = vmatprep.subr.mxu0 0.0
        %1724 = vmatpush1.msra.mxu0 0.0
        %1725 = vmatprep.subr.mxu0 0.0
        %1726 = vmatpush1.msra.mxu0 0.0
        %1727 = vmatprep.subr.mxu0 0.0
        %1728 = vmatpush1.msra.mxu0 0.0
        %1729 = vmatprep.subr.mxu0 0.0
        %1730 = vmatpush1.msra.mxu0 0.0
        %1731 = vmatprep.subr.mxu0 0.0
        %1732 = vmatpush1.msra.mxu0 0.0
        %1733 = vmatprep.subr.mxu0 0.0
        %1734 = vmatpush1.msra.mxu0 0.0
        %1735 = vmatprep.subr.mxu0 0.0
        %1736 = vmatpush1.msra.mxu0 0.0
        %1737 = vmatprep.subr.mxu0 0.0
        %1738 = vmatpush1.msra.mxu0 0.0
        %1739 = vmatprep.subr.mxu0 0.0
        %1740 = vmatpush1.msra.mxu0 0.0
        %1741 = vmatprep.subr.mxu0 0.0
        %1742 = vmatpush1.msra.mxu0 0.0
        %1743 = vmatprep.subr.mxu0 0.0
        %1744 = vmatpush1.msra.mxu0 0.0
        %1745 = vmatprep.subr.mxu0 0.0
        %1746 = vmatpush1.msra.mxu0 0.0
        %1747 = vmatprep.subr.mxu0 0.0
        %1748 = vmatpush1.msra.mxu0 0.0
        %1749 = vmatprep.subr.mxu0 0.0
        %1750 = vmatpush1.msra.mxu0 0.0
        %1751 = vmatprep.subr.mxu0 0.0
        %1752 = vmatpush1.msra.mxu0 0.0
        %1753 = vmatprep.subr.mxu0 0.0
        %1754 = vmatpush1.msra.mxu0 0.0
        %1755 = vmatprep.subr.mxu0 0.0
        %1756 = vmatpush1.msra.mxu0 0.0
        %1757 = vmatprep.subr.mxu0 0.0
        %1758 = vmatpush1.msra.mxu0 0.0
        %1759 = vmatprep.subr.mxu0 0.0
        %1760 = vmatpush1.msra.mxu0 0.0
        %1761 = vmatprep.subr.mxu0 0.0
        %1762 = vmatpush1.msra.mxu0 0.0
        %1763 = vmatprep.subr.mxu0 0.0
        %1764 = vmatpush1.msra.mxu0 0.0
        %1765 = vmatprep.subr.mxu0 0.0
        %1766 = vmatpush1.msra.mxu0 0.0
        %1767 = vmatprep.subr.mxu0 0.0
        %1768 = vmatpush1.msra.mxu0 0.0
        %1769 = vmatprep.subr.mxu0 0.0
        %1770 = vmatpush1.msra.mxu0 0.0
        %1771 = vmatprep.subr.mxu0 0.0
        %1772 = vmatpush1.msra.mxu0 0.0
        %1773 = vmatprep.mubr.f32.mxu0 0.0
        %1774 = vmatmul.mubr.f32.gmra.mrb[0].mxu0 %v1707
        %v1775 = vpop.f32.mrb[0].mxu0
        %v1776 = vadd.f32 %v1704, %v1775
        %v1777 = vpop.f32.mrb[0].mxu0
        %1778 = vdwg.mxu0
        %v1779 = vmax.f32 %v1776, 0.0
        %v1780 = vld [vmem:[#allocation5] sm:$0xff]
        %v1781 = vld [vmem:[#allocation5 + $0x8] sm:$0xff]
        %v1782 = vld [vmem:[#allocation5 + $0x10] sm:$0xff]
        %v1783 = vld [vmem:[#allocation5 + $0x18] sm:$0xff]
        %v1784 = vld [vmem:[#allocation5 + $0x20] sm:$0xff]
        %v1785 = vld [vmem:[#allocation5 + $0x28] sm:$0xff]
        %v1786 = vld [vmem:[#allocation5 + $0x30] sm:$0xff]
        %v1787 = vld [vmem:[#allocation5 + $0x38] sm:$0xff]
        %v1788 = vld [vmem:[%s4] sm:$0xff]
        %v1789 = vld [vmem:[%s4 + $0x8] sm:$0xff]
        %v1790 = vld [vmem:[%s4 + $0x10] sm:$0xff]
        %v1791 = vld [vmem:[%s4 + $0x18] sm:$0xff]
        %v1792 = vld [vmem:[%s4 + $0x20] sm:$0xff]
        %v1793 = vld [vmem:[%s4 + $0x28] sm:$0xff]
        %v1794 = vld [vmem:[%s4 + $0x30] sm:$0xff]
        %v1795 = vld [vmem:[%s4 + $0x38] sm:$0xff]
        %v1796 = vld [vmem:[%s4 + $0x40] sm:$0xff]
        %v1797 = vld [vmem:[%s4 + $0x48] sm:$0xff]
        %v1798 = vld [vmem:[%s4 + $0x50] sm:$0xff]
        %v1799 = vld [vmem:[%s4 + $0x58] sm:$0xff]
        %v1800 = vld [vmem:[%s4 + $0x60] sm:$0xff]
        %v1801 = vld [vmem:[%s4 + $0x68] sm:$0xff]
        %v1802 = vld [vmem:[%s4 + $0x70] sm:$0xff]
        %v1803 = vld [vmem:[%s4 + $0x78] sm:$0xff]
        %v1804 = vld [vmem:[%s4 + $0x80] sm:$0xff]
        %v1805 = vld [vmem:[%s4 + $0x88] sm:$0xff]
        %v1806 = vld [vmem:[%s4 + $0x90] sm:$0xff]
        %v1807 = vld [vmem:[%s4 + $0x98] sm:$0xff]
        %v1808 = vld [vmem:[%s4 + $0xa0] sm:$0xff]
        %v1809 = vld [vmem:[%s4 + $0xa8] sm:$0xff]
        %v1810 = vld [vmem:[%s4 + $0xb0] sm:$0xff]
        %v1811 = vld [vmem:[%s4 + $0xb8] sm:$0xff]
        %v1812 = vld [vmem:[%s4 + $0xc0] sm:$0xff]
        %v1813 = vld [vmem:[%s4 + $0xc8] sm:$0xff]
        %v1814 = vld [vmem:[%s4 + $0xd0] sm:$0xff]
        %v1815 = vld [vmem:[%s4 + $0xd8] sm:$0xff]
        %v1816 = vld [vmem:[%s4 + $0xe0] sm:$0xff]
        %v1817 = vld [vmem:[%s4 + $0xe8] sm:$0xff]
        %v1818 = vld [vmem:[%s4 + $0xf0] sm:$0xff]
        %v1819 = vld [vmem:[%s4 + $0xf8] sm:$0xff]
        %v1820 = vld [vmem:[%s4 + $0x100] sm:$0xff]
        %v1821 = vld [vmem:[%s4 + $0x108] sm:$0xff]
        %v1822 = vld [vmem:[%s4 + $0x110] sm:$0xff]
        %v1823 = vld [vmem:[%s4 + $0x118] sm:$0xff]
        %v1824 = vld [vmem:[%s4 + $0x120] sm:$0xff]
        %v1825 = vld [vmem:[%s4 + $0x128] sm:$0xff]
        %v1826 = vld [vmem:[%s4 + $0x130] sm:$0xff]
        %v1827 = vld [vmem:[%s4 + $0x138] sm:$0xff]
        %v1828 = vld [vmem:[%s4 + $0x140] sm:$0xff]
        %v1829 = vld [vmem:[%s4 + $0x148] sm:$0xff]
        %v1830 = vld [vmem:[%s4 + $0x150] sm:$0xff]
        %v1831 = vld [vmem:[%s4 + $0x158] sm:$0xff]
        %v1832 = vld [vmem:[%s4 + $0x160] sm:$0xff]
        %v1833 = vld [vmem:[%s4 + $0x168] sm:$0xff]
        %v1834 = vld [vmem:[%s4 + $0x170] sm:$0xff]
        %v1835 = vld [vmem:[%s4 + $0x178] sm:$0xff]
        %v1836 = vld [vmem:[%s4 + $0x180] sm:$0xff]
        %v1837 = vld [vmem:[%s4 + $0x188] sm:$0xff]
        %v1838 = vld [vmem:[%s4 + $0x190] sm:$0xff]
        %v1839 = vld [vmem:[%s4 + $0x198] sm:$0xff]
        %v1840 = vld [vmem:[%s4 + $0x1a0] sm:$0xff]
        %v1841 = vld [vmem:[%s4 + $0x1a8] sm:$0xff]
        %v1842 = vld [vmem:[%s4 + $0x1b0] sm:$0xff]
        %v1843 = vld [vmem:[%s4 + $0x1b8] sm:$0xff]
        %v1844 = vld [vmem:[%s4 + $0x1c0] sm:$0xff]
        %v1845 = vld [vmem:[%s4 + $0x1c8] sm:$0xff]
        %v1846 = vld [vmem:[%s4 + $0x1d0] sm:$0xff]
        %v1847 = vld [vmem:[%s4 + $0x1d8] sm:$0xff]
        %v1848 = vld [vmem:[%s4 + $0x1e0] sm:$0xff]
        %v1849 = vld [vmem:[%s4 + $0x1e8] sm:$0xff]
        %v1850 = vld [vmem:[%s4 + $0x1f0] sm:$0xff]
        %v1851 = vld [vmem:[%s4 + $0x1f8] sm:$0xff]
        %v1852 = vld [vmem:[%s4 + $0x200] sm:$0xff]
        %v1853 = vld [vmem:[%s4 + $0x208] sm:$0xff]
        %v1854 = vld [vmem:[%s4 + $0x210] sm:$0xff]
        %v1855 = vld [vmem:[%s4 + $0x218] sm:$0xff]
        %v1856 = vld [vmem:[%s4 + $0x220] sm:$0xff]
        %v1857 = vld [vmem:[%s4 + $0x228] sm:$0xff]
        %v1858 = vld [vmem:[%s4 + $0x230] sm:$0xff]
        %v1859 = vld [vmem:[%s4 + $0x238] sm:$0xff]
        %v1860 = vld [vmem:[%s4 + $0x240] sm:$0xff]
        %v1861 = vld [vmem:[%s4 + $0x248] sm:$0xff]
        %v1862 = vld [vmem:[%s4 + $0x250] sm:$0xff]
        %v1863 = vld [vmem:[%s4 + $0x258] sm:$0xff]
        %v1864 = vld [vmem:[%s4 + $0x260] sm:$0xff]
        %v1865 = vld [vmem:[%s4 + $0x268] sm:$0xff]
        %v1866 = vld [vmem:[%s4 + $0x270] sm:$0xff]
        %v1867 = vld [vmem:[%s4 + $0x278] sm:$0xff]
        %v1868 = vld [vmem:[%s4 + $0x280] sm:$0xff]
        %v1869 = vld [vmem:[%s4 + $0x288] sm:$0xff]
        %v1870 = vld [vmem:[%s4 + $0x290] sm:$0xff]
        %v1871 = vld [vmem:[%s4 + $0x298] sm:$0xff]
        %v1872 = vld [vmem:[%s4 + $0x2a0] sm:$0xff]
        %v1873 = vld [vmem:[%s4 + $0x2a8] sm:$0xff]
        %v1874 = vld [vmem:[%s4 + $0x2b0] sm:$0xff]
        %v1875 = vld [vmem:[%s4 + $0x2b8] sm:$0xff]
        %v1876 = vld [vmem:[%s4 + $0x2c0] sm:$0xff]
        %v1877 = vld [vmem:[%s4 + $0x2c8] sm:$0xff]
        %v1878 = vld [vmem:[%s4 + $0x2d0] sm:$0xff]
        %v1879 = vld [vmem:[%s4 + $0x2d8] sm:$0xff]
        %v1880 = vld [vmem:[%s4 + $0x2e0] sm:$0xff]
        %v1881 = vld [vmem:[%s4 + $0x2e8] sm:$0xff]
        %v1882 = vld [vmem:[%s4 + $0x2f0] sm:$0xff]
        %v1883 = vld [vmem:[%s4 + $0x2f8] sm:$0xff]
        %v1884 = vld [vmem:[%s4 + $0x300] sm:$0xff]
        %v1885 = vld [vmem:[%s4 + $0x308] sm:$0xff]
        %v1886 = vld [vmem:[%s4 + $0x310] sm:$0xff]
        %v1887 = vld [vmem:[%s4 + $0x318] sm:$0xff]
        %v1888 = vld [vmem:[%s4 + $0x320] sm:$0xff]
        %v1889 = vld [vmem:[%s4 + $0x328] sm:$0xff]
        %v1890 = vld [vmem:[%s4 + $0x330] sm:$0xff]
        %v1891 = vld [vmem:[%s4 + $0x338] sm:$0xff]
        %v1892 = vld [vmem:[%s4 + $0x340] sm:$0xff]
        %v1893 = vld [vmem:[%s4 + $0x348] sm:$0xff]
        %v1894 = vld [vmem:[%s4 + $0x350] sm:$0xff]
        %v1895 = vld [vmem:[%s4 + $0x358] sm:$0xff]
        %v1896 = vld [vmem:[%s4 + $0x360] sm:$0xff]
        %v1897 = vld [vmem:[%s4 + $0x368] sm:$0xff]
        %v1898 = vld [vmem:[%s4 + $0x370] sm:$0xff]
        %v1899 = vld [vmem:[%s4 + $0x378] sm:$0xff]
        %v1900 = vld [vmem:[%s4 + $0x380] sm:$0xff]
        %v1901 = vld [vmem:[%s4 + $0x388] sm:$0xff]
        %v1902 = vld [vmem:[%s4 + $0x390] sm:$0xff]
        %v1903 = vld [vmem:[%s4 + $0x398] sm:$0xff]
        %v1904 = vld [vmem:[%s4 + $0x3a0] sm:$0xff]
        %v1905 = vld [vmem:[%s4 + $0x3a8] sm:$0xff]
        %v1906 = vld [vmem:[%s4 + $0x3b0] sm:$0xff]
        %v1907 = vld [vmem:[%s4 + $0x3b8] sm:$0xff]
        %v1908 = vld [vmem:[%s4 + $0x3c0] sm:$0xff]
        %v1909 = vld [vmem:[%s4 + $0x3c8] sm:$0xff]
        %v1910 = vld [vmem:[%s4 + $0x3d0] sm:$0xff]
        %v1911 = vld [vmem:[%s4 + $0x3d8] sm:$0xff]
        %v1912 = vld [vmem:[%s4 + $0x3e0] sm:$0xff]
        %v1913 = vld [vmem:[%s4 + $0x3e8] sm:$0xff]
        %v1914 = vld [vmem:[%s4 + $0x3f0] sm:$0xff]
        %v1915 = vld [vmem:[%s4 + $0x3f8] sm:$0xff]
        %v1916 = vld [vmem:[%s4 + $0x400] sm:$0xff]
        %v1917 = vld [vmem:[%s4 + $0x408] sm:$0xff]
        %v1918 = vld [vmem:[%s4 + $0x410] sm:$0xff]
        %v1919 = vld [vmem:[%s4 + $0x418] sm:$0xff]
        %v1920 = vld [vmem:[%s4 + $0x420] sm:$0xff]
        %v1921 = vld [vmem:[%s4 + $0x428] sm:$0xff]
        %v1922 = vld [vmem:[%s4 + $0x430] sm:$0xff]
        %v1923 = vld [vmem:[%s4 + $0x438] sm:$0xff]
        %v1924 = vld [vmem:[%s4 + $0x440] sm:$0xff]
        %v1925 = vld [vmem:[%s4 + $0x448] sm:$0xff]
        %v1926 = vld [vmem:[%s4 + $0x450] sm:$0xff]
        %v1927 = vld [vmem:[%s4 + $0x458] sm:$0xff]
        %v1928 = vld [vmem:[%s4 + $0x460] sm:$0xff]
        %v1929 = vld [vmem:[%s4 + $0x468] sm:$0xff]
        %v1930 = vld [vmem:[%s4 + $0x470] sm:$0xff]
        %v1931 = vld [vmem:[%s4 + $0x478] sm:$0xff]
        %v1932 = vld [vmem:[%s4 + $0x480] sm:$0xff]
        %v1933 = vld [vmem:[%s4 + $0x488] sm:$0xff]
        %v1934 = vld [vmem:[%s4 + $0x490] sm:$0xff]
        %v1935 = vld [vmem:[%s4 + $0x498] sm:$0xff]
        %v1936 = vld [vmem:[%s4 + $0x4a0] sm:$0xff]
        %v1937 = vld [vmem:[%s4 + $0x4a8] sm:$0xff]
        %v1938 = vld [vmem:[%s4 + $0x4b0] sm:$0xff]
        %v1939 = vld [vmem:[%s4 + $0x4b8] sm:$0xff]
        %v1940 = vld [vmem:[%s4 + $0x4c0] sm:$0xff]
        %v1941 = vld [vmem:[%s4 + $0x4c8] sm:$0xff]
        %v1942 = vld [vmem:[%s4 + $0x4d0] sm:$0xff]
        %v1943 = vld [vmem:[%s4 + $0x4d8] sm:$0xff]
        %v1944 = vld [vmem:[%s4 + $0x4e0] sm:$0xff]
        %v1945 = vld [vmem:[%s4 + $0x4e8] sm:$0xff]
        %v1946 = vld [vmem:[%s4 + $0x4f0] sm:$0xff]
        %v1947 = vld [vmem:[%s4 + $0x4f8] sm:$0xff]
        %v1948 = vld [vmem:[%s4 + $0x500] sm:$0xff]
        %v1949 = vld [vmem:[%s4 + $0x508] sm:$0xff]
        %v1950 = vld [vmem:[%s4 + $0x510] sm:$0xff]
        %v1951 = vld [vmem:[%s4 + $0x518] sm:$0xff]
        %v1952 = vld [vmem:[%s4 + $0x520] sm:$0xff]
        %v1953 = vld [vmem:[%s4 + $0x528] sm:$0xff]
        %v1954 = vld [vmem:[%s4 + $0x530] sm:$0xff]
        %v1955 = vld [vmem:[%s4 + $0x538] sm:$0xff]
        %v1956 = vld [vmem:[%s4 + $0x540] sm:$0xff]
        %v1957 = vld [vmem:[%s4 + $0x548] sm:$0xff]
        %v1958 = vld [vmem:[%s4 + $0x550] sm:$0xff]
        %v1959 = vld [vmem:[%s4 + $0x558] sm:$0xff]
        %v1960 = vld [vmem:[%s4 + $0x560] sm:$0xff]
        %v1961 = vld [vmem:[%s4 + $0x568] sm:$0xff]
        %v1962 = vld [vmem:[%s4 + $0x570] sm:$0xff]
        %v1963 = vld [vmem:[%s4 + $0x578] sm:$0xff]
        %v1964 = vld [vmem:[%s4 + $0x580] sm:$0xff]
        %v1965 = vld [vmem:[%s4 + $0x588] sm:$0xff]
        %v1966 = vld [vmem:[%s4 + $0x590] sm:$0xff]
        %v1967 = vld [vmem:[%s4 + $0x598] sm:$0xff]
        %v1968 = vld [vmem:[%s4 + $0x5a0] sm:$0xff]
        %v1969 = vld [vmem:[%s4 + $0x5a8] sm:$0xff]
        %v1970 = vld [vmem:[%s4 + $0x5b0] sm:$0xff]
        %v1971 = vld [vmem:[%s4 + $0x5b8] sm:$0xff]
        %v1972 = vld [vmem:[%s4 + $0x5c0] sm:$0xff]
        %v1973 = vld [vmem:[%s4 + $0x5c8] sm:$0xff]
        %v1974 = vld [vmem:[%s4 + $0x5d0] sm:$0xff]
        %v1975 = vld [vmem:[%s4 + $0x5d8] sm:$0xff]
        %v1976 = vld [vmem:[%s4 + $0x5e0] sm:$0xff]
        %v1977 = vld [vmem:[%s4 + $0x5e8] sm:$0xff]
        %v1978 = vld [vmem:[%s4 + $0x5f0] sm:$0xff]
        %v1979 = vld [vmem:[%s4 + $0x5f8] sm:$0xff]
        %v1980 = vld [vmem:[%s4 + $0x600] sm:$0xff]
        %v1981 = vld [vmem:[%s4 + $0x608] sm:$0xff]
        %v1982 = vld [vmem:[%s4 + $0x610] sm:$0xff]
        %v1983 = vld [vmem:[%s4 + $0x618] sm:$0xff]
        %v1984 = vld [vmem:[%s4 + $0x620] sm:$0xff]
        %v1985 = vld [vmem:[%s4 + $0x628] sm:$0xff]
        %v1986 = vld [vmem:[%s4 + $0x630] sm:$0xff]
        %v1987 = vld [vmem:[%s4 + $0x638] sm:$0xff]
        %v1988 = vld [vmem:[%s4 + $0x640] sm:$0xff]
        %v1989 = vld [vmem:[%s4 + $0x648] sm:$0xff]
        %v1990 = vld [vmem:[%s4 + $0x650] sm:$0xff]
        %v1991 = vld [vmem:[%s4 + $0x658] sm:$0xff]
        %v1992 = vld [vmem:[%s4 + $0x660] sm:$0xff]
        %v1993 = vld [vmem:[%s4 + $0x668] sm:$0xff]
        %v1994 = vld [vmem:[%s4 + $0x670] sm:$0xff]
        %v1995 = vld [vmem:[%s4 + $0x678] sm:$0xff]
        %v1996 = vld [vmem:[%s4 + $0x680] sm:$0xff]
        %v1997 = vld [vmem:[%s4 + $0x688] sm:$0xff]
        %v1998 = vld [vmem:[%s4 + $0x690] sm:$0xff]
        %v1999 = vld [vmem:[%s4 + $0x698] sm:$0xff]
        %v2000 = vld [vmem:[%s4 + $0x6a0] sm:$0xff]
        %v2001 = vld [vmem:[%s4 + $0x6a8] sm:$0xff]
        %v2002 = vld [vmem:[%s4 + $0x6b0] sm:$0xff]
        %v2003 = vld [vmem:[%s4 + $0x6b8] sm:$0xff]
        %v2004 = vld [vmem:[%s4 + $0x6c0] sm:$0xff]
        %v2005 = vld [vmem:[%s4 + $0x6c8] sm:$0xff]
        %v2006 = vld [vmem:[%s4 + $0x6d0] sm:$0xff]
        %v2007 = vld [vmem:[%s4 + $0x6d8] sm:$0xff]
        %v2008 = vld [vmem:[%s4 + $0x6e0] sm:$0xff]
        %v2009 = vld [vmem:[%s4 + $0x6e8] sm:$0xff]
        %v2010 = vld [vmem:[%s4 + $0x6f0] sm:$0xff]
        %v2011 = vld [vmem:[%s4 + $0x6f8] sm:$0xff]
        %v2012 = vld [vmem:[%s4 + $0x700] sm:$0xff]
        %v2013 = vld [vmem:[%s4 + $0x708] sm:$0xff]
        %v2014 = vld [vmem:[%s4 + $0x710] sm:$0xff]
        %v2015 = vld [vmem:[%s4 + $0x718] sm:$0xff]
        %v2016 = vld [vmem:[%s4 + $0x720] sm:$0xff]
        %v2017 = vld [vmem:[%s4 + $0x728] sm:$0xff]
        %v2018 = vld [vmem:[%s4 + $0x730] sm:$0xff]
        %v2019 = vld [vmem:[%s4 + $0x738] sm:$0xff]
        %v2020 = vld [vmem:[%s4 + $0x740] sm:$0xff]
        %v2021 = vld [vmem:[%s4 + $0x748] sm:$0xff]
        %v2022 = vld [vmem:[%s4 + $0x750] sm:$0xff]
        %v2023 = vld [vmem:[%s4 + $0x758] sm:$0xff]
        %v2024 = vld [vmem:[%s4 + $0x760] sm:$0xff]
        %v2025 = vld [vmem:[%s4 + $0x768] sm:$0xff]
        %v2026 = vld [vmem:[%s4 + $0x770] sm:$0xff]
        %v2027 = vld [vmem:[%s4 + $0x778] sm:$0xff]
        %v2028 = vld [vmem:[%s4 + $0x780] sm:$0xff]
        %v2029 = vld [vmem:[%s4 + $0x788] sm:$0xff]
        %v2030 = vld [vmem:[%s4 + $0x790] sm:$0xff]
        %v2031 = vld [vmem:[%s4 + $0x798] sm:$0xff]
        %v2032 = vld [vmem:[%s4 + $0x7a0] sm:$0xff]
        %v2033 = vld [vmem:[%s4 + $0x7a8] sm:$0xff]
        %v2034 = vld [vmem:[%s4 + $0x7b0] sm:$0xff]
        %v2035 = vld [vmem:[%s4 + $0x7b8] sm:$0xff]
        %v2036 = vld [vmem:[%s4 + $0x7c0] sm:$0xff]
        %v2037 = vld [vmem:[%s4 + $0x7c8] sm:$0xff]
        %v2038 = vld [vmem:[%s4 + $0x7d0] sm:$0xff]
        %v2039 = vld [vmem:[%s4 + $0x7d8] sm:$0xff]
        %v2040 = vld [vmem:[%s4 + $0x7e0] sm:$0xff]
        %v2041 = vld [vmem:[%s4 + $0x7e8] sm:$0xff]
        %v2042 = vld [vmem:[%s4 + $0x7f0] sm:$0xff]
        %v2043 = vld [vmem:[%s4 + $0x7f8] sm:$0xff]
        %v2044 = vld [vmem:[%s4 + $0x800] sm:$0xff]
        %v2045 = vld [vmem:[%s4 + $0x808] sm:$0xff]
        %v2046 = vld [vmem:[%s4 + $0x810] sm:$0xff]
        %v2047 = vld [vmem:[%s4 + $0x818] sm:$0xff]
        %v2048 = vld [vmem:[%s4 + $0x820] sm:$0xff]
        %v2049 = vld [vmem:[%s4 + $0x828] sm:$0xff]
        %v2050 = vld [vmem:[%s4 + $0x830] sm:$0xff]
        %v2051 = vld [vmem:[%s4 + $0x838] sm:$0xff]
        %v2052 = vld [vmem:[%s4 + $0x840] sm:$0xff]
        %v2053 = vld [vmem:[%s4 + $0x848] sm:$0xff]
        %v2054 = vld [vmem:[%s4 + $0x850] sm:$0xff]
        %v2055 = vld [vmem:[%s4 + $0x858] sm:$0xff]
        %v2056 = vld [vmem:[%s4 + $0x860] sm:$0xff]
        %v2057 = vld [vmem:[%s4 + $0x868] sm:$0xff]
        %v2058 = vld [vmem:[%s4 + $0x870] sm:$0xff]
        %v2059 = vld [vmem:[%s4 + $0x878] sm:$0xff]
        %v2060 = vld [vmem:[%s4 + $0x880] sm:$0xff]
        %v2061 = vld [vmem:[%s4 + $0x888] sm:$0xff]
        %v2062 = vld [vmem:[%s4 + $0x890] sm:$0xff]
        %v2063 = vld [vmem:[%s4 + $0x898] sm:$0xff]
        %v2064 = vld [vmem:[%s4 + $0x8a0] sm:$0xff]
        %v2065 = vld [vmem:[%s4 + $0x8a8] sm:$0xff]
        %v2066 = vld [vmem:[%s4 + $0x8b0] sm:$0xff]
        %v2067 = vld [vmem:[%s4 + $0x8b8] sm:$0xff]
        %v2068 = vld [vmem:[%s4 + $0x8c0] sm:$0xff]
        %v2069 = vld [vmem:[%s4 + $0x8c8] sm:$0xff]
        %v2070 = vld [vmem:[%s4 + $0x8d0] sm:$0xff]
        %v2071 = vld [vmem:[%s4 + $0x8d8] sm:$0xff]
        %v2072 = vld [vmem:[%s4 + $0x8e0] sm:$0xff]
        %v2073 = vld [vmem:[%s4 + $0x8e8] sm:$0xff]
        %v2074 = vld [vmem:[%s4 + $0x8f0] sm:$0xff]
        %v2075 = vld [vmem:[%s4 + $0x8f8] sm:$0xff]
        %v2076 = vld [vmem:[%s4 + $0x900] sm:$0xff]
        %v2077 = vld [vmem:[%s4 + $0x908] sm:$0xff]
        %v2078 = vld [vmem:[%s4 + $0x910] sm:$0xff]
        %v2079 = vld [vmem:[%s4 + $0x918] sm:$0xff]
        %v2080 = vld [vmem:[%s4 + $0x920] sm:$0xff]
        %v2081 = vld [vmem:[%s4 + $0x928] sm:$0xff]
        %v2082 = vld [vmem:[%s4 + $0x930] sm:$0xff]
        %v2083 = vld [vmem:[%s4 + $0x938] sm:$0xff]
        %v2084 = vld [vmem:[%s4 + $0x940] sm:$0xff]
        %v2085 = vld [vmem:[%s4 + $0x948] sm:$0xff]
        %v2086 = vld [vmem:[%s4 + $0x950] sm:$0xff]
        %v2087 = vld [vmem:[%s4 + $0x958] sm:$0xff]
        %v2088 = vld [vmem:[%s4 + $0x960] sm:$0xff]
        %v2089 = vld [vmem:[%s4 + $0x968] sm:$0xff]
        %v2090 = vld [vmem:[%s4 + $0x970] sm:$0xff]
        %v2091 = vld [vmem:[%s4 + $0x978] sm:$0xff]
        %v2092 = vld [vmem:[%s4 + $0x980] sm:$0xff]
        %v2093 = vld [vmem:[%s4 + $0x988] sm:$0xff]
        %v2094 = vld [vmem:[%s4 + $0x990] sm:$0xff]
        %v2095 = vld [vmem:[%s4 + $0x998] sm:$0xff]
        %v2096 = vld [vmem:[%s4 + $0x9a0] sm:$0xff]
        %v2097 = vld [vmem:[%s4 + $0x9a8] sm:$0xff]
        %v2098 = vld [vmem:[%s4 + $0x9b0] sm:$0xff]
        %v2099 = vld [vmem:[%s4 + $0x9b8] sm:$0xff]
        %v2100 = vld [vmem:[%s4 + $0x9c0] sm:$0xff]
        %v2101 = vld [vmem:[%s4 + $0x9c8] sm:$0xff]
        %v2102 = vld [vmem:[%s4 + $0x9d0] sm:$0xff]
        %v2103 = vld [vmem:[%s4 + $0x9d8] sm:$0xff]
        %v2104 = vld [vmem:[%s4 + $0x9e0] sm:$0xff]
        %v2105 = vld [vmem:[%s4 + $0x9e8] sm:$0xff]
        %v2106 = vld [vmem:[%s4 + $0x9f0] sm:$0xff]
        %v2107 = vld [vmem:[%s4 + $0x9f8] sm:$0xff]
        %v2108 = vld [vmem:[%s4 + $0xa00] sm:$0xff]
        %v2109 = vld [vmem:[%s4 + $0xa08] sm:$0xff]
        %v2110 = vld [vmem:[%s4 + $0xa10] sm:$0xff]
        %v2111 = vld [vmem:[%s4 + $0xa18] sm:$0xff]
        %v2112 = vld [vmem:[%s4 + $0xa20] sm:$0xff]
        %v2113 = vld [vmem:[%s4 + $0xa28] sm:$0xff]
        %v2114 = vld [vmem:[%s4 + $0xa30] sm:$0xff]
        %v2115 = vld [vmem:[%s4 + $0xa38] sm:$0xff]
        %v2116 = vld [vmem:[%s4 + $0xa40] sm:$0xff]
        %v2117 = vld [vmem:[%s4 + $0xa48] sm:$0xff]
        %v2118 = vld [vmem:[%s4 + $0xa50] sm:$0xff]
        %v2119 = vld [vmem:[%s4 + $0xa58] sm:$0xff]
        %v2120 = vld [vmem:[%s4 + $0xa60] sm:$0xff]
        %v2121 = vld [vmem:[%s4 + $0xa68] sm:$0xff]
        %v2122 = vld [vmem:[%s4 + $0xa70] sm:$0xff]
        %v2123 = vld [vmem:[%s4 + $0xa78] sm:$0xff]
        %v2124 = vld [vmem:[%s4 + $0xa80] sm:$0xff]
        %v2125 = vld [vmem:[%s4 + $0xa88] sm:$0xff]
        %v2126 = vld [vmem:[%s4 + $0xa90] sm:$0xff]
        %v2127 = vld [vmem:[%s4 + $0xa98] sm:$0xff]
        %v2128 = vld [vmem:[%s4 + $0xaa0] sm:$0xff]
        %v2129 = vld [vmem:[%s4 + $0xaa8] sm:$0xff]
        %v2130 = vld [vmem:[%s4 + $0xab0] sm:$0xff]
        %v2131 = vld [vmem:[%s4 + $0xab8] sm:$0xff]
        %v2132 = vld [vmem:[%s4 + $0xac0] sm:$0xff]
        %v2133 = vld [vmem:[%s4 + $0xac8] sm:$0xff]
        %v2134 = vld [vmem:[%s4 + $0xad0] sm:$0xff]
        %v2135 = vld [vmem:[%s4 + $0xad8] sm:$0xff]
        %v2136 = vld [vmem:[%s4 + $0xae0] sm:$0xff]
        %v2137 = vld [vmem:[%s4 + $0xae8] sm:$0xff]
        %v2138 = vld [vmem:[%s4 + $0xaf0] sm:$0xff]
        %v2139 = vld [vmem:[%s4 + $0xaf8] sm:$0xff]
        %v2140 = vld [vmem:[%s4 + $0xb00] sm:$0xff]
        %v2141 = vld [vmem:[%s4 + $0xb08] sm:$0xff]
        %v2142 = vld [vmem:[%s4 + $0xb10] sm:$0xff]
        %v2143 = vld [vmem:[%s4 + $0xb18] sm:$0xff]
        %v2144 = vld [vmem:[%s4 + $0xb20] sm:$0xff]
        %v2145 = vld [vmem:[%s4 + $0xb28] sm:$0xff]
        %v2146 = vld [vmem:[%s4 + $0xb30] sm:$0xff]
        %v2147 = vld [vmem:[%s4 + $0xb38] sm:$0xff]
        %v2148 = vld [vmem:[%s4 + $0xb40] sm:$0xff]
        %v2149 = vld [vmem:[%s4 + $0xb48] sm:$0xff]
        %v2150 = vld [vmem:[%s4 + $0xb50] sm:$0xff]
        %v2151 = vld [vmem:[%s4 + $0xb58] sm:$0xff]
        %v2152 = vld [vmem:[%s4 + $0xb60] sm:$0xff]
        %v2153 = vld [vmem:[%s4 + $0xb68] sm:$0xff]
        %v2154 = vld [vmem:[%s4 + $0xb70] sm:$0xff]
        %v2155 = vld [vmem:[%s4 + $0xb78] sm:$0xff]
        %v2156 = vld [vmem:[%s4 + $0xb80] sm:$0xff]
        %v2157 = vld [vmem:[%s4 + $0xb88] sm:$0xff]
        %v2158 = vld [vmem:[%s4 + $0xb90] sm:$0xff]
        %v2159 = vld [vmem:[%s4 + $0xb98] sm:$0xff]
        %v2160 = vld [vmem:[%s4 + $0xba0] sm:$0xff]
        %v2161 = vld [vmem:[%s4 + $0xba8] sm:$0xff]
        %v2162 = vld [vmem:[%s4 + $0xbb0] sm:$0xff]
        %v2163 = vld [vmem:[%s4 + $0xbb8] sm:$0xff]
        %v2164 = vld [vmem:[%s4 + $0xbc0] sm:$0xff]
        %v2165 = vld [vmem:[%s4 + $0xbc8] sm:$0xff]
        %v2166 = vld [vmem:[%s4 + $0xbd0] sm:$0xff]
        %v2167 = vld [vmem:[%s4 + $0xbd8] sm:$0xff]
        %v2168 = vld [vmem:[%s4 + $0xbe0] sm:$0xff]
        %v2169 = vld [vmem:[%s4 + $0xbe8] sm:$0xff]
        %v2170 = vld [vmem:[%s4 + $0xbf0] sm:$0xff]
        %v2171 = vld [vmem:[%s4 + $0xbf8] sm:$0xff]
        %v2172 = vld [vmem:[%s4 + $0xc00] sm:$0xff]
        %v2173 = vld [vmem:[%s4 + $0xc08] sm:$0xff]
        %v2174 = vld [vmem:[%s4 + $0xc10] sm:$0xff]
        %v2175 = vld [vmem:[%s4 + $0xc18] sm:$0xff]
        %v2176 = vld [vmem:[%s4 + $0xc20] sm:$0xff]
        %v2177 = vld [vmem:[%s4 + $0xc28] sm:$0xff]
        %v2178 = vld [vmem:[%s4 + $0xc30] sm:$0xff]
        %v2179 = vld [vmem:[%s4 + $0xc38] sm:$0xff]
        %v2180 = vld [vmem:[%s4 + $0xc40] sm:$0xff]
        %v2181 = vld [vmem:[%s4 + $0xc48] sm:$0xff]
        %v2182 = vld [vmem:[%s4 + $0xc50] sm:$0xff]
        %v2183 = vld [vmem:[%s4 + $0xc58] sm:$0xff]
        %v2184 = vld [vmem:[%s4 + $0xc60] sm:$0xff]
        %v2185 = vld [vmem:[%s4 + $0xc68] sm:$0xff]
        %v2186 = vld [vmem:[%s4 + $0xc70] sm:$0xff]
        %v2187 = vld [vmem:[%s4 + $0xc78] sm:$0xff]
        %v2188 = vld [vmem:[%s4 + $0xc80] sm:$0xff]
        %v2189 = vld [vmem:[%s4 + $0xc88] sm:$0xff]
        %v2190 = vld [vmem:[%s4 + $0xc90] sm:$0xff]
        %v2191 = vld [vmem:[%s4 + $0xc98] sm:$0xff]
        %v2192 = vld [vmem:[%s4 + $0xca0] sm:$0xff]
        %v2193 = vld [vmem:[%s4 + $0xca8] sm:$0xff]
        %v2194 = vld [vmem:[%s4 + $0xcb0] sm:$0xff]
        %v2195 = vld [vmem:[%s4 + $0xcb8] sm:$0xff]
        %v2196 = vld [vmem:[%s4 + $0xcc0] sm:$0xff]
        %v2197 = vld [vmem:[%s4 + $0xcc8] sm:$0xff]
        %v2198 = vld [vmem:[%s4 + $0xcd0] sm:$0xff]
        %v2199 = vld [vmem:[%s4 + $0xcd8] sm:$0xff]
        %v2200 = vld [vmem:[%s4 + $0xce0] sm:$0xff]
        %v2201 = vld [vmem:[%s4 + $0xce8] sm:$0xff]
        %v2202 = vld [vmem:[%s4 + $0xcf0] sm:$0xff]
        %v2203 = vld [vmem:[%s4 + $0xcf8] sm:$0xff]
        %v2204 = vld [vmem:[%s4 + $0xd00] sm:$0xff]
        %v2205 = vld [vmem:[%s4 + $0xd08] sm:$0xff]
        %v2206 = vld [vmem:[%s4 + $0xd10] sm:$0xff]
        %v2207 = vld [vmem:[%s4 + $0xd18] sm:$0xff]
        %v2208 = vld [vmem:[%s4 + $0xd20] sm:$0xff]
        %v2209 = vld [vmem:[%s4 + $0xd28] sm:$0xff]
        %v2210 = vld [vmem:[%s4 + $0xd30] sm:$0xff]
        %v2211 = vld [vmem:[%s4 + $0xd38] sm:$0xff]
        %v2212 = vld [vmem:[%s4 + $0xd40] sm:$0xff]
        %v2213 = vld [vmem:[%s4 + $0xd48] sm:$0xff]
        %v2214 = vld [vmem:[%s4 + $0xd50] sm:$0xff]
        %v2215 = vld [vmem:[%s4 + $0xd58] sm:$0xff]
        %v2216 = vld [vmem:[%s4 + $0xd60] sm:$0xff]
        %v2217 = vld [vmem:[%s4 + $0xd68] sm:$0xff]
        %v2218 = vld [vmem:[%s4 + $0xd70] sm:$0xff]
        %v2219 = vld [vmem:[%s4 + $0xd78] sm:$0xff]
        %v2220 = vld [vmem:[%s4 + $0xd80] sm:$0xff]
        %v2221 = vld [vmem:[%s4 + $0xd88] sm:$0xff]
        %v2222 = vld [vmem:[%s4 + $0xd90] sm:$0xff]
        %v2223 = vld [vmem:[%s4 + $0xd98] sm:$0xff]
        %v2224 = vld [vmem:[%s4 + $0xda0] sm:$0xff]
        %v2225 = vld [vmem:[%s4 + $0xda8] sm:$0xff]
        %v2226 = vld [vmem:[%s4 + $0xdb0] sm:$0xff]
        %v2227 = vld [vmem:[%s4 + $0xdb8] sm:$0xff]
        %v2228 = vld [vmem:[%s4 + $0xdc0] sm:$0xff]
        %v2229 = vld [vmem:[%s4 + $0xdc8] sm:$0xff]
        %v2230 = vld [vmem:[%s4 + $0xdd0] sm:$0xff]
        %v2231 = vld [vmem:[%s4 + $0xdd8] sm:$0xff]
        %v2232 = vld [vmem:[%s4 + $0xde0] sm:$0xff]
        %v2233 = vld [vmem:[%s4 + $0xde8] sm:$0xff]
        %v2234 = vld [vmem:[%s4 + $0xdf0] sm:$0xff]
        %v2235 = vld [vmem:[%s4 + $0xdf8] sm:$0xff]
        %v2236 = vld [vmem:[%s4 + $0xe00] sm:$0xff]
        %v2237 = vld [vmem:[%s4 + $0xe08] sm:$0xff]
        %v2238 = vld [vmem:[%s4 + $0xe10] sm:$0xff]
        %v2239 = vld [vmem:[%s4 + $0xe18] sm:$0xff]
        %v2240 = vld [vmem:[%s4 + $0xe20] sm:$0xff]
        %v2241 = vld [vmem:[%s4 + $0xe28] sm:$0xff]
        %v2242 = vld [vmem:[%s4 + $0xe30] sm:$0xff]
        %v2243 = vld [vmem:[%s4 + $0xe38] sm:$0xff]
        %v2244 = vld [vmem:[%s4 + $0xe40] sm:$0xff]
        %v2245 = vld [vmem:[%s4 + $0xe48] sm:$0xff]
        %v2246 = vld [vmem:[%s4 + $0xe50] sm:$0xff]
        %v2247 = vld [vmem:[%s4 + $0xe58] sm:$0xff]
        %v2248 = vld [vmem:[%s4 + $0xe60] sm:$0xff]
        %v2249 = vld [vmem:[%s4 + $0xe68] sm:$0xff]
        %v2250 = vld [vmem:[%s4 + $0xe70] sm:$0xff]
        %v2251 = vld [vmem:[%s4 + $0xe78] sm:$0xff]
        %v2252 = vld [vmem:[%s4 + $0xe80] sm:$0xff]
        %v2253 = vld [vmem:[%s4 + $0xe88] sm:$0xff]
        %v2254 = vld [vmem:[%s4 + $0xe90] sm:$0xff]
        %v2255 = vld [vmem:[%s4 + $0xe98] sm:$0xff]
        %v2256 = vld [vmem:[%s4 + $0xea0] sm:$0xff]
        %v2257 = vld [vmem:[%s4 + $0xea8] sm:$0xff]
        %v2258 = vld [vmem:[%s4 + $0xeb0] sm:$0xff]
        %v2259 = vld [vmem:[%s4 + $0xeb8] sm:$0xff]
        %v2260 = vld [vmem:[%s4 + $0xec0] sm:$0xff]
        %v2261 = vld [vmem:[%s4 + $0xec8] sm:$0xff]
        %v2262 = vld [vmem:[%s4 + $0xed0] sm:$0xff]
        %v2263 = vld [vmem:[%s4 + $0xed8] sm:$0xff]
        %v2264 = vld [vmem:[%s4 + $0xee0] sm:$0xff]
        %v2265 = vld [vmem:[%s4 + $0xee8] sm:$0xff]
        %v2266 = vld [vmem:[%s4 + $0xef0] sm:$0xff]
        %v2267 = vld [vmem:[%s4 + $0xef8] sm:$0xff]
        %v2268 = vld [vmem:[%s4 + $0xf00] sm:$0xff]
        %v2269 = vld [vmem:[%s4 + $0xf08] sm:$0xff]
        %v2270 = vld [vmem:[%s4 + $0xf10] sm:$0xff]
        %v2271 = vld [vmem:[%s4 + $0xf18] sm:$0xff]
        %v2272 = vld [vmem:[%s4 + $0xf20] sm:$0xff]
        %v2273 = vld [vmem:[%s4 + $0xf28] sm:$0xff]
        %v2274 = vld [vmem:[%s4 + $0xf30] sm:$0xff]
        %v2275 = vld [vmem:[%s4 + $0xf38] sm:$0xff]
        %v2276 = vld [vmem:[%s4 + $0xf40] sm:$0xff]
        %v2277 = vld [vmem:[%s4 + $0xf48] sm:$0xff]
        %v2278 = vld [vmem:[%s4 + $0xf50] sm:$0xff]
        %v2279 = vld [vmem:[%s4 + $0xf58] sm:$0xff]
        %v2280 = vld [vmem:[%s4 + $0xf60] sm:$0xff]
        %v2281 = vld [vmem:[%s4 + $0xf68] sm:$0xff]
        %v2282 = vld [vmem:[%s4 + $0xf70] sm:$0xff]
        %v2283 = vld [vmem:[%s4 + $0xf78] sm:$0xff]
        %v2284 = vld [vmem:[%s4 + $0xf80] sm:$0xff]
        %v2285 = vld [vmem:[%s4 + $0xf88] sm:$0xff]
        %v2286 = vld [vmem:[%s4 + $0xf90] sm:$0xff]
        %v2287 = vld [vmem:[%s4 + $0xf98] sm:$0xff]
        %v2288 = vld [vmem:[%s4 + $0xfa0] sm:$0xff]
        %v2289 = vld [vmem:[%s4 + $0xfa8] sm:$0xff]
        %v2290 = vld [vmem:[%s4 + $0xfb0] sm:$0xff]
        %v2291 = vld [vmem:[%s4 + $0xfb8] sm:$0xff]
        %v2292 = vld [vmem:[%s4 + $0xfc0] sm:$0xff]
        %v2293 = vld [vmem:[%s4 + $0xfc8] sm:$0xff]
        %v2294 = vld [vmem:[%s4 + $0xfd0] sm:$0xff]
        %v2295 = vld [vmem:[%s4 + $0xfd8] sm:$0xff]
        %v2296 = vld [vmem:[%s4 + $0xfe0] sm:$0xff]
        %v2297 = vld [vmem:[%s4 + $0xfe8] sm:$0xff]
        %v2298 = vld [vmem:[%s4 + $0xff0] sm:$0xff]
        %v2299 = vld [vmem:[%s4 + $0xff8] sm:$0xff]
        %v2300 = vld [vmem:[%s4 + $0x1000] sm:$0xff]
        %v2301 = vld [vmem:[%s4 + $0x1008] sm:$0xff]
        %v2302 = vld [vmem:[%s4 + $0x1010] sm:$0xff]
        %v2303 = vld [vmem:[%s4 + $0x1018] sm:$0xff]
        %v2304 = vld [vmem:[%s4 + $0x1020] sm:$0xff]
        %v2305 = vld [vmem:[%s4 + $0x1028] sm:$0xff]
        %v2306 = vld [vmem:[%s4 + $0x1030] sm:$0xff]
        %v2307 = vld [vmem:[%s4 + $0x1038] sm:$0xff]
        %v2308 = vld [vmem:[%s4 + $0x1040] sm:$0xff]
        %v2309 = vld [vmem:[%s4 + $0x1048] sm:$0xff]
        %v2310 = vld [vmem:[%s4 + $0x1050] sm:$0xff]
        %v2311 = vld [vmem:[%s4 + $0x1058] sm:$0xff]
        %v2312 = vld [vmem:[%s4 + $0x1060] sm:$0xff]
        %v2313 = vld [vmem:[%s4 + $0x1068] sm:$0xff]
        %v2314 = vld [vmem:[%s4 + $0x1070] sm:$0xff]
        %v2315 = vld [vmem:[%s4 + $0x1078] sm:$0xff]
        %v2316 = vld [vmem:[%s4 + $0x1080] sm:$0xff]
        %v2317 = vld [vmem:[%s4 + $0x1088] sm:$0xff]
        %v2318 = vld [vmem:[%s4 + $0x1090] sm:$0xff]
        %v2319 = vld [vmem:[%s4 + $0x1098] sm:$0xff]
        %v2320 = vld [vmem:[%s4 + $0x10a0] sm:$0xff]
        %v2321 = vld [vmem:[%s4 + $0x10a8] sm:$0xff]
        %v2322 = vld [vmem:[%s4 + $0x10b0] sm:$0xff]
        %v2323 = vld [vmem:[%s4 + $0x10b8] sm:$0xff]
        %v2324 = vld [vmem:[%s4 + $0x10c0] sm:$0xff]
        %v2325 = vld [vmem:[%s4 + $0x10c8] sm:$0xff]
        %v2326 = vld [vmem:[%s4 + $0x10d0] sm:$0xff]
        %v2327 = vld [vmem:[%s4 + $0x10d8] sm:$0xff]
        %v2328 = vld [vmem:[%s4 + $0x10e0] sm:$0xff]
        %v2329 = vld [vmem:[%s4 + $0x10e8] sm:$0xff]
        %v2330 = vld [vmem:[%s4 + $0x10f0] sm:$0xff]
        %v2331 = vld [vmem:[%s4 + $0x10f8] sm:$0xff]
        %v2332 = vld [vmem:[%s4 + $0x1100] sm:$0xff]
        %v2333 = vld [vmem:[%s4 + $0x1108] sm:$0xff]
        %v2334 = vld [vmem:[%s4 + $0x1110] sm:$0xff]
        %v2335 = vld [vmem:[%s4 + $0x1118] sm:$0xff]
        %v2336 = vld [vmem:[%s4 + $0x1120] sm:$0xff]
        %v2337 = vld [vmem:[%s4 + $0x1128] sm:$0xff]
        %v2338 = vld [vmem:[%s4 + $0x1130] sm:$0xff]
        %v2339 = vld [vmem:[%s4 + $0x1138] sm:$0xff]
        %v2340 = vld [vmem:[%s4 + $0x1140] sm:$0xff]
        %v2341 = vld [vmem:[%s4 + $0x1148] sm:$0xff]
        %v2342 = vld [vmem:[%s4 + $0x1150] sm:$0xff]
        %v2343 = vld [vmem:[%s4 + $0x1158] sm:$0xff]
        %v2344 = vld [vmem:[%s4 + $0x1160] sm:$0xff]
        %v2345 = vld [vmem:[%s4 + $0x1168] sm:$0xff]
        %v2346 = vld [vmem:[%s4 + $0x1170] sm:$0xff]
        %v2347 = vld [vmem:[%s4 + $0x1178] sm:$0xff]
        %v2348 = vld [vmem:[%s4 + $0x1180] sm:$0xff]
        %v2349 = vld [vmem:[%s4 + $0x1188] sm:$0xff]
        %v2350 = vld [vmem:[%s4 + $0x1190] sm:$0xff]
        %v2351 = vld [vmem:[%s4 + $0x1198] sm:$0xff]
        %v2352 = vld [vmem:[%s4 + $0x11a0] sm:$0xff]
        %v2353 = vld [vmem:[%s4 + $0x11a8] sm:$0xff]
        %v2354 = vld [vmem:[%s4 + $0x11b0] sm:$0xff]
        %v2355 = vld [vmem:[%s4 + $0x11b8] sm:$0xff]
        %v2356 = vld [vmem:[%s4 + $0x11c0] sm:$0xff]
        %v2357 = vld [vmem:[%s4 + $0x11c8] sm:$0xff]
        %v2358 = vld [vmem:[%s4 + $0x11d0] sm:$0xff]
        %v2359 = vld [vmem:[%s4 + $0x11d8] sm:$0xff]
        %v2360 = vld [vmem:[%s4 + $0x11e0] sm:$0xff]
        %v2361 = vld [vmem:[%s4 + $0x11e8] sm:$0xff]
        %v2362 = vld [vmem:[%s4 + $0x11f0] sm:$0xff]
        %v2363 = vld [vmem:[%s4 + $0x11f8] sm:$0xff]
        %v2364 = vld [vmem:[%s4 + $0x1200] sm:$0xff]
        %v2365 = vld [vmem:[%s4 + $0x1208] sm:$0xff]
        %v2366 = vld [vmem:[%s4 + $0x1210] sm:$0xff]
        %v2367 = vld [vmem:[%s4 + $0x1218] sm:$0xff]
        %v2368 = vld [vmem:[%s4 + $0x1220] sm:$0xff]
        %v2369 = vld [vmem:[%s4 + $0x1228] sm:$0xff]
        %v2370 = vld [vmem:[%s4 + $0x1230] sm:$0xff]
        %v2371 = vld [vmem:[%s4 + $0x1238] sm:$0xff]
        %v2372 = vld [vmem:[%s4 + $0x1240] sm:$0xff]
        %v2373 = vld [vmem:[%s4 + $0x1248] sm:$0xff]
        %v2374 = vld [vmem:[%s4 + $0x1250] sm:$0xff]
        %v2375 = vld [vmem:[%s4 + $0x1258] sm:$0xff]
        %v2376 = vld [vmem:[%s4 + $0x1260] sm:$0xff]
        %v2377 = vld [vmem:[%s4 + $0x1268] sm:$0xff]
        %v2378 = vld [vmem:[%s4 + $0x1270] sm:$0xff]
        %v2379 = vld [vmem:[%s4 + $0x1278] sm:$0xff]
        %v2380 = vld [vmem:[%s4 + $0x1280] sm:$0xff]
        %v2381 = vld [vmem:[%s4 + $0x1288] sm:$0xff]
        %v2382 = vld [vmem:[%s4 + $0x1290] sm:$0xff]
        %v2383 = vld [vmem:[%s4 + $0x1298] sm:$0xff]
        %v2384 = vld [vmem:[%s4 + $0x12a0] sm:$0xff]
        %v2385 = vld [vmem:[%s4 + $0x12a8] sm:$0xff]
        %v2386 = vld [vmem:[%s4 + $0x12b0] sm:$0xff]
        %v2387 = vld [vmem:[%s4 + $0x12b8] sm:$0xff]
        %v2388 = vld [vmem:[%s4 + $0x12c0] sm:$0xff]
        %v2389 = vld [vmem:[%s4 + $0x12c8] sm:$0xff]
        %v2390 = vld [vmem:[%s4 + $0x12d0] sm:$0xff]
        %v2391 = vld [vmem:[%s4 + $0x12d8] sm:$0xff]
        %v2392 = vld [vmem:[%s4 + $0x12e0] sm:$0xff]
        %v2393 = vld [vmem:[%s4 + $0x12e8] sm:$0xff]
        %v2394 = vld [vmem:[%s4 + $0x12f0] sm:$0xff]
        %v2395 = vld [vmem:[%s4 + $0x12f8] sm:$0xff]
        %v2396 = vld [vmem:[%s4 + $0x1300] sm:$0xff]
        %v2397 = vld [vmem:[%s4 + $0x1308] sm:$0xff]
        %v2398 = vld [vmem:[%s4 + $0x1310] sm:$0xff]
        %v2399 = vld [vmem:[%s4 + $0x1318] sm:$0xff]
        %v2400 = vld [vmem:[%s4 + $0x1320] sm:$0xff]
        %v2401 = vld [vmem:[%s4 + $0x1328] sm:$0xff]
        %v2402 = vld [vmem:[%s4 + $0x1330] sm:$0xff]
        %v2403 = vld [vmem:[%s4 + $0x1338] sm:$0xff]
        %v2404 = vld [vmem:[%s4 + $0x1340] sm:$0xff]
        %v2405 = vld [vmem:[%s4 + $0x1348] sm:$0xff]
        %v2406 = vld [vmem:[%s4 + $0x1350] sm:$0xff]
        %v2407 = vld [vmem:[%s4 + $0x1358] sm:$0xff]
        %v2408 = vld [vmem:[%s4 + $0x1360] sm:$0xff]
        %v2409 = vld [vmem:[%s4 + $0x1368] sm:$0xff]
        %v2410 = vld [vmem:[%s4 + $0x1370] sm:$0xff]
        %v2411 = vld [vmem:[%s4 + $0x1378] sm:$0xff]
        %v2412 = vld [vmem:[%s4 + $0x1380] sm:$0xff]
        %v2413 = vld [vmem:[%s4 + $0x1388] sm:$0xff]
        %v2414 = vld [vmem:[%s4 + $0x1390] sm:$0xff]
        %v2415 = vld [vmem:[%s4 + $0x1398] sm:$0xff]
        %v2416 = vld [vmem:[%s4 + $0x13a0] sm:$0xff]
        %v2417 = vld [vmem:[%s4 + $0x13a8] sm:$0xff]
        %v2418 = vld [vmem:[%s4 + $0x13b0] sm:$0xff]
        %v2419 = vld [vmem:[%s4 + $0x13b8] sm:$0xff]
        %v2420 = vld [vmem:[%s4 + $0x13c0] sm:$0xff]
        %v2421 = vld [vmem:[%s4 + $0x13c8] sm:$0xff]
        %v2422 = vld [vmem:[%s4 + $0x13d0] sm:$0xff]
        %v2423 = vld [vmem:[%s4 + $0x13d8] sm:$0xff]
        %v2424 = vld [vmem:[%s4 + $0x13e0] sm:$0xff]
        %v2425 = vld [vmem:[%s4 + $0x13e8] sm:$0xff]
        %v2426 = vld [vmem:[%s4 + $0x13f0] sm:$0xff]
        %v2427 = vld [vmem:[%s4 + $0x13f8] sm:$0xff]
        %v2428 = vld [vmem:[%s4 + $0x1400] sm:$0xff]
        %v2429 = vld [vmem:[%s4 + $0x1408] sm:$0xff]
        %v2430 = vld [vmem:[%s4 + $0x1410] sm:$0xff]
        %v2431 = vld [vmem:[%s4 + $0x1418] sm:$0xff]
        %v2432 = vld [vmem:[%s4 + $0x1420] sm:$0xff]
        %v2433 = vld [vmem:[%s4 + $0x1428] sm:$0xff]
        %v2434 = vld [vmem:[%s4 + $0x1430] sm:$0xff]
        %v2435 = vld [vmem:[%s4 + $0x1438] sm:$0xff]
        %v2436 = vld [vmem:[%s4 + $0x1440] sm:$0xff]
        %v2437 = vld [vmem:[%s4 + $0x1448] sm:$0xff]
        %v2438 = vld [vmem:[%s4 + $0x1450] sm:$0xff]
        %v2439 = vld [vmem:[%s4 + $0x1458] sm:$0xff]
        %v2440 = vld [vmem:[%s4 + $0x1460] sm:$0xff]
        %v2441 = vld [vmem:[%s4 + $0x1468] sm:$0xff]
        %v2442 = vld [vmem:[%s4 + $0x1470] sm:$0xff]
        %v2443 = vld [vmem:[%s4 + $0x1478] sm:$0xff]
        %v2444 = vld [vmem:[%s4 + $0x1480] sm:$0xff]
        %v2445 = vld [vmem:[%s4 + $0x1488] sm:$0xff]
        %v2446 = vld [vmem:[%s4 + $0x1490] sm:$0xff]
        %v2447 = vld [vmem:[%s4 + $0x1498] sm:$0xff]
        %v2448 = vld [vmem:[%s4 + $0x14a0] sm:$0xff]
        %v2449 = vld [vmem:[%s4 + $0x14a8] sm:$0xff]
        %v2450 = vld [vmem:[%s4 + $0x14b0] sm:$0xff]
        %v2451 = vld [vmem:[%s4 + $0x14b8] sm:$0xff]
        %v2452 = vld [vmem:[%s4 + $0x14c0] sm:$0xff]
        %v2453 = vld [vmem:[%s4 + $0x14c8] sm:$0xff]
        %v2454 = vld [vmem:[%s4 + $0x14d0] sm:$0xff]
        %v2455 = vld [vmem:[%s4 + $0x14d8] sm:$0xff]
        %v2456 = vld [vmem:[%s4 + $0x14e0] sm:$0xff]
        %v2457 = vld [vmem:[%s4 + $0x14e8] sm:$0xff]
        %v2458 = vld [vmem:[%s4 + $0x14f0] sm:$0xff]
        %v2459 = vld [vmem:[%s4 + $0x14f8] sm:$0xff]
        %v2460 = vld [vmem:[%s4 + $0x1500] sm:$0xff]
        %v2461 = vld [vmem:[%s4 + $0x1508] sm:$0xff]
        %v2462 = vld [vmem:[%s4 + $0x1510] sm:$0xff]
        %v2463 = vld [vmem:[%s4 + $0x1518] sm:$0xff]
        %v2464 = vld [vmem:[%s4 + $0x1520] sm:$0xff]
        %v2465 = vld [vmem:[%s4 + $0x1528] sm:$0xff]
        %v2466 = vld [vmem:[%s4 + $0x1530] sm:$0xff]
        %v2467 = vld [vmem:[%s4 + $0x1538] sm:$0xff]
        %v2468 = vld [vmem:[%s4 + $0x1540] sm:$0xff]
        %v2469 = vld [vmem:[%s4 + $0x1548] sm:$0xff]
        %v2470 = vld [vmem:[%s4 + $0x1550] sm:$0xff]
        %v2471 = vld [vmem:[%s4 + $0x1558] sm:$0xff]
        %v2472 = vld [vmem:[%s4 + $0x1560] sm:$0xff]
        %v2473 = vld [vmem:[%s4 + $0x1568] sm:$0xff]
        %v2474 = vld [vmem:[%s4 + $0x1570] sm:$0xff]
        %v2475 = vld [vmem:[%s4 + $0x1578] sm:$0xff]
        %v2476 = vld [vmem:[%s4 + $0x1580] sm:$0xff]
        %v2477 = vld [vmem:[%s4 + $0x1588] sm:$0xff]
        %v2478 = vld [vmem:[%s4 + $0x1590] sm:$0xff]
        %v2479 = vld [vmem:[%s4 + $0x1598] sm:$0xff]
        %v2480 = vld [vmem:[%s4 + $0x15a0] sm:$0xff]
        %v2481 = vld [vmem:[%s4 + $0x15a8] sm:$0xff]
        %v2482 = vld [vmem:[%s4 + $0x15b0] sm:$0xff]
        %v2483 = vld [vmem:[%s4 + $0x15b8] sm:$0xff]
        %v2484 = vld [vmem:[%s4 + $0x15c0] sm:$0xff]
        %v2485 = vld [vmem:[%s4 + $0x15c8] sm:$0xff]
        %v2486 = vld [vmem:[%s4 + $0x15d0] sm:$0xff]
        %v2487 = vld [vmem:[%s4 + $0x15d8] sm:$0xff]
        %v2488 = vld [vmem:[%s4 + $0x15e0] sm:$0xff]
        %v2489 = vld [vmem:[%s4 + $0x15e8] sm:$0xff]
        %v2490 = vld [vmem:[%s4 + $0x15f0] sm:$0xff]
        %v2491 = vld [vmem:[%s4 + $0x15f8] sm:$0xff]
        %v2492 = vld [vmem:[%s4 + $0x1600] sm:$0xff]
        %v2493 = vld [vmem:[%s4 + $0x1608] sm:$0xff]
        %v2494 = vld [vmem:[%s4 + $0x1610] sm:$0xff]
        %v2495 = vld [vmem:[%s4 + $0x1618] sm:$0xff]
        %v2496 = vld [vmem:[%s4 + $0x1620] sm:$0xff]
        %v2497 = vld [vmem:[%s4 + $0x1628] sm:$0xff]
        %v2498 = vld [vmem:[%s4 + $0x1630] sm:$0xff]
        %v2499 = vld [vmem:[%s4 + $0x1638] sm:$0xff]
        %v2500 = vld [vmem:[%s4 + $0x1640] sm:$0xff]
        %v2501 = vld [vmem:[%s4 + $0x1648] sm:$0xff]
        %v2502 = vld [vmem:[%s4 + $0x1650] sm:$0xff]
        %v2503 = vld [vmem:[%s4 + $0x1658] sm:$0xff]
        %v2504 = vld [vmem:[%s4 + $0x1660] sm:$0xff]
        %v2505 = vld [vmem:[%s4 + $0x1668] sm:$0xff]
        %v2506 = vld [vmem:[%s4 + $0x1670] sm:$0xff]
        %v2507 = vld [vmem:[%s4 + $0x1678] sm:$0xff]
        %v2508 = vld [vmem:[%s4 + $0x1680] sm:$0xff]
        %v2509 = vld [vmem:[%s4 + $0x1688] sm:$0xff]
        %v2510 = vld [vmem:[%s4 + $0x1690] sm:$0xff]
        %v2511 = vld [vmem:[%s4 + $0x1698] sm:$0xff]
        %v2512 = vld [vmem:[%s4 + $0x16a0] sm:$0xff]
        %v2513 = vld [vmem:[%s4 + $0x16a8] sm:$0xff]
        %v2514 = vld [vmem:[%s4 + $0x16b0] sm:$0xff]
        %v2515 = vld [vmem:[%s4 + $0x16b8] sm:$0xff]
        %v2516 = vld [vmem:[%s4 + $0x16c0] sm:$0xff]
        %v2517 = vld [vmem:[%s4 + $0x16c8] sm:$0xff]
        %v2518 = vld [vmem:[%s4 + $0x16d0] sm:$0xff]
        %v2519 = vld [vmem:[%s4 + $0x16d8] sm:$0xff]
        %v2520 = vld [vmem:[%s4 + $0x16e0] sm:$0xff]
        %v2521 = vld [vmem:[%s4 + $0x16e8] sm:$0xff]
        %v2522 = vld [vmem:[%s4 + $0x16f0] sm:$0xff]
        %v2523 = vld [vmem:[%s4 + $0x16f8] sm:$0xff]
        %v2524 = vld [vmem:[%s4 + $0x1700] sm:$0xff]
        %v2525 = vld [vmem:[%s4 + $0x1708] sm:$0xff]
        %v2526 = vld [vmem:[%s4 + $0x1710] sm:$0xff]
        %v2527 = vld [vmem:[%s4 + $0x1718] sm:$0xff]
        %v2528 = vld [vmem:[%s4 + $0x1720] sm:$0xff]
        %v2529 = vld [vmem:[%s4 + $0x1728] sm:$0xff]
        %v2530 = vld [vmem:[%s4 + $0x1730] sm:$0xff]
        %v2531 = vld [vmem:[%s4 + $0x1738] sm:$0xff]
        %v2532 = vld [vmem:[%s4 + $0x1740] sm:$0xff]
        %v2533 = vld [vmem:[%s4 + $0x1748] sm:$0xff]
        %v2534 = vld [vmem:[%s4 + $0x1750] sm:$0xff]
        %v2535 = vld [vmem:[%s4 + $0x1758] sm:$0xff]
        %v2536 = vld [vmem:[%s4 + $0x1760] sm:$0xff]
        %v2537 = vld [vmem:[%s4 + $0x1768] sm:$0xff]
        %v2538 = vld [vmem:[%s4 + $0x1770] sm:$0xff]
        %v2539 = vld [vmem:[%s4 + $0x1778] sm:$0xff]
        %v2540 = vld [vmem:[%s4 + $0x1780] sm:$0xff]
        %v2541 = vld [vmem:[%s4 + $0x1788] sm:$0xff]
        %v2542 = vld [vmem:[%s4 + $0x1790] sm:$0xff]
        %v2543 = vld [vmem:[%s4 + $0x1798] sm:$0xff]
        %v2544 = vld [vmem:[%s4 + $0x17a0] sm:$0xff]
        %v2545 = vld [vmem:[%s4 + $0x17a8] sm:$0xff]
        %v2546 = vld [vmem:[%s4 + $0x17b0] sm:$0xff]
        %v2547 = vld [vmem:[%s4 + $0x17b8] sm:$0xff]
        %v2548 = vld [vmem:[%s4 + $0x17c0] sm:$0xff]
        %v2549 = vld [vmem:[%s4 + $0x17c8] sm:$0xff]
        %v2550 = vld [vmem:[%s4 + $0x17d0] sm:$0xff]
        %v2551 = vld [vmem:[%s4 + $0x17d8] sm:$0xff]
        %v2552 = vld [vmem:[%s4 + $0x17e0] sm:$0xff]
        %v2553 = vld [vmem:[%s4 + $0x17e8] sm:$0xff]
        %v2554 = vld [vmem:[%s4 + $0x17f0] sm:$0xff]
        %v2555 = vld [vmem:[%s4 + $0x17f8] sm:$0xff]
        %v2556 = vld [vmem:[%s4 + $0x1800] sm:$0xff]
        %v2557 = vld [vmem:[%s4 + $0x1808] sm:$0xff]
        %v2558 = vld [vmem:[%s4 + $0x1810] sm:$0xff]
        %v2559 = vld [vmem:[%s4 + $0x1818] sm:$0xff]
        %v2560 = vld [vmem:[%s4 + $0x1820] sm:$0xff]
        %v2561 = vld [vmem:[%s4 + $0x1828] sm:$0xff]
        %v2562 = vld [vmem:[%s4 + $0x1830] sm:$0xff]
        %v2563 = vld [vmem:[%s4 + $0x1838] sm:$0xff]
        %v2564 = vld [vmem:[%s4 + $0x1840] sm:$0xff]
        %v2565 = vld [vmem:[%s4 + $0x1848] sm:$0xff]
        %v2566 = vld [vmem:[%s4 + $0x1850] sm:$0xff]
        %v2567 = vld [vmem:[%s4 + $0x1858] sm:$0xff]
        %v2568 = vld [vmem:[%s4 + $0x1860] sm:$0xff]
        %v2569 = vld [vmem:[%s4 + $0x1868] sm:$0xff]
        %v2570 = vld [vmem:[%s4 + $0x1870] sm:$0xff]
        %v2571 = vld [vmem:[%s4 + $0x1878] sm:$0xff]
        %v2572 = vld [vmem:[%s4 + $0x1880] sm:$0xff]
        %v2573 = vld [vmem:[%s4 + $0x1888] sm:$0xff]
        %v2574 = vld [vmem:[%s4 + $0x1890] sm:$0xff]
        %v2575 = vld [vmem:[%s4 + $0x1898] sm:$0xff]
        %v2576 = vld [vmem:[%s4 + $0x18a0] sm:$0xff]
        %v2577 = vld [vmem:[%s4 + $0x18a8] sm:$0xff]
        %v2578 = vld [vmem:[%s4 + $0x18b0] sm:$0xff]
        %v2579 = vld [vmem:[%s4 + $0x18b8] sm:$0xff]
        %v2580 = vld [vmem:[%s4 + $0x18c0] sm:$0xff]
        %v2581 = vld [vmem:[%s4 + $0x18c8] sm:$0xff]
        %v2582 = vld [vmem:[%s4 + $0x18d0] sm:$0xff]
        %v2583 = vld [vmem:[%s4 + $0x18d8] sm:$0xff]
        %v2584 = vld [vmem:[%s4 + $0x18e0] sm:$0xff]
        %v2585 = vld [vmem:[%s4 + $0x18e8] sm:$0xff]
        %v2586 = vld [vmem:[%s4 + $0x18f0] sm:$0xff]
        %v2587 = vld [vmem:[%s4 + $0x18f8] sm:$0xff]
        %v2588 = vld [vmem:[%s4 + $0x1900] sm:$0xff]
        %v2589 = vld [vmem:[%s4 + $0x1908] sm:$0xff]
        %v2590 = vld [vmem:[%s4 + $0x1910] sm:$0xff]
        %v2591 = vld [vmem:[%s4 + $0x1918] sm:$0xff]
        %v2592 = vld [vmem:[%s4 + $0x1920] sm:$0xff]
        %v2593 = vld [vmem:[%s4 + $0x1928] sm:$0xff]
        %v2594 = vld [vmem:[%s4 + $0x1930] sm:$0xff]
        %v2595 = vld [vmem:[%s4 + $0x1938] sm:$0xff]
        %v2596 = vld [vmem:[%s4 + $0x1940] sm:$0xff]
        %v2597 = vld [vmem:[%s4 + $0x1948] sm:$0xff]
        %v2598 = vld [vmem:[%s4 + $0x1950] sm:$0xff]
        %v2599 = vld [vmem:[%s4 + $0x1958] sm:$0xff]
        %v2600 = vld [vmem:[%s4 + $0x1960] sm:$0xff]
        %v2601 = vld [vmem:[%s4 + $0x1968] sm:$0xff]
        %v2602 = vld [vmem:[%s4 + $0x1970] sm:$0xff]
        %v2603 = vld [vmem:[%s4 + $0x1978] sm:$0xff]
        %v2604 = vld [vmem:[%s4 + $0x1980] sm:$0xff]
        %v2605 = vld [vmem:[%s4 + $0x1988] sm:$0xff]
        %v2606 = vld [vmem:[%s4 + $0x1990] sm:$0xff]
        %v2607 = vld [vmem:[%s4 + $0x1998] sm:$0xff]
        %v2608 = vld [vmem:[%s4 + $0x19a0] sm:$0xff]
        %v2609 = vld [vmem:[%s4 + $0x19a8] sm:$0xff]
        %v2610 = vld [vmem:[%s4 + $0x19b0] sm:$0xff]
        %v2611 = vld [vmem:[%s4 + $0x19b8] sm:$0xff]
        %v2612 = vld [vmem:[%s4 + $0x19c0] sm:$0xff]
        %v2613 = vld [vmem:[%s4 + $0x19c8] sm:$0xff]
        %v2614 = vld [vmem:[%s4 + $0x19d0] sm:$0xff]
        %v2615 = vld [vmem:[%s4 + $0x19d8] sm:$0xff]
        %v2616 = vld [vmem:[%s4 + $0x19e0] sm:$0xff]
        %v2617 = vld [vmem:[%s4 + $0x19e8] sm:$0xff]
        %v2618 = vld [vmem:[%s4 + $0x19f0] sm:$0xff]
        %v2619 = vld [vmem:[%s4 + $0x19f8] sm:$0xff]
        %v2620 = vld [vmem:[%s4 + $0x1a00] sm:$0xff]
        %v2621 = vld [vmem:[%s4 + $0x1a08] sm:$0xff]
        %v2622 = vld [vmem:[%s4 + $0x1a10] sm:$0xff]
        %v2623 = vld [vmem:[%s4 + $0x1a18] sm:$0xff]
        %v2624 = vld [vmem:[%s4 + $0x1a20] sm:$0xff]
        %v2625 = vld [vmem:[%s4 + $0x1a28] sm:$0xff]
        %v2626 = vld [vmem:[%s4 + $0x1a30] sm:$0xff]
        %v2627 = vld [vmem:[%s4 + $0x1a38] sm:$0xff]
        %v2628 = vld [vmem:[%s4 + $0x1a40] sm:$0xff]
        %v2629 = vld [vmem:[%s4 + $0x1a48] sm:$0xff]
        %v2630 = vld [vmem:[%s4 + $0x1a50] sm:$0xff]
        %v2631 = vld [vmem:[%s4 + $0x1a58] sm:$0xff]
        %v2632 = vld [vmem:[%s4 + $0x1a60] sm:$0xff]
        %v2633 = vld [vmem:[%s4 + $0x1a68] sm:$0xff]
        %v2634 = vld [vmem:[%s4 + $0x1a70] sm:$0xff]
        %v2635 = vld [vmem:[%s4 + $0x1a78] sm:$0xff]
        %v2636 = vld [vmem:[%s4 + $0x1a80] sm:$0xff]
        %v2637 = vld [vmem:[%s4 + $0x1a88] sm:$0xff]
        %v2638 = vld [vmem:[%s4 + $0x1a90] sm:$0xff]
        %v2639 = vld [vmem:[%s4 + $0x1a98] sm:$0xff]
        %v2640 = vld [vmem:[%s4 + $0x1aa0] sm:$0xff]
        %v2641 = vld [vmem:[%s4 + $0x1aa8] sm:$0xff]
        %v2642 = vld [vmem:[%s4 + $0x1ab0] sm:$0xff]
        %v2643 = vld [vmem:[%s4 + $0x1ab8] sm:$0xff]
        %v2644 = vld [vmem:[%s4 + $0x1ac0] sm:$0xff]
        %v2645 = vld [vmem:[%s4 + $0x1ac8] sm:$0xff]
        %v2646 = vld [vmem:[%s4 + $0x1ad0] sm:$0xff]
        %v2647 = vld [vmem:[%s4 + $0x1ad8] sm:$0xff]
        %v2648 = vld [vmem:[%s4 + $0x1ae0] sm:$0xff]
        %v2649 = vld [vmem:[%s4 + $0x1ae8] sm:$0xff]
        %v2650 = vld [vmem:[%s4 + $0x1af0] sm:$0xff]
        %v2651 = vld [vmem:[%s4 + $0x1af8] sm:$0xff]
        %v2652 = vld [vmem:[%s4 + $0x1b00] sm:$0xff]
        %v2653 = vld [vmem:[%s4 + $0x1b08] sm:$0xff]
        %v2654 = vld [vmem:[%s4 + $0x1b10] sm:$0xff]
        %v2655 = vld [vmem:[%s4 + $0x1b18] sm:$0xff]
        %v2656 = vld [vmem:[%s4 + $0x1b20] sm:$0xff]
        %v2657 = vld [vmem:[%s4 + $0x1b28] sm:$0xff]
        %v2658 = vld [vmem:[%s4 + $0x1b30] sm:$0xff]
        %v2659 = vld [vmem:[%s4 + $0x1b38] sm:$0xff]
        %v2660 = vld [vmem:[%s4 + $0x1b40] sm:$0xff]
        %v2661 = vld [vmem:[%s4 + $0x1b48] sm:$0xff]
        %v2662 = vld [vmem:[%s4 + $0x1b50] sm:$0xff]
        %v2663 = vld [vmem:[%s4 + $0x1b58] sm:$0xff]
        %v2664 = vld [vmem:[%s4 + $0x1b60] sm:$0xff]
        %v2665 = vld [vmem:[%s4 + $0x1b68] sm:$0xff]
        %v2666 = vld [vmem:[%s4 + $0x1b70] sm:$0xff]
        %v2667 = vld [vmem:[%s4 + $0x1b78] sm:$0xff]
        %v2668 = vld [vmem:[%s4 + $0x1b80] sm:$0xff]
        %v2669 = vld [vmem:[%s4 + $0x1b88] sm:$0xff]
        %v2670 = vld [vmem:[%s4 + $0x1b90] sm:$0xff]
        %v2671 = vld [vmem:[%s4 + $0x1b98] sm:$0xff]
        %v2672 = vld [vmem:[%s4 + $0x1ba0] sm:$0xff]
        %v2673 = vld [vmem:[%s4 + $0x1ba8] sm:$0xff]
        %v2674 = vld [vmem:[%s4 + $0x1bb0] sm:$0xff]
        %v2675 = vld [vmem:[%s4 + $0x1bb8] sm:$0xff]
        %v2676 = vld [vmem:[%s4 + $0x1bc0] sm:$0xff]
        %v2677 = vld [vmem:[%s4 + $0x1bc8] sm:$0xff]
        %v2678 = vld [vmem:[%s4 + $0x1bd0] sm:$0xff]
        %v2679 = vld [vmem:[%s4 + $0x1bd8] sm:$0xff]
        %v2680 = vld [vmem:[%s4 + $0x1be0] sm:$0xff]
        %v2681 = vld [vmem:[%s4 + $0x1be8] sm:$0xff]
        %v2682 = vld [vmem:[%s4 + $0x1bf0] sm:$0xff]
        %v2683 = vld [vmem:[%s4 + $0x1bf8] sm:$0xff]
        %v2684 = vld [vmem:[%s4 + $0x1c00] sm:$0xff]
        %v2685 = vld [vmem:[%s4 + $0x1c08] sm:$0xff]
        %v2686 = vld [vmem:[%s4 + $0x1c10] sm:$0xff]
        %v2687 = vld [vmem:[%s4 + $0x1c18] sm:$0xff]
        %v2688 = vld [vmem:[%s4 + $0x1c20] sm:$0xff]
        %v2689 = vld [vmem:[%s4 + $0x1c28] sm:$0xff]
        %v2690 = vld [vmem:[%s4 + $0x1c30] sm:$0xff]
        %v2691 = vld [vmem:[%s4 + $0x1c38] sm:$0xff]
        %v2692 = vld [vmem:[%s4 + $0x1c40] sm:$0xff]
        %v2693 = vld [vmem:[%s4 + $0x1c48] sm:$0xff]
        %v2694 = vld [vmem:[%s4 + $0x1c50] sm:$0xff]
        %v2695 = vld [vmem:[%s4 + $0x1c58] sm:$0xff]
        %v2696 = vld [vmem:[%s4 + $0x1c60] sm:$0xff]
        %v2697 = vld [vmem:[%s4 + $0x1c68] sm:$0xff]
        %v2698 = vld [vmem:[%s4 + $0x1c70] sm:$0xff]
        %v2699 = vld [vmem:[%s4 + $0x1c78] sm:$0xff]
        %v2700 = vld [vmem:[%s4 + $0x1c80] sm:$0xff]
        %v2701 = vld [vmem:[%s4 + $0x1c88] sm:$0xff]
        %v2702 = vld [vmem:[%s4 + $0x1c90] sm:$0xff]
        %v2703 = vld [vmem:[%s4 + $0x1c98] sm:$0xff]
        %v2704 = vld [vmem:[%s4 + $0x1ca0] sm:$0xff]
        %v2705 = vld [vmem:[%s4 + $0x1ca8] sm:$0xff]
        %v2706 = vld [vmem:[%s4 + $0x1cb0] sm:$0xff]
        %v2707 = vld [vmem:[%s4 + $0x1cb8] sm:$0xff]
        %v2708 = vld [vmem:[%s4 + $0x1cc0] sm:$0xff]
        %v2709 = vld [vmem:[%s4 + $0x1cc8] sm:$0xff]
        %v2710 = vld [vmem:[%s4 + $0x1cd0] sm:$0xff]
        %v2711 = vld [vmem:[%s4 + $0x1cd8] sm:$0xff]
        %v2712 = vld [vmem:[%s4 + $0x1ce0] sm:$0xff]
        %v2713 = vld [vmem:[%s4 + $0x1ce8] sm:$0xff]
        %v2714 = vld [vmem:[%s4 + $0x1cf0] sm:$0xff]
        %v2715 = vld [vmem:[%s4 + $0x1cf8] sm:$0xff]
        %v2716 = vld [vmem:[%s4 + $0x1d00] sm:$0xff]
        %v2717 = vld [vmem:[%s4 + $0x1d08] sm:$0xff]
        %v2718 = vld [vmem:[%s4 + $0x1d10] sm:$0xff]
        %v2719 = vld [vmem:[%s4 + $0x1d18] sm:$0xff]
        %v2720 = vld [vmem:[%s4 + $0x1d20] sm:$0xff]
        %v2721 = vld [vmem:[%s4 + $0x1d28] sm:$0xff]
        %v2722 = vld [vmem:[%s4 + $0x1d30] sm:$0xff]
        %v2723 = vld [vmem:[%s4 + $0x1d38] sm:$0xff]
        %v2724 = vld [vmem:[%s4 + $0x1d40] sm:$0xff]
        %v2725 = vld [vmem:[%s4 + $0x1d48] sm:$0xff]
        %v2726 = vld [vmem:[%s4 + $0x1d50] sm:$0xff]
        %v2727 = vld [vmem:[%s4 + $0x1d58] sm:$0xff]
        %v2728 = vld [vmem:[%s4 + $0x1d60] sm:$0xff]
        %v2729 = vld [vmem:[%s4 + $0x1d68] sm:$0xff]
        %v2730 = vld [vmem:[%s4 + $0x1d70] sm:$0xff]
        %v2731 = vld [vmem:[%s4 + $0x1d78] sm:$0xff]
        %v2732 = vld [vmem:[%s4 + $0x1d80] sm:$0xff]
        %v2733 = vld [vmem:[%s4 + $0x1d88] sm:$0xff]
        %v2734 = vld [vmem:[%s4 + $0x1d90] sm:$0xff]
        %v2735 = vld [vmem:[%s4 + $0x1d98] sm:$0xff]
        %v2736 = vld [vmem:[%s4 + $0x1da0] sm:$0xff]
        %v2737 = vld [vmem:[%s4 + $0x1da8] sm:$0xff]
        %v2738 = vld [vmem:[%s4 + $0x1db0] sm:$0xff]
        %v2739 = vld [vmem:[%s4 + $0x1db8] sm:$0xff]
        %v2740 = vld [vmem:[%s4 + $0x1dc0] sm:$0xff]
        %v2741 = vld [vmem:[%s4 + $0x1dc8] sm:$0xff]
        %v2742 = vld [vmem:[%s4 + $0x1dd0] sm:$0xff]
        %v2743 = vld [vmem:[%s4 + $0x1dd8] sm:$0xff]
        %v2744 = vld [vmem:[%s4 + $0x1de0] sm:$0xff]
        %v2745 = vld [vmem:[%s4 + $0x1de8] sm:$0xff]
        %v2746 = vld [vmem:[%s4 + $0x1df0] sm:$0xff]
        %v2747 = vld [vmem:[%s4 + $0x1df8] sm:$0xff]
        %v2748 = vld [vmem:[%s4 + $0x1e00] sm:$0xff]
        %v2749 = vld [vmem:[%s4 + $0x1e08] sm:$0xff]
        %v2750 = vld [vmem:[%s4 + $0x1e10] sm:$0xff]
        %v2751 = vld [vmem:[%s4 + $0x1e18] sm:$0xff]
        %v2752 = vld [vmem:[%s4 + $0x1e20] sm:$0xff]
        %v2753 = vld [vmem:[%s4 + $0x1e28] sm:$0xff]
        %v2754 = vld [vmem:[%s4 + $0x1e30] sm:$0xff]
        %v2755 = vld [vmem:[%s4 + $0x1e38] sm:$0xff]
        %v2756 = vld [vmem:[%s4 + $0x1e40] sm:$0xff]
        %v2757 = vld [vmem:[%s4 + $0x1e48] sm:$0xff]
        %v2758 = vld [vmem:[%s4 + $0x1e50] sm:$0xff]
        %v2759 = vld [vmem:[%s4 + $0x1e58] sm:$0xff]
        %v2760 = vld [vmem:[%s4 + $0x1e60] sm:$0xff]
        %v2761 = vld [vmem:[%s4 + $0x1e68] sm:$0xff]
        %v2762 = vld [vmem:[%s4 + $0x1e70] sm:$0xff]
        %v2763 = vld [vmem:[%s4 + $0x1e78] sm:$0xff]
        %v2764 = vld [vmem:[%s4 + $0x1e80] sm:$0xff]
        %v2765 = vld [vmem:[%s4 + $0x1e88] sm:$0xff]
        %v2766 = vld [vmem:[%s4 + $0x1e90] sm:$0xff]
        %v2767 = vld [vmem:[%s4 + $0x1e98] sm:$0xff]
        %v2768 = vld [vmem:[%s4 + $0x1ea0] sm:$0xff]
        %v2769 = vld [vmem:[%s4 + $0x1ea8] sm:$0xff]
        %v2770 = vld [vmem:[%s4 + $0x1eb0] sm:$0xff]
        %v2771 = vld [vmem:[%s4 + $0x1eb8] sm:$0xff]
        %v2772 = vld [vmem:[%s4 + $0x1ec0] sm:$0xff]
        %v2773 = vld [vmem:[%s4 + $0x1ec8] sm:$0xff]
        %v2774 = vld [vmem:[%s4 + $0x1ed0] sm:$0xff]
        %v2775 = vld [vmem:[%s4 + $0x1ed8] sm:$0xff]
        %v2776 = vld [vmem:[%s4 + $0x1ee0] sm:$0xff]
        %v2777 = vld [vmem:[%s4 + $0x1ee8] sm:$0xff]
        %v2778 = vld [vmem:[%s4 + $0x1ef0] sm:$0xff]
        %v2779 = vld [vmem:[%s4 + $0x1ef8] sm:$0xff]
        %v2780 = vld [vmem:[%s4 + $0x1f00] sm:$0xff]
        %v2781 = vld [vmem:[%s4 + $0x1f08] sm:$0xff]
        %v2782 = vld [vmem:[%s4 + $0x1f10] sm:$0xff]
        %v2783 = vld [vmem:[%s4 + $0x1f18] sm:$0xff]
        %v2784 = vld [vmem:[%s4 + $0x1f20] sm:$0xff]
        %v2785 = vld [vmem:[%s4 + $0x1f28] sm:$0xff]
        %v2786 = vld [vmem:[%s4 + $0x1f30] sm:$0xff]
        %v2787 = vld [vmem:[%s4 + $0x1f38] sm:$0xff]
        %v2788 = vld [vmem:[%s4 + $0x1f40] sm:$0xff]
        %v2789 = vld [vmem:[%s4 + $0x1f48] sm:$0xff]
        %v2790 = vld [vmem:[%s4 + $0x1f50] sm:$0xff]
        %v2791 = vld [vmem:[%s4 + $0x1f58] sm:$0xff]
        %v2792 = vld [vmem:[%s4 + $0x1f60] sm:$0xff]
        %v2793 = vld [vmem:[%s4 + $0x1f68] sm:$0xff]
        %v2794 = vld [vmem:[%s4 + $0x1f70] sm:$0xff]
        %v2795 = vld [vmem:[%s4 + $0x1f78] sm:$0xff]
        %v2796 = vld [vmem:[%s4 + $0x1f80] sm:$0xff]
        %v2797 = vld [vmem:[%s4 + $0x1f88] sm:$0xff]
        %v2798 = vld [vmem:[%s4 + $0x1f90] sm:$0xff]
        %v2799 = vld [vmem:[%s4 + $0x1f98] sm:$0xff]
        %v2800 = vld [vmem:[%s4 + $0x1fa0] sm:$0xff]
        %v2801 = vld [vmem:[%s4 + $0x1fa8] sm:$0xff]
        %v2802 = vld [vmem:[%s4 + $0x1fb0] sm:$0xff]
        %v2803 = vld [vmem:[%s4 + $0x1fb8] sm:$0xff]
        %v2804 = vld [vmem:[%s4 + $0x1fc0] sm:$0xff]
        %v2805 = vld [vmem:[%s4 + $0x1fc8] sm:$0xff]
        %v2806 = vld [vmem:[%s4 + $0x1fd0] sm:$0xff]
        %v2807 = vld [vmem:[%s4 + $0x1fd8] sm:$0xff]
        %v2808 = vld [vmem:[%s4 + $0x1fe0] sm:$0xff]
        %v2809 = vld [vmem:[%s4 + $0x1fe8] sm:$0xff]
        %v2810 = vld [vmem:[%s4 + $0x1ff0] sm:$0xff]
        %v2811 = vld [vmem:[%s4 + $0x1ff8] sm:$0xff]
        %v2812 = vld [vmem:[%s7] sm:$0xff]
        %v2814 = vsel %vm1705, %v1779, 0
        %2816 = vmatprep.subr.mxu0 0.0
        %2817 = vmatpush1.msra.mxu0 %v2812
        %2818 = vmatprep.subr.mxu0 0.0
        %2819 = vmatpush1.msra.mxu0 0.0
        %2820 = vmatprep.subr.mxu0 0.0
        %2821 = vmatpush1.msra.mxu0 0.0
        %2822 = vmatprep.subr.mxu0 0.0
        %2823 = vmatpush1.msra.mxu0 0.0
        %2824 = vmatprep.subr.mxu0 0.0
        %2825 = vmatpush1.msra.mxu0 0.0
        %2826 = vmatprep.subr.mxu0 0.0
        %2827 = vmatpush1.msra.mxu0 0.0
        %2828 = vmatprep.subr.mxu0 0.0
        %2829 = vmatpush1.msra.mxu0 0.0
        %2830 = vmatprep.subr.mxu0 0.0
        %2831 = vmatpush1.msra.mxu0 0.0
        %2832 = vmatprep.subr.mxu0 0.0
        %2833 = vmatpush1.msra.mxu0 0.0
        %2834 = vmatprep.subr.mxu0 0.0
        %2835 = vmatpush1.msra.mxu0 0.0
        %2836 = vmatprep.subr.mxu0 0.0
        %2837 = vmatpush1.msra.mxu0 0.0
        %2838 = vmatprep.subr.mxu0 0.0
        %2839 = vmatpush1.msra.mxu0 0.0
        %2840 = vmatprep.subr.mxu0 0.0
        %2841 = vmatpush1.msra.mxu0 0.0
        %2842 = vmatprep.subr.mxu0 0.0
        %2843 = vmatpush1.msra.mxu0 0.0
        %2844 = vmatprep.subr.mxu0 0.0
        %2845 = vmatpush1.msra.mxu0 0.0
        %2846 = vmatprep.subr.mxu0 0.0
        %2847 = vmatpush1.msra.mxu0 0.0
        %2848 = vmatprep.subr.mxu0 0.0
        %2849 = vmatpush1.msra.mxu0 0.0
        %2850 = vmatprep.subr.mxu0 0.0
        %2851 = vmatpush1.msra.mxu0 0.0
        %2852 = vmatprep.subr.mxu0 0.0
        %2853 = vmatpush1.msra.mxu0 0.0
        %2854 = vmatprep.subr.mxu0 0.0
        %2855 = vmatpush1.msra.mxu0 0.0
        %2856 = vmatprep.subr.mxu0 0.0
        %2857 = vmatpush1.msra.mxu0 0.0
        %2858 = vmatprep.subr.mxu0 0.0
        %2859 = vmatpush1.msra.mxu0 0.0
        %2860 = vmatprep.subr.mxu0 0.0
        %2861 = vmatpush1.msra.mxu0 0.0
        %2862 = vmatprep.subr.mxu0 0.0
        %2863 = vmatpush1.msra.mxu0 0.0
        %2864 = vmatprep.subr.mxu0 0.0
        %2865 = vmatpush1.msra.mxu0 0.0
        %2866 = vmatprep.subr.mxu0 0.0
        %2867 = vmatpush1.msra.mxu0 0.0
        %2868 = vmatprep.subr.mxu0 0.0
        %2869 = vmatpush1.msra.mxu0 0.0
        %2870 = vmatprep.subr.mxu0 0.0
        %2871 = vmatpush1.msra.mxu0 0.0
        %2872 = vmatprep.subr.mxu0 0.0
        %2873 = vmatpush1.msra.mxu0 0.0
        %2874 = vmatprep.subr.mxu0 0.0
        %2875 = vmatpush1.msra.mxu0 0.0
        %2876 = vmatprep.subr.mxu0 0.0
        %2877 = vmatpush1.msra.mxu0 0.0
        %2878 = vmatprep.subr.mxu0 0.0
        %2879 = vmatpush1.msra.mxu0 0.0
        %2880 = vmatprep.mubr.f32.mxu0 0.0
        %2881 = vmatmul.mubr.f32.gmra.mrb[0].mxu0 %v2814
        %v2882 = vpop.f32.mrb[0].mxu0
        %v2883 = vadd.f32 0.0, %v2882
        %v2884 = vpop.f32.mrb[0].mxu0
        %2885 = vdwg.mxu0
        %v2894 = vlaneseq
        %v2895 = vshrl.u32 %v2894, 7
        %v2896 = vsub.s32 0, %v2895
        %v2897 = vrot.slane %v1780, %v2896
        %v2898 = vlaneseq
        %v2899 = vshrl.u32 %v2898, 7
        %v2900 = vsub.s32 1, %v2899
        %v2901 = vrot.slane %v1780, %v2900
        %v2902 = vlaneseq
        %v2903 = vshrl.u32 %v2902, 7
        %v2904 = vsub.s32 2, %v2903
        %v2905 = vrot.slane %v1780, %v2904
        %v2906 = vlaneseq
        %v2907 = vshrl.u32 %v2906, 7
        %v2908 = vsub.s32 3, %v2907
        %v2909 = vrot.slane %v1780, %v2908
        %v2910 = vlaneseq
        %v2911 = vshrl.u32 %v2910, 7
        %v2912 = vsub.s32 4, %v2911
        %v2913 = vrot.slane %v1780, %v2912
        %v2914 = vlaneseq
        %v2915 = vshrl.u32 %v2914, 7
        %v2916 = vsub.s32 5, %v2915
        %v2917 = vrot.slane %v1780, %v2916
        %v2918 = vlaneseq
        %v2919 = vshrl.u32 %v2918, 7
        %v2920 = vsub.s32 6, %v2919
        %v2921 = vrot.slane %v1780, %v2920
        %v2922 = vlaneseq
        %v2923 = vshrl.u32 %v2922, 7
        %v2924 = vsub.s32 7, %v2923
        %v2925 = vrot.slane %v1780, %v2924
        %v2926 = vlaneseq
        %v2927 = vshrl.u32 %v2926, 7
        %v2928 = vsub.s32 0, %v2927
        %v2929 = vrot.slane %v1781, %v2928
        %v2930 = vlaneseq
        %v2931 = vshrl.u32 %v2930, 7
        %v2932 = vsub.s32 1, %v2931
        %v2933 = vrot.slane %v1781, %v2932
        %v2934 = vlaneseq
        %v2935 = vshrl.u32 %v2934, 7
        %v2936 = vsub.s32 2, %v2935
        %v2937 = vrot.slane %v1781, %v2936
        %v2938 = vlaneseq
        %v2939 = vshrl.u32 %v2938, 7
        %v2940 = vsub.s32 3, %v2939
        %v2941 = vrot.slane %v1781, %v2940
        %v2942 = vlaneseq
        %v2943 = vshrl.u32 %v2942, 7
        %v2944 = vsub.s32 4, %v2943
        %v2945 = vrot.slane %v1781, %v2944
        %v2946 = vlaneseq
        %v2947 = vshrl.u32 %v2946, 7
        %v2948 = vsub.s32 5, %v2947
        %v2949 = vrot.slane %v1781, %v2948
        %v2950 = vlaneseq
        %v2951 = vshrl.u32 %v2950, 7
        %v2952 = vsub.s32 6, %v2951
        %v2953 = vrot.slane %v1781, %v2952
        %v2954 = vlaneseq
        %v2955 = vshrl.u32 %v2954, 7
        %v2956 = vsub.s32 7, %v2955
        %v2957 = vrot.slane %v1781, %v2956
        %v2958 = vlaneseq
        %v2959 = vshrl.u32 %v2958, 7
        %v2960 = vsub.s32 0, %v2959
        %v2961 = vrot.slane %v1782, %v2960
        %v2962 = vlaneseq
        %v2963 = vshrl.u32 %v2962, 7
        %v2964 = vsub.s32 1, %v2963
        %v2965 = vrot.slane %v1782, %v2964
        %v2966 = vlaneseq
        %v2967 = vshrl.u32 %v2966, 7
        %v2968 = vsub.s32 2, %v2967
        %v2969 = vrot.slane %v1782, %v2968
        %v2970 = vlaneseq
        %v2971 = vshrl.u32 %v2970, 7
        %v2972 = vsub.s32 3, %v2971
        %v2973 = vrot.slane %v1782, %v2972
        %v2974 = vlaneseq
        %v2975 = vshrl.u32 %v2974, 7
        %v2976 = vsub.s32 4, %v2975
        %v2977 = vrot.slane %v1782, %v2976
        %v2978 = vlaneseq
        %v2979 = vshrl.u32 %v2978, 7
        %v2980 = vsub.s32 5, %v2979
        %v2981 = vrot.slane %v1782, %v2980
        %v2982 = vlaneseq
        %v2983 = vshrl.u32 %v2982, 7
        %v2984 = vsub.s32 6, %v2983
        %v2985 = vrot.slane %v1782, %v2984
        %v2986 = vlaneseq
        %v2987 = vshrl.u32 %v2986, 7
        %v2988 = vsub.s32 7, %v2987
        %v2989 = vrot.slane %v1782, %v2988
        %v2990 = vlaneseq
        %v2991 = vshrl.u32 %v2990, 7
        %v2992 = vsub.s32 0, %v2991
        %v2993 = vrot.slane %v1783, %v2992
        %v2994 = vlaneseq
        %v2995 = vshrl.u32 %v2994, 7
        %v2996 = vsub.s32 1, %v2995
        %v2997 = vrot.slane %v1783, %v2996
        %v2998 = vlaneseq
        %v2999 = vshrl.u32 %v2998, 7
        %v3000 = vsub.s32 2, %v2999
        %v3001 = vrot.slane %v1783, %v3000
        %v3002 = vlaneseq
        %v3003 = vshrl.u32 %v3002, 7
        %v3004 = vsub.s32 3, %v3003
        %v3005 = vrot.slane %v1783, %v3004
        %v3006 = vlaneseq
        %v3007 = vshrl.u32 %v3006, 7
        %v3008 = vsub.s32 4, %v3007
        %v3009 = vrot.slane %v1783, %v3008
        %v3010 = vlaneseq
        %v3011 = vshrl.u32 %v3010, 7
        %v3012 = vsub.s32 5, %v3011
        %v3013 = vrot.slane %v1783, %v3012
        %v3014 = vlaneseq
        %v3015 = vshrl.u32 %v3014, 7
        %v3016 = vsub.s32 6, %v3015
        %v3017 = vrot.slane %v1783, %v3016
        %v3018 = vlaneseq
        %v3019 = vshrl.u32 %v3018, 7
        %v3020 = vsub.s32 7, %v3019
        %v3021 = vrot.slane %v1783, %v3020
        %v3022 = vlaneseq
        %v3023 = vshrl.u32 %v3022, 7
        %v3024 = vsub.s32 0, %v3023
        %v3025 = vrot.slane %v1784, %v3024
        %v3026 = vlaneseq
        %v3027 = vshrl.u32 %v3026, 7
        %v3028 = vsub.s32 1, %v3027
        %v3029 = vrot.slane %v1784, %v3028
        %v3030 = vlaneseq
        %v3031 = vshrl.u32 %v3030, 7
        %v3032 = vsub.s32 2, %v3031
        %v3033 = vrot.slane %v1784, %v3032
        %v3034 = vlaneseq
        %v3035 = vshrl.u32 %v3034, 7
        %v3036 = vsub.s32 3, %v3035
        %v3037 = vrot.slane %v1784, %v3036
        %v3038 = vlaneseq
        %v3039 = vshrl.u32 %v3038, 7
        %v3040 = vsub.s32 4, %v3039
        %v3041 = vrot.slane %v1784, %v3040
        %v3042 = vlaneseq
        %v3043 = vshrl.u32 %v3042, 7
        %v3044 = vsub.s32 5, %v3043
        %v3045 = vrot.slane %v1784, %v3044
        %v3046 = vlaneseq
        %v3047 = vshrl.u32 %v3046, 7
        %v3048 = vsub.s32 6, %v3047
        %v3049 = vrot.slane %v1784, %v3048
        %v3050 = vlaneseq
        %v3051 = vshrl.u32 %v3050, 7
        %v3052 = vsub.s32 7, %v3051
        %v3053 = vrot.slane %v1784, %v3052
        %v3054 = vlaneseq
        %v3055 = vshrl.u32 %v3054, 7
        %v3056 = vsub.s32 0, %v3055
        %v3057 = vrot.slane %v1785, %v3056
        %v3058 = vlaneseq
        %v3059 = vshrl.u32 %v3058, 7
        %v3060 = vsub.s32 1, %v3059
        %v3061 = vrot.slane %v1785, %v3060
        %v3062 = vlaneseq
        %v3063 = vshrl.u32 %v3062, 7
        %v3064 = vsub.s32 2, %v3063
        %v3065 = vrot.slane %v1785, %v3064
        %v3066 = vlaneseq
        %v3067 = vshrl.u32 %v3066, 7
        %v3068 = vsub.s32 3, %v3067
        %v3069 = vrot.slane %v1785, %v3068
        %v3070 = vlaneseq
        %v3071 = vshrl.u32 %v3070, 7
        %v3072 = vsub.s32 4, %v3071
        %v3073 = vrot.slane %v1785, %v3072
        %v3074 = vlaneseq
        %v3075 = vshrl.u32 %v3074, 7
        %v3076 = vsub.s32 5, %v3075
        %v3077 = vrot.slane %v1785, %v3076
        %v3078 = vlaneseq
        %v3079 = vshrl.u32 %v3078, 7
        %v3080 = vsub.s32 6, %v3079
        %v3081 = vrot.slane %v1785, %v3080
        %v3082 = vlaneseq
        %v3083 = vshrl.u32 %v3082, 7
        %v3084 = vsub.s32 7, %v3083
        %v3085 = vrot.slane %v1785, %v3084
        %v3086 = vlaneseq
        %v3087 = vshrl.u32 %v3086, 7
        %v3088 = vsub.s32 0, %v3087
        %v3089 = vrot.slane %v1786, %v3088
        %v3090 = vlaneseq
        %v3091 = vshrl.u32 %v3090, 7
        %v3092 = vsub.s32 1, %v3091
        %v3093 = vrot.slane %v1786, %v3092
        %v3094 = vlaneseq
        %v3095 = vshrl.u32 %v3094, 7
        %v3096 = vsub.s32 2, %v3095
        %v3097 = vrot.slane %v1786, %v3096
        %v3098 = vlaneseq
        %v3099 = vshrl.u32 %v3098, 7
        %v3100 = vsub.s32 3, %v3099
        %v3101 = vrot.slane %v1786, %v3100
        %v3102 = vlaneseq
        %v3103 = vshrl.u32 %v3102, 7
        %v3104 = vsub.s32 4, %v3103
        %v3105 = vrot.slane %v1786, %v3104
        %v3106 = vlaneseq
        %v3107 = vshrl.u32 %v3106, 7
        %v3108 = vsub.s32 5, %v3107
        %v3109 = vrot.slane %v1786, %v3108
        %v3110 = vlaneseq
        %v3111 = vshrl.u32 %v3110, 7
        %v3112 = vsub.s32 6, %v3111
        %v3113 = vrot.slane %v1786, %v3112
        %v3114 = vlaneseq
        %v3115 = vshrl.u32 %v3114, 7
        %v3116 = vsub.s32 7, %v3115
        %v3117 = vrot.slane %v1786, %v3116
        %v3118 = vlaneseq
        %v3119 = vshrl.u32 %v3118, 7
        %v3120 = vsub.s32 0, %v3119
        %v3121 = vrot.slane %v1787, %v3120
        %v3122 = vlaneseq
        %v3123 = vshrl.u32 %v3122, 7
        %v3124 = vsub.s32 1, %v3123
        %v3125 = vrot.slane %v1787, %v3124
        %v3126 = vlaneseq
        %v3127 = vshrl.u32 %v3126, 7
        %v3128 = vsub.s32 2, %v3127
        %v3129 = vrot.slane %v1787, %v3128
        %v3130 = vlaneseq
        %v3131 = vshrl.u32 %v3130, 7
        %v3132 = vsub.s32 3, %v3131
        %v3133 = vrot.slane %v1787, %v3132
        %v3134 = vlaneseq
        %v3135 = vshrl.u32 %v3134, 7
        %v3136 = vsub.s32 4, %v3135
        %v3137 = vrot.slane %v1787, %v3136
        %v3138 = vlaneseq
        %v3139 = vshrl.u32 %v3138, 7
        %v3140 = vsub.s32 5, %v3139
        %v3141 = vrot.slane %v1787, %v3140
        %v3142 = vlaneseq
        %v3143 = vshrl.u32 %v3142, 7
        %v3144 = vsub.s32 6, %v3143
        %v3145 = vrot.slane %v1787, %v3144
        %v3146 = vlaneseq
        %v3147 = vshrl.u32 %v3146, 7
        %v3148 = vsub.s32 7, %v3147
        %v3149 = vrot.slane %v1787, %v3148
        %3214 = vmatprep.subr.mxu0 0.0
        %3215 = vmatpush1.msra.mxu0 %v1788
        %3216 = vmatprep.subr.mxu0 0.0
        %3217 = vmatpush1.msra.mxu0 %v1789
        %3218 = vmatprep.subr.mxu0 0.0
        %3219 = vmatpush1.msra.mxu0 %v1790
        %3220 = vmatprep.subr.mxu0 0.0
        %3221 = vmatpush1.msra.mxu0 %v1791
        %3222 = vmatprep.subr.mxu0 0.0
        %3223 = vmatpush1.msra.mxu0 %v1792
        %3224 = vmatprep.subr.mxu0 0.0
        %3225 = vmatpush1.msra.mxu0 %v1793
        %3226 = vmatprep.subr.mxu0 0.0
        %3227 = vmatpush1.msra.mxu0 %v1794
        %3228 = vmatprep.subr.mxu0 0.0
        %3229 = vmatpush1.msra.mxu0 %v1795
        %3230 = vmatprep.subr.mxu0 0.0
        %3231 = vmatpush1.msra.mxu0 %v1796
        %3232 = vmatprep.subr.mxu0 0.0
        %3233 = vmatpush1.msra.mxu0 %v1797
        %3234 = vmatprep.subr.mxu0 0.0
        %3235 = vmatpush1.msra.mxu0 %v1798
        %3236 = vmatprep.subr.mxu0 0.0
        %3237 = vmatpush1.msra.mxu0 %v1799
        %3238 = vmatprep.subr.mxu0 0.0
        %3239 = vmatpush1.msra.mxu0 %v1800
        %3240 = vmatprep.subr.mxu0 0.0
        %3241 = vmatpush1.msra.mxu0 %v1801
        %3242 = vmatprep.subr.mxu0 0.0
        %3243 = vmatpush1.msra.mxu0 %v1802
        %3244 = vmatprep.subr.mxu0 0.0
        %3245 = vmatpush1.msra.mxu0 %v1803
        %3246 = vmatprep.subr.mxu0 0.0
        %3247 = vmatpush1.msra.mxu0 %v1804
        %3248 = vmatprep.subr.mxu0 0.0
        %3249 = vmatpush1.msra.mxu0 %v1805
        %3250 = vmatprep.subr.mxu0 0.0
        %3251 = vmatpush1.msra.mxu0 %v1806
        %3252 = vmatprep.subr.mxu0 0.0
        %3253 = vmatpush1.msra.mxu0 %v1807
        %3254 = vmatprep.subr.mxu0 0.0
        %3255 = vmatpush1.msra.mxu0 %v1808
        %3256 = vmatprep.subr.mxu0 0.0
        %3257 = vmatpush1.msra.mxu0 %v1809
        %3258 = vmatprep.subr.mxu0 0.0
        %3259 = vmatpush1.msra.mxu0 %v1810
        %3260 = vmatprep.subr.mxu0 0.0
        %3261 = vmatpush1.msra.mxu0 %v1811
        %3262 = vmatprep.subr.mxu0 0.0
        %3263 = vmatpush1.msra.mxu0 %v1812
        %3264 = vmatprep.subr.mxu0 0.0
        %3265 = vmatpush1.msra.mxu0 %v1813
        %3266 = vmatprep.subr.mxu0 0.0
        %3267 = vmatpush1.msra.mxu0 %v1814
        %3268 = vmatprep.subr.mxu0 0.0
        %3269 = vmatpush1.msra.mxu0 %v1815
        %3270 = vmatprep.subr.mxu0 0.0
        %3271 = vmatpush1.msra.mxu0 %v1816
        %3272 = vmatprep.subr.mxu0 0.0
        %3273 = vmatpush1.msra.mxu0 %v1817
        %3274 = vmatprep.subr.mxu0 0.0
        %3275 = vmatpush1.msra.mxu0 %v1818
        %3276 = vmatprep.subr.mxu0 0.0
        %3277 = vmatpush1.msra.mxu0 %v1819
        %3278 = vmatprep.mubr.f32.mxu0 %v2901
        %3279 = vmatmul.mubr.f32.gmra.mrb[0].mxu0 %v2897
        %v3280 = vpop.f32.mrb[0].mxu0
        %v3281 = vadd.f32 %v2883, %v3280
        %v3282 = vpop.f32.mrb[0].mxu0
        %3283 = vdwg.mxu0
        %3284 = vmatprep.subr.mxu0 0.0
        %3285 = vmatpush1.msra.mxu0 %v1820
        %3286 = vmatprep.subr.mxu0 0.0
        %3287 = vmatpush1.msra.mxu0 %v1821
        %3288 = vmatprep.subr.mxu0 0.0
        %3289 = vmatpush1.msra.mxu0 %v1822
        %3290 = vmatprep.subr.mxu0 0.0
        %3291 = vmatpush1.msra.mxu0 %v1823
        %3292 = vmatprep.subr.mxu0 0.0
        %3293 = vmatpush1.msra.mxu0 %v1824
        %3294 = vmatprep.subr.mxu0 0.0
        %3295 = vmatpush1.msra.mxu0 %v1825
        %3296 = vmatprep.subr.mxu0 0.0
        %3297 = vmatpush1.msra.mxu0 %v1826
        %3298 = vmatprep.subr.mxu0 0.0
        %3299 = vmatpush1.msra.mxu0 %v1827
        %3300 = vmatprep.subr.mxu0 0.0
        %3301 = vmatpush1.msra.mxu0 %v1828
        %3302 = vmatprep.subr.mxu0 0.0
        %3303 = vmatpush1.msra.mxu0 %v1829
        %3304 = vmatprep.subr.mxu0 0.0
        %3305 = vmatpush1.msra.mxu0 %v1830
        %3306 = vmatprep.subr.mxu0 0.0
        %3307 = vmatpush1.msra.mxu0 %v1831
        %3308 = vmatprep.subr.mxu0 0.0
        %3309 = vmatpush1.msra.mxu0 %v1832
        %3310 = vmatprep.subr.mxu0 0.0
        %3311 = vmatpush1.msra.mxu0 %v1833
        %3312 = vmatprep.subr.mxu0 0.0
        %3313 = vmatpush1.msra.mxu0 %v1834
        %3314 = vmatprep.subr.mxu0 0.0
        %3315 = vmatpush1.msra.mxu0 %v1835
        %3316 = vmatprep.subr.mxu0 0.0
        %3317 = vmatpush1.msra.mxu0 %v1836
        %3318 = vmatprep.subr.mxu0 0.0
        %3319 = vmatpush1.msra.mxu0 %v1837
        %3320 = vmatprep.subr.mxu0 0.0
        %3321 = vmatpush1.msra.mxu0 %v1838
        %3322 = vmatprep.subr.mxu0 0.0
        %3323 = vmatpush1.msra.mxu0 %v1839
        %3324 = vmatprep.subr.mxu0 0.0
        %3325 = vmatpush1.msra.mxu0 %v1840
        %3326 = vmatprep.subr.mxu0 0.0
        %3327 = vmatpush1.msra.mxu0 %v1841
        %3328 = vmatprep.subr.mxu0 0.0
        %3329 = vmatpush1.msra.mxu0 %v1842
        %3330 = vmatprep.subr.mxu0 0.0
        %3331 = vmatpush1.msra.mxu0 %v1843
        %3332 = vmatprep.subr.mxu0 0.0
        %3333 = vmatpush1.msra.mxu0 %v1844
        %3334 = vmatprep.subr.mxu0 0.0
        %3335 = vmatpush1.msra.mxu0 %v1845
        %3336 = vmatprep.subr.mxu0 0.0
        %3337 = vmatpush1.msra.mxu0 %v1846
        %3338 = vmatprep.subr.mxu0 0.0
        %3339 = vmatpush1.msra.mxu0 %v1847
        %3340 = vmatprep.subr.mxu0 0.0
        %3341 = vmatpush1.msra.mxu0 %v1848
        %3342 = vmatprep.subr.mxu0 0.0
        %3343 = vmatpush1.msra.mxu0 %v1849
        %3344 = vmatprep.subr.mxu0 0.0
        %3345 = vmatpush1.msra.mxu0 %v1850
        %3346 = vmatprep.subr.mxu0 0.0
        %3347 = vmatpush1.msra.mxu0 %v1851
        %3348 = vmatprep.mubr.f32.mxu0 %v2909
        %3349 = vmatmul.mubr.f32.gmra.mrb[0].mxu0 %v2905
        %v3350 = vpop.f32.mrb[0].mxu0
        %v3351 = vadd.f32 %v3281, %v3350
        %v3352 = vpop.f32.mrb[0].mxu0
        %3353 = vdwg.mxu0
        %3354 = vmatprep.subr.mxu0 0.0
        %3355 = vmatpush1.msra.mxu0 %v1852
        %3356 = vmatprep.subr.mxu0 0.0
        %3357 = vmatpush1.msra.mxu0 %v1853
        %3358 = vmatprep.subr.mxu0 0.0
        %3359 = vmatpush1.msra.mxu0 %v1854
        %3360 = vmatprep.subr.mxu0 0.0
        %3361 = vmatpush1.msra.mxu0 %v1855
        %3362 = vmatprep.subr.mxu0 0.0
        %3363 = vmatpush1.msra.mxu0 %v1856
        %3364 = vmatprep.subr.mxu0 0.0
        %3365 = vmatpush1.msra.mxu0 %v1857
        %3366 = vmatprep.subr.mxu0 0.0
        %3367 = vmatpush1.msra.mxu0 %v1858
        %3368 = vmatprep.subr.mxu0 0.0
        %3369 = vmatpush1.msra.mxu0 %v1859
        %3370 = vmatprep.subr.mxu0 0.0
        %3371 = vmatpush1.msra.mxu0 %v1860
        %3372 = vmatprep.subr.mxu0 0.0
        %3373 = vmatpush1.msra.mxu0 %v1861
        %3374 = vmatprep.subr.mxu0 0.0
        %3375 = vmatpush1.msra.mxu0 %v1862
        %3376 = vmatprep.subr.mxu0 0.0
        %3377 = vmatpush1.msra.mxu0 %v1863
        %3378 = vmatprep.subr.mxu0 0.0
        %3379 = vmatpush1.msra.mxu0 %v1864
        %3380 = vmatprep.subr.mxu0 0.0
        %3381 = vmatpush1.msra.mxu0 %v1865
        %3382 = vmatprep.subr.mxu0 0.0
        %3383 = vmatpush1.msra.mxu0 %v1866
        %3384 = vmatprep.subr.mxu0 0.0
        %3385 = vmatpush1.msra.mxu0 %v1867
        %3386 = vmatprep.subr.mxu0 0.0
        %3387 = vmatpush1.msra.mxu0 %v1868
        %3388 = vmatprep.subr.mxu0 0.0
        %3389 = vmatpush1.msra.mxu0 %v1869
        %3390 = vmatprep.subr.mxu0 0.0
        %3391 = vmatpush1.msra.mxu0 %v1870
        %3392 = vmatprep.subr.mxu0 0.0
        %3393 = vmatpush1.msra.mxu0 %v1871
        %3394 = vmatprep.subr.mxu0 0.0
        %3395 = vmatpush1.msra.mxu0 %v1872
        %3396 = vmatprep.subr.mxu0 0.0
        %3397 = vmatpush1.msra.mxu0 %v1873
        %3398 = vmatprep.subr.mxu0 0.0
        %3399 = vmatpush1.msra.mxu0 %v1874
        %3400 = vmatprep.subr.mxu0 0.0
        %3401 = vmatpush1.msra.mxu0 %v1875
        %3402 = vmatprep.subr.mxu0 0.0
        %3403 = vmatpush1.msra.mxu0 %v1876
        %3404 = vmatprep.subr.mxu0 0.0
        %3405 = vmatpush1.msra.mxu0 %v1877
        %3406 = vmatprep.subr.mxu0 0.0
        %3407 = vmatpush1.msra.mxu0 %v1878
        %3408 = vmatprep.subr.mxu0 0.0
        %3409 = vmatpush1.msra.mxu0 %v1879
        %3410 = vmatprep.subr.mxu0 0.0
        %3411 = vmatpush1.msra.mxu0 %v1880
        %3412 = vmatprep.subr.mxu0 0.0
        %3413 = vmatpush1.msra.mxu0 %v1881
        %3414 = vmatprep.subr.mxu0 0.0
        %3415 = vmatpush1.msra.mxu0 %v1882
        %3416 = vmatprep.subr.mxu0 0.0
        %3417 = vmatpush1.msra.mxu0 %v1883
        %3418 = vmatprep.mubr.f32.mxu0 %v2917
        %3419 = vmatmul.mubr.f32.gmra.mrb[0].mxu0 %v2913
        %v3420 = vpop.f32.mrb[0].mxu0
        %v3421 = vadd.f32 %v3351, %v3420
        %v3422 = vpop.f32.mrb[0].mxu0
        %3423 = vdwg.mxu0
        %3424 = vmatprep.subr.mxu0 0.0
        %3425 = vmatpush1.msra.mxu0 %v1884
        %3426 = vmatprep.subr.mxu0 0.0
        %3427 = vmatpush1.msra.mxu0 %v1885
        %3428 = vmatprep.subr.mxu0 0.0
        %3429 = vmatpush1.msra.mxu0 %v1886
        %3430 = vmatprep.subr.mxu0 0.0
        %3431 = vmatpush1.msra.mxu0 %v1887
        %3432 = vmatprep.subr.mxu0 0.0
        %3433 = vmatpush1.msra.mxu0 %v1888
        %3434 = vmatprep.subr.mxu0 0.0
        %3435 = vmatpush1.msra.mxu0 %v1889
        %3436 = vmatprep.subr.mxu0 0.0
        %3437 = vmatpush1.msra.mxu0 %v1890
        %3438 = vmatprep.subr.mxu0 0.0
        %3439 = vmatpush1.msra.mxu0 %v1891
        %3440 = vmatprep.subr.mxu0 0.0
        %3441 = vmatpush1.msra.mxu0 %v1892
        %3442 = vmatprep.subr.mxu0 0.0
        %3443 = vmatpush1.msra.mxu0 %v1893
        %3444 = vmatprep.subr.mxu0 0.0
        %3445 = vmatpush1.msra.mxu0 %v1894
        %3446 = vmatprep.subr.mxu0 0.0
        %3447 = vmatpush1.msra.mxu0 %v1895
        %3448 = vmatprep.subr.mxu0 0.0
        %3449 = vmatpush1.msra.mxu0 %v1896
        %3450 = vmatprep.subr.mxu0 0.0
        %3451 = vmatpush1.msra.mxu0 %v1897
        %3452 = vmatprep.subr.mxu0 0.0
        %3453 = vmatpush1.msra.mxu0 %v1898
        %3454 = vmatprep.subr.mxu0 0.0
        %3455 = vmatpush1.msra.mxu0 %v1899
        %3456 = vmatprep.subr.mxu0 0.0
        %3457 = vmatpush1.msra.mxu0 %v1900
        %3458 = vmatprep.subr.mxu0 0.0
        %3459 = vmatpush1.msra.mxu0 %v1901
        %3460 = vmatprep.subr.mxu0 0.0
        %3461 = vmatpush1.msra.mxu0 %v1902
        %3462 = vmatprep.subr.mxu0 0.0
        %3463 = vmatpush1.msra.mxu0 %v1903
        %3464 = vmatprep.subr.mxu0 0.0
        %3465 = vmatpush1.msra.mxu0 %v1904
        %3466 = vmatprep.subr.mxu0 0.0
        %3467 = vmatpush1.msra.mxu0 %v1905
        %3468 = vmatprep.subr.mxu0 0.0
        %3469 = vmatpush1.msra.mxu0 %v1906
        %3470 = vmatprep.subr.mxu0 0.0
        %3471 = vmatpush1.msra.mxu0 %v1907
        %3472 = vmatprep.subr.mxu0 0.0
        %3473 = vmatpush1.msra.mxu0 %v1908
        %3474 = vmatprep.subr.mxu0 0.0
        %3475 = vmatpush1.msra.mxu0 %v1909
        %3476 = vmatprep.subr.mxu0 0.0
        %3477 = vmatpush1.msra.mxu0 %v1910
        %3478 = vmatprep.subr.mxu0 0.0
        %3479 = vmatpush1.msra.mxu0 %v1911
        %3480 = vmatprep.subr.mxu0 0.0
        %3481 = vmatpush1.msra.mxu0 %v1912
        %3482 = vmatprep.subr.mxu0 0.0
        %3483 = vmatpush1.msra.mxu0 %v1913
        %3484 = vmatprep.subr.mxu0 0.0
        %3485 = vmatpush1.msra.mxu0 %v1914
        %3486 = vmatprep.subr.mxu0 0.0
        %3487 = vmatpush1.msra.mxu0 %v1915
        %3488 = vmatprep.mubr.f32.mxu0 %v2925
        %3489 = vmatmul.mubr.f32.gmra.mrb[0].mxu0 %v2921
        %v3490 = vpop.f32.mrb[0].mxu0
        %v3491 = vadd.f32 %v3421, %v3490
        %v3492 = vpop.f32.mrb[0].mxu0
        %3493 = vdwg.mxu0
        %3494 = vmatprep.subr.mxu0 0.0
        %3495 = vmatpush1.msra.mxu0 %v1916
        %3496 = vmatprep.subr.mxu0 0.0
        %3497 = vmatpush1.msra.mxu0 %v1917
        %3498 = vmatprep.subr.mxu0 0.0
        %3499 = vmatpush1.msra.mxu0 %v1918
        %3500 = vmatprep.subr.mxu0 0.0
        %3501 = vmatpush1.msra.mxu0 %v1919
        %3502 = vmatprep.subr.mxu0 0.0
        %3503 = vmatpush1.msra.mxu0 %v1920
        %3504 = vmatprep.subr.mxu0 0.0
        %3505 = vmatpush1.msra.mxu0 %v1921
        %3506 = vmatprep.subr.mxu0 0.0
        %3507 = vmatpush1.msra.mxu0 %v1922
        %3508 = vmatprep.subr.mxu0 0.0
        %3509 = vmatpush1.msra.mxu0 %v1923
        %3510 = vmatprep.subr.mxu0 0.0
        %3511 = vmatpush1.msra.mxu0 %v1924
        %3512 = vmatprep.subr.mxu0 0.0
        %3513 = vmatpush1.msra.mxu0 %v1925
        %3514 = vmatprep.subr.mxu0 0.0
        %3515 = vmatpush1.msra.mxu0 %v1926
        %3516 = vmatprep.subr.mxu0 0.0
        %3517 = vmatpush1.msra.mxu0 %v1927
        %3518 = vmatprep.subr.mxu0 0.0
        %3519 = vmatpush1.msra.mxu0 %v1928
        %3520 = vmatprep.subr.mxu0 0.0
        %3521 = vmatpush1.msra.mxu0 %v1929
        %3522 = vmatprep.subr.mxu0 0.0
        %3523 = vmatpush1.msra.mxu0 %v1930
        %3524 = vmatprep.subr.mxu0 0.0
        %3525 = vmatpush1.msra.mxu0 %v1931
        %3526 = vmatprep.subr.mxu0 0.0
        %3527 = vmatpush1.msra.mxu0 %v1932
        %3528 = vmatprep.subr.mxu0 0.0
        %3529 = vmatpush1.msra.mxu0 %v1933
        %3530 = vmatprep.subr.mxu0 0.0
        %3531 = vmatpush1.msra.mxu0 %v1934
        %3532 = vmatprep.subr.mxu0 0.0
        %3533 = vmatpush1.msra.mxu0 %v1935
        %3534 = vmatprep.subr.mxu0 0.0
        %3535 = vmatpush1.msra.mxu0 %v1936
        %3536 = vmatprep.subr.mxu0 0.0
        %3537 = vmatpush1.msra.mxu0 %v1937
        %3538 = vmatprep.subr.mxu0 0.0
        %3539 = vmatpush1.msra.mxu0 %v1938
        %3540 = vmatprep.subr.mxu0 0.0
        %3541 = vmatpush1.msra.mxu0 %v1939
        %3542 = vmatprep.subr.mxu0 0.0
        %3543 = vmatpush1.msra.mxu0 %v1940
        %3544 = vmatprep.subr.mxu0 0.0
        %3545 = vmatpush1.msra.mxu0 %v1941
        %3546 = vmatprep.subr.mxu0 0.0
        %3547 = vmatpush1.msra.mxu0 %v1942
        %3548 = vmatprep.subr.mxu0 0.0
        %3549 = vmatpush1.msra.mxu0 %v1943
        %3550 = vmatprep.subr.mxu0 0.0
        %3551 = vmatpush1.msra.mxu0 %v1944
        %3552 = vmatprep.subr.mxu0 0.0
        %3553 = vmatpush1.msra.mxu0 %v1945
        %3554 = vmatprep.subr.mxu0 0.0
        %3555 = vmatpush1.msra.mxu0 %v1946
        %3556 = vmatprep.subr.mxu0 0.0
        %3557 = vmatpush1.msra.mxu0 %v1947
        %3558 = vmatprep.mubr.f32.mxu0 %v2933
        %3559 = vmatmul.mubr.f32.gmra.mrb[0].mxu0 %v2929
        %v3560 = vpop.f32.mrb[0].mxu0
        %v3561 = vadd.f32 %v3491, %v3560
        %v3562 = vpop.f32.mrb[0].mxu0
        %3563 = vdwg.mxu0
        %3564 = vmatprep.subr.mxu0 0.0
        %3565 = vmatpush1.msra.mxu0 %v1948
        %3566 = vmatprep.subr.mxu0 0.0
        %3567 = vmatpush1.msra.mxu0 %v1949
        %3568 = vmatprep.subr.mxu0 0.0
        %3569 = vmatpush1.msra.mxu0 %v1950
        %3570 = vmatprep.subr.mxu0 0.0
        %3571 = vmatpush1.msra.mxu0 %v1951
        %3572 = vmatprep.subr.mxu0 0.0
        %3573 = vmatpush1.msra.mxu0 %v1952
        %3574 = vmatprep.subr.mxu0 0.0
        %3575 = vmatpush1.msra.mxu0 %v1953
        %3576 = vmatprep.subr.mxu0 0.0
        %3577 = vmatpush1.msra.mxu0 %v1954
        %3578 = vmatprep.subr.mxu0 0.0
        %3579 = vmatpush1.msra.mxu0 %v1955
        %3580 = vmatprep.subr.mxu0 0.0
        %3581 = vmatpush1.msra.mxu0 %v1956
        %3582 = vmatprep.subr.mxu0 0.0
        %3583 = vmatpush1.msra.mxu0 %v1957
        %3584 = vmatprep.subr.mxu0 0.0
        %3585 = vmatpush1.msra.mxu0 %v1958
        %3586 = vmatprep.subr.mxu0 0.0
        %3587 = vmatpush1.msra.mxu0 %v1959
        %3588 = vmatprep.subr.mxu0 0.0
        %3589 = vmatpush1.msra.mxu0 %v1960
        %3590 = vmatprep.subr.mxu0 0.0
        %3591 = vmatpush1.msra.mxu0 %v1961
        %3592 = vmatprep.subr.mxu0 0.0
        %3593 = vmatpush1.msra.mxu0 %v1962
        %3594 = vmatprep.subr.mxu0 0.0
        %3595 = vmatpush1.msra.mxu0 %v1963
        %3596 = vmatprep.subr.mxu0 0.0
        %3597 = vmatpush1.msra.mxu0 %v1964
        %3598 = vmatprep.subr.mxu0 0.0
        %3599 = vmatpush1.msra.mxu0 %v1965
        %3600 = vmatprep.subr.mxu0 0.0
        %3601 = vmatpush1.msra.mxu0 %v1966
        %3602 = vmatprep.subr.mxu0 0.0
        %3603 = vmatpush1.msra.mxu0 %v1967
        %3604 = vmatprep.subr.mxu0 0.0
        %3605 = vmatpush1.msra.mxu0 %v1968
        %3606 = vmatprep.subr.mxu0 0.0
        %3607 = vmatpush1.msra.mxu0 %v1969
        %3608 = vmatprep.subr.mxu0 0.0
        %3609 = vmatpush1.msra.mxu0 %v1970
        %3610 = vmatprep.subr.mxu0 0.0
        %3611 = vmatpush1.msra.mxu0 %v1971
        %3612 = vmatprep.subr.mxu0 0.0
        %3613 = vmatpush1.msra.mxu0 %v1972
        %3614 = vmatprep.subr.mxu0 0.0
        %3615 = vmatpush1.msra.mxu0 %v1973
        %3616 = vmatprep.subr.mxu0 0.0
        %3617 = vmatpush1.msra.mxu0 %v1974
        %3618 = vmatprep.subr.mxu0 0.0
        %3619 = vmatpush1.msra.mxu0 %v1975
        %3620 = vmatprep.subr.mxu0 0.0
        %3621 = vmatpush1.msra.mxu0 %v1976
        %3622 = vmatprep.subr.mxu0 0.0
        %3623 = vmatpush1.msra.mxu0 %v1977
        %3624 = vmatprep.subr.mxu0 0.0
        %3625 = vmatpush1.msra.mxu0 %v1978
        %3626 = vmatprep.subr.mxu0 0.0
        %3627 = vmatpush1.msra.mxu0 %v1979
        %3628 = vmatprep.mubr.f32.mxu0 %v2941
        %3629 = vmatmul.mubr.f32.gmra.mrb[0].mxu0 %v2937
        %v3630 = vpop.f32.mrb[0].mxu0
        %v3631 = vadd.f32 %v3561, %v3630
        %v3632 = vpop.f32.mrb[0].mxu0
        %3633 = vdwg.mxu0
        %3634 = vmatprep.subr.mxu0 0.0
        %3635 = vmatpush1.msra.mxu0 %v1980
        %3636 = vmatprep.subr.mxu0 0.0
        %3637 = vmatpush1.msra.mxu0 %v1981
        %3638 = vmatprep.subr.mxu0 0.0
        %3639 = vmatpush1.msra.mxu0 %v1982
        %3640 = vmatprep.subr.mxu0 0.0
        %3641 = vmatpush1.msra.mxu0 %v1983
        %3642 = vmatprep.subr.mxu0 0.0
        %3643 = vmatpush1.msra.mxu0 %v1984
        %3644 = vmatprep.subr.mxu0 0.0
        %3645 = vmatpush1.msra.mxu0 %v1985
        %3646 = vmatprep.subr.mxu0 0.0
        %3647 = vmatpush1.msra.mxu0 %v1986
        %3648 = vmatprep.subr.mxu0 0.0
        %3649 = vmatpush1.msra.mxu0 %v1987
        %3650 = vmatprep.subr.mxu0 0.0
        %3651 = vmatpush1.msra.mxu0 %v1988
        %3652 = vmatprep.subr.mxu0 0.0
        %3653 = vmatpush1.msra.mxu0 %v1989
        %3654 = vmatprep.subr.mxu0 0.0
        %3655 = vmatpush1.msra.mxu0 %v1990
        %3656 = vmatprep.subr.mxu0 0.0
        %3657 = vmatpush1.msra.mxu0 %v1991
        %3658 = vmatprep.subr.mxu0 0.0
        %3659 = vmatpush1.msra.mxu0 %v1992
        %3660 = vmatprep.subr.mxu0 0.0
        %3661 = vmatpush1.msra.mxu0 %v1993
        %3662 = vmatprep.subr.mxu0 0.0
        %3663 = vmatpush1.msra.mxu0 %v1994
        %3664 = vmatprep.subr.mxu0 0.0
        %3665 = vmatpush1.msra.mxu0 %v1995
        %3666 = vmatprep.subr.mxu0 0.0
        %3667 = vmatpush1.msra.mxu0 %v1996
        %3668 = vmatprep.subr.mxu0 0.0
        %3669 = vmatpush1.msra.mxu0 %v1997
        %3670 = vmatprep.subr.mxu0 0.0
        %3671 = vmatpush1.msra.mxu0 %v1998
        %3672 = vmatprep.subr.mxu0 0.0
        %3673 = vmatpush1.msra.mxu0 %v1999
        %3674 = vmatprep.subr.mxu0 0.0
        %3675 = vmatpush1.msra.mxu0 %v2000
        %3676 = vmatprep.subr.mxu0 0.0
        %3677 = vmatpush1.msra.mxu0 %v2001
        %3678 = vmatprep.subr.mxu0 0.0
        %3679 = vmatpush1.msra.mxu0 %v2002
        %3680 = vmatprep.subr.mxu0 0.0
        %3681 = vmatpush1.msra.mxu0 %v2003
        %3682 = vmatprep.subr.mxu0 0.0
        %3683 = vmatpush1.msra.mxu0 %v2004
        %3684 = vmatprep.subr.mxu0 0.0
        %3685 = vmatpush1.msra.mxu0 %v2005
        %3686 = vmatprep.subr.mxu0 0.0
        %3687 = vmatpush1.msra.mxu0 %v2006
        %3688 = vmatprep.subr.mxu0 0.0
        %3689 = vmatpush1.msra.mxu0 %v2007
        %3690 = vmatprep.subr.mxu0 0.0
        %3691 = vmatpush1.msra.mxu0 %v2008
        %3692 = vmatprep.subr.mxu0 0.0
        %3693 = vmatpush1.msra.mxu0 %v2009
        %3694 = vmatprep.subr.mxu0 0.0
        %3695 = vmatpush1.msra.mxu0 %v2010
        %3696 = vmatprep.subr.mxu0 0.0
        %3697 = vmatpush1.msra.mxu0 %v2011
        %3698 = vmatprep.mubr.f32.mxu0 %v2949
        %3699 = vmatmul.mubr.f32.gmra.mrb[0].mxu0 %v2945
        %v3700 = vpop.f32.mrb[0].mxu0
        %v3701 = vadd.f32 %v3631, %v3700
        %v3702 = vpop.f32.mrb[0].mxu0
        %3703 = vdwg.mxu0
        %3704 = vmatprep.subr.mxu0 0.0
        %3705 = vmatpush1.msra.mxu0 %v2012
        %3706 = vmatprep.subr.mxu0 0.0
        %3707 = vmatpush1.msra.mxu0 %v2013
        %3708 = vmatprep.subr.mxu0 0.0
        %3709 = vmatpush1.msra.mxu0 %v2014
        %3710 = vmatprep.subr.mxu0 0.0
        %3711 = vmatpush1.msra.mxu0 %v2015
        %3712 = vmatprep.subr.mxu0 0.0
        %3713 = vmatpush1.msra.mxu0 %v2016
        %3714 = vmatprep.subr.mxu0 0.0
        %3715 = vmatpush1.msra.mxu0 %v2017
        %3716 = vmatprep.subr.mxu0 0.0
        %3717 = vmatpush1.msra.mxu0 %v2018
        %3718 = vmatprep.subr.mxu0 0.0
        %3719 = vmatpush1.msra.mxu0 %v2019
        %3720 = vmatprep.subr.mxu0 0.0
        %3721 = vmatpush1.msra.mxu0 %v2020
        %3722 = vmatprep.subr.mxu0 0.0
        %3723 = vmatpush1.msra.mxu0 %v2021
        %3724 = vmatprep.subr.mxu0 0.0
        %3725 = vmatpush1.msra.mxu0 %v2022
        %3726 = vmatprep.subr.mxu0 0.0
        %3727 = vmatpush1.msra.mxu0 %v2023
        %3728 = vmatprep.subr.mxu0 0.0
        %3729 = vmatpush1.msra.mxu0 %v2024
        %3730 = vmatprep.subr.mxu0 0.0
        %3731 = vmatpush1.msra.mxu0 %v2025
        %3732 = vmatprep.subr.mxu0 0.0
        %3733 = vmatpush1.msra.mxu0 %v2026
        %3734 = vmatprep.subr.mxu0 0.0
        %3735 = vmatpush1.msra.mxu0 %v2027
        %3736 = vmatprep.subr.mxu0 0.0
        %3737 = vmatpush1.msra.mxu0 %v2028
        %3738 = vmatprep.subr.mxu0 0.0
        %3739 = vmatpush1.msra.mxu0 %v2029
        %3740 = vmatprep.subr.mxu0 0.0
        %3741 = vmatpush1.msra.mxu0 %v2030
        %3742 = vmatprep.subr.mxu0 0.0
        %3743 = vmatpush1.msra.mxu0 %v2031
        %3744 = vmatprep.subr.mxu0 0.0
        %3745 = vmatpush1.msra.mxu0 %v2032
        %3746 = vmatprep.subr.mxu0 0.0
        %3747 = vmatpush1.msra.mxu0 %v2033
        %3748 = vmatprep.subr.mxu0 0.0
        %3749 = vmatpush1.msra.mxu0 %v2034
        %3750 = vmatprep.subr.mxu0 0.0
        %3751 = vmatpush1.msra.mxu0 %v2035
        %3752 = vmatprep.subr.mxu0 0.0
        %3753 = vmatpush1.msra.mxu0 %v2036
        %3754 = vmatprep.subr.mxu0 0.0
        %3755 = vmatpush1.msra.mxu0 %v2037
        %3756 = vmatprep.subr.mxu0 0.0
        %3757 = vmatpush1.msra.mxu0 %v2038
        %3758 = vmatprep.subr.mxu0 0.0
        %3759 = vmatpush1.msra.mxu0 %v2039
        %3760 = vmatprep.subr.mxu0 0.0
        %3761 = vmatpush1.msra.mxu0 %v2040
        %3762 = vmatprep.subr.mxu0 0.0
        %3763 = vmatpush1.msra.mxu0 %v2041
        %3764 = vmatprep.subr.mxu0 0.0
        %3765 = vmatpush1.msra.mxu0 %v2042
        %3766 = vmatprep.subr.mxu0 0.0
        %3767 = vmatpush1.msra.mxu0 %v2043
        %3768 = vmatprep.mubr.f32.mxu0 %v2957
        %3769 = vmatmul.mubr.f32.gmra.mrb[0].mxu0 %v2953
        %v3770 = vpop.f32.mrb[0].mxu0
        %v3771 = vadd.f32 %v3701, %v3770
        %v3772 = vpop.f32.mrb[0].mxu0
        %3773 = vdwg.mxu0
        %3774 = vmatprep.subr.mxu0 0.0
        %3775 = vmatpush1.msra.mxu0 %v2044
        %3776 = vmatprep.subr.mxu0 0.0
        %3777 = vmatpush1.msra.mxu0 %v2045
        %3778 = vmatprep.subr.mxu0 0.0
        %3779 = vmatpush1.msra.mxu0 %v2046
        %3780 = vmatprep.subr.mxu0 0.0
        %3781 = vmatpush1.msra.mxu0 %v2047
        %3782 = vmatprep.subr.mxu0 0.0
        %3783 = vmatpush1.msra.mxu0 %v2048
        %3784 = vmatprep.subr.mxu0 0.0
        %3785 = vmatpush1.msra.mxu0 %v2049
        %3786 = vmatprep.subr.mxu0 0.0
        %3787 = vmatpush1.msra.mxu0 %v2050
        %3788 = vmatprep.subr.mxu0 0.0
        %3789 = vmatpush1.msra.mxu0 %v2051
        %3790 = vmatprep.subr.mxu0 0.0
        %3791 = vmatpush1.msra.mxu0 %v2052
        %3792 = vmatprep.subr.mxu0 0.0
        %3793 = vmatpush1.msra.mxu0 %v2053
        %3794 = vmatprep.subr.mxu0 0.0
        %3795 = vmatpush1.msra.mxu0 %v2054
        %3796 = vmatprep.subr.mxu0 0.0
        %3797 = vmatpush1.msra.mxu0 %v2055
        %3798 = vmatprep.subr.mxu0 0.0
        %3799 = vmatpush1.msra.mxu0 %v2056
        %3800 = vmatprep.subr.mxu0 0.0
        %3801 = vmatpush1.msra.mxu0 %v2057
        %3802 = vmatprep.subr.mxu0 0.0
        %3803 = vmatpush1.msra.mxu0 %v2058
        %3804 = vmatprep.subr.mxu0 0.0
        %3805 = vmatpush1.msra.mxu0 %v2059
        %3806 = vmatprep.subr.mxu0 0.0
        %3807 = vmatpush1.msra.mxu0 %v2060
        %3808 = vmatprep.subr.mxu0 0.0
        %3809 = vmatpush1.msra.mxu0 %v2061
        %3810 = vmatprep.subr.mxu0 0.0
        %3811 = vmatpush1.msra.mxu0 %v2062
        %3812 = vmatprep.subr.mxu0 0.0
        %3813 = vmatpush1.msra.mxu0 %v2063
        %3814 = vmatprep.subr.mxu0 0.0
        %3815 = vmatpush1.msra.mxu0 %v2064
        %3816 = vmatprep.subr.mxu0 0.0
        %3817 = vmatpush1.msra.mxu0 %v2065
        %3818 = vmatprep.subr.mxu0 0.0
        %3819 = vmatpush1.msra.mxu0 %v2066
        %3820 = vmatprep.subr.mxu0 0.0
        %3821 = vmatpush1.msra.mxu0 %v2067
        %3822 = vmatprep.subr.mxu0 0.0
        %3823 = vmatpush1.msra.mxu0 %v2068
        %3824 = vmatprep.subr.mxu0 0.0
        %3825 = vmatpush1.msra.mxu0 %v2069
        %3826 = vmatprep.subr.mxu0 0.0
        %3827 = vmatpush1.msra.mxu0 %v2070
        %3828 = vmatprep.subr.mxu0 0.0
        %3829 = vmatpush1.msra.mxu0 %v2071
        %3830 = vmatprep.subr.mxu0 0.0
        %3831 = vmatpush1.msra.mxu0 %v2072
        %3832 = vmatprep.subr.mxu0 0.0
        %3833 = vmatpush1.msra.mxu0 %v2073
        %3834 = vmatprep.subr.mxu0 0.0
        %3835 = vmatpush1.msra.mxu0 %v2074
        %3836 = vmatprep.subr.mxu0 0.0
        %3837 = vmatpush1.msra.mxu0 %v2075
        %3838 = vmatprep.mubr.f32.mxu0 %v2965
        %3839 = vmatmul.mubr.f32.gmra.mrb[0].mxu0 %v2961
        %v3840 = vpop.f32.mrb[0].mxu0
        %v3841 = vadd.f32 %v3771, %v3840
        %v3842 = vpop.f32.mrb[0].mxu0
        %3843 = vdwg.mxu0
        %3844 = vmatprep.subr.mxu0 0.0
        %3845 = vmatpush1.msra.mxu0 %v2076
        %3846 = vmatprep.subr.mxu0 0.0
        %3847 = vmatpush1.msra.mxu0 %v2077
        %3848 = vmatprep.subr.mxu0 0.0
        %3849 = vmatpush1.msra.mxu0 %v2078
        %3850 = vmatprep.subr.mxu0 0.0
        %3851 = vmatpush1.msra.mxu0 %v2079
        %3852 = vmatprep.subr.mxu0 0.0
        %3853 = vmatpush1.msra.mxu0 %v2080
        %3854 = vmatprep.subr.mxu0 0.0
        %3855 = vmatpush1.msra.mxu0 %v2081
        %3856 = vmatprep.subr.mxu0 0.0
        %3857 = vmatpush1.msra.mxu0 %v2082
        %3858 = vmatprep.subr.mxu0 0.0
        %3859 = vmatpush1.msra.mxu0 %v2083
        %3860 = vmatprep.subr.mxu0 0.0
        %3861 = vmatpush1.msra.mxu0 %v2084
        %3862 = vmatprep.subr.mxu0 0.0
        %3863 = vmatpush1.msra.mxu0 %v2085
        %3864 = vmatprep.subr.mxu0 0.0
        %3865 = vmatpush1.msra.mxu0 %v2086
        %3866 = vmatprep.subr.mxu0 0.0
        %3867 = vmatpush1.msra.mxu0 %v2087
        %3868 = vmatprep.subr.mxu0 0.0
        %3869 = vmatpush1.msra.mxu0 %v2088
        %3870 = vmatprep.subr.mxu0 0.0
        %3871 = vmatpush1.msra.mxu0 %v2089
        %3872 = vmatprep.subr.mxu0 0.0
        %3873 = vmatpush1.msra.mxu0 %v2090
        %3874 = vmatprep.subr.mxu0 0.0
        %3875 = vmatpush1.msra.mxu0 %v2091
        %3876 = vmatprep.subr.mxu0 0.0
        %3877 = vmatpush1.msra.mxu0 %v2092
        %3878 = vmatprep.subr.mxu0 0.0
        %3879 = vmatpush1.msra.mxu0 %v2093
        %3880 = vmatprep.subr.mxu0 0.0
        %3881 = vmatpush1.msra.mxu0 %v2094
        %3882 = vmatprep.subr.mxu0 0.0
        %3883 = vmatpush1.msra.mxu0 %v2095
        %3884 = vmatprep.subr.mxu0 0.0
        %3885 = vmatpush1.msra.mxu0 %v2096
        %3886 = vmatprep.subr.mxu0 0.0
        %3887 = vmatpush1.msra.mxu0 %v2097
        %3888 = vmatprep.subr.mxu0 0.0
        %3889 = vmatpush1.msra.mxu0 %v2098
        %3890 = vmatprep.subr.mxu0 0.0
        %3891 = vmatpush1.msra.mxu0 %v2099
        %3892 = vmatprep.subr.mxu0 0.0
        %3893 = vmatpush1.msra.mxu0 %v2100
        %3894 = vmatprep.subr.mxu0 0.0
        %3895 = vmatpush1.msra.mxu0 %v2101
        %3896 = vmatprep.subr.mxu0 0.0
        %3897 = vmatpush1.msra.mxu0 %v2102
        %3898 = vmatprep.subr.mxu0 0.0
        %3899 = vmatpush1.msra.mxu0 %v2103
        %3900 = vmatprep.subr.mxu0 0.0
        %3901 = vmatpush1.msra.mxu0 %v2104
        %3902 = vmatprep.subr.mxu0 0.0
        %3903 = vmatpush1.msra.mxu0 %v2105
        %3904 = vmatprep.subr.mxu0 0.0
        %3905 = vmatpush1.msra.mxu0 %v2106
        %3906 = vmatprep.subr.mxu0 0.0
        %3907 = vmatpush1.msra.mxu0 %v2107
        %3908 = vmatprep.mubr.f32.mxu0 %v2973
        %3909 = vmatmul.mubr.f32.gmra.mrb[0].mxu0 %v2969
        %v3910 = vpop.f32.mrb[0].mxu0
        %v3911 = vadd.f32 %v3841, %v3910
        %v3912 = vpop.f32.mrb[0].mxu0
        %3913 = vdwg.mxu0
        %3914 = vmatprep.subr.mxu0 0.0
        %3915 = vmatpush1.msra.mxu0 %v2108
        %3916 = vmatprep.subr.mxu0 0.0
        %3917 = vmatpush1.msra.mxu0 %v2109
        %3918 = vmatprep.subr.mxu0 0.0
        %3919 = vmatpush1.msra.mxu0 %v2110
        %3920 = vmatprep.subr.mxu0 0.0
        %3921 = vmatpush1.msra.mxu0 %v2111
        %3922 = vmatprep.subr.mxu0 0.0
        %3923 = vmatpush1.msra.mxu0 %v2112
        %3924 = vmatprep.subr.mxu0 0.0
        %3925 = vmatpush1.msra.mxu0 %v2113
        %3926 = vmatprep.subr.mxu0 0.0
        %3927 = vmatpush1.msra.mxu0 %v2114
        %3928 = vmatprep.subr.mxu0 0.0
        %3929 = vmatpush1.msra.mxu0 %v2115
        %3930 = vmatprep.subr.mxu0 0.0
        %3931 = vmatpush1.msra.mxu0 %v2116
        %3932 = vmatprep.subr.mxu0 0.0
        %3933 = vmatpush1.msra.mxu0 %v2117
        %3934 = vmatprep.subr.mxu0 0.0
        %3935 = vmatpush1.msra.mxu0 %v2118
        %3936 = vmatprep.subr.mxu0 0.0
        %3937 = vmatpush1.msra.mxu0 %v2119
        %3938 = vmatprep.subr.mxu0 0.0
        %3939 = vmatpush1.msra.mxu0 %v2120
        %3940 = vmatprep.subr.mxu0 0.0
        %3941 = vmatpush1.msra.mxu0 %v2121
        %3942 = vmatprep.subr.mxu0 0.0
        %3943 = vmatpush1.msra.mxu0 %v2122
        %3944 = vmatprep.subr.mxu0 0.0
        %3945 = vmatpush1.msra.mxu0 %v2123
        %3946 = vmatprep.subr.mxu0 0.0
        %3947 = vmatpush1.msra.mxu0 %v2124
        %3948 = vmatprep.subr.mxu0 0.0
        %3949 = vmatpush1.msra.mxu0 %v2125
        %3950 = vmatprep.subr.mxu0 0.0
        %3951 = vmatpush1.msra.mxu0 %v2126
        %3952 = vmatprep.subr.mxu0 0.0
        %3953 = vmatpush1.msra.mxu0 %v2127
        %3954 = vmatprep.subr.mxu0 0.0
        %3955 = vmatpush1.msra.mxu0 %v2128
        %3956 = vmatprep.subr.mxu0 0.0
        %3957 = vmatpush1.msra.mxu0 %v2129
        %3958 = vmatprep.subr.mxu0 0.0
        %3959 = vmatpush1.msra.mxu0 %v2130
        %3960 = vmatprep.subr.mxu0 0.0
        %3961 = vmatpush1.msra.mxu0 %v2131
        %3962 = vmatprep.subr.mxu0 0.0
        %3963 = vmatpush1.msra.mxu0 %v2132
        %3964 = vmatprep.subr.mxu0 0.0
        %3965 = vmatpush1.msra.mxu0 %v2133
        %3966 = vmatprep.subr.mxu0 0.0
        %3967 = vmatpush1.msra.mxu0 %v2134
        %3968 = vmatprep.subr.mxu0 0.0
        %3969 = vmatpush1.msra.mxu0 %v2135
        %3970 = vmatprep.subr.mxu0 0.0
        %3971 = vmatpush1.msra.mxu0 %v2136
        %3972 = vmatprep.subr.mxu0 0.0
        %3973 = vmatpush1.msra.mxu0 %v2137
        %3974 = vmatprep.subr.mxu0 0.0
        %3975 = vmatpush1.msra.mxu0 %v2138
        %3976 = vmatprep.subr.mxu0 0.0
        %3977 = vmatpush1.msra.mxu0 %v2139
        %3978 = vmatprep.mubr.f32.mxu0 %v2981
        %3979 = vmatmul.mubr.f32.gmra.mrb[0].mxu0 %v2977
        %v3980 = vpop.f32.mrb[0].mxu0
        %v3981 = vadd.f32 %v3911, %v3980
        %v3982 = vpop.f32.mrb[0].mxu0
        %3983 = vdwg.mxu0
        %3984 = vmatprep.subr.mxu0 0.0
        %3985 = vmatpush1.msra.mxu0 %v2140
        %3986 = vmatprep.subr.mxu0 0.0
        %3987 = vmatpush1.msra.mxu0 %v2141
        %3988 = vmatprep.subr.mxu0 0.0
        %3989 = vmatpush1.msra.mxu0 %v2142
        %3990 = vmatprep.subr.mxu0 0.0
        %3991 = vmatpush1.msra.mxu0 %v2143
        %3992 = vmatprep.subr.mxu0 0.0
        %3993 = vmatpush1.msra.mxu0 %v2144
        %3994 = vmatprep.subr.mxu0 0.0
        %3995 = vmatpush1.msra.mxu0 %v2145
        %3996 = vmatprep.subr.mxu0 0.0
        %3997 = vmatpush1.msra.mxu0 %v2146
        %3998 = vmatprep.subr.mxu0 0.0
        %3999 = vmatpush1.msra.mxu0 %v2147
        %4000 = vmatprep.subr.mxu0 0.0
        %4001 = vmatpush1.msra.mxu0 %v2148
        %4002 = vmatprep.subr.mxu0 0.0
        %4003 = vmatpush1.msra.mxu0 %v2149
        %4004 = vmatprep.subr.mxu0 0.0
        %4005 = vmatpush1.msra.mxu0 %v2150
        %4006 = vmatprep.subr.mxu0 0.0
        %4007 = vmatpush1.msra.mxu0 %v2151
        %4008 = vmatprep.subr.mxu0 0.0
        %4009 = vmatpush1.msra.mxu0 %v2152
        %4010 = vmatprep.subr.mxu0 0.0
        %4011 = vmatpush1.msra.mxu0 %v2153
        %4012 = vmatprep.subr.mxu0 0.0
        %4013 = vmatpush1.msra.mxu0 %v2154
        %4014 = vmatprep.subr.mxu0 0.0
        %4015 = vmatpush1.msra.mxu0 %v2155
        %4016 = vmatprep.subr.mxu0 0.0
        %4017 = vmatpush1.msra.mxu0 %v2156
        %4018 = vmatprep.subr.mxu0 0.0
        %4019 = vmatpush1.msra.mxu0 %v2157
        %4020 = vmatprep.subr.mxu0 0.0
        %4021 = vmatpush1.msra.mxu0 %v2158
        %4022 = vmatprep.subr.mxu0 0.0
        %4023 = vmatpush1.msra.mxu0 %v2159
        %4024 = vmatprep.subr.mxu0 0.0
        %4025 = vmatpush1.msra.mxu0 %v2160
        %4026 = vmatprep.subr.mxu0 0.0
        %4027 = vmatpush1.msra.mxu0 %v2161
        %4028 = vmatprep.subr.mxu0 0.0
        %4029 = vmatpush1.msra.mxu0 %v2162
        %4030 = vmatprep.subr.mxu0 0.0
        %4031 = vmatpush1.msra.mxu0 %v2163
        %4032 = vmatprep.subr.mxu0 0.0
        %4033 = vmatpush1.msra.mxu0 %v2164
        %4034 = vmatprep.subr.mxu0 0.0
        %4035 = vmatpush1.msra.mxu0 %v2165
        %4036 = vmatprep.subr.mxu0 0.0
        %4037 = vmatpush1.msra.mxu0 %v2166
        %4038 = vmatprep.subr.mxu0 0.0
        %4039 = vmatpush1.msra.mxu0 %v2167
        %4040 = vmatprep.subr.mxu0 0.0
        %4041 = vmatpush1.msra.mxu0 %v2168
        %4042 = vmatprep.subr.mxu0 0.0
        %4043 = vmatpush1.msra.mxu0 %v2169
        %4044 = vmatprep.subr.mxu0 0.0
        %4045 = vmatpush1.msra.mxu0 %v2170
        %4046 = vmatprep.subr.mxu0 0.0
        %4047 = vmatpush1.msra.mxu0 %v2171
        %4048 = vmatprep.mubr.f32.mxu0 %v2989
        %4049 = vmatmul.mubr.f32.gmra.mrb[0].mxu0 %v2985
        %v4050 = vpop.f32.mrb[0].mxu0
        %v4051 = vadd.f32 %v3981, %v4050
        %v4052 = vpop.f32.mrb[0].mxu0
        %4053 = vdwg.mxu0
        %4054 = vmatprep.subr.mxu0 0.0
        %4055 = vmatpush1.msra.mxu0 %v2172
        %4056 = vmatprep.subr.mxu0 0.0
        %4057 = vmatpush1.msra.mxu0 %v2173
        %4058 = vmatprep.subr.mxu0 0.0
        %4059 = vmatpush1.msra.mxu0 %v2174
        %4060 = vmatprep.subr.mxu0 0.0
        %4061 = vmatpush1.msra.mxu0 %v2175
        %4062 = vmatprep.subr.mxu0 0.0
        %4063 = vmatpush1.msra.mxu0 %v2176
        %4064 = vmatprep.subr.mxu0 0.0
        %4065 = vmatpush1.msra.mxu0 %v2177
        %4066 = vmatprep.subr.mxu0 0.0
        %4067 = vmatpush1.msra.mxu0 %v2178
        %4068 = vmatprep.subr.mxu0 0.0
        %4069 = vmatpush1.msra.mxu0 %v2179
        %4070 = vmatprep.subr.mxu0 0.0
        %4071 = vmatpush1.msra.mxu0 %v2180
        %4072 = vmatprep.subr.mxu0 0.0
        %4073 = vmatpush1.msra.mxu0 %v2181
        %4074 = vmatprep.subr.mxu0 0.0
        %4075 = vmatpush1.msra.mxu0 %v2182
        %4076 = vmatprep.subr.mxu0 0.0
        %4077 = vmatpush1.msra.mxu0 %v2183
        %4078 = vmatprep.subr.mxu0 0.0
        %4079 = vmatpush1.msra.mxu0 %v2184
        %4080 = vmatprep.subr.mxu0 0.0
        %4081 = vmatpush1.msra.mxu0 %v2185
        %4082 = vmatprep.subr.mxu0 0.0
        %4083 = vmatpush1.msra.mxu0 %v2186
        %4084 = vmatprep.subr.mxu0 0.0
        %4085 = vmatpush1.msra.mxu0 %v2187
        %4086 = vmatprep.subr.mxu0 0.0
        %4087 = vmatpush1.msra.mxu0 %v2188
        %4088 = vmatprep.subr.mxu0 0.0
        %4089 = vmatpush1.msra.mxu0 %v2189
        %4090 = vmatprep.subr.mxu0 0.0
        %4091 = vmatpush1.msra.mxu0 %v2190
        %4092 = vmatprep.subr.mxu0 0.0
        %4093 = vmatpush1.msra.mxu0 %v2191
        %4094 = vmatprep.subr.mxu0 0.0
        %4095 = vmatpush1.msra.mxu0 %v2192
        %4096 = vmatprep.subr.mxu0 0.0
        %4097 = vmatpush1.msra.mxu0 %v2193
        %4098 = vmatprep.subr.mxu0 0.0
        %4099 = vmatpush1.msra.mxu0 %v2194
        %4100 = vmatprep.subr.mxu0 0.0
        %4101 = vmatpush1.msra.mxu0 %v2195
        %4102 = vmatprep.subr.mxu0 0.0
        %4103 = vmatpush1.msra.mxu0 %v2196
        %4104 = vmatprep.subr.mxu0 0.0
        %4105 = vmatpush1.msra.mxu0 %v2197
        %4106 = vmatprep.subr.mxu0 0.0
        %4107 = vmatpush1.msra.mxu0 %v2198
        %4108 = vmatprep.subr.mxu0 0.0
        %4109 = vmatpush1.msra.mxu0 %v2199
        %4110 = vmatprep.subr.mxu0 0.0
        %4111 = vmatpush1.msra.mxu0 %v2200
        %4112 = vmatprep.subr.mxu0 0.0
        %4113 = vmatpush1.msra.mxu0 %v2201
        %4114 = vmatprep.subr.mxu0 0.0
        %4115 = vmatpush1.msra.mxu0 %v2202
        %4116 = vmatprep.subr.mxu0 0.0
        %4117 = vmatpush1.msra.mxu0 %v2203
        %4118 = vmatprep.mubr.f32.mxu0 %v2997
        %4119 = vmatmul.mubr.f32.gmra.mrb[0].mxu0 %v2993
        %v4120 = vpop.f32.mrb[0].mxu0
        %v4121 = vadd.f32 %v4051, %v4120
        %v4122 = vpop.f32.mrb[0].mxu0
        %4123 = vdwg.mxu0
        %4124 = vmatprep.subr.mxu0 0.0
        %4125 = vmatpush1.msra.mxu0 %v2204
        %4126 = vmatprep.subr.mxu0 0.0
        %4127 = vmatpush1.msra.mxu0 %v2205
        %4128 = vmatprep.subr.mxu0 0.0
        %4129 = vmatpush1.msra.mxu0 %v2206
        %4130 = vmatprep.subr.mxu0 0.0
        %4131 = vmatpush1.msra.mxu0 %v2207
        %4132 = vmatprep.subr.mxu0 0.0
        %4133 = vmatpush1.msra.mxu0 %v2208
        %4134 = vmatprep.subr.mxu0 0.0
        %4135 = vmatpush1.msra.mxu0 %v2209
        %4136 = vmatprep.subr.mxu0 0.0
        %4137 = vmatpush1.msra.mxu0 %v2210
        %4138 = vmatprep.subr.mxu0 0.0
        %4139 = vmatpush1.msra.mxu0 %v2211
        %4140 = vmatprep.subr.mxu0 0.0
        %4141 = vmatpush1.msra.mxu0 %v2212
        %4142 = vmatprep.subr.mxu0 0.0
        %4143 = vmatpush1.msra.mxu0 %v2213
        %4144 = vmatprep.subr.mxu0 0.0
        %4145 = vmatpush1.msra.mxu0 %v2214
        %4146 = vmatprep.subr.mxu0 0.0
        %4147 = vmatpush1.msra.mxu0 %v2215
        %4148 = vmatprep.subr.mxu0 0.0
        %4149 = vmatpush1.msra.mxu0 %v2216
        %4150 = vmatprep.subr.mxu0 0.0
        %4151 = vmatpush1.msra.mxu0 %v2217
        %4152 = vmatprep.subr.mxu0 0.0
        %4153 = vmatpush1.msra.mxu0 %v2218
        %4154 = vmatprep.subr.mxu0 0.0
        %4155 = vmatpush1.msra.mxu0 %v2219
        %4156 = vmatprep.subr.mxu0 0.0
        %4157 = vmatpush1.msra.mxu0 %v2220
        %4158 = vmatprep.subr.mxu0 0.0
        %4159 = vmatpush1.msra.mxu0 %v2221
        %4160 = vmatprep.subr.mxu0 0.0
        %4161 = vmatpush1.msra.mxu0 %v2222
        %4162 = vmatprep.subr.mxu0 0.0
        %4163 = vmatpush1.msra.mxu0 %v2223
        %4164 = vmatprep.subr.mxu0 0.0
        %4165 = vmatpush1.msra.mxu0 %v2224
        %4166 = vmatprep.subr.mxu0 0.0
        %4167 = vmatpush1.msra.mxu0 %v2225
        %4168 = vmatprep.subr.mxu0 0.0
        %4169 = vmatpush1.msra.mxu0 %v2226
        %4170 = vmatprep.subr.mxu0 0.0
        %4171 = vmatpush1.msra.mxu0 %v2227
        %4172 = vmatprep.subr.mxu0 0.0
        %4173 = vmatpush1.msra.mxu0 %v2228
        %4174 = vmatprep.subr.mxu0 0.0
        %4175 = vmatpush1.msra.mxu0 %v2229
        %4176 = vmatprep.subr.mxu0 0.0
        %4177 = vmatpush1.msra.mxu0 %v2230
        %4178 = vmatprep.subr.mxu0 0.0
        %4179 = vmatpush1.msra.mxu0 %v2231
        %4180 = vmatprep.subr.mxu0 0.0
        %4181 = vmatpush1.msra.mxu0 %v2232
        %4182 = vmatprep.subr.mxu0 0.0
        %4183 = vmatpush1.msra.mxu0 %v2233
        %4184 = vmatprep.subr.mxu0 0.0
        %4185 = vmatpush1.msra.mxu0 %v2234
        %4186 = vmatprep.subr.mxu0 0.0
        %4187 = vmatpush1.msra.mxu0 %v2235
        %4188 = vmatprep.mubr.f32.mxu0 %v3005
        %4189 = vmatmul.mubr.f32.gmra.mrb[0].mxu0 %v3001
        %v4190 = vpop.f32.mrb[0].mxu0
        %v4191 = vadd.f32 %v4121, %v4190
        %v4192 = vpop.f32.mrb[0].mxu0
        %4193 = vdwg.mxu0
        %4194 = vmatprep.subr.mxu0 0.0
        %4195 = vmatpush1.msra.mxu0 %v2236
        %4196 = vmatprep.subr.mxu0 0.0
        %4197 = vmatpush1.msra.mxu0 %v2237
        %4198 = vmatprep.subr.mxu0 0.0
        %4199 = vmatpush1.msra.mxu0 %v2238
        %4200 = vmatprep.subr.mxu0 0.0
        %4201 = vmatpush1.msra.mxu0 %v2239
        %4202 = vmatprep.subr.mxu0 0.0
        %4203 = vmatpush1.msra.mxu0 %v2240
        %4204 = vmatprep.subr.mxu0 0.0
        %4205 = vmatpush1.msra.mxu0 %v2241
        %4206 = vmatprep.subr.mxu0 0.0
        %4207 = vmatpush1.msra.mxu0 %v2242
        %4208 = vmatprep.subr.mxu0 0.0
        %4209 = vmatpush1.msra.mxu0 %v2243
        %4210 = vmatprep.subr.mxu0 0.0
        %4211 = vmatpush1.msra.mxu0 %v2244
        %4212 = vmatprep.subr.mxu0 0.0
        %4213 = vmatpush1.msra.mxu0 %v2245
        %4214 = vmatprep.subr.mxu0 0.0
        %4215 = vmatpush1.msra.mxu0 %v2246
        %4216 = vmatprep.subr.mxu0 0.0
        %4217 = vmatpush1.msra.mxu0 %v2247
        %4218 = vmatprep.subr.mxu0 0.0
        %4219 = vmatpush1.msra.mxu0 %v2248
        %4220 = vmatprep.subr.mxu0 0.0
        %4221 = vmatpush1.msra.mxu0 %v2249
        %4222 = vmatprep.subr.mxu0 0.0
        %4223 = vmatpush1.msra.mxu0 %v2250
        %4224 = vmatprep.subr.mxu0 0.0
        %4225 = vmatpush1.msra.mxu0 %v2251
        %4226 = vmatprep.subr.mxu0 0.0
        %4227 = vmatpush1.msra.mxu0 %v2252
        %4228 = vmatprep.subr.mxu0 0.0
        %4229 = vmatpush1.msra.mxu0 %v2253
        %4230 = vmatprep.subr.mxu0 0.0
        %4231 = vmatpush1.msra.mxu0 %v2254
        %4232 = vmatprep.subr.mxu0 0.0
        %4233 = vmatpush1.msra.mxu0 %v2255
        %4234 = vmatprep.subr.mxu0 0.0
        %4235 = vmatpush1.msra.mxu0 %v2256
        %4236 = vmatprep.subr.mxu0 0.0
        %4237 = vmatpush1.msra.mxu0 %v2257
        %4238 = vmatprep.subr.mxu0 0.0
        %4239 = vmatpush1.msra.mxu0 %v2258
        %4240 = vmatprep.subr.mxu0 0.0
        %4241 = vmatpush1.msra.mxu0 %v2259
        %4242 = vmatprep.subr.mxu0 0.0
        %4243 = vmatpush1.msra.mxu0 %v2260
        %4244 = vmatprep.subr.mxu0 0.0
        %4245 = vmatpush1.msra.mxu0 %v2261
        %4246 = vmatprep.subr.mxu0 0.0
        %4247 = vmatpush1.msra.mxu0 %v2262
        %4248 = vmatprep.subr.mxu0 0.0
        %4249 = vmatpush1.msra.mxu0 %v2263
        %4250 = vmatprep.subr.mxu0 0.0
        %4251 = vmatpush1.msra.mxu0 %v2264
        %4252 = vmatprep.subr.mxu0 0.0
        %4253 = vmatpush1.msra.mxu0 %v2265
        %4254 = vmatprep.subr.mxu0 0.0
        %4255 = vmatpush1.msra.mxu0 %v2266
        %4256 = vmatprep.subr.mxu0 0.0
        %4257 = vmatpush1.msra.mxu0 %v2267
        %4258 = vmatprep.mubr.f32.mxu0 %v3013
        %4259 = vmatmul.mubr.f32.gmra.mrb[0].mxu0 %v3009
        %v4260 = vpop.f32.mrb[0].mxu0
        %v4261 = vadd.f32 %v4191, %v4260
        %v4262 = vpop.f32.mrb[0].mxu0
        %4263 = vdwg.mxu0
        %4264 = vmatprep.subr.mxu0 0.0
        %4265 = vmatpush1.msra.mxu0 %v2268
        %4266 = vmatprep.subr.mxu0 0.0
        %4267 = vmatpush1.msra.mxu0 %v2269
        %4268 = vmatprep.subr.mxu0 0.0
        %4269 = vmatpush1.msra.mxu0 %v2270
        %4270 = vmatprep.subr.mxu0 0.0
        %4271 = vmatpush1.msra.mxu0 %v2271
        %4272 = vmatprep.subr.mxu0 0.0
        %4273 = vmatpush1.msra.mxu0 %v2272
        %4274 = vmatprep.subr.mxu0 0.0
        %4275 = vmatpush1.msra.mxu0 %v2273
        %4276 = vmatprep.subr.mxu0 0.0
        %4277 = vmatpush1.msra.mxu0 %v2274
        %4278 = vmatprep.subr.mxu0 0.0
        %4279 = vmatpush1.msra.mxu0 %v2275
        %4280 = vmatprep.subr.mxu0 0.0
        %4281 = vmatpush1.msra.mxu0 %v2276
        %4282 = vmatprep.subr.mxu0 0.0
        %4283 = vmatpush1.msra.mxu0 %v2277
        %4284 = vmatprep.subr.mxu0 0.0
        %4285 = vmatpush1.msra.mxu0 %v2278
        %4286 = vmatprep.subr.mxu0 0.0
        %4287 = vmatpush1.msra.mxu0 %v2279
        %4288 = vmatprep.subr.mxu0 0.0
        %4289 = vmatpush1.msra.mxu0 %v2280
        %4290 = vmatprep.subr.mxu0 0.0
        %4291 = vmatpush1.msra.mxu0 %v2281
        %4292 = vmatprep.subr.mxu0 0.0
        %4293 = vmatpush1.msra.mxu0 %v2282
        %4294 = vmatprep.subr.mxu0 0.0
        %4295 = vmatpush1.msra.mxu0 %v2283
        %4296 = vmatprep.subr.mxu0 0.0
        %4297 = vmatpush1.msra.mxu0 %v2284
        %4298 = vmatprep.subr.mxu0 0.0
        %4299 = vmatpush1.msra.mxu0 %v2285
        %4300 = vmatprep.subr.mxu0 0.0
        %4301 = vmatpush1.msra.mxu0 %v2286
        %4302 = vmatprep.subr.mxu0 0.0
        %4303 = vmatpush1.msra.mxu0 %v2287
        %4304 = vmatprep.subr.mxu0 0.0
        %4305 = vmatpush1.msra.mxu0 %v2288
        %4306 = vmatprep.subr.mxu0 0.0
        %4307 = vmatpush1.msra.mxu0 %v2289
        %4308 = vmatprep.subr.mxu0 0.0
        %4309 = vmatpush1.msra.mxu0 %v2290
        %4310 = vmatprep.subr.mxu0 0.0
        %4311 = vmatpush1.msra.mxu0 %v2291
        %4312 = vmatprep.subr.mxu0 0.0
        %4313 = vmatpush1.msra.mxu0 %v2292
        %4314 = vmatprep.subr.mxu0 0.0
        %4315 = vmatpush1.msra.mxu0 %v2293
        %4316 = vmatprep.subr.mxu0 0.0
        %4317 = vmatpush1.msra.mxu0 %v2294
        %4318 = vmatprep.subr.mxu0 0.0
        %4319 = vmatpush1.msra.mxu0 %v2295
        %4320 = vmatprep.subr.mxu0 0.0
        %4321 = vmatpush1.msra.mxu0 %v2296
        %4322 = vmatprep.subr.mxu0 0.0
        %4323 = vmatpush1.msra.mxu0 %v2297
        %4324 = vmatprep.subr.mxu0 0.0
        %4325 = vmatpush1.msra.mxu0 %v2298
        %4326 = vmatprep.subr.mxu0 0.0
        %4327 = vmatpush1.msra.mxu0 %v2299
        %4328 = vmatprep.mubr.f32.mxu0 %v3021
        %4329 = vmatmul.mubr.f32.gmra.mrb[0].mxu0 %v3017
        %v4330 = vpop.f32.mrb[0].mxu0
        %v4331 = vadd.f32 %v4261, %v4330
        %v4332 = vpop.f32.mrb[0].mxu0
        %4333 = vdwg.mxu0
        %4334 = vmatprep.subr.mxu0 0.0
        %4335 = vmatpush1.msra.mxu0 %v2300
        %4336 = vmatprep.subr.mxu0 0.0
        %4337 = vmatpush1.msra.mxu0 %v2301
        %4338 = vmatprep.subr.mxu0 0.0
        %4339 = vmatpush1.msra.mxu0 %v2302
        %4340 = vmatprep.subr.mxu0 0.0
        %4341 = vmatpush1.msra.mxu0 %v2303
        %4342 = vmatprep.subr.mxu0 0.0
        %4343 = vmatpush1.msra.mxu0 %v2304
        %4344 = vmatprep.subr.mxu0 0.0
        %4345 = vmatpush1.msra.mxu0 %v2305
        %4346 = vmatprep.subr.mxu0 0.0
        %4347 = vmatpush1.msra.mxu0 %v2306
        %4348 = vmatprep.subr.mxu0 0.0
        %4349 = vmatpush1.msra.mxu0 %v2307
        %4350 = vmatprep.subr.mxu0 0.0
        %4351 = vmatpush1.msra.mxu0 %v2308
        %4352 = vmatprep.subr.mxu0 0.0
        %4353 = vmatpush1.msra.mxu0 %v2309
        %4354 = vmatprep.subr.mxu0 0.0
        %4355 = vmatpush1.msra.mxu0 %v2310
        %4356 = vmatprep.subr.mxu0 0.0
        %4357 = vmatpush1.msra.mxu0 %v2311
        %4358 = vmatprep.subr.mxu0 0.0
        %4359 = vmatpush1.msra.mxu0 %v2312
        %4360 = vmatprep.subr.mxu0 0.0
        %4361 = vmatpush1.msra.mxu0 %v2313
        %4362 = vmatprep.subr.mxu0 0.0
        %4363 = vmatpush1.msra.mxu0 %v2314
        %4364 = vmatprep.subr.mxu0 0.0
        %4365 = vmatpush1.msra.mxu0 %v2315
        %4366 = vmatprep.subr.mxu0 0.0
        %4367 = vmatpush1.msra.mxu0 %v2316
        %4368 = vmatprep.subr.mxu0 0.0
        %4369 = vmatpush1.msra.mxu0 %v2317
        %4370 = vmatprep.subr.mxu0 0.0
        %4371 = vmatpush1.msra.mxu0 %v2318
        %4372 = vmatprep.subr.mxu0 0.0
        %4373 = vmatpush1.msra.mxu0 %v2319
        %4374 = vmatprep.subr.mxu0 0.0
        %4375 = vmatpush1.msra.mxu0 %v2320
        %4376 = vmatprep.subr.mxu0 0.0
        %4377 = vmatpush1.msra.mxu0 %v2321
        %4378 = vmatprep.subr.mxu0 0.0
        %4379 = vmatpush1.msra.mxu0 %v2322
        %4380 = vmatprep.subr.mxu0 0.0
        %4381 = vmatpush1.msra.mxu0 %v2323
        %4382 = vmatprep.subr.mxu0 0.0
        %4383 = vmatpush1.msra.mxu0 %v2324
        %4384 = vmatprep.subr.mxu0 0.0
        %4385 = vmatpush1.msra.mxu0 %v2325
        %4386 = vmatprep.subr.mxu0 0.0
        %4387 = vmatpush1.msra.mxu0 %v2326
        %4388 = vmatprep.subr.mxu0 0.0
        %4389 = vmatpush1.msra.mxu0 %v2327
        %4390 = vmatprep.subr.mxu0 0.0
        %4391 = vmatpush1.msra.mxu0 %v2328
        %4392 = vmatprep.subr.mxu0 0.0
        %4393 = vmatpush1.msra.mxu0 %v2329
        %4394 = vmatprep.subr.mxu0 0.0
        %4395 = vmatpush1.msra.mxu0 %v2330
        %4396 = vmatprep.subr.mxu0 0.0
        %4397 = vmatpush1.msra.mxu0 %v2331
        %4398 = vmatprep.mubr.f32.mxu0 %v3029
        %4399 = vmatmul.mubr.f32.gmra.mrb[0].mxu0 %v3025
        %v4400 = vpop.f32.mrb[0].mxu0
        %v4401 = vadd.f32 %v4331, %v4400
        %v4402 = vpop.f32.mrb[0].mxu0
        %4403 = vdwg.mxu0
        %4404 = vmatprep.subr.mxu0 0.0
        %4405 = vmatpush1.msra.mxu0 %v2332
        %4406 = vmatprep.subr.mxu0 0.0
        %4407 = vmatpush1.msra.mxu0 %v2333
        %4408 = vmatprep.subr.mxu0 0.0
        %4409 = vmatpush1.msra.mxu0 %v2334
        %4410 = vmatprep.subr.mxu0 0.0
        %4411 = vmatpush1.msra.mxu0 %v2335
        %4412 = vmatprep.subr.mxu0 0.0
        %4413 = vmatpush1.msra.mxu0 %v2336
        %4414 = vmatprep.subr.mxu0 0.0
        %4415 = vmatpush1.msra.mxu0 %v2337
        %4416 = vmatprep.subr.mxu0 0.0
        %4417 = vmatpush1.msra.mxu0 %v2338
        %4418 = vmatprep.subr.mxu0 0.0
        %4419 = vmatpush1.msra.mxu0 %v2339
        %4420 = vmatprep.subr.mxu0 0.0
        %4421 = vmatpush1.msra.mxu0 %v2340
        %4422 = vmatprep.subr.mxu0 0.0
        %4423 = vmatpush1.msra.mxu0 %v2341
        %4424 = vmatprep.subr.mxu0 0.0
        %4425 = vmatpush1.msra.mxu0 %v2342
        %4426 = vmatprep.subr.mxu0 0.0
        %4427 = vmatpush1.msra.mxu0 %v2343
        %4428 = vmatprep.subr.mxu0 0.0
        %4429 = vmatpush1.msra.mxu0 %v2344
        %4430 = vmatprep.subr.mxu0 0.0
        %4431 = vmatpush1.msra.mxu0 %v2345
        %4432 = vmatprep.subr.mxu0 0.0
        %4433 = vmatpush1.msra.mxu0 %v2346
        %4434 = vmatprep.subr.mxu0 0.0
        %4435 = vmatpush1.msra.mxu0 %v2347
        %4436 = vmatprep.subr.mxu0 0.0
        %4437 = vmatpush1.msra.mxu0 %v2348
        %4438 = vmatprep.subr.mxu0 0.0
        %4439 = vmatpush1.msra.mxu0 %v2349
        %4440 = vmatprep.subr.mxu0 0.0
        %4441 = vmatpush1.msra.mxu0 %v2350
        %4442 = vmatprep.subr.mxu0 0.0
        %4443 = vmatpush1.msra.mxu0 %v2351
        %4444 = vmatprep.subr.mxu0 0.0
        %4445 = vmatpush1.msra.mxu0 %v2352
        %4446 = vmatprep.subr.mxu0 0.0
        %4447 = vmatpush1.msra.mxu0 %v2353
        %4448 = vmatprep.subr.mxu0 0.0
        %4449 = vmatpush1.msra.mxu0 %v2354
        %4450 = vmatprep.subr.mxu0 0.0
        %4451 = vmatpush1.msra.mxu0 %v2355
        %4452 = vmatprep.subr.mxu0 0.0
        %4453 = vmatpush1.msra.mxu0 %v2356
        %4454 = vmatprep.subr.mxu0 0.0
        %4455 = vmatpush1.msra.mxu0 %v2357
        %4456 = vmatprep.subr.mxu0 0.0
        %4457 = vmatpush1.msra.mxu0 %v2358
        %4458 = vmatprep.subr.mxu0 0.0
        %4459 = vmatpush1.msra.mxu0 %v2359
        %4460 = vmatprep.subr.mxu0 0.0
        %4461 = vmatpush1.msra.mxu0 %v2360
        %4462 = vmatprep.subr.mxu0 0.0
        %4463 = vmatpush1.msra.mxu0 %v2361
        %4464 = vmatprep.subr.mxu0 0.0
        %4465 = vmatpush1.msra.mxu0 %v2362
        %4466 = vmatprep.subr.mxu0 0.0
        %4467 = vmatpush1.msra.mxu0 %v2363
        %4468 = vmatprep.mubr.f32.mxu0 %v3037
        %4469 = vmatmul.mubr.f32.gmra.mrb[0].mxu0 %v3033
        %v4470 = vpop.f32.mrb[0].mxu0
        %v4471 = vadd.f32 %v4401, %v4470
        %v4472 = vpop.f32.mrb[0].mxu0
        %4473 = vdwg.mxu0
        %4474 = vmatprep.subr.mxu0 0.0
        %4475 = vmatpush1.msra.mxu0 %v2364
        %4476 = vmatprep.subr.mxu0 0.0
        %4477 = vmatpush1.msra.mxu0 %v2365
        %4478 = vmatprep.subr.mxu0 0.0
        %4479 = vmatpush1.msra.mxu0 %v2366
        %4480 = vmatprep.subr.mxu0 0.0
        %4481 = vmatpush1.msra.mxu0 %v2367
        %4482 = vmatprep.subr.mxu0 0.0
        %4483 = vmatpush1.msra.mxu0 %v2368
        %4484 = vmatprep.subr.mxu0 0.0
        %4485 = vmatpush1.msra.mxu0 %v2369
        %4486 = vmatprep.subr.mxu0 0.0
        %4487 = vmatpush1.msra.mxu0 %v2370
        %4488 = vmatprep.subr.mxu0 0.0
        %4489 = vmatpush1.msra.mxu0 %v2371
        %4490 = vmatprep.subr.mxu0 0.0
        %4491 = vmatpush1.msra.mxu0 %v2372
        %4492 = vmatprep.subr.mxu0 0.0
        %4493 = vmatpush1.msra.mxu0 %v2373
        %4494 = vmatprep.subr.mxu0 0.0
        %4495 = vmatpush1.msra.mxu0 %v2374
        %4496 = vmatprep.subr.mxu0 0.0
        %4497 = vmatpush1.msra.mxu0 %v2375
        %4498 = vmatprep.subr.mxu0 0.0
        %4499 = vmatpush1.msra.mxu0 %v2376
        %4500 = vmatprep.subr.mxu0 0.0
        %4501 = vmatpush1.msra.mxu0 %v2377
        %4502 = vmatprep.subr.mxu0 0.0
        %4503 = vmatpush1.msra.mxu0 %v2378
        %4504 = vmatprep.subr.mxu0 0.0
        %4505 = vmatpush1.msra.mxu0 %v2379
        %4506 = vmatprep.subr.mxu0 0.0
        %4507 = vmatpush1.msra.mxu0 %v2380
        %4508 = vmatprep.subr.mxu0 0.0
        %4509 = vmatpush1.msra.mxu0 %v2381
        %4510 = vmatprep.subr.mxu0 0.0
        %4511 = vmatpush1.msra.mxu0 %v2382
        %4512 = vmatprep.subr.mxu0 0.0
        %4513 = vmatpush1.msra.mxu0 %v2383
        %4514 = vmatprep.subr.mxu0 0.0
        %4515 = vmatpush1.msra.mxu0 %v2384
        %4516 = vmatprep.subr.mxu0 0.0
        %4517 = vmatpush1.msra.mxu0 %v2385
        %4518 = vmatprep.subr.mxu0 0.0
        %4519 = vmatpush1.msra.mxu0 %v2386
        %4520 = vmatprep.subr.mxu0 0.0
        %4521 = vmatpush1.msra.mxu0 %v2387
        %4522 = vmatprep.subr.mxu0 0.0
        %4523 = vmatpush1.msra.mxu0 %v2388
        %4524 = vmatprep.subr.mxu0 0.0
        %4525 = vmatpush1.msra.mxu0 %v2389
        %4526 = vmatprep.subr.mxu0 0.0
        %4527 = vmatpush1.msra.mxu0 %v2390
        %4528 = vmatprep.subr.mxu0 0.0
        %4529 = vmatpush1.msra.mxu0 %v2391
        %4530 = vmatprep.subr.mxu0 0.0
        %4531 = vmatpush1.msra.mxu0 %v2392
        %4532 = vmatprep.subr.mxu0 0.0
        %4533 = vmatpush1.msra.mxu0 %v2393
        %4534 = vmatprep.subr.mxu0 0.0
        %4535 = vmatpush1.msra.mxu0 %v2394
        %4536 = vmatprep.subr.mxu0 0.0
        %4537 = vmatpush1.msra.mxu0 %v2395
        %4538 = vmatprep.mubr.f32.mxu0 %v3045
        %4539 = vmatmul.mubr.f32.gmra.mrb[0].mxu0 %v3041
        %v4540 = vpop.f32.mrb[0].mxu0
        %v4541 = vadd.f32 %v4471, %v4540
        %v4542 = vpop.f32.mrb[0].mxu0
        %4543 = vdwg.mxu0
        %4544 = vmatprep.subr.mxu0 0.0
        %4545 = vmatpush1.msra.mxu0 %v2396
        %4546 = vmatprep.subr.mxu0 0.0
        %4547 = vmatpush1.msra.mxu0 %v2397
        %4548 = vmatprep.subr.mxu0 0.0
        %4549 = vmatpush1.msra.mxu0 %v2398
        %4550 = vmatprep.subr.mxu0 0.0
        %4551 = vmatpush1.msra.mxu0 %v2399
        %4552 = vmatprep.subr.mxu0 0.0
        %4553 = vmatpush1.msra.mxu0 %v2400
        %4554 = vmatprep.subr.mxu0 0.0
        %4555 = vmatpush1.msra.mxu0 %v2401
        %4556 = vmatprep.subr.mxu0 0.0
        %4557 = vmatpush1.msra.mxu0 %v2402
        %4558 = vmatprep.subr.mxu0 0.0
        %4559 = vmatpush1.msra.mxu0 %v2403
        %4560 = vmatprep.subr.mxu0 0.0
        %4561 = vmatpush1.msra.mxu0 %v2404
        %4562 = vmatprep.subr.mxu0 0.0
        %4563 = vmatpush1.msra.mxu0 %v2405
        %4564 = vmatprep.subr.mxu0 0.0
        %4565 = vmatpush1.msra.mxu0 %v2406
        %4566 = vmatprep.subr.mxu0 0.0
        %4567 = vmatpush1.msra.mxu0 %v2407
        %4568 = vmatprep.subr.mxu0 0.0
        %4569 = vmatpush1.msra.mxu0 %v2408
        %4570 = vmatprep.subr.mxu0 0.0
        %4571 = vmatpush1.msra.mxu0 %v2409
        %4572 = vmatprep.subr.mxu0 0.0
        %4573 = vmatpush1.msra.mxu0 %v2410
        %4574 = vmatprep.subr.mxu0 0.0
        %4575 = vmatpush1.msra.mxu0 %v2411
        %4576 = vmatprep.subr.mxu0 0.0
        %4577 = vmatpush1.msra.mxu0 %v2412
        %4578 = vmatprep.subr.mxu0 0.0
        %4579 = vmatpush1.msra.mxu0 %v2413
        %4580 = vmatprep.subr.mxu0 0.0
        %4581 = vmatpush1.msra.mxu0 %v2414
        %4582 = vmatprep.subr.mxu0 0.0
        %4583 = vmatpush1.msra.mxu0 %v2415
        %4584 = vmatprep.subr.mxu0 0.0
        %4585 = vmatpush1.msra.mxu0 %v2416
        %4586 = vmatprep.subr.mxu0 0.0
        %4587 = vmatpush1.msra.mxu0 %v2417
        %4588 = vmatprep.subr.mxu0 0.0
        %4589 = vmatpush1.msra.mxu0 %v2418
        %4590 = vmatprep.subr.mxu0 0.0
        %4591 = vmatpush1.msra.mxu0 %v2419
        %4592 = vmatprep.subr.mxu0 0.0
        %4593 = vmatpush1.msra.mxu0 %v2420
        %4594 = vmatprep.subr.mxu0 0.0
        %4595 = vmatpush1.msra.mxu0 %v2421
        %4596 = vmatprep.subr.mxu0 0.0
        %4597 = vmatpush1.msra.mxu0 %v2422
        %4598 = vmatprep.subr.mxu0 0.0
        %4599 = vmatpush1.msra.mxu0 %v2423
        %4600 = vmatprep.subr.mxu0 0.0
        %4601 = vmatpush1.msra.mxu0 %v2424
        %4602 = vmatprep.subr.mxu0 0.0
        %4603 = vmatpush1.msra.mxu0 %v2425
        %4604 = vmatprep.subr.mxu0 0.0
        %4605 = vmatpush1.msra.mxu0 %v2426
        %4606 = vmatprep.subr.mxu0 0.0
        %4607 = vmatpush1.msra.mxu0 %v2427
        %4608 = vmatprep.mubr.f32.mxu0 %v3053
        %4609 = vmatmul.mubr.f32.gmra.mrb[0].mxu0 %v3049
        %v4610 = vpop.f32.mrb[0].mxu0
        %v4611 = vadd.f32 %v4541, %v4610
        %v4612 = vpop.f32.mrb[0].mxu0
        %4613 = vdwg.mxu0
        %4614 = vmatprep.subr.mxu0 0.0
        %4615 = vmatpush1.msra.mxu0 %v2428
        %4616 = vmatprep.subr.mxu0 0.0
        %4617 = vmatpush1.msra.mxu0 %v2429
        %4618 = vmatprep.subr.mxu0 0.0
        %4619 = vmatpush1.msra.mxu0 %v2430
        %4620 = vmatprep.subr.mxu0 0.0
        %4621 = vmatpush1.msra.mxu0 %v2431
        %4622 = vmatprep.subr.mxu0 0.0
        %4623 = vmatpush1.msra.mxu0 %v2432
        %4624 = vmatprep.subr.mxu0 0.0
        %4625 = vmatpush1.msra.mxu0 %v2433
        %4626 = vmatprep.subr.mxu0 0.0
        %4627 = vmatpush1.msra.mxu0 %v2434
        %4628 = vmatprep.subr.mxu0 0.0
        %4629 = vmatpush1.msra.mxu0 %v2435
        %4630 = vmatprep.subr.mxu0 0.0
        %4631 = vmatpush1.msra.mxu0 %v2436
        %4632 = vmatprep.subr.mxu0 0.0
        %4633 = vmatpush1.msra.mxu0 %v2437
        %4634 = vmatprep.subr.mxu0 0.0
        %4635 = vmatpush1.msra.mxu0 %v2438
        %4636 = vmatprep.subr.mxu0 0.0
        %4637 = vmatpush1.msra.mxu0 %v2439
        %4638 = vmatprep.subr.mxu0 0.0
        %4639 = vmatpush1.msra.mxu0 %v2440
        %4640 = vmatprep.subr.mxu0 0.0
        %4641 = vmatpush1.msra.mxu0 %v2441
        %4642 = vmatprep.subr.mxu0 0.0
        %4643 = vmatpush1.msra.mxu0 %v2442
        %4644 = vmatprep.subr.mxu0 0.0
        %4645 = vmatpush1.msra.mxu0 %v2443
        %4646 = vmatprep.subr.mxu0 0.0
        %4647 = vmatpush1.msra.mxu0 %v2444
        %4648 = vmatprep.subr.mxu0 0.0
        %4649 = vmatpush1.msra.mxu0 %v2445
        %4650 = vmatprep.subr.mxu0 0.0
        %4651 = vmatpush1.msra.mxu0 %v2446
        %4652 = vmatprep.subr.mxu0 0.0
        %4653 = vmatpush1.msra.mxu0 %v2447
        %4654 = vmatprep.subr.mxu0 0.0
        %4655 = vmatpush1.msra.mxu0 %v2448
        %4656 = vmatprep.subr.mxu0 0.0
        %4657 = vmatpush1.msra.mxu0 %v2449
        %4658 = vmatprep.subr.mxu0 0.0
        %4659 = vmatpush1.msra.mxu0 %v2450
        %4660 = vmatprep.subr.mxu0 0.0
        %4661 = vmatpush1.msra.mxu0 %v2451
        %4662 = vmatprep.subr.mxu0 0.0
        %4663 = vmatpush1.msra.mxu0 %v2452
        %4664 = vmatprep.subr.mxu0 0.0
        %4665 = vmatpush1.msra.mxu0 %v2453
        %4666 = vmatprep.subr.mxu0 0.0
        %4667 = vmatpush1.msra.mxu0 %v2454
        %4668 = vmatprep.subr.mxu0 0.0
        %4669 = vmatpush1.msra.mxu0 %v2455
        %4670 = vmatprep.subr.mxu0 0.0
        %4671 = vmatpush1.msra.mxu0 %v2456
        %4672 = vmatprep.subr.mxu0 0.0
        %4673 = vmatpush1.msra.mxu0 %v2457
        %4674 = vmatprep.subr.mxu0 0.0
        %4675 = vmatpush1.msra.mxu0 %v2458
        %4676 = vmatprep.subr.mxu0 0.0
        %4677 = vmatpush1.msra.mxu0 %v2459
        %4678 = vmatprep.mubr.f32.mxu0 %v3061
        %4679 = vmatmul.mubr.f32.gmra.mrb[0].mxu0 %v3057
        %v4680 = vpop.f32.mrb[0].mxu0
        %v4681 = vadd.f32 %v4611, %v4680
        %v4682 = vpop.f32.mrb[0].mxu0
        %4683 = vdwg.mxu0
        %4684 = vmatprep.subr.mxu0 0.0
        %4685 = vmatpush1.msra.mxu0 %v2460
        %4686 = vmatprep.subr.mxu0 0.0
        %4687 = vmatpush1.msra.mxu0 %v2461
        %4688 = vmatprep.subr.mxu0 0.0
        %4689 = vmatpush1.msra.mxu0 %v2462
        %4690 = vmatprep.subr.mxu0 0.0
        %4691 = vmatpush1.msra.mxu0 %v2463
        %4692 = vmatprep.subr.mxu0 0.0
        %4693 = vmatpush1.msra.mxu0 %v2464
        %4694 = vmatprep.subr.mxu0 0.0
        %4695 = vmatpush1.msra.mxu0 %v2465
        %4696 = vmatprep.subr.mxu0 0.0
        %4697 = vmatpush1.msra.mxu0 %v2466
        %4698 = vmatprep.subr.mxu0 0.0
        %4699 = vmatpush1.msra.mxu0 %v2467
        %4700 = vmatprep.subr.mxu0 0.0
        %4701 = vmatpush1.msra.mxu0 %v2468
        %4702 = vmatprep.subr.mxu0 0.0
        %4703 = vmatpush1.msra.mxu0 %v2469
        %4704 = vmatprep.subr.mxu0 0.0
        %4705 = vmatpush1.msra.mxu0 %v2470
        %4706 = vmatprep.subr.mxu0 0.0
        %4707 = vmatpush1.msra.mxu0 %v2471
        %4708 = vmatprep.subr.mxu0 0.0
        %4709 = vmatpush1.msra.mxu0 %v2472
        %4710 = vmatprep.subr.mxu0 0.0
        %4711 = vmatpush1.msra.mxu0 %v2473
        %4712 = vmatprep.subr.mxu0 0.0
        %4713 = vmatpush1.msra.mxu0 %v2474
        %4714 = vmatprep.subr.mxu0 0.0
        %4715 = vmatpush1.msra.mxu0 %v2475
        %4716 = vmatprep.subr.mxu0 0.0
        %4717 = vmatpush1.msra.mxu0 %v2476
        %4718 = vmatprep.subr.mxu0 0.0
        %4719 = vmatpush1.msra.mxu0 %v2477
        %4720 = vmatprep.subr.mxu0 0.0
        %4721 = vmatpush1.msra.mxu0 %v2478
        %4722 = vmatprep.subr.mxu0 0.0
        %4723 = vmatpush1.msra.mxu0 %v2479
        %4724 = vmatprep.subr.mxu0 0.0
        %4725 = vmatpush1.msra.mxu0 %v2480
        %4726 = vmatprep.subr.mxu0 0.0
        %4727 = vmatpush1.msra.mxu0 %v2481
        %4728 = vmatprep.subr.mxu0 0.0
        %4729 = vmatpush1.msra.mxu0 %v2482
        %4730 = vmatprep.subr.mxu0 0.0
        %4731 = vmatpush1.msra.mxu0 %v2483
        %4732 = vmatprep.subr.mxu0 0.0
        %4733 = vmatpush1.msra.mxu0 %v2484
        %4734 = vmatprep.subr.mxu0 0.0
        %4735 = vmatpush1.msra.mxu0 %v2485
        %4736 = vmatprep.subr.mxu0 0.0
        %4737 = vmatpush1.msra.mxu0 %v2486
        %4738 = vmatprep.subr.mxu0 0.0
        %4739 = vmatpush1.msra.mxu0 %v2487
        %4740 = vmatprep.subr.mxu0 0.0
        %4741 = vmatpush1.msra.mxu0 %v2488
        %4742 = vmatprep.subr.mxu0 0.0
        %4743 = vmatpush1.msra.mxu0 %v2489
        %4744 = vmatprep.subr.mxu0 0.0
        %4745 = vmatpush1.msra.mxu0 %v2490
        %4746 = vmatprep.subr.mxu0 0.0
        %4747 = vmatpush1.msra.mxu0 %v2491
        %4748 = vmatprep.mubr.f32.mxu0 %v3069
        %4749 = vmatmul.mubr.f32.gmra.mrb[0].mxu0 %v3065
        %v4750 = vpop.f32.mrb[0].mxu0
        %v4751 = vadd.f32 %v4681, %v4750
        %v4752 = vpop.f32.mrb[0].mxu0
        %4753 = vdwg.mxu0
        %4754 = vmatprep.subr.mxu0 0.0
        %4755 = vmatpush1.msra.mxu0 %v2492
        %4756 = vmatprep.subr.mxu0 0.0
        %4757 = vmatpush1.msra.mxu0 %v2493
        %4758 = vmatprep.subr.mxu0 0.0
        %4759 = vmatpush1.msra.mxu0 %v2494
        %4760 = vmatprep.subr.mxu0 0.0
        %4761 = vmatpush1.msra.mxu0 %v2495
        %4762 = vmatprep.subr.mxu0 0.0
        %4763 = vmatpush1.msra.mxu0 %v2496
        %4764 = vmatprep.subr.mxu0 0.0
        %4765 = vmatpush1.msra.mxu0 %v2497
        %4766 = vmatprep.subr.mxu0 0.0
        %4767 = vmatpush1.msra.mxu0 %v2498
        %4768 = vmatprep.subr.mxu0 0.0
        %4769 = vmatpush1.msra.mxu0 %v2499
        %4770 = vmatprep.subr.mxu0 0.0
        %4771 = vmatpush1.msra.mxu0 %v2500
        %4772 = vmatprep.subr.mxu0 0.0
        %4773 = vmatpush1.msra.mxu0 %v2501
        %4774 = vmatprep.subr.mxu0 0.0
        %4775 = vmatpush1.msra.mxu0 %v2502
        %4776 = vmatprep.subr.mxu0 0.0
        %4777 = vmatpush1.msra.mxu0 %v2503
        %4778 = vmatprep.subr.mxu0 0.0
        %4779 = vmatpush1.msra.mxu0 %v2504
        %4780 = vmatprep.subr.mxu0 0.0
        %4781 = vmatpush1.msra.mxu0 %v2505
        %4782 = vmatprep.subr.mxu0 0.0
        %4783 = vmatpush1.msra.mxu0 %v2506
        %4784 = vmatprep.subr.mxu0 0.0
        %4785 = vmatpush1.msra.mxu0 %v2507
        %4786 = vmatprep.subr.mxu0 0.0
        %4787 = vmatpush1.msra.mxu0 %v2508
        %4788 = vmatprep.subr.mxu0 0.0
        %4789 = vmatpush1.msra.mxu0 %v2509
        %4790 = vmatprep.subr.mxu0 0.0
        %4791 = vmatpush1.msra.mxu0 %v2510
        %4792 = vmatprep.subr.mxu0 0.0
        %4793 = vmatpush1.msra.mxu0 %v2511
        %4794 = vmatprep.subr.mxu0 0.0
        %4795 = vmatpush1.msra.mxu0 %v2512
        %4796 = vmatprep.subr.mxu0 0.0
        %4797 = vmatpush1.msra.mxu0 %v2513
        %4798 = vmatprep.subr.mxu0 0.0
        %4799 = vmatpush1.msra.mxu0 %v2514
        %4800 = vmatprep.subr.mxu0 0.0
        %4801 = vmatpush1.msra.mxu0 %v2515
        %4802 = vmatprep.subr.mxu0 0.0
        %4803 = vmatpush1.msra.mxu0 %v2516
        %4804 = vmatprep.subr.mxu0 0.0
        %4805 = vmatpush1.msra.mxu0 %v2517
        %4806 = vmatprep.subr.mxu0 0.0
        %4807 = vmatpush1.msra.mxu0 %v2518
        %4808 = vmatprep.subr.mxu0 0.0
        %4809 = vmatpush1.msra.mxu0 %v2519
        %4810 = vmatprep.subr.mxu0 0.0
        %4811 = vmatpush1.msra.mxu0 %v2520
        %4812 = vmatprep.subr.mxu0 0.0
        %4813 = vmatpush1.msra.mxu0 %v2521
        %4814 = vmatprep.subr.mxu0 0.0
        %4815 = vmatpush1.msra.mxu0 %v2522
        %4816 = vmatprep.subr.mxu0 0.0
        %4817 = vmatpush1.msra.mxu0 %v2523
        %4818 = vmatprep.mubr.f32.mxu0 %v3077
        %4819 = vmatmul.mubr.f32.gmra.mrb[0].mxu0 %v3073
        %v4820 = vpop.f32.mrb[0].mxu0
        %v4821 = vadd.f32 %v4751, %v4820
        %v4822 = vpop.f32.mrb[0].mxu0
        %4823 = vdwg.mxu0
        %4824 = vmatprep.subr.mxu0 0.0
        %4825 = vmatpush1.msra.mxu0 %v2524
        %4826 = vmatprep.subr.mxu0 0.0
        %4827 = vmatpush1.msra.mxu0 %v2525
        %4828 = vmatprep.subr.mxu0 0.0
        %4829 = vmatpush1.msra.mxu0 %v2526
        %4830 = vmatprep.subr.mxu0 0.0
        %4831 = vmatpush1.msra.mxu0 %v2527
        %4832 = vmatprep.subr.mxu0 0.0
        %4833 = vmatpush1.msra.mxu0 %v2528
        %4834 = vmatprep.subr.mxu0 0.0
        %4835 = vmatpush1.msra.mxu0 %v2529
        %4836 = vmatprep.subr.mxu0 0.0
        %4837 = vmatpush1.msra.mxu0 %v2530
        %4838 = vmatprep.subr.mxu0 0.0
        %4839 = vmatpush1.msra.mxu0 %v2531
        %4840 = vmatprep.subr.mxu0 0.0
        %4841 = vmatpush1.msra.mxu0 %v2532
        %4842 = vmatprep.subr.mxu0 0.0
        %4843 = vmatpush1.msra.mxu0 %v2533
        %4844 = vmatprep.subr.mxu0 0.0
        %4845 = vmatpush1.msra.mxu0 %v2534
        %4846 = vmatprep.subr.mxu0 0.0
        %4847 = vmatpush1.msra.mxu0 %v2535
        %4848 = vmatprep.subr.mxu0 0.0
        %4849 = vmatpush1.msra.mxu0 %v2536
        %4850 = vmatprep.subr.mxu0 0.0
        %4851 = vmatpush1.msra.mxu0 %v2537
        %4852 = vmatprep.subr.mxu0 0.0
        %4853 = vmatpush1.msra.mxu0 %v2538
        %4854 = vmatprep.subr.mxu0 0.0
        %4855 = vmatpush1.msra.mxu0 %v2539
        %4856 = vmatprep.subr.mxu0 0.0
        %4857 = vmatpush1.msra.mxu0 %v2540
        %4858 = vmatprep.subr.mxu0 0.0
        %4859 = vmatpush1.msra.mxu0 %v2541
        %4860 = vmatprep.subr.mxu0 0.0
        %4861 = vmatpush1.msra.mxu0 %v2542
        %4862 = vmatprep.subr.mxu0 0.0
        %4863 = vmatpush1.msra.mxu0 %v2543
        %4864 = vmatprep.subr.mxu0 0.0
        %4865 = vmatpush1.msra.mxu0 %v2544
        %4866 = vmatprep.subr.mxu0 0.0
        %4867 = vmatpush1.msra.mxu0 %v2545
        %4868 = vmatprep.subr.mxu0 0.0
        %4869 = vmatpush1.msra.mxu0 %v2546
        %4870 = vmatprep.subr.mxu0 0.0
        %4871 = vmatpush1.msra.mxu0 %v2547
        %4872 = vmatprep.subr.mxu0 0.0
        %4873 = vmatpush1.msra.mxu0 %v2548
        %4874 = vmatprep.subr.mxu0 0.0
        %4875 = vmatpush1.msra.mxu0 %v2549
        %4876 = vmatprep.subr.mxu0 0.0
        %4877 = vmatpush1.msra.mxu0 %v2550
        %4878 = vmatprep.subr.mxu0 0.0
        %4879 = vmatpush1.msra.mxu0 %v2551
        %4880 = vmatprep.subr.mxu0 0.0
        %4881 = vmatpush1.msra.mxu0 %v2552
        %4882 = vmatprep.subr.mxu0 0.0
        %4883 = vmatpush1.msra.mxu0 %v2553
        %4884 = vmatprep.subr.mxu0 0.0
        %4885 = vmatpush1.msra.mxu0 %v2554
        %4886 = vmatprep.subr.mxu0 0.0
        %4887 = vmatpush1.msra.mxu0 %v2555
        %4888 = vmatprep.mubr.f32.mxu0 %v3085
        %4889 = vmatmul.mubr.f32.gmra.mrb[0].mxu0 %v3081
        %v4890 = vpop.f32.mrb[0].mxu0
        %v4891 = vadd.f32 %v4821, %v4890
        %v4892 = vpop.f32.mrb[0].mxu0
        %4893 = vdwg.mxu0
        %4894 = vmatprep.subr.mxu0 0.0
        %4895 = vmatpush1.msra.mxu0 %v2556
        %4896 = vmatprep.subr.mxu0 0.0
        %4897 = vmatpush1.msra.mxu0 %v2557
        %4898 = vmatprep.subr.mxu0 0.0
        %4899 = vmatpush1.msra.mxu0 %v2558
        %4900 = vmatprep.subr.mxu0 0.0
        %4901 = vmatpush1.msra.mxu0 %v2559
        %4902 = vmatprep.subr.mxu0 0.0
        %4903 = vmatpush1.msra.mxu0 %v2560
        %4904 = vmatprep.subr.mxu0 0.0
        %4905 = vmatpush1.msra.mxu0 %v2561
        %4906 = vmatprep.subr.mxu0 0.0
        %4907 = vmatpush1.msra.mxu0 %v2562
        %4908 = vmatprep.subr.mxu0 0.0
        %4909 = vmatpush1.msra.mxu0 %v2563
        %4910 = vmatprep.subr.mxu0 0.0
        %4911 = vmatpush1.msra.mxu0 %v2564
        %4912 = vmatprep.subr.mxu0 0.0
        %4913 = vmatpush1.msra.mxu0 %v2565
        %4914 = vmatprep.subr.mxu0 0.0
        %4915 = vmatpush1.msra.mxu0 %v2566
        %4916 = vmatprep.subr.mxu0 0.0
        %4917 = vmatpush1.msra.mxu0 %v2567
        %4918 = vmatprep.subr.mxu0 0.0
        %4919 = vmatpush1.msra.mxu0 %v2568
        %4920 = vmatprep.subr.mxu0 0.0
        %4921 = vmatpush1.msra.mxu0 %v2569
        %4922 = vmatprep.subr.mxu0 0.0
        %4923 = vmatpush1.msra.mxu0 %v2570
        %4924 = vmatprep.subr.mxu0 0.0
        %4925 = vmatpush1.msra.mxu0 %v2571
        %4926 = vmatprep.subr.mxu0 0.0
        %4927 = vmatpush1.msra.mxu0 %v2572
        %4928 = vmatprep.subr.mxu0 0.0
        %4929 = vmatpush1.msra.mxu0 %v2573
        %4930 = vmatprep.subr.mxu0 0.0
        %4931 = vmatpush1.msra.mxu0 %v2574
        %4932 = vmatprep.subr.mxu0 0.0
        %4933 = vmatpush1.msra.mxu0 %v2575
        %4934 = vmatprep.subr.mxu0 0.0
        %4935 = vmatpush1.msra.mxu0 %v2576
        %4936 = vmatprep.subr.mxu0 0.0
        %4937 = vmatpush1.msra.mxu0 %v2577
        %4938 = vmatprep.subr.mxu0 0.0
        %4939 = vmatpush1.msra.mxu0 %v2578
        %4940 = vmatprep.subr.mxu0 0.0
        %4941 = vmatpush1.msra.mxu0 %v2579
        %4942 = vmatprep.subr.mxu0 0.0
        %4943 = vmatpush1.msra.mxu0 %v2580
        %4944 = vmatprep.subr.mxu0 0.0
        %4945 = vmatpush1.msra.mxu0 %v2581
        %4946 = vmatprep.subr.mxu0 0.0
        %4947 = vmatpush1.msra.mxu0 %v2582
        %4948 = vmatprep.subr.mxu0 0.0
        %4949 = vmatpush1.msra.mxu0 %v2583
        %4950 = vmatprep.subr.mxu0 0.0
        %4951 = vmatpush1.msra.mxu0 %v2584
        %4952 = vmatprep.subr.mxu0 0.0
        %4953 = vmatpush1.msra.mxu0 %v2585
        %4954 = vmatprep.subr.mxu0 0.0
        %4955 = vmatpush1.msra.mxu0 %v2586
        %4956 = vmatprep.subr.mxu0 0.0
        %4957 = vmatpush1.msra.mxu0 %v2587
        %4958 = vmatprep.mubr.f32.mxu0 %v3093
        %4959 = vmatmul.mubr.f32.gmra.mrb[0].mxu0 %v3089
        %v4960 = vpop.f32.mrb[0].mxu0
        %v4961 = vadd.f32 %v4891, %v4960
        %v4962 = vpop.f32.mrb[0].mxu0
        %4963 = vdwg.mxu0
        %4964 = vmatprep.subr.mxu0 0.0
        %4965 = vmatpush1.msra.mxu0 %v2588
        %4966 = vmatprep.subr.mxu0 0.0
        %4967 = vmatpush1.msra.mxu0 %v2589
        %4968 = vmatprep.subr.mxu0 0.0
        %4969 = vmatpush1.msra.mxu0 %v2590
        %4970 = vmatprep.subr.mxu0 0.0
        %4971 = vmatpush1.msra.mxu0 %v2591
        %4972 = vmatprep.subr.mxu0 0.0
        %4973 = vmatpush1.msra.mxu0 %v2592
        %4974 = vmatprep.subr.mxu0 0.0
        %4975 = vmatpush1.msra.mxu0 %v2593
        %4976 = vmatprep.subr.mxu0 0.0
        %4977 = vmatpush1.msra.mxu0 %v2594
        %4978 = vmatprep.subr.mxu0 0.0
        %4979 = vmatpush1.msra.mxu0 %v2595
        %4980 = vmatprep.subr.mxu0 0.0
        %4981 = vmatpush1.msra.mxu0 %v2596
        %4982 = vmatprep.subr.mxu0 0.0
        %4983 = vmatpush1.msra.mxu0 %v2597
        %4984 = vmatprep.subr.mxu0 0.0
        %4985 = vmatpush1.msra.mxu0 %v2598
        %4986 = vmatprep.subr.mxu0 0.0
        %4987 = vmatpush1.msra.mxu0 %v2599
        %4988 = vmatprep.subr.mxu0 0.0
        %4989 = vmatpush1.msra.mxu0 %v2600
        %4990 = vmatprep.subr.mxu0 0.0
        %4991 = vmatpush1.msra.mxu0 %v2601
        %4992 = vmatprep.subr.mxu0 0.0
        %4993 = vmatpush1.msra.mxu0 %v2602
        %4994 = vmatprep.subr.mxu0 0.0
        %4995 = vmatpush1.msra.mxu0 %v2603
        %4996 = vmatprep.subr.mxu0 0.0
        %4997 = vmatpush1.msra.mxu0 %v2604
        %4998 = vmatprep.subr.mxu0 0.0
        %4999 = vmatpush1.msra.mxu0 %v2605
        %5000 = vmatprep.subr.mxu0 0.0
        %5001 = vmatpush1.msra.mxu0 %v2606
        %5002 = vmatprep.subr.mxu0 0.0
        %5003 = vmatpush1.msra.mxu0 %v2607
        %5004 = vmatprep.subr.mxu0 0.0
        %5005 = vmatpush1.msra.mxu0 %v2608
        %5006 = vmatprep.subr.mxu0 0.0
        %5007 = vmatpush1.msra.mxu0 %v2609
        %5008 = vmatprep.subr.mxu0 0.0
        %5009 = vmatpush1.msra.mxu0 %v2610
        %5010 = vmatprep.subr.mxu0 0.0
        %5011 = vmatpush1.msra.mxu0 %v2611
        %5012 = vmatprep.subr.mxu0 0.0
        %5013 = vmatpush1.msra.mxu0 %v2612
        %5014 = vmatprep.subr.mxu0 0.0
        %5015 = vmatpush1.msra.mxu0 %v2613
        %5016 = vmatprep.subr.mxu0 0.0
        %5017 = vmatpush1.msra.mxu0 %v2614
        %5018 = vmatprep.subr.mxu0 0.0
        %5019 = vmatpush1.msra.mxu0 %v2615
        %5020 = vmatprep.subr.mxu0 0.0
        %5021 = vmatpush1.msra.mxu0 %v2616
        %5022 = vmatprep.subr.mxu0 0.0
        %5023 = vmatpush1.msra.mxu0 %v2617
        %5024 = vmatprep.subr.mxu0 0.0
        %5025 = vmatpush1.msra.mxu0 %v2618
        %5026 = vmatprep.subr.mxu0 0.0
        %5027 = vmatpush1.msra.mxu0 %v2619
        %5028 = vmatprep.mubr.f32.mxu0 %v3101
        %5029 = vmatmul.mubr.f32.gmra.mrb[0].mxu0 %v3097
        %v5030 = vpop.f32.mrb[0].mxu0
        %v5031 = vadd.f32 %v4961, %v5030
        %v5032 = vpop.f32.mrb[0].mxu0
        %5033 = vdwg.mxu0
        %5034 = vmatprep.subr.mxu0 0.0
        %5035 = vmatpush1.msra.mxu0 %v2620
        %5036 = vmatprep.subr.mxu0 0.0
        %5037 = vmatpush1.msra.mxu0 %v2621
        %5038 = vmatprep.subr.mxu0 0.0
        %5039 = vmatpush1.msra.mxu0 %v2622
        %5040 = vmatprep.subr.mxu0 0.0
        %5041 = vmatpush1.msra.mxu0 %v2623
        %5042 = vmatprep.subr.mxu0 0.0
        %5043 = vmatpush1.msra.mxu0 %v2624
        %5044 = vmatprep.subr.mxu0 0.0
        %5045 = vmatpush1.msra.mxu0 %v2625
        %5046 = vmatprep.subr.mxu0 0.0
        %5047 = vmatpush1.msra.mxu0 %v2626
        %5048 = vmatprep.subr.mxu0 0.0
        %5049 = vmatpush1.msra.mxu0 %v2627
        %5050 = vmatprep.subr.mxu0 0.0
        %5051 = vmatpush1.msra.mxu0 %v2628
        %5052 = vmatprep.subr.mxu0 0.0
        %5053 = vmatpush1.msra.mxu0 %v2629
        %5054 = vmatprep.subr.mxu0 0.0
        %5055 = vmatpush1.msra.mxu0 %v2630
        %5056 = vmatprep.subr.mxu0 0.0
        %5057 = vmatpush1.msra.mxu0 %v2631
        %5058 = vmatprep.subr.mxu0 0.0
        %5059 = vmatpush1.msra.mxu0 %v2632
        %5060 = vmatprep.subr.mxu0 0.0
        %5061 = vmatpush1.msra.mxu0 %v2633
        %5062 = vmatprep.subr.mxu0 0.0
        %5063 = vmatpush1.msra.mxu0 %v2634
        %5064 = vmatprep.subr.mxu0 0.0
        %5065 = vmatpush1.msra.mxu0 %v2635
        %5066 = vmatprep.subr.mxu0 0.0
        %5067 = vmatpush1.msra.mxu0 %v2636
        %5068 = vmatprep.subr.mxu0 0.0
        %5069 = vmatpush1.msra.mxu0 %v2637
        %5070 = vmatprep.subr.mxu0 0.0
        %5071 = vmatpush1.msra.mxu0 %v2638
        %5072 = vmatprep.subr.mxu0 0.0
        %5073 = vmatpush1.msra.mxu0 %v2639
        %5074 = vmatprep.subr.mxu0 0.0
        %5075 = vmatpush1.msra.mxu0 %v2640
        %5076 = vmatprep.subr.mxu0 0.0
        %5077 = vmatpush1.msra.mxu0 %v2641
        %5078 = vmatprep.subr.mxu0 0.0
        %5079 = vmatpush1.msra.mxu0 %v2642
        %5080 = vmatprep.subr.mxu0 0.0
        %5081 = vmatpush1.msra.mxu0 %v2643
        %5082 = vmatprep.subr.mxu0 0.0
        %5083 = vmatpush1.msra.mxu0 %v2644
        %5084 = vmatprep.subr.mxu0 0.0
        %5085 = vmatpush1.msra.mxu0 %v2645
        %5086 = vmatprep.subr.mxu0 0.0
        %5087 = vmatpush1.msra.mxu0 %v2646
        %5088 = vmatprep.subr.mxu0 0.0
        %5089 = vmatpush1.msra.mxu0 %v2647
        %5090 = vmatprep.subr.mxu0 0.0
        %5091 = vmatpush1.msra.mxu0 %v2648
        %5092 = vmatprep.subr.mxu0 0.0
        %5093 = vmatpush1.msra.mxu0 %v2649
        %5094 = vmatprep.subr.mxu0 0.0
        %5095 = vmatpush1.msra.mxu0 %v2650
        %5096 = vmatprep.subr.mxu0 0.0
        %5097 = vmatpush1.msra.mxu0 %v2651
        %5098 = vmatprep.mubr.f32.mxu0 %v3109
        %5099 = vmatmul.mubr.f32.gmra.mrb[0].mxu0 %v3105
        %v5100 = vpop.f32.mrb[0].mxu0
        %v5101 = vadd.f32 %v5031, %v5100
        %v5102 = vpop.f32.mrb[0].mxu0
        %5103 = vdwg.mxu0
        %5104 = vmatprep.subr.mxu0 0.0
        %5105 = vmatpush1.msra.mxu0 %v2652
        %5106 = vmatprep.subr.mxu0 0.0
        %5107 = vmatpush1.msra.mxu0 %v2653
        %5108 = vmatprep.subr.mxu0 0.0
        %5109 = vmatpush1.msra.mxu0 %v2654
        %5110 = vmatprep.subr.mxu0 0.0
        %5111 = vmatpush1.msra.mxu0 %v2655
        %5112 = vmatprep.subr.mxu0 0.0
        %5113 = vmatpush1.msra.mxu0 %v2656
        %5114 = vmatprep.subr.mxu0 0.0
        %5115 = vmatpush1.msra.mxu0 %v2657
        %5116 = vmatprep.subr.mxu0 0.0
        %5117 = vmatpush1.msra.mxu0 %v2658
        %5118 = vmatprep.subr.mxu0 0.0
        %5119 = vmatpush1.msra.mxu0 %v2659
        %5120 = vmatprep.subr.mxu0 0.0
        %5121 = vmatpush1.msra.mxu0 %v2660
        %5122 = vmatprep.subr.mxu0 0.0
        %5123 = vmatpush1.msra.mxu0 %v2661
        %5124 = vmatprep.subr.mxu0 0.0
        %5125 = vmatpush1.msra.mxu0 %v2662
        %5126 = vmatprep.subr.mxu0 0.0
        %5127 = vmatpush1.msra.mxu0 %v2663
        %5128 = vmatprep.subr.mxu0 0.0
        %5129 = vmatpush1.msra.mxu0 %v2664
        %5130 = vmatprep.subr.mxu0 0.0
        %5131 = vmatpush1.msra.mxu0 %v2665
        %5132 = vmatprep.subr.mxu0 0.0
        %5133 = vmatpush1.msra.mxu0 %v2666
        %5134 = vmatprep.subr.mxu0 0.0
        %5135 = vmatpush1.msra.mxu0 %v2667
        %5136 = vmatprep.subr.mxu0 0.0
        %5137 = vmatpush1.msra.mxu0 %v2668
        %5138 = vmatprep.subr.mxu0 0.0
        %5139 = vmatpush1.msra.mxu0 %v2669
        %5140 = vmatprep.subr.mxu0 0.0
        %5141 = vmatpush1.msra.mxu0 %v2670
        %5142 = vmatprep.subr.mxu0 0.0
        %5143 = vmatpush1.msra.mxu0 %v2671
        %5144 = vmatprep.subr.mxu0 0.0
        %5145 = vmatpush1.msra.mxu0 %v2672
        %5146 = vmatprep.subr.mxu0 0.0
        %5147 = vmatpush1.msra.mxu0 %v2673
        %5148 = vmatprep.subr.mxu0 0.0
        %5149 = vmatpush1.msra.mxu0 %v2674
        %5150 = vmatprep.subr.mxu0 0.0
        %5151 = vmatpush1.msra.mxu0 %v2675
        %5152 = vmatprep.subr.mxu0 0.0
        %5153 = vmatpush1.msra.mxu0 %v2676
        %5154 = vmatprep.subr.mxu0 0.0
        %5155 = vmatpush1.msra.mxu0 %v2677
        %5156 = vmatprep.subr.mxu0 0.0
        %5157 = vmatpush1.msra.mxu0 %v2678
        %5158 = vmatprep.subr.mxu0 0.0
        %5159 = vmatpush1.msra.mxu0 %v2679
        %5160 = vmatprep.subr.mxu0 0.0
        %5161 = vmatpush1.msra.mxu0 %v2680
        %5162 = vmatprep.subr.mxu0 0.0
        %5163 = vmatpush1.msra.mxu0 %v2681
        %5164 = vmatprep.subr.mxu0 0.0
        %5165 = vmatpush1.msra.mxu0 %v2682
        %5166 = vmatprep.subr.mxu0 0.0
        %5167 = vmatpush1.msra.mxu0 %v2683
        %5168 = vmatprep.mubr.f32.mxu0 %v3117
        %5169 = vmatmul.mubr.f32.gmra.mrb[0].mxu0 %v3113
        %v5170 = vpop.f32.mrb[0].mxu0
        %v5171 = vadd.f32 %v5101, %v5170
        %v5172 = vpop.f32.mrb[0].mxu0
        %5173 = vdwg.mxu0
        %5174 = vmatprep.subr.mxu0 0.0
        %5175 = vmatpush1.msra.mxu0 %v2684
        %5176 = vmatprep.subr.mxu0 0.0
        %5177 = vmatpush1.msra.mxu0 %v2685
        %5178 = vmatprep.subr.mxu0 0.0
        %5179 = vmatpush1.msra.mxu0 %v2686
        %5180 = vmatprep.subr.mxu0 0.0
        %5181 = vmatpush1.msra.mxu0 %v2687
        %5182 = vmatprep.subr.mxu0 0.0
        %5183 = vmatpush1.msra.mxu0 %v2688
        %5184 = vmatprep.subr.mxu0 0.0
        %5185 = vmatpush1.msra.mxu0 %v2689
        %5186 = vmatprep.subr.mxu0 0.0
        %5187 = vmatpush1.msra.mxu0 %v2690
        %5188 = vmatprep.subr.mxu0 0.0
        %5189 = vmatpush1.msra.mxu0 %v2691
        %5190 = vmatprep.subr.mxu0 0.0
        %5191 = vmatpush1.msra.mxu0 %v2692
        %5192 = vmatprep.subr.mxu0 0.0
        %5193 = vmatpush1.msra.mxu0 %v2693
        %5194 = vmatprep.subr.mxu0 0.0
        %5195 = vmatpush1.msra.mxu0 %v2694
        %5196 = vmatprep.subr.mxu0 0.0
        %5197 = vmatpush1.msra.mxu0 %v2695
        %5198 = vmatprep.subr.mxu0 0.0
        %5199 = vmatpush1.msra.mxu0 %v2696
        %5200 = vmatprep.subr.mxu0 0.0
        %5201 = vmatpush1.msra.mxu0 %v2697
        %5202 = vmatprep.subr.mxu0 0.0
        %5203 = vmatpush1.msra.mxu0 %v2698
        %5204 = vmatprep.subr.mxu0 0.0
        %5205 = vmatpush1.msra.mxu0 %v2699
        %5206 = vmatprep.subr.mxu0 0.0
        %5207 = vmatpush1.msra.mxu0 %v2700
        %5208 = vmatprep.subr.mxu0 0.0
        %5209 = vmatpush1.msra.mxu0 %v2701
        %5210 = vmatprep.subr.mxu0 0.0
        %5211 = vmatpush1.msra.mxu0 %v2702
        %5212 = vmatprep.subr.mxu0 0.0
        %5213 = vmatpush1.msra.mxu0 %v2703
        %5214 = vmatprep.subr.mxu0 0.0
        %5215 = vmatpush1.msra.mxu0 %v2704
        %5216 = vmatprep.subr.mxu0 0.0
        %5217 = vmatpush1.msra.mxu0 %v2705
        %5218 = vmatprep.subr.mxu0 0.0
        %5219 = vmatpush1.msra.mxu0 %v2706
        %5220 = vmatprep.subr.mxu0 0.0
        %5221 = vmatpush1.msra.mxu0 %v2707
        %5222 = vmatprep.subr.mxu0 0.0
        %5223 = vmatpush1.msra.mxu0 %v2708
        %5224 = vmatprep.subr.mxu0 0.0
        %5225 = vmatpush1.msra.mxu0 %v2709
        %5226 = vmatprep.subr.mxu0 0.0
        %5227 = vmatpush1.msra.mxu0 %v2710
        %5228 = vmatprep.subr.mxu0 0.0
        %5229 = vmatpush1.msra.mxu0 %v2711
        %5230 = vmatprep.subr.mxu0 0.0
        %5231 = vmatpush1.msra.mxu0 %v2712
        %5232 = vmatprep.subr.mxu0 0.0
        %5233 = vmatpush1.msra.mxu0 %v2713
        %5234 = vmatprep.subr.mxu0 0.0
        %5235 = vmatpush1.msra.mxu0 %v2714
        %5236 = vmatprep.subr.mxu0 0.0
        %5237 = vmatpush1.msra.mxu0 %v2715
        %5238 = vmatprep.mubr.f32.mxu0 %v3125
        %5239 = vmatmul.mubr.f32.gmra.mrb[0].mxu0 %v3121
        %v5240 = vpop.f32.mrb[0].mxu0
        %v5241 = vadd.f32 %v5171, %v5240
        %v5242 = vpop.f32.mrb[0].mxu0
        %5243 = vdwg.mxu0
        %5244 = vmatprep.subr.mxu0 0.0
        %5245 = vmatpush1.msra.mxu0 %v2716
        %5246 = vmatprep.subr.mxu0 0.0
        %5247 = vmatpush1.msra.mxu0 %v2717
        %5248 = vmatprep.subr.mxu0 0.0
        %5249 = vmatpush1.msra.mxu0 %v2718
        %5250 = vmatprep.subr.mxu0 0.0
        %5251 = vmatpush1.msra.mxu0 %v2719
        %5252 = vmatprep.subr.mxu0 0.0
        %5253 = vmatpush1.msra.mxu0 %v2720
        %5254 = vmatprep.subr.mxu0 0.0
        %5255 = vmatpush1.msra.mxu0 %v2721
        %5256 = vmatprep.subr.mxu0 0.0
        %5257 = vmatpush1.msra.mxu0 %v2722
        %5258 = vmatprep.subr.mxu0 0.0
        %5259 = vmatpush1.msra.mxu0 %v2723
        %5260 = vmatprep.subr.mxu0 0.0
        %5261 = vmatpush1.msra.mxu0 %v2724
        %5262 = vmatprep.subr.mxu0 0.0
        %5263 = vmatpush1.msra.mxu0 %v2725
        %5264 = vmatprep.subr.mxu0 0.0
        %5265 = vmatpush1.msra.mxu0 %v2726
        %5266 = vmatprep.subr.mxu0 0.0
        %5267 = vmatpush1.msra.mxu0 %v2727
        %5268 = vmatprep.subr.mxu0 0.0
        %5269 = vmatpush1.msra.mxu0 %v2728
        %5270 = vmatprep.subr.mxu0 0.0
        %5271 = vmatpush1.msra.mxu0 %v2729
        %5272 = vmatprep.subr.mxu0 0.0
        %5273 = vmatpush1.msra.mxu0 %v2730
        %5274 = vmatprep.subr.mxu0 0.0
        %5275 = vmatpush1.msra.mxu0 %v2731
        %5276 = vmatprep.subr.mxu0 0.0
        %5277 = vmatpush1.msra.mxu0 %v2732
        %5278 = vmatprep.subr.mxu0 0.0
        %5279 = vmatpush1.msra.mxu0 %v2733
        %5280 = vmatprep.subr.mxu0 0.0
        %5281 = vmatpush1.msra.mxu0 %v2734
        %5282 = vmatprep.subr.mxu0 0.0
        %5283 = vmatpush1.msra.mxu0 %v2735
        %5284 = vmatprep.subr.mxu0 0.0
        %5285 = vmatpush1.msra.mxu0 %v2736
        %5286 = vmatprep.subr.mxu0 0.0
        %5287 = vmatpush1.msra.mxu0 %v2737
        %5288 = vmatprep.subr.mxu0 0.0
        %5289 = vmatpush1.msra.mxu0 %v2738
        %5290 = vmatprep.subr.mxu0 0.0
        %5291 = vmatpush1.msra.mxu0 %v2739
        %5292 = vmatprep.subr.mxu0 0.0
        %5293 = vmatpush1.msra.mxu0 %v2740
        %5294 = vmatprep.subr.mxu0 0.0
        %5295 = vmatpush1.msra.mxu0 %v2741
        %5296 = vmatprep.subr.mxu0 0.0
        %5297 = vmatpush1.msra.mxu0 %v2742
        %5298 = vmatprep.subr.mxu0 0.0
        %5299 = vmatpush1.msra.mxu0 %v2743
        %5300 = vmatprep.subr.mxu0 0.0
        %5301 = vmatpush1.msra.mxu0 %v2744
        %5302 = vmatprep.subr.mxu0 0.0
        %5303 = vmatpush1.msra.mxu0 %v2745
        %5304 = vmatprep.subr.mxu0 0.0
        %5305 = vmatpush1.msra.mxu0 %v2746
        %5306 = vmatprep.subr.mxu0 0.0
        %5307 = vmatpush1.msra.mxu0 %v2747
        %5308 = vmatprep.mubr.f32.mxu0 %v3133
        %5309 = vmatmul.mubr.f32.gmra.mrb[0].mxu0 %v3129
        %v5310 = vpop.f32.mrb[0].mxu0
        %v5311 = vadd.f32 %v5241, %v5310
        %v5312 = vpop.f32.mrb[0].mxu0
        %5313 = vdwg.mxu0
        %5314 = vmatprep.subr.mxu0 0.0
        %5315 = vmatpush1.msra.mxu0 %v2748
        %5316 = vmatprep.subr.mxu0 0.0
        %5317 = vmatpush1.msra.mxu0 %v2749
        %5318 = vmatprep.subr.mxu0 0.0
        %5319 = vmatpush1.msra.mxu0 %v2750
        %5320 = vmatprep.subr.mxu0 0.0
        %5321 = vmatpush1.msra.mxu0 %v2751
        %5322 = vmatprep.subr.mxu0 0.0
        %5323 = vmatpush1.msra.mxu0 %v2752
        %5324 = vmatprep.subr.mxu0 0.0
        %5325 = vmatpush1.msra.mxu0 %v2753
        %5326 = vmatprep.subr.mxu0 0.0
        %5327 = vmatpush1.msra.mxu0 %v2754
        %5328 = vmatprep.subr.mxu0 0.0
        %5329 = vmatpush1.msra.mxu0 %v2755
        %5330 = vmatprep.subr.mxu0 0.0
        %5331 = vmatpush1.msra.mxu0 %v2756
        %5332 = vmatprep.subr.mxu0 0.0
        %5333 = vmatpush1.msra.mxu0 %v2757
        %5334 = vmatprep.subr.mxu0 0.0
        %5335 = vmatpush1.msra.mxu0 %v2758
        %5336 = vmatprep.subr.mxu0 0.0
        %5337 = vmatpush1.msra.mxu0 %v2759
        %5338 = vmatprep.subr.mxu0 0.0
        %5339 = vmatpush1.msra.mxu0 %v2760
        %5340 = vmatprep.subr.mxu0 0.0
        %5341 = vmatpush1.msra.mxu0 %v2761
        %5342 = vmatprep.subr.mxu0 0.0
        %5343 = vmatpush1.msra.mxu0 %v2762
        %5344 = vmatprep.subr.mxu0 0.0
        %5345 = vmatpush1.msra.mxu0 %v2763
        %5346 = vmatprep.subr.mxu0 0.0
        %5347 = vmatpush1.msra.mxu0 %v2764
        %5348 = vmatprep.subr.mxu0 0.0
        %5349 = vmatpush1.msra.mxu0 %v2765
        %5350 = vmatprep.subr.mxu0 0.0
        %5351 = vmatpush1.msra.mxu0 %v2766
        %5352 = vmatprep.subr.mxu0 0.0
        %5353 = vmatpush1.msra.mxu0 %v2767
        %5354 = vmatprep.subr.mxu0 0.0
        %5355 = vmatpush1.msra.mxu0 %v2768
        %5356 = vmatprep.subr.mxu0 0.0
        %5357 = vmatpush1.msra.mxu0 %v2769
        %5358 = vmatprep.subr.mxu0 0.0
        %5359 = vmatpush1.msra.mxu0 %v2770
        %5360 = vmatprep.subr.mxu0 0.0
        %5361 = vmatpush1.msra.mxu0 %v2771
        %5362 = vmatprep.subr.mxu0 0.0
        %5363 = vmatpush1.msra.mxu0 %v2772
        %5364 = vmatprep.subr.mxu0 0.0
        %5365 = vmatpush1.msra.mxu0 %v2773
        %5366 = vmatprep.subr.mxu0 0.0
        %5367 = vmatpush1.msra.mxu0 %v2774
        %5368 = vmatprep.subr.mxu0 0.0
        %5369 = vmatpush1.msra.mxu0 %v2775
        %5370 = vmatprep.subr.mxu0 0.0
        %5371 = vmatpush1.msra.mxu0 %v2776
        %5372 = vmatprep.subr.mxu0 0.0
        %5373 = vmatpush1.msra.mxu0 %v2777
        %5374 = vmatprep.subr.mxu0 0.0
        %5375 = vmatpush1.msra.mxu0 %v2778
        %5376 = vmatprep.subr.mxu0 0.0
        %5377 = vmatpush1.msra.mxu0 %v2779
        %5378 = vmatprep.mubr.f32.mxu0 %v3141
        %5379 = vmatmul.mubr.f32.gmra.mrb[0].mxu0 %v3137
        %v5380 = vpop.f32.mrb[0].mxu0
        %v5381 = vadd.f32 %v5311, %v5380
        %v5382 = vpop.f32.mrb[0].mxu0
        %5383 = vdwg.mxu0
        %5384 = vmatprep.subr.mxu0 0.0
        %5385 = vmatpush1.msra.mxu0 %v2780
        %5386 = vmatprep.subr.mxu0 0.0
        %5387 = vmatpush1.msra.mxu0 %v2781
        %5388 = vmatprep.subr.mxu0 0.0
        %5389 = vmatpush1.msra.mxu0 %v2782
        %5390 = vmatprep.subr.mxu0 0.0
        %5391 = vmatpush1.msra.mxu0 %v2783
        %5392 = vmatprep.subr.mxu0 0.0
        %5393 = vmatpush1.msra.mxu0 %v2784
        %5394 = vmatprep.subr.mxu0 0.0
        %5395 = vmatpush1.msra.mxu0 %v2785
        %5396 = vmatprep.subr.mxu0 0.0
        %5397 = vmatpush1.msra.mxu0 %v2786
        %5398 = vmatprep.subr.mxu0 0.0
        %5399 = vmatpush1.msra.mxu0 %v2787
        %5400 = vmatprep.subr.mxu0 0.0
        %5401 = vmatpush1.msra.mxu0 %v2788
        %5402 = vmatprep.subr.mxu0 0.0
        %5403 = vmatpush1.msra.mxu0 %v2789
        %5404 = vmatprep.subr.mxu0 0.0
        %5405 = vmatpush1.msra.mxu0 %v2790
        %5406 = vmatprep.subr.mxu0 0.0
        %5407 = vmatpush1.msra.mxu0 %v2791
        %5408 = vmatprep.subr.mxu0 0.0
        %5409 = vmatpush1.msra.mxu0 %v2792
        %5410 = vmatprep.subr.mxu0 0.0
        %5411 = vmatpush1.msra.mxu0 %v2793
        %5412 = vmatprep.subr.mxu0 0.0
        %5413 = vmatpush1.msra.mxu0 %v2794
        %5414 = vmatprep.subr.mxu0 0.0
        %5415 = vmatpush1.msra.mxu0 %v2795
        %5416 = vmatprep.subr.mxu0 0.0
        %5417 = vmatpush1.msra.mxu0 %v2796
        %5418 = vmatprep.subr.mxu0 0.0
        %5419 = vmatpush1.msra.mxu0 %v2797
        %5420 = vmatprep.subr.mxu0 0.0
        %5421 = vmatpush1.msra.mxu0 %v2798
        %5422 = vmatprep.subr.mxu0 0.0
        %5423 = vmatpush1.msra.mxu0 %v2799
        %5424 = vmatprep.subr.mxu0 0.0
        %5425 = vmatpush1.msra.mxu0 %v2800
        %5426 = vmatprep.subr.mxu0 0.0
        %5427 = vmatpush1.msra.mxu0 %v2801
        %5428 = vmatprep.subr.mxu0 0.0
        %5429 = vmatpush1.msra.mxu0 %v2802
        %5430 = vmatprep.subr.mxu0 0.0
        %5431 = vmatpush1.msra.mxu0 %v2803
        %5432 = vmatprep.subr.mxu0 0.0
        %5433 = vmatpush1.msra.mxu0 %v2804
        %5434 = vmatprep.subr.mxu0 0.0
        %5435 = vmatpush1.msra.mxu0 %v2805
        %5436 = vmatprep.subr.mxu0 0.0
        %5437 = vmatpush1.msra.mxu0 %v2806
        %5438 = vmatprep.subr.mxu0 0.0
        %5439 = vmatpush1.msra.mxu0 %v2807
        %5440 = vmatprep.subr.mxu0 0.0
        %5441 = vmatpush1.msra.mxu0 %v2808
        %5442 = vmatprep.subr.mxu0 0.0
        %5443 = vmatpush1.msra.mxu0 %v2809
        %5444 = vmatprep.subr.mxu0 0.0
        %5445 = vmatpush1.msra.mxu0 %v2810
        %5446 = vmatprep.subr.mxu0 0.0
        %5447 = vmatpush1.msra.mxu0 %v2811
        %5448 = vmatprep.mubr.f32.mxu0 %v3149
        %5449 = vmatmul.mubr.f32.gmra.mrb[0].mxu0 %v3145
        %v5450 = vpop.f32.mrb[0].mxu0
        %v5451 = vadd.f32 %v5381, %v5450
        %v5452 = vpop.f32.mrb[0].mxu0
        %5453 = vdwg.mxu0
        %v5454 = vld [vmem:[%s8] sm:$0x1]
        %v5455 = vadd.f32 %v5451, %v5454
        %v5456 = vmax.f32 %v5455, 0.0
        %v5457 = vld [vmem:[%s9] sm:$0xff]
        %v5458 = vld [vmem:[%s9 + $0x8] sm:$0xff]
        %v5459 = vld [vmem:[%s9 + $0x10] sm:$0xff]
        %v5460 = vld [vmem:[%s9 + $0x18] sm:$0xff]
        %v5461 = vld [vmem:[%s10] sm:$0x1]
        %vm5462 = vcmask 261120
        %v5464 = vsel %vm5462, %v5456, 0
        %5466 = vmatprep.subr.mxu0 0.0
        %5467 = vmatpush1.msra.mxu0 %v5457
        %5468 = vmatprep.subr.mxu0 0.0
        %5469 = vmatpush1.msra.mxu0 %v5458
        %5470 = vmatprep.subr.mxu0 0.0
        %5471 = vmatpush1.msra.mxu0 %v5459
        %5472 = vmatprep.subr.mxu0 0.0
        %5473 = vmatpush1.msra.mxu0 %v5460
        %5474 = vmatprep.subr.mxu0 0.0
        %5475 = vmatpush1.msra.mxu0 0.0
        %5476 = vmatprep.subr.mxu0 0.0
        %5477 = vmatpush1.msra.mxu0 0.0
        %5478 = vmatprep.subr.mxu0 0.0
        %5479 = vmatpush1.msra.mxu0 0.0
        %5480 = vmatprep.subr.mxu0 0.0
        %5481 = vmatpush1.msra.mxu0 0.0
        %5482 = vmatprep.subr.mxu0 0.0
        %5483 = vmatpush1.msra.mxu0 0.0
        %5484 = vmatprep.subr.mxu0 0.0
        %5485 = vmatpush1.msra.mxu0 0.0
        %5486 = vmatprep.subr.mxu0 0.0
        %5487 = vmatpush1.msra.mxu0 0.0
        %5488 = vmatprep.subr.mxu0 0.0
        %5489 = vmatpush1.msra.mxu0 0.0
        %5490 = vmatprep.subr.mxu0 0.0
        %5491 = vmatpush1.msra.mxu0 0.0
        %5492 = vmatprep.subr.mxu0 0.0
        %5493 = vmatpush1.msra.mxu0 0.0
        %5494 = vmatprep.subr.mxu0 0.0
        %5495 = vmatpush1.msra.mxu0 0.0
        %5496 = vmatprep.subr.mxu0 0.0
        %5497 = vmatpush1.msra.mxu0 0.0
        %5498 = vmatprep.subr.mxu0 0.0
        %5499 = vmatpush1.msra.mxu0 0.0
        %5500 = vmatprep.subr.mxu0 0.0
        %5501 = vmatpush1.msra.mxu0 0.0
        %5502 = vmatprep.subr.mxu0 0.0
        %5503 = vmatpush1.msra.mxu0 0.0
        %5504 = vmatprep.subr.mxu0 0.0
        %5505 = vmatpush1.msra.mxu0 0.0
        %5506 = vmatprep.subr.mxu0 0.0
        %5507 = vmatpush1.msra.mxu0 0.0
        %5508 = vmatprep.subr.mxu0 0.0
        %5509 = vmatpush1.msra.mxu0 0.0
        %5510 = vmatprep.subr.mxu0 0.0
        %5511 = vmatpush1.msra.mxu0 0.0
        %5512 = vmatprep.subr.mxu0 0.0
        %5513 = vmatpush1.msra.mxu0 0.0
        %5514 = vmatprep.subr.mxu0 0.0
        %5515 = vmatpush1.msra.mxu0 0.0
        %5516 = vmatprep.subr.mxu0 0.0
        %5517 = vmatpush1.msra.mxu0 0.0
        %5518 = vmatprep.subr.mxu0 0.0
        %5519 = vmatpush1.msra.mxu0 0.0
        %5520 = vmatprep.subr.mxu0 0.0
        %5521 = vmatpush1.msra.mxu0 0.0
        %5522 = vmatprep.subr.mxu0 0.0
        %5523 = vmatpush1.msra.mxu0 0.0
        %5524 = vmatprep.subr.mxu0 0.0
        %5525 = vmatpush1.msra.mxu0 0.0
        %5526 = vmatprep.subr.mxu0 0.0
        %5527 = vmatpush1.msra.mxu0 0.0
        %5528 = vmatprep.subr.mxu0 0.0
        %5529 = vmatpush1.msra.mxu0 0.0
        %5530 = vmatprep.mubr.f32.mxu0 0.0
        %5531 = vmatmul.mubr.f32.gmra.mrb[0].mxu0 %v5464
        %v5532 = vpop.f32.mrb[0].mxu0
        %v5533 = vadd.f32 %v5461, %v5532
        %v5534 = vpop.f32.mrb[0].mxu0
        %5535 = vdwg.mxu0
        %vm5536 = vcmask 16384
        %5537 = vst.msk [vmem:[%s389] sm:$0x1] %vm5536, %v5533
        %s5538 = sand.u32 %s274, 1
        %s5539 = scalar_lea.sflag [#allocation7], %s5538
        %s5540 = sand.u32 %s274, 1
        %s5541 = scalar_lea.vmem [#allocation6], %s5540
        // Predicated region
        $region65: #{qnetwork_forward.1} parent=63 // pred_check
          %p5542 = pneg %p284
        $region66: #{qnetwork_forward.1} parent=63 // pred_check_branch
          %5544 = sbr.rel (%p5542) target = $region68
        $region67: #{qnetwork_forward.1} parent=63 // pred_region
          %s5546 = ssub.s32 16, 16
          %5547 = vsyncadd %s5539, %s5546
          %s5548 = smul.addr %s25, 16
          %s5549 = scalar_lea.hbm %s11, %s5548
          %s5551 = sshll.u32 %s5541, 4
          %s5552 = int_to_ptr.vmem [resolvable:$true] %s5551
          %5554 = dma.vmem_to_hbm [thread:$0]  %s5552, 16, %s5549, %s5539
        $region68: #{qnetwork_forward.1} parent=63 // pred_fallthru
          _
      $region64: #{qnetwork_forward.1} parent=5 // pred_fallthru
        _
      %p5555 = scmp.le.s32.totalorder 2, %s20
      // Predicated region
      $region69: #{qnetwork_forward.1} parent=5 // pred_check
        %p5556 = pneg %p5555
      $region70: #{qnetwork_forward.1} parent=5 // pred_check_branch
        %5558 = sbr.rel (%p5556) target = $region72
      $region71: #{qnetwork_forward.1} parent=5 // pred_region
        %s5559 = ssub.s32 %s20, 2
        // Predicated region
        $region73: #{qnetwork_forward.1} parent=71 // pred_check
          %p5560 = pneg %p290
        $region74: #{qnetwork_forward.1} parent=71 // pred_check_branch
          %5562 = sbr.rel (%p5560) target = $region76
        $region75: #{qnetwork_forward.1} parent=71 // pred_region
          %s5563 = sand.u32 %s275, 1
          %s5564 = scalar_lea.sflag [#allocation7], %s5563
          %s5565 = sand.u32 %s275, 1
          %s5566 = scalar_lea.vmem [#allocation6], %s5565
          %5567 = dma.done %s5564, 16
        $region76: #{qnetwork_forward.1} parent=71 // pred_fallthru
          _
      $region72: #{qnetwork_forward.1} parent=5 // pred_fallthru
        _
    $region6: #{qnetwork_forward.1} parent=1 // loop_footer
      %s24 = sadd.s32 1, %s20
    $region7: #{qnetwork_forward.1} parent=1 // loop_footer_branch
      %19 = sbr.rel target = $region3
    $region8: #{qnetwork_forward.1} parent=1 // loop_exit
      _
    %5568 = vsyncpa [#allocation7], 1
    %s5569 = scalar_lea.sflag [#allocation7], 1
    %5570 = vsyncpa %s5569, 1

</llo_original>
